<compile_context>
chip_gen: v5e
topology: v5e:2x2
jax: 0.10.0
libtpu: 0.0.40
codegen_flags: <defaults>
</compile_context>

<pallas_src>
import functools

import jax
import jax.numpy as jnp
from jax import lax
from jax.experimental import pallas as pl
from jax.experimental.pallas import tpu as pltpu


# ---------------------------------------------------------------------------
# Fused LSTM kernel: per-chunk input projection (MXU, off the serial path)
# + serial recurrence (only h @ W_hh on the critical path).
# ---------------------------------------------------------------------------
def _lstm_fused_kernel(emb_ref, h0_ref, c0_ref, wih_ref, whh_ref, bias_ref,
                       hs_ref, hn_ref, cn_ref,
                       gx_sc, h_sc, c_sc, *, hidden_dim, batch, chunk):
    ci = pl.program_id(0)
    H = hidden_dim
    B = batch

    @pl.when(ci == 0)
    def _():
        # h carry kept in bf16 (it is the MXU LHS every step); c stays f32.
        h_sc[...] = h0_ref[...].astype(jnp.bfloat16)
        c_sc[...] = c0_ref[...]

    # Input projection for the whole chunk at once (M = chunk*B rows keeps the
    # MXU busy).  Result stays in VMEM scratch -> no f32 gates_x HBM traffic.
    gx_sc[...] = (
        jnp.dot(emb_ref[...], wih_ref[...], preferred_element_type=jnp.float32)
        + bias_ref[...]
    )

    def step(t, carry):
        h_bf, c = carry                                  # h: bf16, c: f32
        row0 = pl.multiple_of(t * B, B)                  # sublane-aligned offset
        # Only h @ W_hh sits on the serial path; W_hh fed from its VMEM ref.
        gates = gx_sc[pl.ds(row0, B), :] + jnp.dot(
            h_bf, whh_ref[...], preferred_element_type=jnp.float32)
        # PyTorch gate order [i, f, g, o]; slices lane-aligned when H % 128 == 0.
        i_g = jax.nn.sigmoid(gates[:, 0 * H:1 * H])
        f_g = jax.nn.sigmoid(gates[:, 1 * H:2 * H])
        g_g = jnp.tanh(gates[:, 2 * H:3 * H])
        o_g = jax.nn.sigmoid(gates[:, 3 * H:4 * H])
        c_new = f_g * c + i_g * g_g
        h_new_bf = (o_g * jnp.tanh(c_new)).astype(jnp.bfloat16)
        hs_ref[pl.ds(row0, B), :] = h_new_bf             # per-step hidden (bf16)
        return (h_new_bf, c_new)

    h_last, c_last = lax.fori_loop(0, chunk, step, (h_sc[...], c_sc[...]),
                                   unroll=True)
    h_sc[...] = h_last
    c_sc[...] = c_last

    @pl.when(ci == pl.num_programs(0) - 1)
    def _():
        hn_ref[...] = h_last.astype(jnp.float32)
        cn_ref[...] = c_last


def _chunk_size(T, B, E, H, *, max_chunk=64, vmem_budget_bytes=8 << 20):
    """Largest chunk <= max_chunk dividing T whose per-step VMEM footprint
    (gates_x scratch + double-buffered emb-in / hs-out blocks) fits the budget."""
    def chunk_bytes(c):
        return c * B * (4 * H * 4            # gates_x scratch (f32)
                        + 2 * (H * 2)        # hs out blocks (bf16, 2 buffers)
                        + 2 * (E * 2))       # emb in blocks (bf16, 2 buffers)
    c = min(T, max_chunk)
    while c > 1 and (T % c != 0 or chunk_bytes(c) > vmem_budget_bytes):
        c -= 1
    return max(c, 1)


# ---------------------------------------------------------------------------
# Batched matmul + bias kernel (hoisted output projection).
# ---------------------------------------------------------------------------
def _matmul_bias_kernel(x_ref, w_ref, b_ref, o_ref):
    o_ref[...] = (
        jnp.dot(x_ref[...], w_ref[...], preferred_element_type=jnp.float32)
        + b_ref[...]
    ).astype(o_ref.dtype)


def _pick_tile(dim, target, aligns=(256, 128, 8)):
    """Largest tile <= target dividing `dim`, preferring MXU-granule alignment
    (256 on v6e/v7x, 128 on v5e).  Falls back to the full dimension."""
    if dim <= target:
        return dim
    for align in aligns:
        t = (target // align) * align
        while t >= align:
            if dim % t == 0:
                return t
            t -= align
    # TODO(synk): pad non-divisible dims instead of one giant block.
    return dim


def matmul_bias(x, w, b, *, tile_m=512, tile_n=512, out_dtype=jnp.float32):
    """(M, K) @ (K, N) + b; bf16 MXU operands, f32 accumulation."""
    M, K = x.shape
    K2, N = w.shape
    assert K == K2
    tm = _pick_tile(M, tile_m)
    tn = _pick_tile(N, tile_n, aligns=(256, 128))
    xb = x.astype(jnp.bfloat16)
    wb = w.astype(jnp.bfloat16)
    bb = b.reshape(1, N).astype(jnp.float32)
    gm, gn = M // tm, N // tn
    # Larger parallel axis leading so v7x megacore sharding engages even when
    # the other axis has a single block (no effect on single-TC v5e/v6e).
    if gn >= gm:
        grid = (gn, gm)
        in_specs = [pl.BlockSpec((tm, K), lambda j, i: (i, 0)),
                    pl.BlockSpec((K, tn), lambda j, i: (0, j)),
                    pl.BlockSpec((1, tn), lambda j, i: (0, j))]
        out_spec = pl.BlockSpec((tm, tn), lambda j, i: (i, j))
    else:
        grid = (gm, gn)
        in_specs = [pl.BlockSpec((tm, K), lambda i, j: (i, 0)),
                    pl.BlockSpec((K, tn), lambda i, j: (0, j)),
                    pl.BlockSpec((1, tn), lambda i, j: (0, j))]
        out_spec = pl.BlockSpec((tm, tn), lambda i, j: (i, j))
    return pl.pallas_call(
        _matmul_bias_kernel,
        out_shape=jax.ShapeDtypeStruct((M, N), out_dtype),
        grid_spec=pltpu.PrefetchScalarGridSpec(
            num_scalar_prefetch=0,
            grid=grid,
            in_specs=in_specs,
            out_specs=out_spec,
        ),
        compiler_params=pltpu.CompilerParams(
            dimension_semantics=("parallel", "parallel"),
            vmem_limit_bytes=32 * 1024 * 1024),
    )(xb, wb, bb)


# ---------------------------------------------------------------------------
# Forward pass: Embedding -> LSTM -> Linear
# ---------------------------------------------------------------------------
def rnn_lm_forward(tokens, params, hidden=None, *, max_chunk=64):
    """tokens: (T, B) int32. Returns (logits (T,B,V), (h_n (1,B,H), c_n (1,B,H)))."""
    T, B = tokens.shape
    E = params["emb"].shape[1]
    H = params["w_hh"].shape[0]
    V = params["w_out"].shape[1]

    # TODO(synk): embedding row gather stays as plain-JAX glue; at E=32 a
    # scalar-prefetched pl.Element row-gather kernel would not move the needle.
    emb = params["emb"][tokens].reshape(T * B, E).astype(jnp.bfloat16)

    if hidden is None:
        h0 = jnp.zeros((B, H), jnp.float32)
        c0 = jnp.zeros((B, H), jnp.float32)
    else:
        h0 = hidden[0][0].astype(jnp.float32)
        c0 = hidden[1][0].astype(jnp.float32)

    b_comb = (params["b_ih"] + params["b_hh"]).reshape(1, 4 * H).astype(jnp.float32)
    chunk = _chunk_size(T, B, E, H, max_chunk=max_chunk)

    kernel = functools.partial(_lstm_fused_kernel,
                               hidden_dim=H, batch=B, chunk=chunk)
    hs, hn, cn = pl.pallas_call(
        kernel,
        out_shape=(
            jax.ShapeDtypeStruct((T * B, H), jnp.bfloat16),
            jax.ShapeDtypeStruct((B, H), jnp.float32),
            jax.ShapeDtypeStruct((B, H), jnp.float32),
        ),
        grid_spec=pltpu.PrefetchScalarGridSpec(
            num_scalar_prefetch=0,
            grid=(T // chunk,),
            in_specs=[
                pl.BlockSpec((chunk * B, E), lambda c: (c, 0)),   # emb chunk (bf16)
                pl.BlockSpec((B, H), lambda c: (0, 0)),           # h0 (resident)
                pl.BlockSpec((B, H), lambda c: (0, 0)),           # c0 (resident)
                pl.BlockSpec((E, 4 * H), lambda c: (0, 0)),       # W_ih (resident)
                pl.BlockSpec((H, 4 * H), lambda c: (0, 0)),       # W_hh (resident)
                pl.BlockSpec((1, 4 * H), lambda c: (0, 0)),       # b_ih + b_hh
            ],
            out_specs=[
                pl.BlockSpec((chunk * B, H), lambda c: (c, 0)),   # hs per-step
                pl.BlockSpec((B, H), lambda c: (0, 0)),           # h_n (resident)
                pl.BlockSpec((B, H), lambda c: (0, 0)),           # c_n (resident)
            ],
            scratch_shapes=[
                pltpu.VMEM((chunk * B, 4 * H), jnp.float32),      # gates_x chunk
                pltpu.VMEM((B, H), jnp.bfloat16),                 # h carry
                pltpu.VMEM((B, H), jnp.float32),                  # c carry
            ],
        ),
        # The T axis MUST stay sequential ("arbitrary"): carries live in scratch
        # and h_n/c_n depend on the resident outputs flushing after the last chunk.
        compiler_params=pltpu.CompilerParams(
            dimension_semantics=("arbitrary",),
            vmem_limit_bytes=32 * 1024 * 1024),
    )(emb, h0, c0,
      params["w_ih"].astype(jnp.bfloat16),
      params["w_hh"].astype(jnp.bfloat16),
      b_comb)

    # Batched output (vocab) projection over all timesteps.
    logits = matmul_bias(hs, params["w_out"], params["b_out"])
    return logits.reshape(T, B, V), (hn[None], cn[None])


# ---------------------------------------------------------------------------
# Pure-JAX reference (matches PyTorch Embedding -> LSTM -> Linear semantics).
# ---------------------------------------------------------------------------
def rnn_lm_reference(tokens, params, hidden=None):
    emb = params["emb"][tokens].astype(jnp.float32)     # (T, B, E)
    T, B, E = emb.shape
    H = params["w_hh"].shape[0]
    if hidden is None:
        h0 = jnp.zeros((B, H), jnp.float32)
        c0 = jnp.zeros((B, H), jnp.float32)
    else:
        h0, c0 = hidden[0][0], hidden[1][0]
    b = params["b_ih"] + params["b_hh"]

    def step(carry, x_t):
        h, c = carry
        gates = x_t @ params["w_ih"] + h @ params["w_hh"] + b
        i_g = jax.nn.sigmoid(gates[:, 0 * H:1 * H])
        f_g = jax.nn.sigmoid(gates[:, 1 * H:2 * H])
        g_g = jnp.tanh(gates[:, 2 * H:3 * H])
        o_g = jax.nn.sigmoid(gates[:, 3 * H:4 * H])
        c_new = f_g * c + i_g * g_g
        h_new = o_g * jnp.tanh(c_new)
        return (h_new, c_new), h_new

    (h_n, c_n), hs = lax.scan(step, (h0, c0), emb)
    logits = hs @ params["w_out"] + params["b_out"]
    return logits, (h_n[None], c_n[None])


def make_params(key, vocab_size, emb_dim, hidden_dim):
    ks = jax.random.split(key, 8)
    s = 0.1
    return {
        "emb":   s * jax.random.normal(ks[0], (vocab_size, emb_dim), jnp.float32),
        # Stored transposed relative to PyTorch (weight_ih_l0 is (4H, E)) so the
        # kernels compute x @ W_ih directly.
        "w_ih":  s * jax.random.normal(ks[1], (emb_dim, 4 * hidden_dim), jnp.float32),
        "w_hh":  s * jax.random.normal(ks[2], (hidden_dim, 4 * hidden_dim), jnp.float32),
        "b_ih":  s * jax.random.normal(ks[3], (4 * hidden_dim,), jnp.float32),
        "b_hh":  s * jax.random.normal(ks[4], (4 * hidden_dim,), jnp.float32),
        "w_out": s * jax.random.normal(ks[5], (hidden_dim, vocab_size), jnp.float32),
        "b_out": s * jax.random.normal(ks[6], (vocab_size,), jnp.float32),
    }


if __name__ == "__main__":
    # Small, TPU-friendly shapes consistent with the module's forward:
    # vocab=256, emb_dim=32, lstm_hidden=128, seq_len=64, batch=8.
    VOCAB, EMB, HID = 256, 32, 128
    SEQ, BATCH = 64, 8

    key = jax.random.PRNGKey(0)
    k_param, k_tok = jax.random.split(key)
    params = make_params(k_param, VOCAB, EMB, HID)
    tokens = jax.random.randint(k_tok, (SEQ, BATCH), 0, VOCAB, dtype=jnp.int32)

    # max_chunk=16 here so the demo exercises the multi-chunk carry path (grid=4).
    fwd = jax.jit(functools.partial(rnn_lm_forward, max_chunk=16))
    logits, (h_n, c_n) = fwd(tokens, params)
    jax.block_until_ready((logits, h_n, c_n))

    ref_logits, (ref_h, ref_c) = rnn_lm_reference(tokens, params, hidden=None)
    assert logits.shape == (SEQ, BATCH, VOCAB)
    assert h_n.shape == (1, BATCH, HID) and c_n.shape == (1, BATCH, HID)
    # bf16 MXU operands / bf16 hidden-state stream with f32 accumulation and
    # gate math -> compare against the all-f32 reference with loose tolerance.
    assert jnp.allclose(logits, ref_logits, atol=5e-2, rtol=5e-2)
    assert jnp.allclose(h_n, ref_h, atol=5e-2, rtol=5e-2)
    assert jnp.allclose(c_n, ref_c, atol=5e-2, rtol=5e-2)

    print("KERNEL_OK")
</pallas_src>

<mosaic_0001>
module attributes {stable_mosaic.version = 11 : i64} {
  func.func @_matmul_bias_kernel(%arg0: i32, %arg1: i32, %arg2: memref<512x128xbf16, #tpu.memory_space<vmem>>, %arg3: memref<128x256xbf16, #tpu.memory_space<vmem>>, %arg4: memref<1x256xf32, #tpu.memory_space<vmem>>, %arg5: memref<512x256xf32, #tpu.memory_space<vmem>>) attributes {dimension_semantics = [#tpu.dimension_semantics<parallel>, #tpu.dimension_semantics<parallel>], iteration_bounds = array<i64: 1, 1>, scalar_prefetch = 0 : i64, scratch_operands = 0 : i64, tpu.core_type = #tpu.core_type<tc>, window_params = [{transform_indices = @transform_0, window_bounds = array<i64: 512, 128>}, {transform_indices = @transform_1, window_bounds = array<i64: 128, 256>}, {transform_indices = @transform_2, window_bounds = array<i64: 1, 256>}, {transform_indices = @transform_3, window_bounds = array<i64: 512, 256>}]} {
    %c0 = arith.constant 0 : index
    %c0_0 = arith.constant 0 : index
    %0 = vector.load %arg2[%c0, %c0_0] : memref<512x128xbf16, #tpu.memory_space<vmem>>, vector<512x128xbf16>
    %c0_1 = arith.constant 0 : index
    %c0_2 = arith.constant 0 : index
    %1 = vector.load %arg3[%c0_1, %c0_2] : memref<128x256xbf16, #tpu.memory_space<vmem>>, vector<128x256xbf16>
    %cst = arith.constant dense<0.000000e+00> : vector<512x256xf32>
    %2 = tpu.matmul %0, %1, %cst {dimension_numbers = #tpu.dot_dimension_numbers<[1], [0], [0], [1], [0, 0, 1, 1], [], []>} : vector<512x128xbf16>, vector<128x256xbf16>, vector<512x256xf32> -> vector<512x256xf32>
    %c0_3 = arith.constant 0 : index
    %c0_4 = arith.constant 0 : index
    %3 = vector.load %arg4[%c0_3, %c0_4] : memref<1x256xf32, #tpu.memory_space<vmem>>, vector<1x256xf32>
    %4 = vector.broadcast %3 : vector<1x256xf32> to vector<512x256xf32>
    %5 = arith.addf %2, %4 : vector<512x256xf32>
    %c0_5 = arith.constant 0 : index
    %c0_6 = arith.constant 0 : index
    %6 = vector.load %arg5[%c0_5, %c0_6] : memref<512x256xf32, #tpu.memory_space<vmem>>, vector<512x256xf32>
    tpu.vector_store %arg5[%c0_5, %c0_6], %5 {strides = array<i32>} : memref<512x256xf32, #tpu.memory_space<vmem>>, vector<512x256xf32>,
    return
  }
  func.func @transform_0(%arg0: i32, %arg1: i32) -> (i32, i32) {
    %c0_i32 = arith.constant 0 : i32
    %c0_i32_0 = arith.constant 0 : i32
    return %arg1, %c0_i32 : i32, i32
  }
  func.func @transform_1(%arg0: i32, %arg1: i32) -> (i32, i32) {
    %c0_i32 = arith.constant 0 : i32
    %c0_i32_0 = arith.constant 0 : i32
    return %c0_i32, %arg0 : i32, i32
  }
  func.func @transform_2(%arg0: i32, %arg1: i32) -> (i32, i32) {
    %c0_i32 = arith.constant 0 : i32
    %c0_i32_0 = arith.constant 0 : i32
    return %c0_i32, %arg0 : i32, i32
  }
  func.func @transform_3(%arg0: i32, %arg1: i32) -> (i32, i32) {
    %c0_i32 = arith.constant 0 : i32
    return %arg1, %arg0 : i32, i32
  }
}

module attributes {stable_mosaic.version = 11 : i64} {
  func.func @_lstm_fused_kernel(%arg0: i32, %arg1: memref<128x32xbf16, #tpu.memory_space<vmem>>, %arg2: memref<8x128xf32, #tpu.memory_space<vmem>>, %arg3: memref<8x128xf32, #tpu.memory_space<vmem>>, %arg4: memref<32x512xbf16, #tpu.memory_space<vmem>>, %arg5: memref<128x512xbf16, #tpu.memory_space<vmem>>, %arg6: memref<1x512xf32, #tpu.memory_space<vmem>>, %arg7: memref<128x128xbf16, #tpu.memory_space<vmem>>, %arg8: memref<8x128xf32, #tpu.memory_space<vmem>>, %arg9: memref<8x128xf32, #tpu.memory_space<vmem>>, %arg10: memref<128x512xf32, #tpu.memory_space<vmem>>, %arg11: memref<8x128xbf16, #tpu.memory_space<vmem>>, %arg12: memref<8x128xf32, #tpu.memory_space<vmem>>) attributes {dimension_semantics = [#tpu.dimension_semantics<arbitrary>], iteration_bounds = array<i64: 4>, scalar_prefetch = 0 : i64, scratch_operands = 3 : i64, tpu.core_type = #tpu.core_type<tc>, window_params = [{transform_indices = @transform_0, window_bounds = array<i64: 128, 32>}, {pipeline_mode = #tpu.pipeline_mode<synchronous>, transform_indices = @transform_1, window_bounds = array<i64: 8, 128>}, {pipeline_mode = #tpu.pipeline_mode<synchronous>, transform_indices = @transform_2, window_bounds = array<i64: 8, 128>}, {pipeline_mode = #tpu.pipeline_mode<synchronous>, transform_indices = @transform_3, window_bounds = array<i64: 32, 512>}, {pipeline_mode = #tpu.pipeline_mode<synchronous>, transform_indices = @transform_4, window_bounds = array<i64: 128, 512>}, {pipeline_mode = #tpu.pipeline_mode<synchronous>, transform_indices = @transform_5, window_bounds = array<i64: 1, 512>}, {transform_indices = @transform_6, window_bounds = array<i64: 128, 128>}, {pipeline_mode = #tpu.pipeline_mode<synchronous>, transform_indices = @transform_7, window_bounds = array<i64: 8, 128>}, {pipeline_mode = #tpu.pipeline_mode<synchronous>, transform_indices = @transform_8, window_bounds = array<i64: 8, 128>}]} {
    %c0_i32 = arith.constant 0 : i32
    %0 = arith.cmpi eq, %arg0, %c0_i32 : i32
    %1 = arith.extui %0 : i1 to i32
    %c0_i32_0 = arith.constant 0 : i32
    %2 = arith.cmpi ne, %1, %c0_i32_0 : i32
    scf.if %2 {
      %c0_163 = arith.constant 0 : index
      %c0_164 = arith.constant 0 : index
      %577 = vector.load %arg2[%c0_163, %c0_164] : memref<8x128xf32, #tpu.memory_space<vmem>>, vector<8x128xf32>
      %578 = arith.truncf %577 : vector<8x128xf32> to vector<8x128xbf16>
      %c0_165 = arith.constant 0 : index
      %c0_166 = arith.constant 0 : index
      %579 = vector.load %arg11[%c0_165, %c0_166] : memref<8x128xbf16, #tpu.memory_space<vmem>>, vector<8x128xbf16>
      tpu.vector_store %arg11[%c0_165, %c0_166], %578 {strides = array<i32>} : memref<8x128xbf16, #tpu.memory_space<vmem>>, vector<8x128xbf16>,
      %c0_167 = arith.constant 0 : index
      %c0_168 = arith.constant 0 : index
      %580 = vector.load %arg3[%c0_167, %c0_168] : memref<8x128xf32, #tpu.memory_space<vmem>>, vector<8x128xf32>
      %c0_169 = arith.constant 0 : index
      %c0_170 = arith.constant 0 : index
      %581 = vector.load %arg12[%c0_169, %c0_170] : memref<8x128xf32, #tpu.memory_space<vmem>>, vector<8x128xf32>
      tpu.vector_store %arg12[%c0_169, %c0_170], %580 {strides = array<i32>} : memref<8x128xf32, #tpu.memory_space<vmem>>, vector<8x128xf32>,
    } else {
    }
    %c0 = arith.constant 0 : index
    %c0_1 = arith.constant 0 : index
    %3 = vector.load %arg1[%c0, %c0_1] : memref<128x32xbf16, #tpu.memory_space<vmem>>, vector<128x32xbf16>
    %c0_2 = arith.constant 0 : index
    %c0_3 = arith.constant 0 : index
    %4 = vector.load %arg4[%c0_2, %c0_3] : memref<32x512xbf16, #tpu.memory_space<vmem>>, vector<32x512xbf16>
    %cst = arith.constant dense<0.000000e+00> : vector<128x512xf32>
    %5 = tpu.matmul %3, %4, %cst {dimension_numbers = #tpu.dot_dimension_numbers<[1], [0], [0], [1], [0, 0, 1, 1], [], []>} : vector<128x32xbf16>, vector<32x512xbf16>, vector<128x512xf32> -> vector<128x512xf32>
    %c0_4 = arith.constant 0 : index
    %c0_5 = arith.constant 0 : index
    %6 = vector.load %arg6[%c0_4, %c0_5] : memref<1x512xf32, #tpu.memory_space<vmem>>, vector<1x512xf32>
    %7 = vector.broadcast %6 : vector<1x512xf32> to vector<128x512xf32>
    %8 = arith.addf %5, %7 : vector<128x512xf32>
    %c0_6 = arith.constant 0 : index
    %c0_7 = arith.constant 0 : index
    %9 = vector.load %arg10[%c0_6, %c0_7] : memref<128x512xf32, #tpu.memory_space<vmem>>, vector<128x512xf32>
    tpu.vector_store %arg10[%c0_6, %c0_7], %8 {strides = array<i32>} : memref<128x512xf32, #tpu.memory_space<vmem>>, vector<128x512xf32>,
    %c0_8 = arith.constant 0 : index
    %c0_9 = arith.constant 0 : index
    %10 = vector.load %arg11[%c0_8, %c0_9] : memref<8x128xbf16, #tpu.memory_space<vmem>>, vector<8x128xbf16>
    %c0_10 = arith.constant 0 : index
    %c0_11 = arith.constant 0 : index
    %11 = vector.load %arg12[%c0_10, %c0_11] : memref<8x128xf32, #tpu.memory_space<vmem>>, vector<8x128xf32>
    %c0_i32_12 = arith.constant 0 : i32
    %c8_i32 = arith.constant 8 : i32
    %12 = arith.muli %c0_i32_12, %c8_i32 : i32
    %13 = tpu.assume_multiple %12, 8 : i32
    %14 = arith.index_cast %13 : i32 to index
    %c0_13 = arith.constant 0 : index
    %15 = vector.load %arg10[%14, %c0_13] : memref<128x512xf32, #tpu.memory_space<vmem>>, vector<8x512xf32>
    %c0_14 = arith.constant 0 : index
    %c0_15 = arith.constant 0 : index
    %16 = vector.load %arg5[%c0_14, %c0_15] : memref<128x512xbf16, #tpu.memory_space<vmem>>, vector<128x512xbf16>
    %cst_16 = arith.constant dense<0.000000e+00> : vector<8x512xf32>
    %17 = tpu.matmul %10, %16, %cst_16 {dimension_numbers = #tpu.dot_dimension_numbers<[1], [0], [0], [1], [0, 0, 1, 1], [], []>} : vector<8x128xbf16>, vector<128x512xbf16>, vector<8x512xf32> -> vector<8x512xf32>
    %18 = arith.addf %15, %17 : vector<8x512xf32>
    %19 = vector.extract_strided_slice %18 {offsets = [0, 0], sizes = [8, 128], strides = [1, 1]} : vector<8x512xf32> to vector<8x128xf32>
    %20 = arith.negf %19 : vector<8x128xf32>
    %21 = math.exp %20 : vector<8x128xf32>
    %cst_17 = arith.constant 1.000000e+00 : f32
    %22 = vector.broadcast %cst_17 : f32 to vector<8x128xf32>
    %23 = arith.addf %22, %21 : vector<8x128xf32>
    %24 = arith.divf %22, %23 : vector<8x128xf32>
    %25 = vector.extract_strided_slice %18 {offsets = [0, 128], sizes = [8, 128], strides = [1, 1]} : vector<8x512xf32> to vector<8x128xf32>
    %26 = arith.negf %25 : vector<8x128xf32>
    %27 = math.exp %26 : vector<8x128xf32>
    %cst_18 = arith.constant 1.000000e+00 : f32
    %28 = vector.broadcast %cst_18 : f32 to vector<8x128xf32>
    %29 = arith.addf %28, %27 : vector<8x128xf32>
    %30 = arith.divf %28, %29 : vector<8x128xf32>
    %31 = vector.extract_strided_slice %18 {offsets = [0, 256], sizes = [8, 128], strides = [1, 1]} : vector<8x512xf32> to vector<8x128xf32>
    %32 = math.tanh %31 : vector<8x128xf32>
    %33 = vector.extract_strided_slice %18 {offsets = [0, 384], sizes = [8, 128], strides = [1, 1]} : vector<8x512xf32> to vector<8x128xf32>
    %34 = arith.negf %33 : vector<8x128xf32>
    %35 = math.exp %34 : vector<8x128xf32>
    %cst_19 = arith.constant 1.000000e+00 : f32
    %36 = vector.broadcast %cst_19 : f32 to vector<8x128xf32>
    %37 = arith.addf %36, %35 : vector<8x128xf32>
    %38 = arith.divf %36, %37 : vector<8x128xf32>
    %39 = arith.mulf %30, %11 : vector<8x128xf32>
    %40 = arith.mulf %24, %32 : vector<8x128xf32>
    %41 = arith.addf %39, %40 : vector<8x128xf32>
    %42 = math.tanh %41 : vector<8x128xf32>
    %43 = arith.mulf %38, %42 : vector<8x128xf32>
    %44 = arith.truncf %43 : vector<8x128xf32> to vector<8x128xbf16>
    %45 = arith.index_cast %13 : i32 to index
    %c0_20 = arith.constant 0 : index
    %46 = vector.load %arg7[%45, %c0_20] : memref<128x128xbf16, #tpu.memory_space<vmem>>, vector<8x128xbf16>
    tpu.vector_store %arg7[%45, %c0_20], %44 {strides = array<i32>} : memref<128x128xbf16, #tpu.memory_space<vmem>>, vector<8x128xbf16>,
    %c1_i32 = arith.constant 1 : i32
    %c8_i32_21 = arith.constant 8 : i32
    %47 = arith.muli %c1_i32, %c8_i32_21 : i32
    %48 = tpu.assume_multiple %47, 8 : i32
    %49 = arith.index_cast %48 : i32 to index
    %c0_22 = arith.constant 0 : index
    %50 = vector.load %arg10[%49, %c0_22] : memref<128x512xf32, #tpu.memory_space<vmem>>, vector<8x512xf32>
    %c0_23 = arith.constant 0 : index
    %c0_24 = arith.constant 0 : index
    %51 = vector.load %arg5[%c0_23, %c0_24] : memref<128x512xbf16, #tpu.memory_space<vmem>>, vector<128x512xbf16>
    %cst_25 = arith.constant dense<0.000000e+00> : vector<8x512xf32>
    %52 = tpu.matmul %44, %51, %cst_25 {dimension_numbers = #tpu.dot_dimension_numbers<[1], [0], [0], [1], [0, 0, 1, 1], [], []>} : vector<8x128xbf16>, vector<128x512xbf16>, vector<8x512xf32> -> vector<8x512xf32>
    %53 = arith.addf %50, %52 : vector<8x512xf32>
    %54 = vector.extract_strided_slice %53 {offsets = [0, 0], sizes = [8, 128], strides = [1, 1]} : vector<8x512xf32> to vector<8x128xf32>
    %55 = arith.negf %54 : vector<8x128xf32>
    %56 = math.exp %55 : vector<8x128xf32>
    %cst_26 = arith.constant 1.000000e+00 : f32
    %57 = vector.broadcast %cst_26 : f32 to vector<8x128xf32>
    %58 = arith.addf %57, %56 : vector<8x128xf32>
    %59 = arith.divf %57, %58 : vector<8x128xf32>
    %60 = vector.extract_strided_slice %53 {offsets = [0, 128], sizes = [8, 128], strides = [1, 1]} : vector<8x512xf32> to vector<8x128xf32>
    %61 = arith.negf %60 : vector<8x128xf32>
    %62 = math.exp %61 : vector<8x128xf32>
    %cst_27 = arith.constant 1.000000e+00 : f32
    %63 = vector.broadcast %cst_27 : f32 to vector<8x128xf32>
    %64 = arith.addf %63, %62 : vector<8x128xf32>
    %65 = arith.divf %63, %64 : vector<8x128xf32>
    %66 = vector.extract_strided_slice %53 {offsets = [0, 256], sizes = [8, 128], strides = [1, 1]} : vector<8x512xf32> to vector<8x128xf32>
    %67 = math.tanh %66 : vector<8x128xf32>
    %68 = vector.extract_strided_slice %53 {offsets = [0, 384], sizes = [8, 128], strides = [1, 1]} : vector<8x512xf32> to vector<8x128xf32>
    %69 = arith.negf %68 : vector<8x128xf32>
    %70 = math.exp %69 : vector<8x128xf32>
    %cst_28 = arith.constant 1.000000e+00 : f32
    %71 = vector.broadcast %cst_28 : f32 to vector<8x128xf32>
    %72 = arith.addf %71, %70 : vector<8x128xf32>
    %73 = arith.divf %71, %72 : vector<8x128xf32>
    %74 = arith.mulf %65, %41 : vector<8x128xf32>
    %75 = arith.mulf %59, %67 : vector<8x128xf32>
    %76 = arith.addf %74, %75 : vector<8x128xf32>
    %77 = math.tanh %76 : vector<8x128xf32>
    %78 = arith.mulf %73, %77 : vector<8x128xf32>
    %79 = arith.truncf %78 : vector<8x128xf32> to vector<8x128xbf16>
    %80 = arith.index_cast %48 : i32 to index
    %c0_29 = arith.constant 0 : index
    %81 = vector.load %arg7[%80, %c0_29] : memref<128x128xbf16, #tpu.memory_space<vmem>>, vector<8x128xbf16>
    tpu.vector_store %arg7[%80, %c0_29], %79 {strides = array<i32>} : memref<128x128xbf16, #tpu.memory_space<vmem>>, vector<8x128xbf16>,
    %c2_i32 = arith.constant 2 : i32
    %c8_i32_30 = arith.constant 8 : i32
    %82 = arith.muli %c2_i32, %c8_i32_30 : i32
    %83 = tpu.assume_multiple %82, 8 : i32
    %84 = arith.index_cast %83 : i32 to index
    %c0_31 = arith.constant 0 : index
    %85 = vector.load %arg10[%84, %c0_31] : memref<128x512xf32, #tpu.memory_space<vmem>>, vector<8x512xf32>
    %c0_32 = arith.constant 0 : index
    %c0_33 = arith.constant 0 : index
    %86 = vector.load %arg5[%c0_32, %c0_33] : memref<128x512xbf16, #tpu.memory_space<vmem>>, vector<128x512xbf16>
    %cst_34 = arith.constant dense<0.000000e+00> : vector<8x512xf32>
    %87 = tpu.matmul %79, %86, %cst_34 {dimension_numbers = #tpu.dot_dimension_numbers<[1], [0], [0], [1], [0, 0, 1, 1], [], []>} : vector<8x128xbf16>, vector<128x512xbf16>, vector<8x512xf32> -> vector<8x512xf32>
    %88 = arith.addf %85, %87 : vector<8x512xf32>
    %89 = vector.extract_strided_slice %88 {offsets = [0, 0], sizes = [8, 128], strides = [1, 1]} : vector<8x512xf32> to vector<8x128xf32>
    %90 = arith.negf %89 : vector<8x128xf32>
    %91 = math.exp %90 : vector<8x128xf32>
    %cst_35 = arith.constant 1.000000e+00 : f32
    %92 = vector.broadcast %cst_35 : f32 to vector<8x128xf32>
    %93 = arith.addf %92, %91 : vector<8x128xf32>
    %94 = arith.divf %92, %93 : vector<8x128xf32>
    %95 = vector.extract_strided_slice %88 {offsets = [0, 128], sizes = [8, 128], strides = [1, 1]} : vector<8x512xf32> to vector<8x128xf32>
    %96 = arith.negf %95 : vector<8x128xf32>
    %97 = math.exp %96 : vector<8x128xf32>
    %cst_36 = arith.constant 1.000000e+00 : f32
    %98 = vector.broadcast %cst_36 : f32 to vector<8x128xf32>
    %99 = arith.addf %98, %97 : vector<8x128xf32>
    %100 = arith.divf %98, %99 : vector<8x128xf32>
    %101 = vector.extract_strided_slice %88 {offsets = [0, 256], sizes = [8, 128], strides = [1, 1]} : vector<8x512xf32> to vector<8x128xf32>
    %102 = math.tanh %101 : vector<8x128xf32>
    %103 = vector.extract_strided_slice %88 {offsets = [0, 384], sizes = [8, 128], strides = [1, 1]} : vector<8x512xf32> to vector<8x128xf32>
    %104 = arith.negf %103 : vector<8x128xf32>
    %105 = math.exp %104 : vector<8x128xf32>
    %cst_37 = arith.constant 1.000000e+00 : f32
    %106 = vector.broadcast %cst_37 : f32 to vector<8x128xf32>
    %107 = arith.addf %106, %105 : vector<8x128xf32>
    %108 = arith.divf %106, %107 : vector<8x128xf32>
    %109 = arith.mulf %100, %76 : vector<8x128xf32>
    %110 = arith.mulf %94, %102 : vector<8x128xf32>
    %111 = arith.addf %109, %110 : vector<8x128xf32>
    %112 = math.tanh %111 : vector<8x128xf32>
    %113 = arith.mulf %108, %112 : vector<8x128xf32>
    %114 = arith.truncf %113 : vector<8x128xf32> to vector<8x128xbf16>
    %115 = arith.index_cast %83 : i32 to index
    %c0_38 = arith.constant 0 : index
    %116 = vector.load %arg7[%115, %c0_38] : memref<128x128xbf16, #tpu.memory_space<vmem>>, vector<8x128xbf16>
    tpu.vector_store %arg7[%115, %c0_38], %114 {strides = array<i32>} : memref<128x128xbf16, #tpu.memory_space<vmem>>, vector<8x128xbf16>,
    %c3_i32 = arith.constant 3 : i32
    %c8_i32_39 = arith.constant 8 : i32
    %117 = arith.muli %c3_i32, %c8_i32_39 : i32
    %118 = tpu.assume_multiple %117, 8 : i32
    %119 = arith.index_cast %118 : i32 to index
    %c0_40 = arith.constant 0 : index
    %120 = vector.load %arg10[%119, %c0_40] : memref<128x512xf32, #tpu.memory_space<vmem>>, vector<8x512xf32>
    %c0_41 = arith.constant 0 : index
    %c0_42 = arith.constant 0 : index
    %121 = vector.load %arg5[%c0_41, %c0_42] : memref<128x512xbf16, #tpu.memory_space<vmem>>, vector<128x512xbf16>
    %cst_43 = arith.constant dense<0.000000e+00> : vector<8x512xf32>
    %122 = tpu.matmul %114, %121, %cst_43 {dimension_numbers = #tpu.dot_dimension_numbers<[1], [0], [0], [1], [0, 0, 1, 1], [], []>} : vector<8x128xbf16>, vector<128x512xbf16>, vector<8x512xf32> -> vector<8x512xf32>
    %123 = arith.addf %120, %122 : vector<8x512xf32>
    %124 = vector.extract_strided_slice %123 {offsets = [0, 0], sizes = [8, 128], strides = [1, 1]} : vector<8x512xf32> to vector<8x128xf32>
    %125 = arith.negf %124 : vector<8x128xf32>
    %126 = math.exp %125 : vector<8x128xf32>
    %cst_44 = arith.constant 1.000000e+00 : f32
    %127 = vector.broadcast %cst_44 : f32 to vector<8x128xf32>
    %128 = arith.addf %127, %126 : vector<8x128xf32>
    %129 = arith.divf %127, %128 : vector<8x128xf32>
    %130 = vector.extract_strided_slice %123 {offsets = [0, 128], sizes = [8, 128], strides = [1, 1]} : vector<8x512xf32> to vector<8x128xf32>
    %131 = arith.negf %130 : vector<8x128xf32>
    %132 = math.exp %131 : vector<8x128xf32>
    %cst_45 = arith.constant 1.000000e+00 : f32
    %133 = vector.broadcast %cst_45 : f32 to vector<8x128xf32>
    %134 = arith.addf %133, %132 : vector<8x128xf32>
    %135 = arith.divf %133, %134 : vector<8x128xf32>
    %136 = vector.extract_strided_slice %123 {offsets = [0, 256], sizes = [8, 128], strides = [1, 1]} : vector<8x512xf32> to vector<8x128xf32>
    %137 = math.tanh %136 : vector<8x128xf32>
    %138 = vector.extract_strided_slice %123 {offsets = [0, 384], sizes = [8, 128], strides = [1, 1]} : vector<8x512xf32> to vector<8x128xf32>
    %139 = arith.negf %138 : vector<8x128xf32>
    %140 = math.exp %139 : vector<8x128xf32>
    %cst_46 = arith.constant 1.000000e+00 : f32
    %141 = vector.broadcast %cst_46 : f32 to vector<8x128xf32>
    %142 = arith.addf %141, %140 : vector<8x128xf32>
    %143 = arith.divf %141, %142 : vector<8x128xf32>
    %144 = arith.mulf %135, %111 : vector<8x128xf32>
    %145 = arith.mulf %129, %137 : vector<8x128xf32>
    %146 = arith.addf %144, %145 : vector<8x128xf32>
    %147 = math.tanh %146 : vector<8x128xf32>
    %148 = arith.mulf %143, %147 : vector<8x128xf32>
    %149 = arith.truncf %148 : vector<8x128xf32> to vector<8x128xbf16>
    %150 = arith.index_cast %118 : i32 to index
    %c0_47 = arith.constant 0 : index
    %151 = vector.load %arg7[%150, %c0_47] : memref<128x128xbf16, #tpu.memory_space<vmem>>, vector<8x128xbf16>
    tpu.vector_store %arg7[%150, %c0_47], %149 {strides = array<i32>} : memref<128x128xbf16, #tpu.memory_space<vmem>>, vector<8x128xbf16>,
    %c4_i32 = arith.constant 4 : i32
    %c8_i32_48 = arith.constant 8 : i32
    %152 = arith.muli %c4_i32, %c8_i32_48 : i32
    %153 = tpu.assume_multiple %152, 8 : i32
    %154 = arith.index_cast %153 : i32 to index
    %c0_49 = arith.constant 0 : index
    %155 = vector.load %arg10[%154, %c0_49] : memref<128x512xf32, #tpu.memory_space<vmem>>, vector<8x512xf32>
    %c0_50 = arith.constant 0 : index
    %c0_51 = arith.constant 0 : index
    %156 = vector.load %arg5[%c0_50, %c0_51] : memref<128x512xbf16, #tpu.memory_space<vmem>>, vector<128x512xbf16>
    %cst_52 = arith.constant dense<0.000000e+00> : vector<8x512xf32>
    %157 = tpu.matmul %149, %156, %cst_52 {dimension_numbers = #tpu.dot_dimension_numbers<[1], [0], [0], [1], [0, 0, 1, 1], [], []>} : vector<8x128xbf16>, vector<128x512xbf16>, vector<8x512xf32> -> vector<8x512xf32>
    %158 = arith.addf %155, %157 : vector<8x512xf32>
    %159 = vector.extract_strided_slice %158 {offsets = [0, 0], sizes = [8, 128], strides = [1, 1]} : vector<8x512xf32> to vector<8x128xf32>
    %160 = arith.negf %159 : vector<8x128xf32>
    %161 = math.exp %160 : vector<8x128xf32>
    %cst_53 = arith.constant 1.000000e+00 : f32
    %162 = vector.broadcast %cst_53 : f32 to vector<8x128xf32>
    %163 = arith.addf %162, %161 : vector<8x128xf32>
    %164 = arith.divf %162, %163 : vector<8x128xf32>
    %165 = vector.extract_strided_slice %158 {offsets = [0, 128], sizes = [8, 128], strides = [1, 1]} : vector<8x512xf32> to vector<8x128xf32>
    %166 = arith.negf %165 : vector<8x128xf32>
    %167 = math.exp %166 : vector<8x128xf32>
    %cst_54 = arith.constant 1.000000e+00 : f32
    %168 = vector.broadcast %cst_54 : f32 to vector<8x128xf32>
    %169 = arith.addf %168, %167 : vector<8x128xf32>
    %170 = arith.divf %168, %169 : vector<8x128xf32>
    %171 = vector.extract_strided_slice %158 {offsets = [0, 256], sizes = [8, 128], strides = [1, 1]} : vector<8x512xf32> to vector<8x128xf32>
    %172 = math.tanh %171 : vector<8x128xf32>
    %173 = vector.extract_strided_slice %158 {offsets = [0, 384], sizes = [8, 128], strides = [1, 1]} : vector<8x512xf32> to vector<8x128xf32>
    %174 = arith.negf %173 : vector<8x128xf32>
    %175 = math.exp %174 : vector<8x128xf32>
    %cst_55 = arith.constant 1.000000e+00 : f32
    %176 = vector.broadcast %cst_55 : f32 to vector<8x128xf32>
    %177 = arith.addf %176, %175 : vector<8x128xf32>
    %178 = arith.divf %176, %177 : vector<8x128xf32>
    %179 = arith.mulf %170, %146 : vector<8x128xf32>
    %180 = arith.mulf %164, %172 : vector<8x128xf32>
    %181 = arith.addf %179, %180 : vector<8x128xf32>
    %182 = math.tanh %181 : vector<8x128xf32>
    %183 = arith.mulf %178, %182 : vector<8x128xf32>
    %184 = arith.truncf %183 : vector<8x128xf32> to vector<8x128xbf16>
    %185 = arith.index_cast %153 : i32 to index
    %c0_56 = arith.constant 0 : index
    %186 = vector.load %arg7[%185, %c0_56] : memref<128x128xbf16, #tpu.memory_space<vmem>>, vector<8x128xbf16>
    tpu.vector_store %arg7[%185, %c0_56], %184 {strides = array<i32>} : memref<128x128xbf16, #tpu.memory_space<vmem>>, vector<8x128xbf16>,
    %c5_i32 = arith.constant 5 : i32
    %c8_i32_57 = arith.constant 8 : i32
    %187 = arith.muli %c5_i32, %c8_i32_57 : i32
    %188 = tpu.assume_multiple %187, 8 : i32
    %189 = arith.index_cast %188 : i32 to index
    %c0_58 = arith.constant 0 : index
    %190 = vector.load %arg10[%189, %c0_58] : memref<128x512xf32, #tpu.memory_space<vmem>>, vector<8x512xf32>
    %c0_59 = arith.constant 0 : index
    %c0_60 = arith.constant 0 : index
    %191 = vector.load %arg5[%c0_59, %c0_60] : memref<128x512xbf16, #tpu.memory_space<vmem>>, vector<128x512xbf16>
    %cst_61 = arith.constant dense<0.000000e+00> : vector<8x512xf32>
    %192 = tpu.matmul %184, %191, %cst_61 {dimension_numbers = #tpu.dot_dimension_numbers<[1], [0], [0], [1], [0, 0, 1, 1], [], []>} : vector<8x128xbf16>, vector<128x512xbf16>, vector<8x512xf32> -> vector<8x512xf32>
    %193 = arith.addf %190, %192 : vector<8x512xf32>
    %194 = vector.extract_strided_slice %193 {offsets = [0, 0], sizes = [8, 128], strides = [1, 1]} : vector<8x512xf32> to vector<8x128xf32>
    %195 = arith.negf %194 : vector<8x128xf32>
    %196 = math.exp %195 : vector<8x128xf32>
    %cst_62 = arith.constant 1.000000e+00 : f32
    %197 = vector.broadcast %cst_62 : f32 to vector<8x128xf32>
    %198 = arith.addf %197, %196 : vector<8x128xf32>
    %199 = arith.divf %197, %198 : vector<8x128xf32>
    %200 = vector.extract_strided_slice %193 {offsets = [0, 128], sizes = [8, 128], strides = [1, 1]} : vector<8x512xf32> to vector<8x128xf32>
    %201 = arith.negf %200 : vector<8x128xf32>
    %202 = math.exp %201 : vector<8x128xf32>
    %cst_63 = arith.constant 1.000000e+00 : f32
    %203 = vector.broadcast %cst_63 : f32 to vector<8x128xf32>
    %204 = arith.addf %203, %202 : vector<8x128xf32>
    %205 = arith.divf %203, %204 : vector<8x128xf32>
    %206 = vector.extract_strided_slice %193 {offsets = [0, 256], sizes = [8, 128], strides = [1, 1]} : vector<8x512xf32> to vector<8x128xf32>
    %207 = math.tanh %206 : vector<8x128xf32>
    %208 = vector.extract_strided_slice %193 {offsets = [0, 384], sizes = [8, 128], strides = [1, 1]} : vector<8x512xf32> to vector<8x128xf32>
    %209 = arith.negf %208 : vector<8x128xf32>
    %210 = math.exp %209 : vector<8x128xf32>
    %cst_64 = arith.constant 1.000000e+00 : f32
    %211 = vector.broadcast %cst_64 : f32 to vector<8x128xf32>
    %212 = arith.addf %211, %210 : vector<8x128xf32>
    %213 = arith.divf %211, %212 : vector<8x128xf32>
    %214 = arith.mulf %205, %181 : vector<8x128xf32>
    %215 = arith.mulf %199, %207 : vector<8x128xf32>
    %216 = arith.addf %214, %215 : vector<8x128xf32>
    %217 = math.tanh %216 : vector<8x128xf32>
    %218 = arith.mulf %213, %217 : vector<8x128xf32>
    %219 = arith.truncf %218 : vector<8x128xf32> to vector<8x128xbf16>
    %220 = arith.index_cast %188 : i32 to index
    %c0_65 = arith.constant 0 : index
    %221 = vector.load %arg7[%220, %c0_65] : memref<128x128xbf16, #tpu.memory_space<vmem>>, vector<8x128xbf16>
    tpu.vector_store %arg7[%220, %c0_65], %219 {strides = array<i32>} : memref<128x128xbf16, #tpu.memory_space<vmem>>, vector<8x128xbf16>,
    %c6_i32 = arith.constant 6 : i32
    %c8_i32_66 = arith.constant 8 : i32
    %222 = arith.muli %c6_i32, %c8_i32_66 : i32
    %223 = tpu.assume_multiple %222, 8 : i32
    %224 = arith.index_cast %223 : i32 to index
    %c0_67 = arith.constant 0 : index
    %225 = vector.load %arg10[%224, %c0_67] : memref<128x512xf32, #tpu.memory_space<vmem>>, vector<8x512xf32>
    %c0_68 = arith.constant 0 : index
    %c0_69 = arith.constant 0 : index
    %226 = vector.load %arg5[%c0_68, %c0_69] : memref<128x512xbf16, #tpu.memory_space<vmem>>, vector<128x512xbf16>
    %cst_70 = arith.constant dense<0.000000e+00> : vector<8x512xf32>
    %227 = tpu.matmul %219, %226, %cst_70 {dimension_numbers = #tpu.dot_dimension_numbers<[1], [0], [0], [1], [0, 0, 1, 1], [], []>} : vector<8x128xbf16>, vector<128x512xbf16>, vector<8x512xf32> -> vector<8x512xf32>
    %228 = arith.addf %225, %227 : vector<8x512xf32>
    %229 = vector.extract_strided_slice %228 {offsets = [0, 0], sizes = [8, 128], strides = [1, 1]} : vector<8x512xf32> to vector<8x128xf32>
    %230 = arith.negf %229 : vector<8x128xf32>
    %231 = math.exp %230 : vector<8x128xf32>
    %cst_71 = arith.constant 1.000000e+00 : f32
    %232 = vector.broadcast %cst_71 : f32 to vector<8x128xf32>
    %233 = arith.addf %232, %231 : vector<8x128xf32>
    %234 = arith.divf %232, %233 : vector<8x128xf32>
    %235 = vector.extract_strided_slice %228 {offsets = [0, 128], sizes = [8, 128], strides = [1, 1]} : vector<8x512xf32> to vector<8x128xf32>
    %236 = arith.negf %235 : vector<8x128xf32>
    %237 = math.exp %236 : vector<8x128xf32>
    %cst_72 = arith.constant 1.000000e+00 : f32
    %238 = vector.broadcast %cst_72 : f32 to vector<8x128xf32>
    %239 = arith.addf %238, %237 : vector<8x128xf32>
    %240 = arith.divf %238, %239 : vector<8x128xf32>
    %241 = vector.extract_strided_slice %228 {offsets = [0, 256], sizes = [8, 128], strides = [1, 1]} : vector<8x512xf32> to vector<8x128xf32>
    %242 = math.tanh %241 : vector<8x128xf32>
    %243 = vector.extract_strided_slice %228 {offsets = [0, 384], sizes = [8, 128], strides = [1, 1]} : vector<8x512xf32> to vector<8x128xf32>
    %244 = arith.negf %243 : vector<8x128xf32>
    %245 = math.exp %244 : vector<8x128xf32>
    %cst_73 = arith.constant 1.000000e+00 : f32
    %246 = vector.broadcast %cst_73 : f32 to vector<8x128xf32>
    %247 = arith.addf %246, %245 : vector<8x128xf32>
    %248 = arith.divf %246, %247 : vector<8x128xf32>
    %249 = arith.mulf %240, %216 : vector<8x128xf32>
    %250 = arith.mulf %234, %242 : vector<8x128xf32>
    %251 = arith.addf %249, %250 : vector<8x128xf32>
    %252 = math.tanh %251 : vector<8x128xf32>
    %253 = arith.mulf %248, %252 : vector<8x128xf32>
    %254 = arith.truncf %253 : vector<8x128xf32> to vector<8x128xbf16>
    %255 = arith.index_cast %223 : i32 to index
    %c0_74 = arith.constant 0 : index
    %256 = vector.load %arg7[%255, %c0_74] : memref<128x128xbf16, #tpu.memory_space<vmem>>, vector<8x128xbf16>
    tpu.vector_store %arg7[%255, %c0_74], %254 {strides = array<i32>} : memref<128x128xbf16, #tpu.memory_space<vmem>>, vector<8x128xbf16>,
    %c7_i32 = arith.constant 7 : i32
    %c8_i32_75 = arith.constant 8 : i32
    %257 = arith.muli %c7_i32, %c8_i32_75 : i32
    %258 = tpu.assume_multiple %257, 8 : i32
    %259 = arith.index_cast %258 : i32 to index
    %c0_76 = arith.constant 0 : index
    %260 = vector.load %arg10[%259, %c0_76] : memref<128x512xf32, #tpu.memory_space<vmem>>, vector<8x512xf32>
    %c0_77 = arith.constant 0 : index
    %c0_78 = arith.constant 0 : index
    %261 = vector.load %arg5[%c0_77, %c0_78] : memref<128x512xbf16, #tpu.memory_space<vmem>>, vector<128x512xbf16>
    %cst_79 = arith.constant dense<0.000000e+00> : vector<8x512xf32>
    %262 = tpu.matmul %254, %261, %cst_79 {dimension_numbers = #tpu.dot_dimension_numbers<[1], [0], [0], [1], [0, 0, 1, 1], [], []>} : vector<8x128xbf16>, vector<128x512xbf16>, vector<8x512xf32> -> vector<8x512xf32>
    %263 = arith.addf %260, %262 : vector<8x512xf32>
    %264 = vector.extract_strided_slice %263 {offsets = [0, 0], sizes = [8, 128], strides = [1, 1]} : vector<8x512xf32> to vector<8x128xf32>
    %265 = arith.negf %264 : vector<8x128xf32>
    %266 = math.exp %265 : vector<8x128xf32>
    %cst_80 = arith.constant 1.000000e+00 : f32
    %267 = vector.broadcast %cst_80 : f32 to vector<8x128xf32>
    %268 = arith.addf %267, %266 : vector<8x128xf32>
    %269 = arith.divf %267, %268 : vector<8x128xf32>
    %270 = vector.extract_strided_slice %263 {offsets = [0, 128], sizes = [8, 128], strides = [1, 1]} : vector<8x512xf32> to vector<8x128xf32>
    %271 = arith.negf %270 : vector<8x128xf32>
    %272 = math.exp %271 : vector<8x128xf32>
    %cst_81 = arith.constant 1.000000e+00 : f32
    %273 = vector.broadcast %cst_81 : f32 to vector<8x128xf32>
    %274 = arith.addf %273, %272 : vector<8x128xf32>
    %275 = arith.divf %273, %274 : vector<8x128xf32>
    %276 = vector.extract_strided_slice %263 {offsets = [0, 256], sizes = [8, 128], strides = [1, 1]} : vector<8x512xf32> to vector<8x128xf32>
    %277 = math.tanh %276 : vector<8x128xf32>
    %278 = vector.extract_strided_slice %263 {offsets = [0, 384], sizes = [8, 128], strides = [1, 1]} : vector<8x512xf32> to vector<8x128xf32>
    %279 = arith.negf %278 : vector<8x128xf32>
    %280 = math.exp %279 : vector<8x128xf32>
    %cst_82 = arith.constant 1.000000e+00 : f32
    %281 = vector.broadcast %cst_82 : f32 to vector<8x128xf32>
    %282 = arith.addf %281, %280 : vector<8x128xf32>
    %283 = arith.divf %281, %282 : vector<8x128xf32>
    %284 = arith.mulf %275, %251 : vector<8x128xf32>
    %285 = arith.mulf %269, %277 : vector<8x128xf32>
    %286 = arith.addf %284, %285 : vector<8x128xf32>
    %287 = math.tanh %286 : vector<8x128xf32>
    %288 = arith.mulf %283, %287 : vector<8x128xf32>
    %289 = arith.truncf %288 : vector<8x128xf32> to vector<8x128xbf16>
    %290 = arith.index_cast %258 : i32 to index
    %c0_83 = arith.constant 0 : index
    %291 = vector.load %arg7[%290, %c0_83] : memref<128x128xbf16, #tpu.memory_space<vmem>>, vector<8x128xbf16>
    tpu.vector_store %arg7[%290, %c0_83], %289 {strides = array<i32>} : memref<128x128xbf16, #tpu.memory_space<vmem>>, vector<8x128xbf16>,
    %c8_i32_84 = arith.constant 8 : i32
    %c8_i32_85 = arith.constant 8 : i32
    %292 = arith.muli %c8_i32_84, %c8_i32_85 : i32
    %293 = tpu.assume_multiple %292, 8 : i32
    %294 = arith.index_cast %293 : i32 to index
    %c0_86 = arith.constant 0 : index
    %295 = vector.load %arg10[%294, %c0_86] : memref<128x512xf32, #tpu.memory_space<vmem>>, vector<8x512xf32>
    %c0_87 = arith.constant 0 : index
    %c0_88 = arith.constant 0 : index
    %296 = vector.load %arg5[%c0_87, %c0_88] : memref<128x512xbf16, #tpu.memory_space<vmem>>, vector<128x512xbf16>
    %cst_89 = arith.constant dense<0.000000e+00> : vector<8x512xf32>
    %297 = tpu.matmul %289, %296, %cst_89 {dimension_numbers = #tpu.dot_dimension_numbers<[1], [0], [0], [1], [0, 0, 1, 1], [], []>} : vector<8x128xbf16>, vector<128x512xbf16>, vector<8x512xf32> -> vector<8x512xf32>
    %298 = arith.addf %295, %297 : vector<8x512xf32>
    %299 = vector.extract_strided_slice %298 {offsets = [0, 0], sizes = [8, 128], strides = [1, 1]} : vector<8x512xf32> to vector<8x128xf32>
    %300 = arith.negf %299 : vector<8x128xf32>
    %301 = math.exp %300 : vector<8x128xf32>
    %cst_90 = arith.constant 1.000000e+00 : f32
    %302 = vector.broadcast %cst_90 : f32 to vector<8x128xf32>
    %303 = arith.addf %302, %301 : vector<8x128xf32>
    %304 = arith.divf %302, %303 : vector<8x128xf32>
    %305 = vector.extract_strided_slice %298 {offsets = [0, 128], sizes = [8, 128], strides = [1, 1]} : vector<8x512xf32> to vector<8x128xf32>
    %306 = arith.negf %305 : vector<8x128xf32>
    %307 = math.exp %306 : vector<8x128xf32>
    %cst_91 = arith.constant 1.000000e+00 : f32
    %308 = vector.broadcast %cst_91 : f32 to vector<8x128xf32>
    %309 = arith.addf %308, %307 : vector<8x128xf32>
    %310 = arith.divf %308, %309 : vector<8x128xf32>
    %311 = vector.extract_strided_slice %298 {offsets = [0, 256], sizes = [8, 128], strides = [1, 1]} : vector<8x512xf32> to vector<8x128xf32>
    %312 = math.tanh %311 : vector<8x128xf32>
    %313 = vector.extract_strided_slice %298 {offsets = [0, 384], sizes = [8, 128], strides = [1, 1]} : vector<8x512xf32> to vector<8x128xf32>
    %314 = arith.negf %313 : vector<8x128xf32>
    %315 = math.exp %314 : vector<8x128xf32>
    %cst_92 = arith.constant 1.000000e+00 : f32
    %316 = vector.broadcast %cst_92 : f32 to vector<8x128xf32>
    %317 = arith.addf %316, %315 : vector<8x128xf32>
    %318 = arith.divf %316, %317 : vector<8x128xf32>
    %319 = arith.mulf %310, %286 : vector<8x128xf32>
    %320 = arith.mulf %304, %312 : vector<8x128xf32>
    %321 = arith.addf %319, %320 : vector<8x128xf32>
    %322 = math.tanh %321 : vector<8x128xf32>
    %323 = arith.mulf %318, %322 : vector<8x128xf32>
    %324 = arith.truncf %323 : vector<8x128xf32> to vector<8x128xbf16>
    %325 = arith.index_cast %293 : i32 to index
    %c0_93 = arith.constant 0 : index
    %326 = vector.load %arg7[%325, %c0_93] : memref<128x128xbf16, #tpu.memory_space<vmem>>, vector<8x128xbf16>
    tpu.vector_store %arg7[%325, %c0_93], %324 {strides = array<i32>} : memref<128x128xbf16, #tpu.memory_space<vmem>>, vector<8x128xbf16>,
    %c9_i32 = arith.constant 9 : i32
    %c8_i32_94 = arith.constant 8 : i32
    %327 = arith.muli %c9_i32, %c8_i32_94 : i32
    %328 = tpu.assume_multiple %327, 8 : i32
    %329 = arith.index_cast %328 : i32 to index
    %c0_95 = arith.constant 0 : index
    %330 = vector.load %arg10[%329, %c0_95] : memref<128x512xf32, #tpu.memory_space<vmem>>, vector<8x512xf32>
    %c0_96 = arith.constant 0 : index
    %c0_97 = arith.constant 0 : index
    %331 = vector.load %arg5[%c0_96, %c0_97] : memref<128x512xbf16, #tpu.memory_space<vmem>>, vector<128x512xbf16>
    %cst_98 = arith.constant dense<0.000000e+00> : vector<8x512xf32>
    %332 = tpu.matmul %324, %331, %cst_98 {dimension_numbers = #tpu.dot_dimension_numbers<[1], [0], [0], [1], [0, 0, 1, 1], [], []>} : vector<8x128xbf16>, vector<128x512xbf16>, vector<8x512xf32> -> vector<8x512xf32>
    %333 = arith.addf %330, %332 : vector<8x512xf32>
    %334 = vector.extract_strided_slice %333 {offsets = [0, 0], sizes = [8, 128], strides = [1, 1]} : vector<8x512xf32> to vector<8x128xf32>
    %335 = arith.negf %334 : vector<8x128xf32>
    %336 = math.exp %335 : vector<8x128xf32>
    %cst_99 = arith.constant 1.000000e+00 : f32
    %337 = vector.broadcast %cst_99 : f32 to vector<8x128xf32>
    %338 = arith.addf %337, %336 : vector<8x128xf32>
    %339 = arith.divf %337, %338 : vector<8x128xf32>
    %340 = vector.extract_strided_slice %333 {offsets = [0, 128], sizes = [8, 128], strides = [1, 1]} : vector<8x512xf32> to vector<8x128xf32>
    %341 = arith.negf %340 : vector<8x128xf32>
    %342 = math.exp %341 : vector<8x128xf32>
    %cst_100 = arith.constant 1.000000e+00 : f32
    %343 = vector.broadcast %cst_100 : f32 to vector<8x128xf32>
    %344 = arith.addf %343, %342 : vector<8x128xf32>
    %345 = arith.divf %343, %344 : vector<8x128xf32>
    %346 = vector.extract_strided_slice %333 {offsets = [0, 256], sizes = [8, 128], strides = [1, 1]} : vector<8x512xf32> to vector<8x128xf32>
    %347 = math.tanh %346 : vector<8x128xf32>
    %348 = vector.extract_strided_slice %333 {offsets = [0, 384], sizes = [8, 128], strides = [1, 1]} : vector<8x512xf32> to vector<8x128xf32>
    %349 = arith.negf %348 : vector<8x128xf32>
    %350 = math.exp %349 : vector<8x128xf32>
    %cst_101 = arith.constant 1.000000e+00 : f32
    %351 = vector.broadcast %cst_101 : f32 to vector<8x128xf32>
    %352 = arith.addf %351, %350 : vector<8x128xf32>
    %353 = arith.divf %351, %352 : vector<8x128xf32>
    %354 = arith.mulf %345, %321 : vector<8x128xf32>
    %355 = arith.mulf %339, %347 : vector<8x128xf32>
    %356 = arith.addf %354, %355 : vector<8x128xf32>
    %357 = math.tanh %356 : vector<8x128xf32>
    %358 = arith.mulf %353, %357 : vector<8x128xf32>
    %359 = arith.truncf %358 : vector<8x128xf32> to vector<8x128xbf16>
    %360 = arith.index_cast %328 : i32 to index
    %c0_102 = arith.constant 0 : index
    %361 = vector.load %arg7[%360, %c0_102] : memref<128x128xbf16, #tpu.memory_space<vmem>>, vector<8x128xbf16>
    tpu.vector_store %arg7[%360, %c0_102], %359 {strides = array<i32>} : memref<128x128xbf16, #tpu.memory_space<vmem>>, vector<8x128xbf16>,
    %c10_i32 = arith.constant 10 : i32
    %c8_i32_103 = arith.constant 8 : i32
    %362 = arith.muli %c10_i32, %c8_i32_103 : i32
    %363 = tpu.assume_multiple %362, 8 : i32
    %364 = arith.index_cast %363 : i32 to index
    %c0_104 = arith.constant 0 : index
    %365 = vector.load %arg10[%364, %c0_104] : memref<128x512xf32, #tpu.memory_space<vmem>>, vector<8x512xf32>
    %c0_105 = arith.constant 0 : index
    %c0_106 = arith.constant 0 : index
    %366 = vector.load %arg5[%c0_105, %c0_106] : memref<128x512xbf16, #tpu.memory_space<vmem>>, vector<128x512xbf16>
    %cst_107 = arith.constant dense<0.000000e+00> : vector<8x512xf32>
    %367 = tpu.matmul %359, %366, %cst_107 {dimension_numbers = #tpu.dot_dimension_numbers<[1], [0], [0], [1], [0, 0, 1, 1], [], []>} : vector<8x128xbf16>, vector<128x512xbf16>, vector<8x512xf32> -> vector<8x512xf32>
    %368 = arith.addf %365, %367 : vector<8x512xf32>
    %369 = vector.extract_strided_slice %368 {offsets = [0, 0], sizes = [8, 128], strides = [1, 1]} : vector<8x512xf32> to vector<8x128xf32>
    %370 = arith.negf %369 : vector<8x128xf32>
    %371 = math.exp %370 : vector<8x128xf32>
    %cst_108 = arith.constant 1.000000e+00 : f32
    %372 = vector.broadcast %cst_108 : f32 to vector<8x128xf32>
    %373 = arith.addf %372, %371 : vector<8x128xf32>
    %374 = arith.divf %372, %373 : vector<8x128xf32>
    %375 = vector.extract_strided_slice %368 {offsets = [0, 128], sizes = [8, 128], strides = [1, 1]} : vector<8x512xf32> to vector<8x128xf32>
    %376 = arith.negf %375 : vector<8x128xf32>
    %377 = math.exp %376 : vector<8x128xf32>
    %cst_109 = arith.constant 1.000000e+00 : f32
    %378 = vector.broadcast %cst_109 : f32 to vector<8x128xf32>
    %379 = arith.addf %378, %377 : vector<8x128xf32>
    %380 = arith.divf %378, %379 : vector<8x128xf32>
    %381 = vector.extract_strided_slice %368 {offsets = [0, 256], sizes = [8, 128], strides = [1, 1]} : vector<8x512xf32> to vector<8x128xf32>
    %382 = math.tanh %381 : vector<8x128xf32>
    %383 = vector.extract_strided_slice %368 {offsets = [0, 384], sizes = [8, 128], strides = [1, 1]} : vector<8x512xf32> to vector<8x128xf32>
    %384 = arith.negf %383 : vector<8x128xf32>
    %385 = math.exp %384 : vector<8x128xf32>
    %cst_110 = arith.constant 1.000000e+00 : f32
    %386 = vector.broadcast %cst_110 : f32 to vector<8x128xf32>
    %387 = arith.addf %386, %385 : vector<8x128xf32>
    %388 = arith.divf %386, %387 : vector<8x128xf32>
    %389 = arith.mulf %380, %356 : vector<8x128xf32>
    %390 = arith.mulf %374, %382 : vector<8x128xf32>
    %391 = arith.addf %389, %390 : vector<8x128xf32>
    %392 = math.tanh %391 : vector<8x128xf32>
    %393 = arith.mulf %388, %392 : vector<8x128xf32>
    %394 = arith.truncf %393 : vector<8x128xf32> to vector<8x128xbf16>
    %395 = arith.index_cast %363 : i32 to index
    %c0_111 = arith.constant 0 : index
    %396 = vector.load %arg7[%395, %c0_111] : memref<128x128xbf16, #tpu.memory_space<vmem>>, vector<8x128xbf16>
    tpu.vector_store %arg7[%395, %c0_111], %394 {strides = array<i32>} : memref<128x128xbf16, #tpu.memory_space<vmem>>, vector<8x128xbf16>,
    %c11_i32 = arith.constant 11 : i32
    %c8_i32_112 = arith.constant 8 : i32
    %397 = arith.muli %c11_i32, %c8_i32_112 : i32
    %398 = tpu.assume_multiple %397, 8 : i32
    %399 = arith.index_cast %398 : i32 to index
    %c0_113 = arith.constant 0 : index
    %400 = vector.load %arg10[%399, %c0_113] : memref<128x512xf32, #tpu.memory_space<vmem>>, vector<8x512xf32>
    %c0_114 = arith.constant 0 : index
    %c0_115 = arith.constant 0 : index
    %401 = vector.load %arg5[%c0_114, %c0_115] : memref<128x512xbf16, #tpu.memory_space<vmem>>, vector<128x512xbf16>
    %cst_116 = arith.constant dense<0.000000e+00> : vector<8x512xf32>
    %402 = tpu.matmul %394, %401, %cst_116 {dimension_numbers = #tpu.dot_dimension_numbers<[1], [0], [0], [1], [0, 0, 1, 1], [], []>} : vector<8x128xbf16>, vector<128x512xbf16>, vector<8x512xf32> -> vector<8x512xf32>
    %403 = arith.addf %400, %402 : vector<8x512xf32>
    %404 = vector.extract_strided_slice %403 {offsets = [0, 0], sizes = [8, 128], strides = [1, 1]} : vector<8x512xf32> to vector<8x128xf32>
    %405 = arith.negf %404 : vector<8x128xf32>
    %406 = math.exp %405 : vector<8x128xf32>
    %cst_117 = arith.constant 1.000000e+00 : f32
    %407 = vector.broadcast %cst_117 : f32 to vector<8x128xf32>
    %408 = arith.addf %407, %406 : vector<8x128xf32>
    %409 = arith.divf %407, %408 : vector<8x128xf32>
    %410 = vector.extract_strided_slice %403 {offsets = [0, 128], sizes = [8, 128], strides = [1, 1]} : vector<8x512xf32> to vector<8x128xf32>
    %411 = arith.negf %410 : vector<8x128xf32>
    %412 = math.exp %411 : vector<8x128xf32>
    %cst_118 = arith.constant 1.000000e+00 : f32
    %413 = vector.broadcast %cst_118 : f32 to vector<8x128xf32>
    %414 = arith.addf %413, %412 : vector<8x128xf32>
    %415 = arith.divf %413, %414 : vector<8x128xf32>
    %416 = vector.extract_strided_slice %403 {offsets = [0, 256], sizes = [8, 128], strides = [1, 1]} : vector<8x512xf32> to vector<8x128xf32>
    %417 = math.tanh %416 : vector<8x128xf32>
    %418 = vector.extract_strided_slice %403 {offsets = [0, 384], sizes = [8, 128], strides = [1, 1]} : vector<8x512xf32> to vector<8x128xf32>
    %419 = arith.negf %418 : vector<8x128xf32>
    %420 = math.exp %419 : vector<8x128xf32>
    %cst_119 = arith.constant 1.000000e+00 : f32
    %421 = vector.broadcast %cst_119 : f32 to vector<8x128xf32>
    %422 = arith.addf %421, %420 : vector<8x128xf32>
    %423 = arith.divf %421, %422 : vector<8x128xf32>
    %424 = arith.mulf %415, %391 : vector<8x128xf32>
    %425 = arith.mulf %409, %417 : vector<8x128xf32>
    %426 = arith.addf %424, %425 : vector<8x128xf32>
    %427 = math.tanh %426 : vector<8x128xf32>
    %428 = arith.mulf %423, %427 : vector<8x128xf32>
    %429 = arith.truncf %428 : vector<8x128xf32> to vector<8x128xbf16>
    %430 = arith.index_cast %398 : i32 to index
    %c0_120 = arith.constant 0 : index
    %431 = vector.load %arg7[%430, %c0_120] : memref<128x128xbf16, #tpu.memory_space<vmem>>, vector<8x128xbf16>
    tpu.vector_store %arg7[%430, %c0_120], %429 {strides = array<i32>} : memref<128x128xbf16, #tpu.memory_space<vmem>>, vector<8x128xbf16>,
    %c12_i32 = arith.constant 12 : i32
    %c8_i32_121 = arith.constant 8 : i32
    %432 = arith.muli %c12_i32, %c8_i32_121 : i32
    %433 = tpu.assume_multiple %432, 8 : i32
    %434 = arith.index_cast %433 : i32 to index
    %c0_122 = arith.constant 0 : index
    %435 = vector.load %arg10[%434, %c0_122] : memref<128x512xf32, #tpu.memory_space<vmem>>, vector<8x512xf32>
    %c0_123 = arith.constant 0 : index
    %c0_124 = arith.constant 0 : index
    %436 = vector.load %arg5[%c0_123, %c0_124] : memref<128x512xbf16, #tpu.memory_space<vmem>>, vector<128x512xbf16>
    %cst_125 = arith.constant dense<0.000000e+00> : vector<8x512xf32>
    %437 = tpu.matmul %429, %436, %cst_125 {dimension_numbers = #tpu.dot_dimension_numbers<[1], [0], [0], [1], [0, 0, 1, 1], [], []>} : vector<8x128xbf16>, vector<128x512xbf16>, vector<8x512xf32> -> vector<8x512xf32>
    %438 = arith.addf %435, %437 : vector<8x512xf32>
    %439 = vector.extract_strided_slice %438 {offsets = [0, 0], sizes = [8, 128], strides = [1, 1]} : vector<8x512xf32> to vector<8x128xf32>
    %440 = arith.negf %439 : vector<8x128xf32>
    %441 = math.exp %440 : vector<8x128xf32>
    %cst_126 = arith.constant 1.000000e+00 : f32
    %442 = vector.broadcast %cst_126 : f32 to vector<8x128xf32>
    %443 = arith.addf %442, %441 : vector<8x128xf32>
    %444 = arith.divf %442, %443 : vector<8x128xf32>
    %445 = vector.extract_strided_slice %438 {offsets = [0, 128], sizes = [8, 128], strides = [1, 1]} : vector<8x512xf32> to vector<8x128xf32>
    %446 = arith.negf %445 : vector<8x128xf32>
    %447 = math.exp %446 : vector<8x128xf32>
    %cst_127 = arith.constant 1.000000e+00 : f32
    %448 = vector.broadcast %cst_127 : f32 to vector<8x128xf32>
    %449 = arith.addf %448, %447 : vector<8x128xf32>
    %450 = arith.divf %448, %449 : vector<8x128xf32>
    %451 = vector.extract_strided_slice %438 {offsets = [0, 256], sizes = [8, 128], strides = [1, 1]} : vector<8x512xf32> to vector<8x128xf32>
    %452 = math.tanh %451 : vector<8x128xf32>
    %453 = vector.extract_strided_slice %438 {offsets = [0, 384], sizes = [8, 128], strides = [1, 1]} : vector<8x512xf32> to vector<8x128xf32>
    %454 = arith.negf %453 : vector<8x128xf32>
    %455 = math.exp %454 : vector<8x128xf32>
    %cst_128 = arith.constant 1.000000e+00 : f32
    %456 = vector.broadcast %cst_128 : f32 to vector<8x128xf32>
    %457 = arith.addf %456, %455 : vector<8x128xf32>
    %458 = arith.divf %456, %457 : vector<8x128xf32>
    %459 = arith.mulf %450, %426 : vector<8x128xf32>
    %460 = arith.mulf %444, %452 : vector<8x128xf32>
    %461 = arith.addf %459, %460 : vector<8x128xf32>
    %462 = math.tanh %461 : vector<8x128xf32>
    %463 = arith.mulf %458, %462 : vector<8x128xf32>
    %464 = arith.truncf %463 : vector<8x128xf32> to vector<8x128xbf16>
    %465 = arith.index_cast %433 : i32 to index
    %c0_129 = arith.constant 0 : index
    %466 = vector.load %arg7[%465, %c0_129] : memref<128x128xbf16, #tpu.memory_space<vmem>>, vector<8x128xbf16>
    tpu.vector_store %arg7[%465, %c0_129], %464 {strides = array<i32>} : memref<128x128xbf16, #tpu.memory_space<vmem>>, vector<8x128xbf16>,
    %c13_i32 = arith.constant 13 : i32
    %c8_i32_130 = arith.constant 8 : i32
    %467 = arith.muli %c13_i32, %c8_i32_130 : i32
    %468 = tpu.assume_multiple %467, 8 : i32
    %469 = arith.index_cast %468 : i32 to index
    %c0_131 = arith.constant 0 : index
    %470 = vector.load %arg10[%469, %c0_131] : memref<128x512xf32, #tpu.memory_space<vmem>>, vector<8x512xf32>
    %c0_132 = arith.constant 0 : index
    %c0_133 = arith.constant 0 : index
    %471 = vector.load %arg5[%c0_132, %c0_133] : memref<128x512xbf16, #tpu.memory_space<vmem>>, vector<128x512xbf16>
    %cst_134 = arith.constant dense<0.000000e+00> : vector<8x512xf32>
    %472 = tpu.matmul %464, %471, %cst_134 {dimension_numbers = #tpu.dot_dimension_numbers<[1], [0], [0], [1], [0, 0, 1, 1], [], []>} : vector<8x128xbf16>, vector<128x512xbf16>, vector<8x512xf32> -> vector<8x512xf32>
    %473 = arith.addf %470, %472 : vector<8x512xf32>
    %474 = vector.extract_strided_slice %473 {offsets = [0, 0], sizes = [8, 128], strides = [1, 1]} : vector<8x512xf32> to vector<8x128xf32>
    %475 = arith.negf %474 : vector<8x128xf32>
    %476 = math.exp %475 : vector<8x128xf32>
    %cst_135 = arith.constant 1.000000e+00 : f32
    %477 = vector.broadcast %cst_135 : f32 to vector<8x128xf32>
    %478 = arith.addf %477, %476 : vector<8x128xf32>
    %479 = arith.divf %477, %478 : vector<8x128xf32>
    %480 = vector.extract_strided_slice %473 {offsets = [0, 128], sizes = [8, 128], strides = [1, 1]} : vector<8x512xf32> to vector<8x128xf32>
    %481 = arith.negf %480 : vector<8x128xf32>
    %482 = math.exp %481 : vector<8x128xf32>
    %cst_136 = arith.constant 1.000000e+00 : f32
    %483 = vector.broadcast %cst_136 : f32 to vector<8x128xf32>
    %484 = arith.addf %483, %482 : vector<8x128xf32>
    %485 = arith.divf %483, %484 : vector<8x128xf32>
    %486 = vector.extract_strided_slice %473 {offsets = [0, 256], sizes = [8, 128], strides = [1, 1]} : vector<8x512xf32> to vector<8x128xf32>
    %487 = math.tanh %486 : vector<8x128xf32>
    %488 = vector.extract_strided_slice %473 {offsets = [0, 384], sizes = [8, 128], strides = [1, 1]} : vector<8x512xf32> to vector<8x128xf32>
    %489 = arith.negf %488 : vector<8x128xf32>
    %490 = math.exp %489 : vector<8x128xf32>
    %cst_137 = arith.constant 1.000000e+00 : f32
    %491 = vector.broadcast %cst_137 : f32 to vector<8x128xf32>
    %492 = arith.addf %491, %490 : vector<8x128xf32>
    %493 = arith.divf %491, %492 : vector<8x128xf32>
    %494 = arith.mulf %485, %461 : vector<8x128xf32>
    %495 = arith.mulf %479, %487 : vector<8x128xf32>
    %496 = arith.addf %494, %495 : vector<8x128xf32>
    %497 = math.tanh %496 : vector<8x128xf32>
    %498 = arith.mulf %493, %497 : vector<8x128xf32>
    %499 = arith.truncf %498 : vector<8x128xf32> to vector<8x128xbf16>
    %500 = arith.index_cast %468 : i32 to index
    %c0_138 = arith.constant 0 : index
    %501 = vector.load %arg7[%500, %c0_138] : memref<128x128xbf16, #tpu.memory_space<vmem>>, vector<8x128xbf16>
    tpu.vector_store %arg7[%500, %c0_138], %499 {strides = array<i32>} : memref<128x128xbf16, #tpu.memory_space<vmem>>, vector<8x128xbf16>,
    %c14_i32 = arith.constant 14 : i32
    %c8_i32_139 = arith.constant 8 : i32
    %502 = arith.muli %c14_i32, %c8_i32_139 : i32
    %503 = tpu.assume_multiple %502, 8 : i32
    %504 = arith.index_cast %503 : i32 to index
    %c0_140 = arith.constant 0 : index
    %505 = vector.load %arg10[%504, %c0_140] : memref<128x512xf32, #tpu.memory_space<vmem>>, vector<8x512xf32>
    %c0_141 = arith.constant 0 : index
    %c0_142 = arith.constant 0 : index
    %506 = vector.load %arg5[%c0_141, %c0_142] : memref<128x512xbf16, #tpu.memory_space<vmem>>, vector<128x512xbf16>
    %cst_143 = arith.constant dense<0.000000e+00> : vector<8x512xf32>
    %507 = tpu.matmul %499, %506, %cst_143 {dimension_numbers = #tpu.dot_dimension_numbers<[1], [0], [0], [1], [0, 0, 1, 1], [], []>} : vector<8x128xbf16>, vector<128x512xbf16>, vector<8x512xf32> -> vector<8x512xf32>
    %508 = arith.addf %505, %507 : vector<8x512xf32>
    %509 = vector.extract_strided_slice %508 {offsets = [0, 0], sizes = [8, 128], strides = [1, 1]} : vector<8x512xf32> to vector<8x128xf32>
    %510 = arith.negf %509 : vector<8x128xf32>
    %511 = math.exp %510 : vector<8x128xf32>
    %cst_144 = arith.constant 1.000000e+00 : f32
    %512 = vector.broadcast %cst_144 : f32 to vector<8x128xf32>
    %513 = arith.addf %512, %511 : vector<8x128xf32>
    %514 = arith.divf %512, %513 : vector<8x128xf32>
    %515 = vector.extract_strided_slice %508 {offsets = [0, 128], sizes = [8, 128], strides = [1, 1]} : vector<8x512xf32> to vector<8x128xf32>
    %516 = arith.negf %515 : vector<8x128xf32>
    %517 = math.exp %516 : vector<8x128xf32>
    %cst_145 = arith.constant 1.000000e+00 : f32
    %518 = vector.broadcast %cst_145 : f32 to vector<8x128xf32>
    %519 = arith.addf %518, %517 : vector<8x128xf32>
    %520 = arith.divf %518, %519 : vector<8x128xf32>
    %521 = vector.extract_strided_slice %508 {offsets = [0, 256], sizes = [8, 128], strides = [1, 1]} : vector<8x512xf32> to vector<8x128xf32>
    %522 = math.tanh %521 : vector<8x128xf32>
    %523 = vector.extract_strided_slice %508 {offsets = [0, 384], sizes = [8, 128], strides = [1, 1]} : vector<8x512xf32> to vector<8x128xf32>
    %524 = arith.negf %523 : vector<8x128xf32>
    %525 = math.exp %524 : vector<8x128xf32>
    %cst_146 = arith.constant 1.000000e+00 : f32
    %526 = vector.broadcast %cst_146 : f32 to vector<8x128xf32>
    %527 = arith.addf %526, %525 : vector<8x128xf32>
    %528 = arith.divf %526, %527 : vector<8x128xf32>
    %529 = arith.mulf %520, %496 : vector<8x128xf32>
    %530 = arith.mulf %514, %522 : vector<8x128xf32>
    %531 = arith.addf %529, %530 : vector<8x128xf32>
    %532 = math.tanh %531 : vector<8x128xf32>
    %533 = arith.mulf %528, %532 : vector<8x128xf32>
    %534 = arith.truncf %533 : vector<8x128xf32> to vector<8x128xbf16>
    %535 = arith.index_cast %503 : i32 to index
    %c0_147 = arith.constant 0 : index
    %536 = vector.load %arg7[%535, %c0_147] : memref<128x128xbf16, #tpu.memory_space<vmem>>, vector<8x128xbf16>
    tpu.vector_store %arg7[%535, %c0_147], %534 {strides = array<i32>} : memref<128x128xbf16, #tpu.memory_space<vmem>>, vector<8x128xbf16>,
    %c15_i32 = arith.constant 15 : i32
    %c8_i32_148 = arith.constant 8 : i32
    %537 = arith.muli %c15_i32, %c8_i32_148 : i32
    %538 = tpu.assume_multiple %537, 8 : i32
    %539 = arith.index_cast %538 : i32 to index
    %c0_149 = arith.constant 0 : index
    %540 = vector.load %arg10[%539, %c0_149] : memref<128x512xf32, #tpu.memory_space<vmem>>, vector<8x512xf32>
    %c0_150 = arith.constant 0 : index
    %c0_151 = arith.constant 0 : index
    %541 = vector.load %arg5[%c0_150, %c0_151] : memref<128x512xbf16, #tpu.memory_space<vmem>>, vector<128x512xbf16>
    %cst_152 = arith.constant dense<0.000000e+00> : vector<8x512xf32>
    %542 = tpu.matmul %534, %541, %cst_152 {dimension_numbers = #tpu.dot_dimension_numbers<[1], [0], [0], [1], [0, 0, 1, 1], [], []>} : vector<8x128xbf16>, vector<128x512xbf16>, vector<8x512xf32> -> vector<8x512xf32>
    %543 = arith.addf %540, %542 : vector<8x512xf32>
    %544 = vector.extract_strided_slice %543 {offsets = [0, 0], sizes = [8, 128], strides = [1, 1]} : vector<8x512xf32> to vector<8x128xf32>
    %545 = arith.negf %544 : vector<8x128xf32>
    %546 = math.exp %545 : vector<8x128xf32>
    %cst_153 = arith.constant 1.000000e+00 : f32
    %547 = vector.broadcast %cst_153 : f32 to vector<8x128xf32>
    %548 = arith.addf %547, %546 : vector<8x128xf32>
    %549 = arith.divf %547, %548 : vector<8x128xf32>
    %550 = vector.extract_strided_slice %543 {offsets = [0, 128], sizes = [8, 128], strides = [1, 1]} : vector<8x512xf32> to vector<8x128xf32>
    %551 = arith.negf %550 : vector<8x128xf32>
    %552 = math.exp %551 : vector<8x128xf32>
    %cst_154 = arith.constant 1.000000e+00 : f32
    %553 = vector.broadcast %cst_154 : f32 to vector<8x128xf32>
    %554 = arith.addf %553, %552 : vector<8x128xf32>
    %555 = arith.divf %553, %554 : vector<8x128xf32>
    %556 = vector.extract_strided_slice %543 {offsets = [0, 256], sizes = [8, 128], strides = [1, 1]} : vector<8x512xf32> to vector<8x128xf32>
    %557 = math.tanh %556 : vector<8x128xf32>
    %558 = vector.extract_strided_slice %543 {offsets = [0, 384], sizes = [8, 128], strides = [1, 1]} : vector<8x512xf32> to vector<8x128xf32>
    %559 = arith.negf %558 : vector<8x128xf32>
    %560 = math.exp %559 : vector<8x128xf32>
    %cst_155 = arith.constant 1.000000e+00 : f32
    %561 = vector.broadcast %cst_155 : f32 to vector<8x128xf32>
    %562 = arith.addf %561, %560 : vector<8x128xf32>
    %563 = arith.divf %561, %562 : vector<8x128xf32>
    %564 = arith.mulf %555, %531 : vector<8x128xf32>
    %565 = arith.mulf %549, %557 : vector<8x128xf32>
    %566 = arith.addf %564, %565 : vector<8x128xf32>
    %567 = math.tanh %566 : vector<8x128xf32>
    %568 = arith.mulf %563, %567 : vector<8x128xf32>
    %569 = arith.truncf %568 : vector<8x128xf32> to vector<8x128xbf16>
    %570 = arith.index_cast %538 : i32 to index
    %c0_156 = arith.constant 0 : index
    %571 = vector.load %arg7[%570, %c0_156] : memref<128x128xbf16, #tpu.memory_space<vmem>>, vector<8x128xbf16>
    tpu.vector_store %arg7[%570, %c0_156], %569 {strides = array<i32>} : memref<128x128xbf16, #tpu.memory_space<vmem>>, vector<8x128xbf16>,
    %c16_i32 = arith.constant 16 : i32
    %c0_157 = arith.constant 0 : index
    %c0_158 = arith.constant 0 : index
    %572 = vector.load %arg11[%c0_157, %c0_158] : memref<8x128xbf16, #tpu.memory_space<vmem>>, vector<8x128xbf16>
    tpu.vector_store %arg11[%c0_157, %c0_158], %569 {strides = array<i32>} : memref<8x128xbf16, #tpu.memory_space<vmem>>, vector<8x128xbf16>,
    %c0_159 = arith.constant 0 : index
    %c0_160 = arith.constant 0 : index
    %573 = vector.load %arg12[%c0_159, %c0_160] : memref<8x128xf32, #tpu.memory_space<vmem>>, vector<8x128xf32>
    tpu.vector_store %arg12[%c0_159, %c0_160], %566 {strides = array<i32>} : memref<8x128xf32, #tpu.memory_space<vmem>>, vector<8x128xf32>,
    %c3_i32_161 = arith.constant 3 : i32
    %574 = arith.cmpi eq, %arg0, %c3_i32_161 : i32
    %575 = arith.extui %574 : i1 to i32
    %c0_i32_162 = arith.constant 0 : i32
    %576 = arith.cmpi ne, %575, %c0_i32_162 : i32
    scf.if %576 {
      %577 = arith.extf %569 : vector<8x128xbf16> to vector<8x128xf32>
      %c0_163 = arith.constant 0 : index
      %c0_164 = arith.constant 0 : index
      %578 = vector.load %arg8[%c0_163, %c0_164] : memref<8x128xf32, #tpu.memory_space<vmem>>, vector<8x128xf32>
      tpu.vector_store %arg8[%c0_163, %c0_164], %577 {strides = array<i32>} : memref<8x128xf32, #tpu.memory_space<vmem>>, vector<8x128xf32>,
      %c0_165 = arith.constant 0 : index
      %c0_166 = arith.constant 0 : index
      %579 = vector.load %arg9[%c0_165, %c0_166] : memref<8x128xf32, #tpu.memory_space<vmem>>, vector<8x128xf32>
      tpu.vector_store %arg9[%c0_165, %c0_166], %566 {strides = array<i32>} : memref<8x128xf32, #tpu.memory_space<vmem>>, vector<8x128xf32>,
    } else {
    }
    return
  }
  func.func @transform_0(%arg0: i32) -> (i32, i32) {
    %c0_i32 = arith.constant 0 : i32
    %c0_i32_0 = arith.constant 0 : i32
    return %arg0, %c0_i32 : i32, i32
  }
  func.func @transform_1(%arg0: i32) -> (i32, i32) {
    %c0_i32 = arith.constant 0 : i32
    %c0_i32_0 = arith.constant 0 : i32
    %c0_i32_1 = arith.constant 0 : i32
    return %c0_i32, %c0_i32_0 : i32, i32
  }
  func.func @transform_2(%arg0: i32) -> (i32, i32) {
    %c0_i32 = arith.constant 0 : i32
    %c0_i32_0 = arith.constant 0 : i32
    %c0_i32_1 = arith.constant 0 : i32
    return %c0_i32, %c0_i32_0 : i32, i32
  }
  func.func @transform_3(%arg0: i32) -> (i32, i32) {
    %c0_i32 = arith.constant 0 : i32
    %c0_i32_0 = arith.constant 0 : i32
    %c0_i32_1 = arith.constant 0 : i32
    return %c0_i32, %c0_i32_0 : i32, i32
  }
  func.func @transform_4(%arg0: i32) -> (i32, i32) {
    %c0_i32 = arith.constant 0 : i32
    %c0_i32_0 = arith.constant 0 : i32
    %c0_i32_1 = arith.constant 0 : i32
    return %c0_i32, %c0_i32_0 : i32, i32
  }
  func.func @transform_5(%arg0: i32) -> (i32, i32) {
    %c0_i32 = arith.constant 0 : i32
    %c0_i32_0 = arith.constant 0 : i32
    %c0_i32_1 = arith.constant 0 : i32
    return %c0_i32, %c0_i32_0 : i32, i32
  }
  func.func @transform_6(%arg0: i32) -> (i32, i32) {
    %c0_i32 = arith.constant 0 : i32
    %c0_i32_0 = arith.constant 0 : i32
    return %arg0, %c0_i32 : i32, i32
  }
  func.func @transform_7(%arg0: i32) -> (i32, i32) {
    %c0_i32 = arith.constant 0 : i32
    %c0_i32_0 = arith.constant 0 : i32
    %c0_i32_1 = arith.constant 0 : i32
    return %c0_i32, %c0_i32_0 : i32, i32
  }
  func.func @transform_8(%arg0: i32) -> (i32, i32) {
    %c0_i32 = arith.constant 0 : i32
    %c0_i32_0 = arith.constant 0 : i32
    %c0_i32_1 = arith.constant 0 : i32
    return %c0_i32, %c0_i32_0 : i32, i32
  }
}

</mosaic_0001>

<llo_original>
// kernel: rnn_lm_forward.3
$region0: #{rnn_lm_forward.3}
  #allocation0 [shape = 'u32[]', space=smem, size = 0x4, offset = 0x4, fixed_abs, tag = 'smem constant byte address 0x4 - core index']
  #allocation1 [shape = 'u32[72,128]{1,0:T(1,128)}', space=vmem, size = 0x9000, scoped, tag = 'internal scratch']
  %s0 = inlined_call_operand.vmem [shape: bf16[512,128], index: 0, kind: input, shape index: {}]
  %s1 = inlined_call_operand.vmem [shape: bf16[128,256], index: 1, kind: input, shape index: {}]
  %s2 = inlined_call_operand.vmem [shape: f32[1,256], index: 2, kind: input, shape index: {}]
  %s3 = inlined_call_operand.hbm [shape: f32[512,256], index: 3, kind: output, shape index: {}]
  %s4 = sld [smem:[#allocation0]]
  $region22: #{rnn_lm_forward.3} parent=0
    _
  %s6 = ssub.s32 1, %s4
  %s7 = scalar_select 0, %s6, %s4
  $region1: #{rnn_lm_forward.3} parent=0
    #allocation2 [shape = 'u8[524288]{0}', space=vmem, size = 0x80000, scoped, tag = 'output window, operand 0, single buffered']
    #allocation3 [shape = 's32[1]{0}', space=sflag, size = 0x4, scoped, tag = 'scoped memory for rnn_lm_forward.3']
    %8 = vsyncpa [#allocation3], 0
    // Predicated region
    $region2: #{rnn_lm_forward.3} parent=1 // pred_check
      _
    $region3: #{rnn_lm_forward.3} parent=1 // pred_check_branch
      %10 = sbr.rel (0) target = $region5
    $region4: #{rnn_lm_forward.3} parent=1 // pred_region
      _
    $region5: #{rnn_lm_forward.3} parent=1 // pred_fallthru
      _
    // Predicated region
    $region6: #{rnn_lm_forward.3} parent=1 // pred_check
      _
    $region7: #{rnn_lm_forward.3} parent=1 // pred_check_branch
      %12 = sbr.rel (0) target = $region9
    $region8: #{rnn_lm_forward.3} parent=1 // pred_region
      _
    $region9: #{rnn_lm_forward.3} parent=1 // pred_fallthru
      _
    // Predicated region
    $region10: #{rnn_lm_forward.3} parent=1 // pred_check
      _
    $region11: #{rnn_lm_forward.3} parent=1 // pred_check_branch
      %14 = sbr.rel (0) target = $region13
    $region12: #{rnn_lm_forward.3} parent=1 // pred_region
      _
    $region13: #{rnn_lm_forward.3} parent=1 // pred_fallthru
      _
    %v15 = vld [vmem:[%s0] sm:$0xf]
    %v16 = vld [vmem:[%s0 + $0x4] sm:$0xf]
    %v17 = vld [vmem:[%s0 + $0x8] sm:$0xf]
    %v18 = vld [vmem:[%s0 + $0xc] sm:$0xf]
    %v19 = vld [vmem:[%s0 + $0x10] sm:$0xf]
    %v20 = vld [vmem:[%s0 + $0x14] sm:$0xf]
    %v21 = vld [vmem:[%s0 + $0x18] sm:$0xf]
    %v22 = vld [vmem:[%s0 + $0x1c] sm:$0xf]
    %v23 = vld [vmem:[%s0 + $0x20] sm:$0xf]
    %v24 = vld [vmem:[%s0 + $0x24] sm:$0xf]
    %v25 = vld [vmem:[%s0 + $0x28] sm:$0xf]
    %v26 = vld [vmem:[%s0 + $0x2c] sm:$0xf]
    %v27 = vld [vmem:[%s0 + $0x30] sm:$0xf]
    %v28 = vld [vmem:[%s0 + $0x34] sm:$0xf]
    %v29 = vld [vmem:[%s0 + $0x38] sm:$0xf]
    %v30 = vld [vmem:[%s0 + $0x3c] sm:$0xf]
    %v31 = vld [vmem:[%s0 + $0x40] sm:$0xf]
    %v32 = vld [vmem:[%s0 + $0x44] sm:$0xf]
    %v33 = vld [vmem:[%s0 + $0x48] sm:$0xf]
    %v34 = vld [vmem:[%s0 + $0x4c] sm:$0xf]
    %v35 = vld [vmem:[%s0 + $0x50] sm:$0xf]
    %v36 = vld [vmem:[%s0 + $0x54] sm:$0xf]
    %v37 = vld [vmem:[%s0 + $0x58] sm:$0xf]
    %v38 = vld [vmem:[%s0 + $0x5c] sm:$0xf]
    %v39 = vld [vmem:[%s0 + $0x60] sm:$0xf]
    %v40 = vld [vmem:[%s0 + $0x64] sm:$0xf]
    %v41 = vld [vmem:[%s0 + $0x68] sm:$0xf]
    %v42 = vld [vmem:[%s0 + $0x6c] sm:$0xf]
    %v43 = vld [vmem:[%s0 + $0x70] sm:$0xf]
    %v44 = vld [vmem:[%s0 + $0x74] sm:$0xf]
    %v45 = vld [vmem:[%s0 + $0x78] sm:$0xf]
    %v46 = vld [vmem:[%s0 + $0x7c] sm:$0xf]
    %v47 = vld [vmem:[%s0 + $0x80] sm:$0xf]
    %v48 = vld [vmem:[%s0 + $0x84] sm:$0xf]
    %v49 = vld [vmem:[%s0 + $0x88] sm:$0xf]
    %v50 = vld [vmem:[%s0 + $0x8c] sm:$0xf]
    %v51 = vld [vmem:[%s0 + $0x90] sm:$0xf]
    %v52 = vld [vmem:[%s0 + $0x94] sm:$0xf]
    %v53 = vld [vmem:[%s0 + $0x98] sm:$0xf]
    %v54 = vld [vmem:[%s0 + $0x9c] sm:$0xf]
    %v55 = vld [vmem:[%s0 + $0xa0] sm:$0xf]
    %v56 = vld [vmem:[%s0 + $0xa4] sm:$0xf]
    %v57 = vld [vmem:[%s0 + $0xa8] sm:$0xf]
    %v58 = vld [vmem:[%s0 + $0xac] sm:$0xf]
    %v59 = vld [vmem:[%s0 + $0xb0] sm:$0xf]
    %v60 = vld [vmem:[%s0 + $0xb4] sm:$0xf]
    %v61 = vld [vmem:[%s0 + $0xb8] sm:$0xf]
    %v62 = vld [vmem:[%s0 + $0xbc] sm:$0xf]
    %v63 = vld [vmem:[%s0 + $0xc0] sm:$0xf]
    %v64 = vld [vmem:[%s0 + $0xc4] sm:$0xf]
    %v65 = vld [vmem:[%s0 + $0xc8] sm:$0xf]
    %v66 = vld [vmem:[%s0 + $0xcc] sm:$0xf]
    %v67 = vld [vmem:[%s0 + $0xd0] sm:$0xf]
    %v68 = vld [vmem:[%s0 + $0xd4] sm:$0xf]
    %v69 = vld [vmem:[%s0 + $0xd8] sm:$0xf]
    %v70 = vld [vmem:[%s0 + $0xdc] sm:$0xf]
    %v71 = vld [vmem:[%s0 + $0xe0] sm:$0xf]
    %v72 = vld [vmem:[%s0 + $0xe4] sm:$0xf]
    %v73 = vld [vmem:[%s0 + $0xe8] sm:$0xf]
    %v74 = vld [vmem:[%s0 + $0xec] sm:$0xf]
    %v75 = vld [vmem:[%s0 + $0xf0] sm:$0xf]
    %v76 = vld [vmem:[%s0 + $0xf4] sm:$0xf]
    %v77 = vld [vmem:[%s0 + $0xf8] sm:$0xf]
    %v78 = vld [vmem:[%s0 + $0xfc] sm:$0xf]
    %v79 = vld [vmem:[%s1] sm:$0xff]
    %v80 = vld [vmem:[%s1 + $0x8] sm:$0xff]
    %v81 = vld [vmem:[%s1 + $0x10] sm:$0xff]
    %v82 = vld [vmem:[%s1 + $0x18] sm:$0xff]
    %v83 = vld [vmem:[%s1 + $0x20] sm:$0xff]
    %v84 = vld [vmem:[%s1 + $0x28] sm:$0xff]
    %v85 = vld [vmem:[%s1 + $0x30] sm:$0xff]
    %v86 = vld [vmem:[%s1 + $0x38] sm:$0xff]
    %v87 = vld [vmem:[%s1 + $0x40] sm:$0xff]
    %v88 = vld [vmem:[%s1 + $0x48] sm:$0xff]
    %v89 = vld [vmem:[%s1 + $0x50] sm:$0xff]
    %v90 = vld [vmem:[%s1 + $0x58] sm:$0xff]
    %v91 = vld [vmem:[%s1 + $0x60] sm:$0xff]
    %v92 = vld [vmem:[%s1 + $0x68] sm:$0xff]
    %v93 = vld [vmem:[%s1 + $0x70] sm:$0xff]
    %v94 = vld [vmem:[%s1 + $0x78] sm:$0xff]
    %v95 = vld [vmem:[%s2] sm:$0x3]
    %v97 = vperm.slane %v95, 0
    %v98 = vperm.slane %v95, 1
    %v165 = vunpack.c.l.b16 %v15
    %v166 = vunpack.c.l.b16 %v16
    %v167 = vunpack.c.l.b16 %v17
    %v168 = vunpack.c.l.b16 %v18
    %v169 = vunpack.c.l.b16 %v19
    %v170 = vunpack.c.l.b16 %v20
    %v171 = vunpack.c.l.b16 %v21
    %v172 = vunpack.c.l.b16 %v22
    %v173 = vunpack.c.l.b16 %v23
    %v174 = vunpack.c.l.b16 %v24
    %v175 = vunpack.c.l.b16 %v25
    %v176 = vunpack.c.l.b16 %v26
    %v177 = vunpack.c.l.b16 %v27
    %v178 = vunpack.c.l.b16 %v28
    %v179 = vunpack.c.l.b16 %v29
    %v180 = vunpack.c.l.b16 %v30
    %v181 = vunpack.c.l.b16 %v31
    %v182 = vunpack.c.l.b16 %v32
    %v183 = vunpack.c.l.b16 %v33
    %v184 = vunpack.c.l.b16 %v34
    %v185 = vunpack.c.l.b16 %v35
    %v186 = vunpack.c.l.b16 %v36
    %v187 = vunpack.c.l.b16 %v37
    %v188 = vunpack.c.l.b16 %v38
    %v189 = vunpack.c.l.b16 %v39
    %v190 = vunpack.c.l.b16 %v40
    %v191 = vunpack.c.l.b16 %v41
    %v192 = vunpack.c.l.b16 %v42
    %v193 = vunpack.c.l.b16 %v43
    %v194 = vunpack.c.l.b16 %v44
    %v195 = vunpack.c.l.b16 %v45
    %v196 = vunpack.c.l.b16 %v46
    %v197 = vunpack.c.l.b16 %v47
    %v198 = vunpack.c.l.b16 %v48
    %v199 = vunpack.c.l.b16 %v49
    %v200 = vunpack.c.l.b16 %v50
    %v201 = vunpack.c.l.b16 %v51
    %v202 = vunpack.c.l.b16 %v52
    %v203 = vunpack.c.l.b16 %v53
    %v204 = vunpack.c.l.b16 %v54
    %v205 = vunpack.c.l.b16 %v55
    %v206 = vunpack.c.l.b16 %v56
    %v207 = vunpack.c.l.b16 %v57
    %v208 = vunpack.c.l.b16 %v58
    %v209 = vunpack.c.l.b16 %v59
    %v210 = vunpack.c.l.b16 %v60
    %v211 = vunpack.c.l.b16 %v61
    %v212 = vunpack.c.l.b16 %v62
    %v213 = vunpack.c.l.b16 %v63
    %v214 = vunpack.c.l.b16 %v64
    %v215 = vunpack.c.l.b16 %v65
    %v216 = vunpack.c.l.b16 %v66
    %v217 = vunpack.c.l.b16 %v67
    %v218 = vunpack.c.l.b16 %v68
    %v219 = vunpack.c.l.b16 %v69
    %v220 = vunpack.c.l.b16 %v70
    %v221 = vunpack.c.l.b16 %v71
    %v222 = vunpack.c.l.b16 %v72
    %v223 = vunpack.c.l.b16 %v73
    %v224 = vunpack.c.l.b16 %v74
    %v225 = vunpack.c.l.b16 %v75
    %v226 = vunpack.c.l.b16 %v76
    %v227 = vunpack.c.l.b16 %v77
    %v228 = vunpack.c.l.b16 %v78
    %v229 = vpack.c.b16 %v166, %v165
    %v230 = vpack.c.b16 %v168, %v167
    %v231 = vpack.c.b16 %v170, %v169
    %v232 = vpack.c.b16 %v172, %v171
    %v233 = vpack.c.b16 %v174, %v173
    %v234 = vpack.c.b16 %v176, %v175
    %v235 = vpack.c.b16 %v178, %v177
    %v236 = vpack.c.b16 %v180, %v179
    %v237 = vpack.c.b16 %v182, %v181
    %v238 = vpack.c.b16 %v184, %v183
    %v239 = vpack.c.b16 %v186, %v185
    %v240 = vpack.c.b16 %v188, %v187
    %v241 = vpack.c.b16 %v190, %v189
    %v242 = vpack.c.b16 %v192, %v191
    %v243 = vpack.c.b16 %v194, %v193
    %v244 = vpack.c.b16 %v196, %v195
    %v245 = vpack.c.b16 %v198, %v197
    %v246 = vpack.c.b16 %v200, %v199
    %v247 = vpack.c.b16 %v202, %v201
    %v248 = vpack.c.b16 %v204, %v203
    %v249 = vpack.c.b16 %v206, %v205
    %v250 = vpack.c.b16 %v208, %v207
    %v251 = vpack.c.b16 %v210, %v209
    %v252 = vpack.c.b16 %v212, %v211
    %v253 = vpack.c.b16 %v214, %v213
    %v254 = vpack.c.b16 %v216, %v215
    %v255 = vpack.c.b16 %v218, %v217
    %v256 = vpack.c.b16 %v220, %v219
    %v257 = vpack.c.b16 %v222, %v221
    %v258 = vpack.c.b16 %v224, %v223
    %v259 = vpack.c.b16 %v226, %v225
    %v260 = vpack.c.b16 %v228, %v227
    %v309 = vunpack.c.l.b16 %v79
    %v310 = vunpack.c.h.b16 %v79
    %v311 = vunpack.c.l.b16 %v80
    %v312 = vunpack.c.h.b16 %v80
    %v313 = vunpack.c.l.b16 %v81
    %v314 = vunpack.c.h.b16 %v81
    %v315 = vunpack.c.l.b16 %v82
    %v316 = vunpack.c.h.b16 %v82
    %v317 = vunpack.c.l.b16 %v83
    %v318 = vunpack.c.h.b16 %v83
    %v319 = vunpack.c.l.b16 %v84
    %v320 = vunpack.c.h.b16 %v84
    %v321 = vunpack.c.l.b16 %v85
    %v322 = vunpack.c.h.b16 %v85
    %v323 = vunpack.c.l.b16 %v86
    %v324 = vunpack.c.h.b16 %v86
    %v325 = vunpack.c.l.b16 %v87
    %v326 = vunpack.c.h.b16 %v87
    %v327 = vunpack.c.l.b16 %v88
    %v328 = vunpack.c.h.b16 %v88
    %v329 = vunpack.c.l.b16 %v89
    %v330 = vunpack.c.h.b16 %v89
    %v331 = vunpack.c.l.b16 %v90
    %v332 = vunpack.c.h.b16 %v90
    %v333 = vunpack.c.l.b16 %v91
    %v334 = vunpack.c.h.b16 %v91
    %v335 = vunpack.c.l.b16 %v92
    %v336 = vunpack.c.h.b16 %v92
    %v337 = vunpack.c.l.b16 %v93
    %v338 = vunpack.c.h.b16 %v93
    %v339 = vunpack.c.l.b16 %v94
    %v340 = vunpack.c.h.b16 %v94
    %v341 = vpack.c.b16 %v311, %v309
    %v342 = vpack.c.b16 %v312, %v310
    %v343 = vpack.c.b16 %v315, %v313
    %v344 = vpack.c.b16 %v316, %v314
    %v345 = vpack.c.b16 %v319, %v317
    %v346 = vpack.c.b16 %v320, %v318
    %v347 = vpack.c.b16 %v323, %v321
    %v348 = vpack.c.b16 %v324, %v322
    %v349 = vpack.c.b16 %v327, %v325
    %v350 = vpack.c.b16 %v328, %v326
    %v351 = vpack.c.b16 %v331, %v329
    %v352 = vpack.c.b16 %v332, %v330
    %v353 = vpack.c.b16 %v335, %v333
    %v354 = vpack.c.b16 %v336, %v334
    %v355 = vpack.c.b16 %v339, %v337
    %v356 = vpack.c.b16 %v340, %v338
    %373 = vmatpush.bf16.msra.mxu0 %v355
    %374 = vmatpush.bf16.msra.mxu0 %v353
    %375 = vmatpush.bf16.msra.mxu0 %v351
    %376 = vmatpush.bf16.msra.mxu0 %v349
    %377 = vmatpush.bf16.msra.mxu0 %v347
    %378 = vmatpush.bf16.msra.mxu0 %v345
    %379 = vmatpush.bf16.msra.mxu0 %v343
    %380 = vmatpush.bf16.msra.mxu0 %v341
    %381 = vmatmul.bf16.gmra.mxu0 %v229
    %v382 = vpop.f32.mrf.mxu0
    %v383 = vadd.f32 %v97, %v382
    %v384 = vpop.f32.mrf.mxu0
    %v385 = vadd.f32 %v97, %v384
    %386 = vmatmul.bf16.gmra.mxu0 %v230
    %v387 = vpop.f32.mrf.mxu0
    %v388 = vadd.f32 %v97, %v387
    %v389 = vpop.f32.mrf.mxu0
    %v390 = vadd.f32 %v97, %v389
    %391 = vmatmul.bf16.gmra.mxu0 %v231
    %v392 = vpop.f32.mrf.mxu0
    %v393 = vadd.f32 %v97, %v392
    %v394 = vpop.f32.mrf.mxu0
    %v395 = vadd.f32 %v97, %v394
    %396 = vmatmul.bf16.gmra.mxu0 %v232
    %v397 = vpop.f32.mrf.mxu0
    %v398 = vadd.f32 %v97, %v397
    %v399 = vpop.f32.mrf.mxu0
    %v400 = vadd.f32 %v97, %v399
    %401 = vmatmul.bf16.gmra.mxu0 %v233
    %v402 = vpop.f32.mrf.mxu0
    %v403 = vadd.f32 %v97, %v402
    %v404 = vpop.f32.mrf.mxu0
    %v405 = vadd.f32 %v97, %v404
    %406 = vmatmul.bf16.gmra.mxu0 %v234
    %v407 = vpop.f32.mrf.mxu0
    %v408 = vadd.f32 %v97, %v407
    %v409 = vpop.f32.mrf.mxu0
    %v410 = vadd.f32 %v97, %v409
    %411 = vmatmul.bf16.gmra.mxu0 %v235
    %v412 = vpop.f32.mrf.mxu0
    %v413 = vadd.f32 %v97, %v412
    %v414 = vpop.f32.mrf.mxu0
    %v415 = vadd.f32 %v97, %v414
    %416 = vmatmul.bf16.gmra.mxu0 %v236
    %v417 = vpop.f32.mrf.mxu0
    %v418 = vadd.f32 %v97, %v417
    %v419 = vpop.f32.mrf.mxu0
    %v420 = vadd.f32 %v97, %v419
    %421 = vmatmul.bf16.gmra.mxu0 %v237
    %v422 = vpop.f32.mrf.mxu0
    %v423 = vadd.f32 %v97, %v422
    %v424 = vpop.f32.mrf.mxu0
    %v425 = vadd.f32 %v97, %v424
    %426 = vmatmul.bf16.gmra.mxu0 %v238
    %v427 = vpop.f32.mrf.mxu0
    %v428 = vadd.f32 %v97, %v427
    %v429 = vpop.f32.mrf.mxu0
    %v430 = vadd.f32 %v97, %v429
    %431 = vmatmul.bf16.gmra.mxu0 %v239
    %v432 = vpop.f32.mrf.mxu0
    %v433 = vadd.f32 %v97, %v432
    %v434 = vpop.f32.mrf.mxu0
    %v435 = vadd.f32 %v97, %v434
    %436 = vmatmul.bf16.gmra.mxu0 %v240
    %v437 = vpop.f32.mrf.mxu0
    %v438 = vadd.f32 %v97, %v437
    %v439 = vpop.f32.mrf.mxu0
    %v440 = vadd.f32 %v97, %v439
    %441 = vmatmul.bf16.gmra.mxu0 %v241
    %v442 = vpop.f32.mrf.mxu0
    %v443 = vadd.f32 %v97, %v442
    %v444 = vpop.f32.mrf.mxu0
    %v445 = vadd.f32 %v97, %v444
    %446 = vmatmul.bf16.gmra.mxu0 %v242
    %v447 = vpop.f32.mrf.mxu0
    %v448 = vadd.f32 %v97, %v447
    %v449 = vpop.f32.mrf.mxu0
    %v450 = vadd.f32 %v97, %v449
    %451 = vmatmul.bf16.gmra.mxu0 %v243
    %v452 = vpop.f32.mrf.mxu0
    %v453 = vadd.f32 %v97, %v452
    %v454 = vpop.f32.mrf.mxu0
    %v455 = vadd.f32 %v97, %v454
    %456 = vmatmul.bf16.gmra.mxu0 %v244
    %v457 = vpop.f32.mrf.mxu0
    %v458 = vadd.f32 %v97, %v457
    %v459 = vpop.f32.mrf.mxu0
    %v460 = vadd.f32 %v97, %v459
    %461 = vmatmul.bf16.gmra.mxu0 %v245
    %v462 = vpop.f32.mrf.mxu0
    %v463 = vadd.f32 %v97, %v462
    %v464 = vpop.f32.mrf.mxu0
    %v465 = vadd.f32 %v97, %v464
    %466 = vmatmul.bf16.gmra.mxu0 %v246
    %v467 = vpop.f32.mrf.mxu0
    %v468 = vadd.f32 %v97, %v467
    %v469 = vpop.f32.mrf.mxu0
    %v470 = vadd.f32 %v97, %v469
    %471 = vmatmul.bf16.gmra.mxu0 %v247
    %v472 = vpop.f32.mrf.mxu0
    %v473 = vadd.f32 %v97, %v472
    %v474 = vpop.f32.mrf.mxu0
    %v475 = vadd.f32 %v97, %v474
    %476 = vmatmul.bf16.gmra.mxu0 %v248
    %v477 = vpop.f32.mrf.mxu0
    %v478 = vadd.f32 %v97, %v477
    %v479 = vpop.f32.mrf.mxu0
    %v480 = vadd.f32 %v97, %v479
    %481 = vmatmul.bf16.gmra.mxu0 %v249
    %v482 = vpop.f32.mrf.mxu0
    %v483 = vadd.f32 %v97, %v482
    %v484 = vpop.f32.mrf.mxu0
    %v485 = vadd.f32 %v97, %v484
    %486 = vmatmul.bf16.gmra.mxu0 %v250
    %v487 = vpop.f32.mrf.mxu0
    %v488 = vadd.f32 %v97, %v487
    %v489 = vpop.f32.mrf.mxu0
    %v490 = vadd.f32 %v97, %v489
    %491 = vmatmul.bf16.gmra.mxu0 %v251
    %v492 = vpop.f32.mrf.mxu0
    %v493 = vadd.f32 %v97, %v492
    %v494 = vpop.f32.mrf.mxu0
    %v495 = vadd.f32 %v97, %v494
    %496 = vmatmul.bf16.gmra.mxu0 %v252
    %v497 = vpop.f32.mrf.mxu0
    %v498 = vadd.f32 %v97, %v497
    %v499 = vpop.f32.mrf.mxu0
    %v500 = vadd.f32 %v97, %v499
    %501 = vmatmul.bf16.gmra.mxu0 %v253
    %v502 = vpop.f32.mrf.mxu0
    %v503 = vadd.f32 %v97, %v502
    %v504 = vpop.f32.mrf.mxu0
    %v505 = vadd.f32 %v97, %v504
    %506 = vmatmul.bf16.gmra.mxu0 %v254
    %v507 = vpop.f32.mrf.mxu0
    %v508 = vadd.f32 %v97, %v507
    %v509 = vpop.f32.mrf.mxu0
    %v510 = vadd.f32 %v97, %v509
    %511 = vmatmul.bf16.gmra.mxu0 %v255
    %v512 = vpop.f32.mrf.mxu0
    %v513 = vadd.f32 %v97, %v512
    %v514 = vpop.f32.mrf.mxu0
    %v515 = vadd.f32 %v97, %v514
    %516 = vmatmul.bf16.gmra.mxu0 %v256
    %v517 = vpop.f32.mrf.mxu0
    %v518 = vadd.f32 %v97, %v517
    %v519 = vpop.f32.mrf.mxu0
    %v520 = vadd.f32 %v97, %v519
    %521 = vmatmul.bf16.gmra.mxu0 %v257
    %v522 = vpop.f32.mrf.mxu0
    %v523 = vadd.f32 %v97, %v522
    %v524 = vpop.f32.mrf.mxu0
    %v525 = vadd.f32 %v97, %v524
    %526 = vmatmul.bf16.gmra.mxu0 %v258
    %v527 = vpop.f32.mrf.mxu0
    %v528 = vadd.f32 %v97, %v527
    %v529 = vpop.f32.mrf.mxu0
    %v530 = vadd.f32 %v97, %v529
    %531 = vmatmul.bf16.gmra.mxu0 %v259
    %v532 = vpop.f32.mrf.mxu0
    %v533 = vadd.f32 %v97, %v532
    %v534 = vpop.f32.mrf.mxu0
    %v535 = vadd.f32 %v97, %v534
    %536 = vmatmul.bf16.gmra.mxu0 %v260
    %v537 = vpop.f32.mrf.mxu0
    %v538 = vadd.f32 %v97, %v537
    %v539 = vpop.f32.mrf.mxu0
    %v540 = vadd.f32 %v97, %v539
    %541 = vdwg.mxu0
    %542 = vmatpush.bf16.msra.mxu0 %v356
    %543 = vmatpush.bf16.msra.mxu0 %v354
    %544 = vmatpush.bf16.msra.mxu0 %v352
    %545 = vmatpush.bf16.msra.mxu0 %v350
    %546 = vmatpush.bf16.msra.mxu0 %v348
    %547 = vmatpush.bf16.msra.mxu0 %v346
    %548 = vmatpush.bf16.msra.mxu0 %v344
    %549 = vmatpush.bf16.msra.mxu0 %v342
    %550 = vmatmul.bf16.gmra.mxu0 %v229
    %v551 = vpop.f32.mrf.mxu0
    %v552 = vadd.f32 %v98, %v551
    %v553 = vpop.f32.mrf.mxu0
    %v554 = vadd.f32 %v98, %v553
    %555 = vmatmul.bf16.gmra.mxu0 %v230
    %v556 = vpop.f32.mrf.mxu0
    %v557 = vadd.f32 %v98, %v556
    %v558 = vpop.f32.mrf.mxu0
    %v559 = vadd.f32 %v98, %v558
    %560 = vmatmul.bf16.gmra.mxu0 %v231
    %v561 = vpop.f32.mrf.mxu0
    %v562 = vadd.f32 %v98, %v561
    %v563 = vpop.f32.mrf.mxu0
    %v564 = vadd.f32 %v98, %v563
    %565 = vmatmul.bf16.gmra.mxu0 %v232
    %v566 = vpop.f32.mrf.mxu0
    %v567 = vadd.f32 %v98, %v566
    %v568 = vpop.f32.mrf.mxu0
    %v569 = vadd.f32 %v98, %v568
    %570 = vmatmul.bf16.gmra.mxu0 %v233
    %v571 = vpop.f32.mrf.mxu0
    %v572 = vadd.f32 %v98, %v571
    %v573 = vpop.f32.mrf.mxu0
    %v574 = vadd.f32 %v98, %v573
    %575 = vmatmul.bf16.gmra.mxu0 %v234
    %v576 = vpop.f32.mrf.mxu0
    %v577 = vadd.f32 %v98, %v576
    %v578 = vpop.f32.mrf.mxu0
    %v579 = vadd.f32 %v98, %v578
    %580 = vmatmul.bf16.gmra.mxu0 %v235
    %v581 = vpop.f32.mrf.mxu0
    %v582 = vadd.f32 %v98, %v581
    %v583 = vpop.f32.mrf.mxu0
    %v584 = vadd.f32 %v98, %v583
    %585 = vmatmul.bf16.gmra.mxu0 %v236
    %v586 = vpop.f32.mrf.mxu0
    %v587 = vadd.f32 %v98, %v586
    %v588 = vpop.f32.mrf.mxu0
    %v589 = vadd.f32 %v98, %v588
    %590 = vmatmul.bf16.gmra.mxu0 %v237
    %v591 = vpop.f32.mrf.mxu0
    %v592 = vadd.f32 %v98, %v591
    %v593 = vpop.f32.mrf.mxu0
    %v594 = vadd.f32 %v98, %v593
    %595 = vmatmul.bf16.gmra.mxu0 %v238
    %v596 = vpop.f32.mrf.mxu0
    %v597 = vadd.f32 %v98, %v596
    %v598 = vpop.f32.mrf.mxu0
    %v599 = vadd.f32 %v98, %v598
    %600 = vmatmul.bf16.gmra.mxu0 %v239
    %v601 = vpop.f32.mrf.mxu0
    %v602 = vadd.f32 %v98, %v601
    %v603 = vpop.f32.mrf.mxu0
    %v604 = vadd.f32 %v98, %v603
    %605 = vmatmul.bf16.gmra.mxu0 %v240
    %v606 = vpop.f32.mrf.mxu0
    %v607 = vadd.f32 %v98, %v606
    %v608 = vpop.f32.mrf.mxu0
    %v609 = vadd.f32 %v98, %v608
    %610 = vmatmul.bf16.gmra.mxu0 %v241
    %v611 = vpop.f32.mrf.mxu0
    %v612 = vadd.f32 %v98, %v611
    %v613 = vpop.f32.mrf.mxu0
    %v614 = vadd.f32 %v98, %v613
    %615 = vmatmul.bf16.gmra.mxu0 %v242
    %v616 = vpop.f32.mrf.mxu0
    %v617 = vadd.f32 %v98, %v616
    %v618 = vpop.f32.mrf.mxu0
    %v619 = vadd.f32 %v98, %v618
    %620 = vmatmul.bf16.gmra.mxu0 %v243
    %v621 = vpop.f32.mrf.mxu0
    %v622 = vadd.f32 %v98, %v621
    %v623 = vpop.f32.mrf.mxu0
    %v624 = vadd.f32 %v98, %v623
    %625 = vmatmul.bf16.gmra.mxu0 %v244
    %v626 = vpop.f32.mrf.mxu0
    %v627 = vadd.f32 %v98, %v626
    %v628 = vpop.f32.mrf.mxu0
    %v629 = vadd.f32 %v98, %v628
    %630 = vmatmul.bf16.gmra.mxu0 %v245
    %v631 = vpop.f32.mrf.mxu0
    %v632 = vadd.f32 %v98, %v631
    %v633 = vpop.f32.mrf.mxu0
    %v634 = vadd.f32 %v98, %v633
    %635 = vmatmul.bf16.gmra.mxu0 %v246
    %v636 = vpop.f32.mrf.mxu0
    %v637 = vadd.f32 %v98, %v636
    %v638 = vpop.f32.mrf.mxu0
    %v639 = vadd.f32 %v98, %v638
    %640 = vmatmul.bf16.gmra.mxu0 %v247
    %v641 = vpop.f32.mrf.mxu0
    %v642 = vadd.f32 %v98, %v641
    %v643 = vpop.f32.mrf.mxu0
    %v644 = vadd.f32 %v98, %v643
    %645 = vmatmul.bf16.gmra.mxu0 %v248
    %v646 = vpop.f32.mrf.mxu0
    %v647 = vadd.f32 %v98, %v646
    %v648 = vpop.f32.mrf.mxu0
    %v649 = vadd.f32 %v98, %v648
    %650 = vmatmul.bf16.gmra.mxu0 %v249
    %v651 = vpop.f32.mrf.mxu0
    %v652 = vadd.f32 %v98, %v651
    %v653 = vpop.f32.mrf.mxu0
    %v654 = vadd.f32 %v98, %v653
    %655 = vmatmul.bf16.gmra.mxu0 %v250
    %v656 = vpop.f32.mrf.mxu0
    %v657 = vadd.f32 %v98, %v656
    %v658 = vpop.f32.mrf.mxu0
    %v659 = vadd.f32 %v98, %v658
    %660 = vmatmul.bf16.gmra.mxu0 %v251
    %v661 = vpop.f32.mrf.mxu0
    %v662 = vadd.f32 %v98, %v661
    %v663 = vpop.f32.mrf.mxu0
    %v664 = vadd.f32 %v98, %v663
    %665 = vmatmul.bf16.gmra.mxu0 %v252
    %v666 = vpop.f32.mrf.mxu0
    %v667 = vadd.f32 %v98, %v666
    %v668 = vpop.f32.mrf.mxu0
    %v669 = vadd.f32 %v98, %v668
    %670 = vmatmul.bf16.gmra.mxu0 %v253
    %v671 = vpop.f32.mrf.mxu0
    %v672 = vadd.f32 %v98, %v671
    %v673 = vpop.f32.mrf.mxu0
    %v674 = vadd.f32 %v98, %v673
    %675 = vmatmul.bf16.gmra.mxu0 %v254
    %v676 = vpop.f32.mrf.mxu0
    %v677 = vadd.f32 %v98, %v676
    %v678 = vpop.f32.mrf.mxu0
    %v679 = vadd.f32 %v98, %v678
    %680 = vmatmul.bf16.gmra.mxu0 %v255
    %v681 = vpop.f32.mrf.mxu0
    %v682 = vadd.f32 %v98, %v681
    %v683 = vpop.f32.mrf.mxu0
    %v684 = vadd.f32 %v98, %v683
    %685 = vmatmul.bf16.gmra.mxu0 %v256
    %v686 = vpop.f32.mrf.mxu0
    %v687 = vadd.f32 %v98, %v686
    %v688 = vpop.f32.mrf.mxu0
    %v689 = vadd.f32 %v98, %v688
    %690 = vmatmul.bf16.gmra.mxu0 %v257
    %v691 = vpop.f32.mrf.mxu0
    %v692 = vadd.f32 %v98, %v691
    %v693 = vpop.f32.mrf.mxu0
    %v694 = vadd.f32 %v98, %v693
    %695 = vmatmul.bf16.gmra.mxu0 %v258
    %v696 = vpop.f32.mrf.mxu0
    %v697 = vadd.f32 %v98, %v696
    %v698 = vpop.f32.mrf.mxu0
    %v699 = vadd.f32 %v98, %v698
    %700 = vmatmul.bf16.gmra.mxu0 %v259
    %v701 = vpop.f32.mrf.mxu0
    %v702 = vadd.f32 %v98, %v701
    %v703 = vpop.f32.mrf.mxu0
    %v704 = vadd.f32 %v98, %v703
    %705 = vmatmul.bf16.gmra.mxu0 %v260
    %v706 = vpop.f32.mrf.mxu0
    %v707 = vadd.f32 %v98, %v706
    %v708 = vpop.f32.mrf.mxu0
    %v709 = vadd.f32 %v98, %v708
    %710 = vdwg.mxu0
    %711 = vst [vmem:[#allocation2] sm:$0xff] %v383
    %712 = vst [vmem:[#allocation2 + $0x8] sm:$0xff] %v552
    %713 = vst [vmem:[#allocation2 + $0x10] sm:$0xff] %v385
    %714 = vst [vmem:[#allocation2 + $0x18] sm:$0xff] %v554
    %715 = vst [vmem:[#allocation2 + $0x20] sm:$0xff] %v388
    %716 = vst [vmem:[#allocation2 + $0x28] sm:$0xff] %v557
    %717 = vst [vmem:[#allocation2 + $0x30] sm:$0xff] %v390
    %718 = vst [vmem:[#allocation2 + $0x38] sm:$0xff] %v559
    %719 = vst [vmem:[#allocation2 + $0x40] sm:$0xff] %v393
    %720 = vst [vmem:[#allocation2 + $0x48] sm:$0xff] %v562
    %721 = vst [vmem:[#allocation2 + $0x50] sm:$0xff] %v395
    %722 = vst [vmem:[#allocation2 + $0x58] sm:$0xff] %v564
    %723 = vst [vmem:[#allocation2 + $0x60] sm:$0xff] %v398
    %724 = vst [vmem:[#allocation2 + $0x68] sm:$0xff] %v567
    %725 = vst [vmem:[#allocation2 + $0x70] sm:$0xff] %v400
    %726 = vst [vmem:[#allocation2 + $0x78] sm:$0xff] %v569
    %727 = vst [vmem:[#allocation2 + $0x80] sm:$0xff] %v403
    %728 = vst [vmem:[#allocation2 + $0x88] sm:$0xff] %v572
    %729 = vst [vmem:[#allocation2 + $0x90] sm:$0xff] %v405
    %730 = vst [vmem:[#allocation2 + $0x98] sm:$0xff] %v574
    %731 = vst [vmem:[#allocation2 + $0xa0] sm:$0xff] %v408
    %732 = vst [vmem:[#allocation2 + $0xa8] sm:$0xff] %v577
    %733 = vst [vmem:[#allocation2 + $0xb0] sm:$0xff] %v410
    %734 = vst [vmem:[#allocation2 + $0xb8] sm:$0xff] %v579
    %735 = vst [vmem:[#allocation2 + $0xc0] sm:$0xff] %v413
    %736 = vst [vmem:[#allocation2 + $0xc8] sm:$0xff] %v582
    %737 = vst [vmem:[#allocation2 + $0xd0] sm:$0xff] %v415
    %738 = vst [vmem:[#allocation2 + $0xd8] sm:$0xff] %v584
    %739 = vst [vmem:[#allocation2 + $0xe0] sm:$0xff] %v418
    %740 = vst [vmem:[#allocation2 + $0xe8] sm:$0xff] %v587
    %741 = vst [vmem:[#allocation2 + $0xf0] sm:$0xff] %v420
    %742 = vst [vmem:[#allocation2 + $0xf8] sm:$0xff] %v589
    %743 = vst [vmem:[#allocation2 + $0x100] sm:$0xff] %v423
    %744 = vst [vmem:[#allocation2 + $0x108] sm:$0xff] %v592
    %745 = vst [vmem:[#allocation2 + $0x110] sm:$0xff] %v425
    %746 = vst [vmem:[#allocation2 + $0x118] sm:$0xff] %v594
    %747 = vst [vmem:[#allocation2 + $0x120] sm:$0xff] %v428
    %748 = vst [vmem:[#allocation2 + $0x128] sm:$0xff] %v597
    %749 = vst [vmem:[#allocation2 + $0x130] sm:$0xff] %v430
    %750 = vst [vmem:[#allocation2 + $0x138] sm:$0xff] %v599
    %751 = vst [vmem:[#allocation2 + $0x140] sm:$0xff] %v433
    %752 = vst [vmem:[#allocation2 + $0x148] sm:$0xff] %v602
    %753 = vst [vmem:[#allocation2 + $0x150] sm:$0xff] %v435
    %754 = vst [vmem:[#allocation2 + $0x158] sm:$0xff] %v604
    %755 = vst [vmem:[#allocation2 + $0x160] sm:$0xff] %v438
    %756 = vst [vmem:[#allocation2 + $0x168] sm:$0xff] %v607
    %757 = vst [vmem:[#allocation2 + $0x170] sm:$0xff] %v440
    %758 = vst [vmem:[#allocation2 + $0x178] sm:$0xff] %v609
    %759 = vst [vmem:[#allocation2 + $0x180] sm:$0xff] %v443
    %760 = vst [vmem:[#allocation2 + $0x188] sm:$0xff] %v612
    %761 = vst [vmem:[#allocation2 + $0x190] sm:$0xff] %v445
    %762 = vst [vmem:[#allocation2 + $0x198] sm:$0xff] %v614
    %763 = vst [vmem:[#allocation2 + $0x1a0] sm:$0xff] %v448
    %764 = vst [vmem:[#allocation2 + $0x1a8] sm:$0xff] %v617
    %765 = vst [vmem:[#allocation2 + $0x1b0] sm:$0xff] %v450
    %766 = vst [vmem:[#allocation2 + $0x1b8] sm:$0xff] %v619
    %767 = vst [vmem:[#allocation2 + $0x1c0] sm:$0xff] %v453
    %768 = vst [vmem:[#allocation2 + $0x1c8] sm:$0xff] %v622
    %769 = vst [vmem:[#allocation2 + $0x1d0] sm:$0xff] %v455
    %770 = vst [vmem:[#allocation2 + $0x1d8] sm:$0xff] %v624
    %771 = vst [vmem:[#allocation2 + $0x1e0] sm:$0xff] %v458
    %772 = vst [vmem:[#allocation2 + $0x1e8] sm:$0xff] %v627
    %773 = vst [vmem:[#allocation2 + $0x1f0] sm:$0xff] %v460
    %774 = vst [vmem:[#allocation2 + $0x1f8] sm:$0xff] %v629
    %775 = vst [vmem:[#allocation2 + $0x200] sm:$0xff] %v463
    %776 = vst [vmem:[#allocation2 + $0x208] sm:$0xff] %v632
    %777 = vst [vmem:[#allocation2 + $0x210] sm:$0xff] %v465
    %778 = vst [vmem:[#allocation2 + $0x218] sm:$0xff] %v634
    %779 = vst [vmem:[#allocation2 + $0x220] sm:$0xff] %v468
    %780 = vst [vmem:[#allocation2 + $0x228] sm:$0xff] %v637
    %781 = vst [vmem:[#allocation2 + $0x230] sm:$0xff] %v470
    %782 = vst [vmem:[#allocation2 + $0x238] sm:$0xff] %v639
    %783 = vst [vmem:[#allocation2 + $0x240] sm:$0xff] %v473
    %784 = vst [vmem:[#allocation2 + $0x248] sm:$0xff] %v642
    %785 = vst [vmem:[#allocation2 + $0x250] sm:$0xff] %v475
    %786 = vst [vmem:[#allocation2 + $0x258] sm:$0xff] %v644
    %787 = vst [vmem:[#allocation2 + $0x260] sm:$0xff] %v478
    %788 = vst [vmem:[#allocation2 + $0x268] sm:$0xff] %v647
    %789 = vst [vmem:[#allocation2 + $0x270] sm:$0xff] %v480
    %790 = vst [vmem:[#allocation2 + $0x278] sm:$0xff] %v649
    %791 = vst [vmem:[#allocation2 + $0x280] sm:$0xff] %v483
    %792 = vst [vmem:[#allocation2 + $0x288] sm:$0xff] %v652
    %793 = vst [vmem:[#allocation2 + $0x290] sm:$0xff] %v485
    %794 = vst [vmem:[#allocation2 + $0x298] sm:$0xff] %v654
    %795 = vst [vmem:[#allocation2 + $0x2a0] sm:$0xff] %v488
    %796 = vst [vmem:[#allocation2 + $0x2a8] sm:$0xff] %v657
    %797 = vst [vmem:[#allocation2 + $0x2b0] sm:$0xff] %v490
    %798 = vst [vmem:[#allocation2 + $0x2b8] sm:$0xff] %v659
    %799 = vst [vmem:[#allocation2 + $0x2c0] sm:$0xff] %v493
    %800 = vst [vmem:[#allocation2 + $0x2c8] sm:$0xff] %v662
    %801 = vst [vmem:[#allocation2 + $0x2d0] sm:$0xff] %v495
    %802 = vst [vmem:[#allocation2 + $0x2d8] sm:$0xff] %v664
    %803 = vst [vmem:[#allocation2 + $0x2e0] sm:$0xff] %v498
    %804 = vst [vmem:[#allocation2 + $0x2e8] sm:$0xff] %v667
    %805 = vst [vmem:[#allocation2 + $0x2f0] sm:$0xff] %v500
    %806 = vst [vmem:[#allocation2 + $0x2f8] sm:$0xff] %v669
    %807 = vst [vmem:[#allocation2 + $0x300] sm:$0xff] %v503
    %808 = vst [vmem:[#allocation2 + $0x308] sm:$0xff] %v672
    %809 = vst [vmem:[#allocation2 + $0x310] sm:$0xff] %v505
    %810 = vst [vmem:[#allocation2 + $0x318] sm:$0xff] %v674
    %811 = vst [vmem:[#allocation2 + $0x320] sm:$0xff] %v508
    %812 = vst [vmem:[#allocation2 + $0x328] sm:$0xff] %v677
    %813 = vst [vmem:[#allocation2 + $0x330] sm:$0xff] %v510
    %814 = vst [vmem:[#allocation2 + $0x338] sm:$0xff] %v679
    %815 = vst [vmem:[#allocation2 + $0x340] sm:$0xff] %v513
    %816 = vst [vmem:[#allocation2 + $0x348] sm:$0xff] %v682
    %817 = vst [vmem:[#allocation2 + $0x350] sm:$0xff] %v515
    %818 = vst [vmem:[#allocation2 + $0x358] sm:$0xff] %v684
    %819 = vst [vmem:[#allocation2 + $0x360] sm:$0xff] %v518
    %820 = vst [vmem:[#allocation2 + $0x368] sm:$0xff] %v687
    %821 = vst [vmem:[#allocation2 + $0x370] sm:$0xff] %v520
    %822 = vst [vmem:[#allocation2 + $0x378] sm:$0xff] %v689
    %823 = vst [vmem:[#allocation2 + $0x380] sm:$0xff] %v523
    %824 = vst [vmem:[#allocation2 + $0x388] sm:$0xff] %v692
    %825 = vst [vmem:[#allocation2 + $0x390] sm:$0xff] %v525
    %826 = vst [vmem:[#allocation2 + $0x398] sm:$0xff] %v694
    %827 = vst [vmem:[#allocation2 + $0x3a0] sm:$0xff] %v528
    %828 = vst [vmem:[#allocation2 + $0x3a8] sm:$0xff] %v697
    %829 = vst [vmem:[#allocation2 + $0x3b0] sm:$0xff] %v530
    %830 = vst [vmem:[#allocation2 + $0x3b8] sm:$0xff] %v699
    %831 = vst [vmem:[#allocation2 + $0x3c0] sm:$0xff] %v533
    %832 = vst [vmem:[#allocation2 + $0x3c8] sm:$0xff] %v702
    %833 = vst [vmem:[#allocation2 + $0x3d0] sm:$0xff] %v535
    %834 = vst [vmem:[#allocation2 + $0x3d8] sm:$0xff] %v704
    %835 = vst [vmem:[#allocation2 + $0x3e0] sm:$0xff] %v538
    %836 = vst [vmem:[#allocation2 + $0x3e8] sm:$0xff] %v707
    %837 = vst [vmem:[#allocation2 + $0x3f0] sm:$0xff] %v540
    %838 = vst [vmem:[#allocation2 + $0x3f8] sm:$0xff] %v709
    // Predicated region
    $region14: #{rnn_lm_forward.3} parent=1 // pred_check
      _
    $region15: #{rnn_lm_forward.3} parent=1 // pred_check_branch
      %840 = sbr.rel (0) target = $region17
    $region16: #{rnn_lm_forward.3} parent=1 // pred_region
      %842 = vsyncadd [#allocation3], 0
      %s843 = sshll.u32 [#allocation2], 4
      %s844 = int_to_ptr.vmem [resolvable:$true] %s843
      %s845 = sshll.u32 %s3, 4
      %s846 = int_to_ptr.hbm [resolvable:$true] %s845
      %851 = dma.vmem_to_hbm [thread:$0]  %s844, 16384, %s846, [#allocation3], 256, 256, 16
    $region17: #{rnn_lm_forward.3} parent=1 // pred_fallthru
      _
    // Predicated region
    $region18: #{rnn_lm_forward.3} parent=1 // pred_check
      _
    $region19: #{rnn_lm_forward.3} parent=1 // pred_check_branch
      %853 = sbr.rel (0) target = $region21
    $region20: #{rnn_lm_forward.3} parent=1 // pred_region
      %855 = dma.done [#allocation3], 16384
    $region21: #{rnn_lm_forward.3} parent=1 // pred_fallthru
      _
    %856 = vsyncpa [#allocation3], 1

// kernel: rnn_lm_forward.2
$region0: #{rnn_lm_forward.2}
  #allocation0 [shape = 'u32[]', space=smem, size = 0x4, offset = 0x4, fixed_abs, tag = 'smem constant byte address 0x4 - core index']
  #allocation1 [shape = 'u32[72,128]{1,0:T(1,128)}', space=vmem, size = 0x9000, scoped, tag = 'internal scratch']
  #allocation2 [shape = 'f32[128,512]{1,0:T(8,128)}', space=vmem, size = 0x40000, scoped, tag = 'scratch operand']
  #allocation3 [shape = 'bf16[8,128]{1,0:T(8,128)(2,1)}', space=vmem, size = 0x800, scoped, tag = 'scratch operand']
  #allocation4 [shape = 'f32[8,128]{1,0:T(8,128)}', space=vmem, size = 0x1000, scoped, tag = 'scratch operand']
  %s0 = inlined_call_operand.vmem [shape: bf16[512,32], index: 0, kind: input, shape index: {}]
  %s1 = inlined_call_operand.vmem [shape: f32[8,128], index: 1, kind: input, shape index: {}, may-alias: {1,2}]
  %s2 = inlined_call_operand.vmem [shape: f32[8,128], index: 2, kind: input, shape index: {}, may-alias: {1,2}]
  %s3 = inlined_call_operand.vmem [shape: bf16[32,512], index: 3, kind: input, shape index: {}]
  %s4 = inlined_call_operand.vmem [shape: bf16[128,512], index: 4, kind: input, shape index: {}]
  %s5 = inlined_call_operand.vmem [shape: f32[1,512], index: 5, kind: input, shape index: {}]
  %s6 = inlined_call_operand.vmem [shape: bf16[512,128], index: 6, kind: output, shape index: {0}]
  %s7 = inlined_call_operand.hbm [shape: f32[8,128], index: 7, kind: output, shape index: {1}]
  %s8 = inlined_call_operand.hbm [shape: f32[8,128], index: 8, kind: output, shape index: {2}]
  %9 = xla_tuple %s6, %s7, %s8
  %s10 = sld [smem:[#allocation0]]
  $region81: #{rnn_lm_forward.2} parent=0
    _
  %s12 = ssub.s32 1, %s10
  %s13 = scalar_select 0, %s12, %s10
  $region1: #{rnn_lm_forward.2} parent=0
    #allocation5 [shape = 'u8[4096]{0}', space=vmem, size = 0x1000, scoped, tag = 'output window, operand 1, single buffered']
    #allocation6 [shape = 's32[2]{0}', space=sflag, size = 0x8, scoped, tag = 'scoped memory for rnn_lm_forward.2']
    #allocation7 [shape = 'u8[4096]{0}', space=vmem, size = 0x1000, scoped, tag = 'output window, operand 2, single buffered']
    #allocation8 [shape = 's32[1]{0}', space=sflag, size = 0x4, scoped, tag = 'scoped memory for rnn_lm_forward.2']
    %14 = vsyncpa [#allocation6], 0
    %15 = vsyncpa [#allocation8], 0
    loop: start=0, step=1, limit=6
    $region2: #{rnn_lm_forward.2} parent=1 // loop_pre_header
      _
    $region3: #{rnn_lm_forward.2} parent=1 // loop_header
      %s17 = sphi 0, %s21
      %p18 = scmp.ge.s32.totalorder %s17, 6
      %s27 = sphi 0, %s29
      %s30 = sphi 0, %s27
      %s31 = sphi 0, %s30
      %s47 = sphi 0, %s31
      %s51 = sphi 0, %s51
      %s53 = sphi 0, %s51
      %s54 = sphi 0, %s53
      %s68 = sphi 0, %s54
      %s72 = sphi 0, %s72
      %s74 = sphi 0, %s72
      %s75 = sphi 0, %s74
      %s89 = sphi 0, %s75
      %s93 = sphi 0, %s93
      %s95 = sphi 0, %s93
      %s96 = sphi 0, %s95
      %s110 = sphi 0, %s96
      %s114 = sphi 0, %s114
      %s116 = sphi 0, %s114
      %s117 = sphi 0, %s116
      %s131 = sphi 0, %s117
      %s135 = sphi 0, %s135
      %s137 = sphi 0, %s135
      %s138 = sphi 0, %s137
      %s152 = sphi 0, %s138
      %s158 = sphi 0, %s160
      %s161 = sphi 0, %s158
      %s162 = sphi 0, %s161
      %s178 = sphi 0, %s162
      %s182 = sphi 0, %s182
      %s184 = sphi 0, %s182
      %s185 = sphi 0, %s184
      %s199 = sphi 0, %s185
      %s203 = sphi 0, %s203
      %s205 = sphi 0, %s203
      %s206 = sphi 0, %s205
      %s220 = sphi 0, %s206
    $region4: #{rnn_lm_forward.2} parent=1 // loop_header_branch
      %20 = sbr.rel (%p18) target = $region8
    $region5: #{rnn_lm_forward.2} parent=1 // loop_body
      %s22 = ssub.s32 %s17, 1
      %s23 = ssub.s32 %s17, 2
      %s24 = sadd.s32 %s17, 1
      %s25 = ssub.s32 %s17, %s24
      %p26 = scmp.eq.s32.totalorder %s25, 0
      %s28 = sadd.s32 %s27, 1
      %s29 = scalar_select %p26, %s27, %s28
      %p32 = pneg %p26
      %p33 = scmp.eq.s32.totalorder %s17, 3
      %p34 = por %p32, %p33
      %p35 = scmp.ne.s32.totalorder %s27, %s30
      %p36 = scmp.eq.s32.totalorder %s17, 0
      %p37 = por %p35, %p36
      %p38 = scmp.ne.s32.totalorder %s27, %s30
      %p39 = scmp.eq.s32.totalorder %s22, 3
      %p40 = por %p38, %p39
      %p41 = scmp.ne.s32.totalorder %s30, %s31
      %p42 = scmp.eq.s32.totalorder %s22, 0
      %p43 = por %p41, %p42
      %p44 = scmp.ne.s32.totalorder %s30, %s31
      %p45 = scmp.eq.s32.totalorder %s23, 3
      %p46 = por %p44, %p45
      %p48 = scmp.ne.s32.totalorder %s31, %s47
      %p49 = scmp.eq.s32.totalorder %s23, 0
      %p50 = por %p48, %p49
      %s52 = sadd.s32 %s51, 1
      %p55 = scmp.eq.s32.totalorder %s17, 3
      %p56 = scmp.ne.s32.totalorder %s51, %s53
      %p57 = scmp.eq.s32.totalorder %s17, 0
      %p58 = por %p56, %p57
      %p59 = scmp.ne.s32.totalorder %s51, %s53
      %p60 = scmp.eq.s32.totalorder %s22, 3
      %p61 = por %p59, %p60
      %p62 = scmp.ne.s32.totalorder %s53, %s54
      %p63 = scmp.eq.s32.totalorder %s22, 0
      %p64 = por %p62, %p63
      %p65 = scmp.ne.s32.totalorder %s53, %s54
      %p66 = scmp.eq.s32.totalorder %s23, 3
      %p67 = por %p65, %p66
      %p69 = scmp.ne.s32.totalorder %s54, %s68
      %p70 = scmp.eq.s32.totalorder %s23, 0
      %p71 = por %p69, %p70
      %s73 = sadd.s32 %s72, 1
      %p76 = scmp.eq.s32.totalorder %s17, 3
      %p77 = scmp.ne.s32.totalorder %s72, %s74
      %p78 = scmp.eq.s32.totalorder %s17, 0
      %p79 = por %p77, %p78
      %p80 = scmp.ne.s32.totalorder %s72, %s74
      %p81 = scmp.eq.s32.totalorder %s22, 3
      %p82 = por %p80, %p81
      %p83 = scmp.ne.s32.totalorder %s74, %s75
      %p84 = scmp.eq.s32.totalorder %s22, 0
      %p85 = por %p83, %p84
      %p86 = scmp.ne.s32.totalorder %s74, %s75
      %p87 = scmp.eq.s32.totalorder %s23, 3
      %p88 = por %p86, %p87
      %p90 = scmp.ne.s32.totalorder %s75, %s89
      %p91 = scmp.eq.s32.totalorder %s23, 0
      %p92 = por %p90, %p91
      %s94 = sadd.s32 %s93, 1
      %p97 = scmp.eq.s32.totalorder %s17, 3
      %p98 = scmp.ne.s32.totalorder %s93, %s95
      %p99 = scmp.eq.s32.totalorder %s17, 0
      %p100 = por %p98, %p99
      %p101 = scmp.ne.s32.totalorder %s93, %s95
      %p102 = scmp.eq.s32.totalorder %s22, 3
      %p103 = por %p101, %p102
      %p104 = scmp.ne.s32.totalorder %s95, %s96
      %p105 = scmp.eq.s32.totalorder %s22, 0
      %p106 = por %p104, %p105
      %p107 = scmp.ne.s32.totalorder %s95, %s96
      %p108 = scmp.eq.s32.totalorder %s23, 3
      %p109 = por %p107, %p108
      %p111 = scmp.ne.s32.totalorder %s96, %s110
      %p112 = scmp.eq.s32.totalorder %s23, 0
      %p113 = por %p111, %p112
      %s115 = sadd.s32 %s114, 1
      %p118 = scmp.eq.s32.totalorder %s17, 3
      %p119 = scmp.ne.s32.totalorder %s114, %s116
      %p120 = scmp.eq.s32.totalorder %s17, 0
      %p121 = por %p119, %p120
      %p122 = scmp.ne.s32.totalorder %s114, %s116
      %p123 = scmp.eq.s32.totalorder %s22, 3
      %p124 = por %p122, %p123
      %p125 = scmp.ne.s32.totalorder %s116, %s117
      %p126 = scmp.eq.s32.totalorder %s22, 0
      %p127 = por %p125, %p126
      %p128 = scmp.ne.s32.totalorder %s116, %s117
      %p129 = scmp.eq.s32.totalorder %s23, 3
      %p130 = por %p128, %p129
      %p132 = scmp.ne.s32.totalorder %s117, %s131
      %p133 = scmp.eq.s32.totalorder %s23, 0
      %p134 = por %p132, %p133
      %s136 = sadd.s32 %s135, 1
      %p139 = scmp.eq.s32.totalorder %s17, 3
      %p140 = scmp.ne.s32.totalorder %s135, %s137
      %p141 = scmp.eq.s32.totalorder %s17, 0
      %p142 = por %p140, %p141
      %p143 = scmp.ne.s32.totalorder %s135, %s137
      %p144 = scmp.eq.s32.totalorder %s22, 3
      %p145 = por %p143, %p144
      %p146 = scmp.ne.s32.totalorder %s137, %s138
      %p147 = scmp.eq.s32.totalorder %s22, 0
      %p148 = por %p146, %p147
      %p149 = scmp.ne.s32.totalorder %s137, %s138
      %p150 = scmp.eq.s32.totalorder %s23, 3
      %p151 = por %p149, %p150
      %p153 = scmp.ne.s32.totalorder %s138, %s152
      %p154 = scmp.eq.s32.totalorder %s23, 0
      %p155 = por %p153, %p154
      %s156 = ssub.s32 %s17, %s24
      %p157 = scmp.eq.s32.totalorder %s156, 0
      %s159 = sadd.s32 %s158, 1
      %s160 = scalar_select %p157, %s158, %s159
      %p163 = pneg %p157
      %p164 = scmp.eq.s32.totalorder %s17, 3
      %p165 = por %p163, %p164
      %p166 = scmp.ne.s32.totalorder %s158, %s161
      %p167 = scmp.eq.s32.totalorder %s17, 0
      %p168 = por %p166, %p167
      %p169 = scmp.ne.s32.totalorder %s158, %s161
      %p170 = scmp.eq.s32.totalorder %s22, 3
      %p171 = por %p169, %p170
      %p172 = scmp.ne.s32.totalorder %s161, %s162
      %p173 = scmp.eq.s32.totalorder %s22, 0
      %p174 = por %p172, %p173
      %p175 = scmp.ne.s32.totalorder %s161, %s162
      %p176 = scmp.eq.s32.totalorder %s23, 3
      %p177 = por %p175, %p176
      %p179 = scmp.ne.s32.totalorder %s162, %s178
      %p180 = scmp.eq.s32.totalorder %s23, 0
      %p181 = por %p179, %p180
      %s183 = sadd.s32 %s182, 1
      %p186 = scmp.eq.s32.totalorder %s17, 3
      %p187 = scmp.ne.s32.totalorder %s182, %s184
      %p188 = scmp.eq.s32.totalorder %s17, 0
      %p189 = por %p187, %p188
      %p190 = scmp.ne.s32.totalorder %s182, %s184
      %p191 = scmp.eq.s32.totalorder %s22, 3
      %p192 = por %p190, %p191
      %p193 = scmp.ne.s32.totalorder %s184, %s185
      %p194 = scmp.eq.s32.totalorder %s22, 0
      %p195 = por %p193, %p194
      %p196 = scmp.ne.s32.totalorder %s184, %s185
      %p197 = scmp.eq.s32.totalorder %s23, 3
      %p198 = por %p196, %p197
      %p200 = scmp.ne.s32.totalorder %s185, %s199
      %p201 = scmp.eq.s32.totalorder %s23, 0
      %p202 = por %p200, %p201
      %s204 = sadd.s32 %s203, 1
      %p207 = scmp.eq.s32.totalorder %s17, 3
      %p208 = scmp.ne.s32.totalorder %s203, %s205
      %p209 = scmp.eq.s32.totalorder %s17, 0
      %p210 = por %p208, %p209
      %p211 = scmp.ne.s32.totalorder %s203, %s205
      %p212 = scmp.eq.s32.totalorder %s22, 3
      %p213 = por %p211, %p212
      %p214 = scmp.ne.s32.totalorder %s205, %s206
      %p215 = scmp.eq.s32.totalorder %s22, 0
      %p216 = por %p214, %p215
      %p217 = scmp.ne.s32.totalorder %s205, %s206
      %p218 = scmp.eq.s32.totalorder %s23, 3
      %p219 = por %p217, %p218
      %p221 = scmp.ne.s32.totalorder %s206, %s220
      %p222 = scmp.eq.s32.totalorder %s23, 0
      %p223 = por %p221, %p222
      %p224 = scmp.le.s32.totalorder 1, %s17
      %p225 = scmp.lt.s32.totalorder %s17, 5
      %p226 = pnand %p224, %p225
      %p227 = pneg %p226
      // Predicated region
      $region9: #{rnn_lm_forward.2} parent=5 // pred_check
        _
      $region10: #{rnn_lm_forward.2} parent=5 // pred_check_branch
        %229 = sbr.rel (%p226) target = $region12
      $region11: #{rnn_lm_forward.2} parent=5 // pred_region
        %s230 = ssub.s32 %s17, 1
        // Predicated region
        $region13: #{rnn_lm_forward.2} parent=11 // pred_check
          %p231 = pneg %p64
        $region14: #{rnn_lm_forward.2} parent=11 // pred_check_branch
          %233 = sbr.rel (%p231) target = $region16
        $region15: #{rnn_lm_forward.2} parent=11 // pred_region
          _
        $region16: #{rnn_lm_forward.2} parent=11 // pred_fallthru
          _
        // Predicated region
        $region17: #{rnn_lm_forward.2} parent=11 // pred_check
          %p234 = pneg %p85
        $region18: #{rnn_lm_forward.2} parent=11 // pred_check_branch
          %236 = sbr.rel (%p234) target = $region20
        $region19: #{rnn_lm_forward.2} parent=11 // pred_region
          _
        $region20: #{rnn_lm_forward.2} parent=11 // pred_fallthru
          _
        // Predicated region
        $region21: #{rnn_lm_forward.2} parent=11 // pred_check
          %p237 = pneg %p106
        $region22: #{rnn_lm_forward.2} parent=11 // pred_check_branch
          %239 = sbr.rel (%p237) target = $region24
        $region23: #{rnn_lm_forward.2} parent=11 // pred_region
          _
        $region24: #{rnn_lm_forward.2} parent=11 // pred_fallthru
          _
        // Predicated region
        $region25: #{rnn_lm_forward.2} parent=11 // pred_check
          %p240 = pneg %p127
        $region26: #{rnn_lm_forward.2} parent=11 // pred_check_branch
          %242 = sbr.rel (%p240) target = $region28
        $region27: #{rnn_lm_forward.2} parent=11 // pred_region
          _
        $region28: #{rnn_lm_forward.2} parent=11 // pred_fallthru
          _
        // Predicated region
        $region29: #{rnn_lm_forward.2} parent=11 // pred_check
          %p243 = pneg %p148
        $region30: #{rnn_lm_forward.2} parent=11 // pred_check_branch
          %245 = sbr.rel (%p243) target = $region32
        $region31: #{rnn_lm_forward.2} parent=11 // pred_region
          _
        $region32: #{rnn_lm_forward.2} parent=11 // pred_fallthru
          _
      $region12: #{rnn_lm_forward.2} parent=5 // pred_fallthru
        _
      %p246 = scmp.lt.s32.totalorder %s17, 4
      // Predicated region
      $region33: #{rnn_lm_forward.2} parent=5 // pred_check
        %p247 = pneg %p246
      $region34: #{rnn_lm_forward.2} parent=5 // pred_check_branch
        %249 = sbr.rel (%p247) target = $region36
      $region35: #{rnn_lm_forward.2} parent=5 // pred_region
        // Predicated region
        $region37: #{rnn_lm_forward.2} parent=35 // pred_check
          %p250 = pneg %p37
        $region38: #{rnn_lm_forward.2} parent=35 // pred_check_branch
          %252 = sbr.rel (%p250) target = $region40
        $region39: #{rnn_lm_forward.2} parent=35 // pred_region
          %s253 = smul.u32 16, %s17
          %p254 = scmp.lt.s32.totalorder %s253, 63
          %s255 = scalar_select %p254, %s253, 63
          %s256 = smul.addr %s255, 4
          %s257 = scalar_lea.vmem %s0, %s256
          %s258 = smul.u32 16, %s17
        $region40: #{rnn_lm_forward.2} parent=35 // pred_fallthru
          _
      $region36: #{rnn_lm_forward.2} parent=5 // pred_fallthru
        _
      %p259 = scmp.le.s32.totalorder 1, %s17
      %p260 = scmp.lt.s32.totalorder %s17, 5
      %p261 = pnand %p259, %p260
      %p262 = pneg %p261
      // Predicated region
      $region41: #{rnn_lm_forward.2} parent=5 // pred_check
        _
      $region42: #{rnn_lm_forward.2} parent=5 // pred_check_branch
        %264 = sbr.rel (%p261) target = $region44
      $region43: #{rnn_lm_forward.2} parent=5 // pred_region
        %s265 = ssub.s32 %s17, 1
        %s266 = smul.u32 16, %s22
        %p267 = scmp.lt.s32.totalorder %s266, 63
        %s268 = scalar_select %p267, %s266, 63
        %s269 = smul.addr %s268, 4
        %s270 = scalar_lea.vmem %s0, %s269
        %p271 = pneg %p43
        %p272 = pneg %p40
        %p273 = pneg %p64
        %p274 = pneg %p61
        %p275 = pneg %p85
        %p276 = pneg %p82
        %p277 = pneg %p106
        %p278 = pneg %p103
        %p279 = pneg %p127
        %p280 = pneg %p124
        %p281 = pneg %p148
        %p282 = pneg %p145
        %p283 = pneg %p174
        %p284 = pneg %p171
        %s285 = smul.u32 16, %s22
        %p286 = scmp.lt.s32.totalorder %s285, 63
        %s287 = scalar_select %p286, %s285, 63
        %s288 = smul.addr %s287, 4
        %s289 = scalar_lea.vmem %s6, %s288
        %p290 = pneg %p195
        %p291 = pneg %p192
        %p292 = pneg %p216
        %p293 = pneg %p213
        %s294 = smul.u32 16, %s22
        %p295 = scmp.lt.s32.totalorder %s294, 63
        %s296 = scalar_select %p295, %s294, 63
        %s297 = smul.addr %s296, 4
        %s298 = scalar_lea.vmem %s0, %s297
        %s299 = smul.u32 16, %s22
        %s300 = smul.u32 16, %s22
        %p301 = scmp.lt.s32.totalorder %s300, 63
        %s302 = scalar_select %p301, %s300, 63
        %s303 = smul.addr %s302, 4
        %s304 = scalar_lea.vmem %s6, %s303
        %s305 = smul.u32 16, %s22
        %p307 = scmp.eq.s32.totalorder %s22, 0
        // Predicated region
        $region45: #{rnn_lm_forward.2} parent=43 // pred_check
          %p308 = pneg %p307
        $region46: #{rnn_lm_forward.2} parent=43 // pred_check_branch
          %310 = sbr.rel (%p308) target = $region48
        $region47: #{rnn_lm_forward.2} parent=43 // pred_region
          %v311 = vld [vmem:[%s1] sm:$0xff]
          %v312 = vpack.c.bf16 %v311, %v311
          %313 = vst [vmem:[#allocation3] sm:$0xf] %v312
          %v314 = vld [vmem:[%s2] sm:$0xff]
          %315 = vst [vmem:[#allocation4] sm:$0xff] %v314
        $region48: #{rnn_lm_forward.2} parent=43 // pred_fallthru
          _
        %v316 = vld [vmem:[%s298] sm:$0xf]
        %v317 = vld [vmem:[%s298 + $0x4] sm:$0xf]
        %v318 = vld [vmem:[%s298 + $0x8] sm:$0xf]
        %v319 = vld [vmem:[%s298 + $0xc] sm:$0xf]
        %v320 = vld [vmem:[%s298 + $0x10] sm:$0xf]
        %v321 = vld [vmem:[%s298 + $0x14] sm:$0xf]
        %v322 = vld [vmem:[%s298 + $0x18] sm:$0xf]
        %v323 = vld [vmem:[%s298 + $0x1c] sm:$0xf]
        %v324 = vld [vmem:[%s298 + $0x20] sm:$0xf]
        %v325 = vld [vmem:[%s298 + $0x24] sm:$0xf]
        %v326 = vld [vmem:[%s298 + $0x28] sm:$0xf]
        %v327 = vld [vmem:[%s298 + $0x2c] sm:$0xf]
        %v328 = vld [vmem:[%s298 + $0x30] sm:$0xf]
        %v329 = vld [vmem:[%s298 + $0x34] sm:$0xf]
        %v330 = vld [vmem:[%s298 + $0x38] sm:$0xf]
        %v331 = vld [vmem:[%s298 + $0x3c] sm:$0xf]
        %v332 = vld [vmem:[%s3] sm:$0xff]
        %v333 = vld [vmem:[%s3 + $0x8] sm:$0xff]
        %v334 = vld [vmem:[%s3 + $0x10] sm:$0xff]
        %v335 = vld [vmem:[%s3 + $0x18] sm:$0xff]
        %v336 = vld [vmem:[%s3 + $0x20] sm:$0xff]
        %v337 = vld [vmem:[%s3 + $0x28] sm:$0xff]
        %v338 = vld [vmem:[%s3 + $0x30] sm:$0xff]
        %v339 = vld [vmem:[%s3 + $0x38] sm:$0xff]
        %v340 = vld [vmem:[%s5] sm:$0xf]
        %v342 = vperm.slane %v340, 0
        %v343 = vperm.slane %v340, 1
        %v344 = vperm.slane %v340, 2
        %v345 = vperm.slane %v340, 3
        %v366 = vunpack.c.l.b16 %v316
        %v367 = vunpack.c.l.b16 %v317
        %v368 = vunpack.c.l.b16 %v318
        %v369 = vunpack.c.l.b16 %v319
        %v370 = vunpack.c.l.b16 %v320
        %v371 = vunpack.c.l.b16 %v321
        %v372 = vunpack.c.l.b16 %v322
        %v373 = vunpack.c.l.b16 %v323
        %v374 = vunpack.c.l.b16 %v324
        %v375 = vunpack.c.l.b16 %v325
        %v376 = vunpack.c.l.b16 %v326
        %v377 = vunpack.c.l.b16 %v327
        %v378 = vunpack.c.l.b16 %v328
        %v379 = vunpack.c.l.b16 %v329
        %v380 = vunpack.c.l.b16 %v330
        %v381 = vunpack.c.l.b16 %v331
        %v382 = vpack.c.b16 %v367, %v366
        %v383 = vpack.c.b16 %v369, %v368
        %v384 = vpack.c.b16 %v371, %v370
        %v385 = vpack.c.b16 %v373, %v372
        %v386 = vpack.c.b16 %v375, %v374
        %v387 = vpack.c.b16 %v377, %v376
        %v388 = vpack.c.b16 %v379, %v378
        %v389 = vpack.c.b16 %v381, %v380
        %v398 = vunpack.c.l.b16 %v332
        %v399 = vunpack.c.h.b16 %v332
        %v400 = vunpack.c.l.b16 %v333
        %v401 = vunpack.c.h.b16 %v333
        %v402 = vunpack.c.l.b16 %v334
        %v403 = vunpack.c.h.b16 %v334
        %v404 = vunpack.c.l.b16 %v335
        %v405 = vunpack.c.h.b16 %v335
        %v406 = vunpack.c.l.b16 %v336
        %v407 = vunpack.c.h.b16 %v336
        %v408 = vunpack.c.l.b16 %v337
        %v409 = vunpack.c.h.b16 %v337
        %v410 = vunpack.c.l.b16 %v338
        %v411 = vunpack.c.h.b16 %v338
        %v412 = vunpack.c.l.b16 %v339
        %v413 = vunpack.c.h.b16 %v339
        %v414 = vpack.c.b16 %v402, %v398
        %v415 = vpack.c.b16 %v403, %v399
        %v416 = vpack.c.b16 %v404, %v400
        %v417 = vpack.c.b16 %v405, %v401
        %v418 = vpack.c.b16 %v410, %v406
        %v419 = vpack.c.b16 %v411, %v407
        %v420 = vpack.c.b16 %v412, %v408
        %v421 = vpack.c.b16 %v413, %v409
        %vm430 = vcmask 261120
        %v432 = vsel %vm430, %v382, 0
        %v435 = vsel %vm430, %v383, 0
        %v438 = vsel %vm430, %v384, 0
        %v441 = vsel %vm430, %v385, 0
        %v444 = vsel %vm430, %v386, 0
        %v447 = vsel %vm430, %v387, 0
        %v450 = vsel %vm430, %v388, 0
        %v453 = vsel %vm430, %v389, 0
        %455 = vmatpush.bf16.msra.mxu0 0
        %456 = vmatpush.bf16.msra.mxu0 0
        %457 = vmatpush.bf16.msra.mxu0 0
        %458 = vmatpush.bf16.msra.mxu0 0
        %459 = vmatpush.bf16.msra.mxu0 0
        %460 = vmatpush.bf16.msra.mxu0 0
        %461 = vmatpush.bf16.msra.mxu0 %v418
        %462 = vmatpush.bf16.msra.mxu0 %v414
        %463 = vmatmul.bf16.gmra.mxu0 %v432
        %v464 = vpop.f32.mrf.mxu0
        %v465 = vadd.f32 %v342, %v464
        %v466 = vpop.f32.mrf.mxu0
        %v467 = vadd.f32 %v342, %v466
        %468 = vmatmul.bf16.gmra.mxu0 %v435
        %v469 = vpop.f32.mrf.mxu0
        %v470 = vadd.f32 %v342, %v469
        %v471 = vpop.f32.mrf.mxu0
        %v472 = vadd.f32 %v342, %v471
        %473 = vmatmul.bf16.gmra.mxu0 %v438
        %v474 = vpop.f32.mrf.mxu0
        %v475 = vadd.f32 %v342, %v474
        %v476 = vpop.f32.mrf.mxu0
        %v477 = vadd.f32 %v342, %v476
        %478 = vmatmul.bf16.gmra.mxu0 %v441
        %v479 = vpop.f32.mrf.mxu0
        %v480 = vadd.f32 %v342, %v479
        %v481 = vpop.f32.mrf.mxu0
        %v482 = vadd.f32 %v342, %v481
        %483 = vmatmul.bf16.gmra.mxu0 %v444
        %v484 = vpop.f32.mrf.mxu0
        %v485 = vadd.f32 %v342, %v484
        %v486 = vpop.f32.mrf.mxu0
        %v487 = vadd.f32 %v342, %v486
        %488 = vmatmul.bf16.gmra.mxu0 %v447
        %v489 = vpop.f32.mrf.mxu0
        %v490 = vadd.f32 %v342, %v489
        %v491 = vpop.f32.mrf.mxu0
        %v492 = vadd.f32 %v342, %v491
        %493 = vmatmul.bf16.gmra.mxu0 %v450
        %v494 = vpop.f32.mrf.mxu0
        %v495 = vadd.f32 %v342, %v494
        %v496 = vpop.f32.mrf.mxu0
        %v497 = vadd.f32 %v342, %v496
        %498 = vmatmul.bf16.gmra.mxu0 %v453
        %v499 = vpop.f32.mrf.mxu0
        %v500 = vadd.f32 %v342, %v499
        %v501 = vpop.f32.mrf.mxu0
        %v502 = vadd.f32 %v342, %v501
        %503 = vdwg.mxu0
        %504 = vmatpush.bf16.msra.mxu0 0
        %505 = vmatpush.bf16.msra.mxu0 0
        %506 = vmatpush.bf16.msra.mxu0 0
        %507 = vmatpush.bf16.msra.mxu0 0
        %508 = vmatpush.bf16.msra.mxu0 0
        %509 = vmatpush.bf16.msra.mxu0 0
        %510 = vmatpush.bf16.msra.mxu0 %v419
        %511 = vmatpush.bf16.msra.mxu0 %v415
        %512 = vmatmul.bf16.gmra.mxu0 %v432
        %v513 = vpop.f32.mrf.mxu0
        %v514 = vadd.f32 %v343, %v513
        %v515 = vpop.f32.mrf.mxu0
        %v516 = vadd.f32 %v343, %v515
        %517 = vmatmul.bf16.gmra.mxu0 %v435
        %v518 = vpop.f32.mrf.mxu0
        %v519 = vadd.f32 %v343, %v518
        %v520 = vpop.f32.mrf.mxu0
        %v521 = vadd.f32 %v343, %v520
        %522 = vmatmul.bf16.gmra.mxu0 %v438
        %v523 = vpop.f32.mrf.mxu0
        %v524 = vadd.f32 %v343, %v523
        %v525 = vpop.f32.mrf.mxu0
        %v526 = vadd.f32 %v343, %v525
        %527 = vmatmul.bf16.gmra.mxu0 %v441
        %v528 = vpop.f32.mrf.mxu0
        %v529 = vadd.f32 %v343, %v528
        %v530 = vpop.f32.mrf.mxu0
        %v531 = vadd.f32 %v343, %v530
        %532 = vmatmul.bf16.gmra.mxu0 %v444
        %v533 = vpop.f32.mrf.mxu0
        %v534 = vadd.f32 %v343, %v533
        %v535 = vpop.f32.mrf.mxu0
        %v536 = vadd.f32 %v343, %v535
        %537 = vmatmul.bf16.gmra.mxu0 %v447
        %v538 = vpop.f32.mrf.mxu0
        %v539 = vadd.f32 %v343, %v538
        %v540 = vpop.f32.mrf.mxu0
        %v541 = vadd.f32 %v343, %v540
        %542 = vmatmul.bf16.gmra.mxu0 %v450
        %v543 = vpop.f32.mrf.mxu0
        %v544 = vadd.f32 %v343, %v543
        %v545 = vpop.f32.mrf.mxu0
        %v546 = vadd.f32 %v343, %v545
        %547 = vmatmul.bf16.gmra.mxu0 %v453
        %v548 = vpop.f32.mrf.mxu0
        %v549 = vadd.f32 %v343, %v548
        %v550 = vpop.f32.mrf.mxu0
        %v551 = vadd.f32 %v343, %v550
        %552 = vdwg.mxu0
        %553 = vmatpush.bf16.msra.mxu0 0
        %554 = vmatpush.bf16.msra.mxu0 0
        %555 = vmatpush.bf16.msra.mxu0 0
        %556 = vmatpush.bf16.msra.mxu0 0
        %557 = vmatpush.bf16.msra.mxu0 0
        %558 = vmatpush.bf16.msra.mxu0 0
        %559 = vmatpush.bf16.msra.mxu0 %v420
        %560 = vmatpush.bf16.msra.mxu0 %v416
        %561 = vmatmul.bf16.gmra.mxu0 %v432
        %v562 = vpop.f32.mrf.mxu0
        %v563 = vadd.f32 %v344, %v562
        %v564 = vpop.f32.mrf.mxu0
        %v565 = vadd.f32 %v344, %v564
        %566 = vmatmul.bf16.gmra.mxu0 %v435
        %v567 = vpop.f32.mrf.mxu0
        %v568 = vadd.f32 %v344, %v567
        %v569 = vpop.f32.mrf.mxu0
        %v570 = vadd.f32 %v344, %v569
        %571 = vmatmul.bf16.gmra.mxu0 %v438
        %v572 = vpop.f32.mrf.mxu0
        %v573 = vadd.f32 %v344, %v572
        %v574 = vpop.f32.mrf.mxu0
        %v575 = vadd.f32 %v344, %v574
        %576 = vmatmul.bf16.gmra.mxu0 %v441
        %v577 = vpop.f32.mrf.mxu0
        %v578 = vadd.f32 %v344, %v577
        %v579 = vpop.f32.mrf.mxu0
        %v580 = vadd.f32 %v344, %v579
        %581 = vmatmul.bf16.gmra.mxu0 %v444
        %v582 = vpop.f32.mrf.mxu0
        %v583 = vadd.f32 %v344, %v582
        %v584 = vpop.f32.mrf.mxu0
        %v585 = vadd.f32 %v344, %v584
        %586 = vmatmul.bf16.gmra.mxu0 %v447
        %v587 = vpop.f32.mrf.mxu0
        %v588 = vadd.f32 %v344, %v587
        %v589 = vpop.f32.mrf.mxu0
        %v590 = vadd.f32 %v344, %v589
        %591 = vmatmul.bf16.gmra.mxu0 %v450
        %v592 = vpop.f32.mrf.mxu0
        %v593 = vadd.f32 %v344, %v592
        %v594 = vpop.f32.mrf.mxu0
        %v595 = vadd.f32 %v344, %v594
        %596 = vmatmul.bf16.gmra.mxu0 %v453
        %v597 = vpop.f32.mrf.mxu0
        %v598 = vadd.f32 %v344, %v597
        %v599 = vpop.f32.mrf.mxu0
        %v600 = vadd.f32 %v344, %v599
        %601 = vdwg.mxu0
        %602 = vmatpush.bf16.msra.mxu0 0
        %603 = vmatpush.bf16.msra.mxu0 0
        %604 = vmatpush.bf16.msra.mxu0 0
        %605 = vmatpush.bf16.msra.mxu0 0
        %606 = vmatpush.bf16.msra.mxu0 0
        %607 = vmatpush.bf16.msra.mxu0 0
        %608 = vmatpush.bf16.msra.mxu0 %v421
        %609 = vmatpush.bf16.msra.mxu0 %v417
        %610 = vmatmul.bf16.gmra.mxu0 %v432
        %v611 = vpop.f32.mrf.mxu0
        %v612 = vadd.f32 %v345, %v611
        %v613 = vpop.f32.mrf.mxu0
        %v614 = vadd.f32 %v345, %v613
        %615 = vmatmul.bf16.gmra.mxu0 %v435
        %v616 = vpop.f32.mrf.mxu0
        %v617 = vadd.f32 %v345, %v616
        %v618 = vpop.f32.mrf.mxu0
        %v619 = vadd.f32 %v345, %v618
        %620 = vmatmul.bf16.gmra.mxu0 %v438
        %v621 = vpop.f32.mrf.mxu0
        %v622 = vadd.f32 %v345, %v621
        %v623 = vpop.f32.mrf.mxu0
        %v624 = vadd.f32 %v345, %v623
        %625 = vmatmul.bf16.gmra.mxu0 %v441
        %v626 = vpop.f32.mrf.mxu0
        %v627 = vadd.f32 %v345, %v626
        %v628 = vpop.f32.mrf.mxu0
        %v629 = vadd.f32 %v345, %v628
        %630 = vmatmul.bf16.gmra.mxu0 %v444
        %v631 = vpop.f32.mrf.mxu0
        %v632 = vadd.f32 %v345, %v631
        %v633 = vpop.f32.mrf.mxu0
        %v634 = vadd.f32 %v345, %v633
        %635 = vmatmul.bf16.gmra.mxu0 %v447
        %v636 = vpop.f32.mrf.mxu0
        %v637 = vadd.f32 %v345, %v636
        %v638 = vpop.f32.mrf.mxu0
        %v639 = vadd.f32 %v345, %v638
        %640 = vmatmul.bf16.gmra.mxu0 %v450
        %v641 = vpop.f32.mrf.mxu0
        %v642 = vadd.f32 %v345, %v641
        %v643 = vpop.f32.mrf.mxu0
        %v644 = vadd.f32 %v345, %v643
        %645 = vmatmul.bf16.gmra.mxu0 %v453
        %v646 = vpop.f32.mrf.mxu0
        %v647 = vadd.f32 %v345, %v646
        %v648 = vpop.f32.mrf.mxu0
        %v649 = vadd.f32 %v345, %v648
        %650 = vdwg.mxu0
        %651 = vst [vmem:[#allocation2] sm:$0xff] %v465
        %652 = vst [vmem:[#allocation2 + $0x8] sm:$0xff] %v514
        %653 = vst [vmem:[#allocation2 + $0x10] sm:$0xff] %v563
        %654 = vst [vmem:[#allocation2 + $0x18] sm:$0xff] %v612
        %655 = vst [vmem:[#allocation2 + $0x20] sm:$0xff] %v467
        %656 = vst [vmem:[#allocation2 + $0x28] sm:$0xff] %v516
        %657 = vst [vmem:[#allocation2 + $0x30] sm:$0xff] %v565
        %658 = vst [vmem:[#allocation2 + $0x38] sm:$0xff] %v614
        %659 = vst [vmem:[#allocation2 + $0x40] sm:$0xff] %v470
        %660 = vst [vmem:[#allocation2 + $0x48] sm:$0xff] %v519
        %661 = vst [vmem:[#allocation2 + $0x50] sm:$0xff] %v568
        %662 = vst [vmem:[#allocation2 + $0x58] sm:$0xff] %v617
        %663 = vst [vmem:[#allocation2 + $0x60] sm:$0xff] %v472
        %664 = vst [vmem:[#allocation2 + $0x68] sm:$0xff] %v521
        %665 = vst [vmem:[#allocation2 + $0x70] sm:$0xff] %v570
        %666 = vst [vmem:[#allocation2 + $0x78] sm:$0xff] %v619
        %667 = vst [vmem:[#allocation2 + $0x80] sm:$0xff] %v475
        %668 = vst [vmem:[#allocation2 + $0x88] sm:$0xff] %v524
        %669 = vst [vmem:[#allocation2 + $0x90] sm:$0xff] %v573
        %670 = vst [vmem:[#allocation2 + $0x98] sm:$0xff] %v622
        %671 = vst [vmem:[#allocation2 + $0xa0] sm:$0xff] %v477
        %672 = vst [vmem:[#allocation2 + $0xa8] sm:$0xff] %v526
        %673 = vst [vmem:[#allocation2 + $0xb0] sm:$0xff] %v575
        %674 = vst [vmem:[#allocation2 + $0xb8] sm:$0xff] %v624
        %675 = vst [vmem:[#allocation2 + $0xc0] sm:$0xff] %v480
        %676 = vst [vmem:[#allocation2 + $0xc8] sm:$0xff] %v529
        %677 = vst [vmem:[#allocation2 + $0xd0] sm:$0xff] %v578
        %678 = vst [vmem:[#allocation2 + $0xd8] sm:$0xff] %v627
        %679 = vst [vmem:[#allocation2 + $0xe0] sm:$0xff] %v482
        %680 = vst [vmem:[#allocation2 + $0xe8] sm:$0xff] %v531
        %681 = vst [vmem:[#allocation2 + $0xf0] sm:$0xff] %v580
        %682 = vst [vmem:[#allocation2 + $0xf8] sm:$0xff] %v629
        %683 = vst [vmem:[#allocation2 + $0x100] sm:$0xff] %v485
        %684 = vst [vmem:[#allocation2 + $0x108] sm:$0xff] %v534
        %685 = vst [vmem:[#allocation2 + $0x110] sm:$0xff] %v583
        %686 = vst [vmem:[#allocation2 + $0x118] sm:$0xff] %v632
        %687 = vst [vmem:[#allocation2 + $0x120] sm:$0xff] %v487
        %688 = vst [vmem:[#allocation2 + $0x128] sm:$0xff] %v536
        %689 = vst [vmem:[#allocation2 + $0x130] sm:$0xff] %v585
        %690 = vst [vmem:[#allocation2 + $0x138] sm:$0xff] %v634
        %691 = vst [vmem:[#allocation2 + $0x140] sm:$0xff] %v490
        %692 = vst [vmem:[#allocation2 + $0x148] sm:$0xff] %v539
        %693 = vst [vmem:[#allocation2 + $0x150] sm:$0xff] %v588
        %694 = vst [vmem:[#allocation2 + $0x158] sm:$0xff] %v637
        %695 = vst [vmem:[#allocation2 + $0x160] sm:$0xff] %v492
        %696 = vst [vmem:[#allocation2 + $0x168] sm:$0xff] %v541
        %697 = vst [vmem:[#allocation2 + $0x170] sm:$0xff] %v590
        %698 = vst [vmem:[#allocation2 + $0x178] sm:$0xff] %v639
        %699 = vst [vmem:[#allocation2 + $0x180] sm:$0xff] %v495
        %700 = vst [vmem:[#allocation2 + $0x188] sm:$0xff] %v544
        %701 = vst [vmem:[#allocation2 + $0x190] sm:$0xff] %v593
        %702 = vst [vmem:[#allocation2 + $0x198] sm:$0xff] %v642
        %703 = vst [vmem:[#allocation2 + $0x1a0] sm:$0xff] %v497
        %704 = vst [vmem:[#allocation2 + $0x1a8] sm:$0xff] %v546
        %705 = vst [vmem:[#allocation2 + $0x1b0] sm:$0xff] %v595
        %706 = vst [vmem:[#allocation2 + $0x1b8] sm:$0xff] %v644
        %707 = vst [vmem:[#allocation2 + $0x1c0] sm:$0xff] %v500
        %708 = vst [vmem:[#allocation2 + $0x1c8] sm:$0xff] %v549
        %709 = vst [vmem:[#allocation2 + $0x1d0] sm:$0xff] %v598
        %710 = vst [vmem:[#allocation2 + $0x1d8] sm:$0xff] %v647
        %711 = vst [vmem:[#allocation2 + $0x1e0] sm:$0xff] %v502
        %712 = vst [vmem:[#allocation2 + $0x1e8] sm:$0xff] %v551
        %713 = vst [vmem:[#allocation2 + $0x1f0] sm:$0xff] %v600
        %714 = vst [vmem:[#allocation2 + $0x1f8] sm:$0xff] %v649
        %v715 = vld [vmem:[#allocation3] sm:$0xf]
        %v716 = vld [vmem:[#allocation4] sm:$0xff]
        %s717 = smul.u32 0, 4
        %s718 = smul.addr %s717, 8
        %s719 = scalar_lea.vmem [#allocation2], %s718
        %v720 = vld [vmem:[%s719] sm:$0xff]
        %v721 = vld [vmem:[%s719 + $0x8] sm:$0xff]
        %v722 = vld [vmem:[%s719 + $0x10] sm:$0xff]
        %v723 = vld [vmem:[%s719 + $0x18] sm:$0xff]
        %v724 = vld [vmem:[%s4] sm:$0xff]
        %v725 = vld [vmem:[%s4 + $0x8] sm:$0xff]
        %v726 = vld [vmem:[%s4 + $0x10] sm:$0xff]
        %v727 = vld [vmem:[%s4 + $0x18] sm:$0xff]
        %v728 = vld [vmem:[%s4 + $0x20] sm:$0xff]
        %v729 = vld [vmem:[%s4 + $0x28] sm:$0xff]
        %v730 = vld [vmem:[%s4 + $0x30] sm:$0xff]
        %v731 = vld [vmem:[%s4 + $0x38] sm:$0xff]
        %v732 = vld [vmem:[%s4 + $0x40] sm:$0xff]
        %v733 = vld [vmem:[%s4 + $0x48] sm:$0xff]
        %v734 = vld [vmem:[%s4 + $0x50] sm:$0xff]
        %v735 = vld [vmem:[%s4 + $0x58] sm:$0xff]
        %v736 = vld [vmem:[%s4 + $0x60] sm:$0xff]
        %v737 = vld [vmem:[%s4 + $0x68] sm:$0xff]
        %v738 = vld [vmem:[%s4 + $0x70] sm:$0xff]
        %v739 = vld [vmem:[%s4 + $0x78] sm:$0xff]
        %v740 = vld [vmem:[%s4 + $0x80] sm:$0xff]
        %v741 = vld [vmem:[%s4 + $0x88] sm:$0xff]
        %v742 = vld [vmem:[%s4 + $0x90] sm:$0xff]
        %v743 = vld [vmem:[%s4 + $0x98] sm:$0xff]
        %v744 = vld [vmem:[%s4 + $0xa0] sm:$0xff]
        %v745 = vld [vmem:[%s4 + $0xa8] sm:$0xff]
        %v746 = vld [vmem:[%s4 + $0xb0] sm:$0xff]
        %v747 = vld [vmem:[%s4 + $0xb8] sm:$0xff]
        %v748 = vld [vmem:[%s4 + $0xc0] sm:$0xff]
        %v749 = vld [vmem:[%s4 + $0xc8] sm:$0xff]
        %v750 = vld [vmem:[%s4 + $0xd0] sm:$0xff]
        %v751 = vld [vmem:[%s4 + $0xd8] sm:$0xff]
        %v752 = vld [vmem:[%s4 + $0xe0] sm:$0xff]
        %v753 = vld [vmem:[%s4 + $0xe8] sm:$0xff]
        %v754 = vld [vmem:[%s4 + $0xf0] sm:$0xff]
        %v755 = vld [vmem:[%s4 + $0xf8] sm:$0xff]
        %v788 = vunpack.c.l.b16 %v724
        %v789 = vunpack.c.h.b16 %v724
        %v790 = vunpack.c.l.b16 %v725
        %v791 = vunpack.c.h.b16 %v725
        %v792 = vunpack.c.l.b16 %v726
        %v793 = vunpack.c.h.b16 %v726
        %v794 = vunpack.c.l.b16 %v727
        %v795 = vunpack.c.h.b16 %v727
        %v796 = vunpack.c.l.b16 %v728
        %v797 = vunpack.c.h.b16 %v728
        %v798 = vunpack.c.l.b16 %v729
        %v799 = vunpack.c.h.b16 %v729
        %v800 = vunpack.c.l.b16 %v730
        %v801 = vunpack.c.h.b16 %v730
        %v802 = vunpack.c.l.b16 %v731
        %v803 = vunpack.c.h.b16 %v731
        %v804 = vunpack.c.l.b16 %v732
        %v805 = vunpack.c.h.b16 %v732
        %v806 = vunpack.c.l.b16 %v733
        %v807 = vunpack.c.h.b16 %v733
        %v808 = vunpack.c.l.b16 %v734
        %v809 = vunpack.c.h.b16 %v734
        %v810 = vunpack.c.l.b16 %v735
        %v811 = vunpack.c.h.b16 %v735
        %v812 = vunpack.c.l.b16 %v736
        %v813 = vunpack.c.h.b16 %v736
        %v814 = vunpack.c.l.b16 %v737
        %v815 = vunpack.c.h.b16 %v737
        %v816 = vunpack.c.l.b16 %v738
        %v817 = vunpack.c.h.b16 %v738
        %v818 = vunpack.c.l.b16 %v739
        %v819 = vunpack.c.h.b16 %v739
        %v820 = vunpack.c.l.b16 %v740
        %v821 = vunpack.c.h.b16 %v740
        %v822 = vunpack.c.l.b16 %v741
        %v823 = vunpack.c.h.b16 %v741
        %v824 = vunpack.c.l.b16 %v742
        %v825 = vunpack.c.h.b16 %v742
        %v826 = vunpack.c.l.b16 %v743
        %v827 = vunpack.c.h.b16 %v743
        %v828 = vunpack.c.l.b16 %v744
        %v829 = vunpack.c.h.b16 %v744
        %v830 = vunpack.c.l.b16 %v745
        %v831 = vunpack.c.h.b16 %v745
        %v832 = vunpack.c.l.b16 %v746
        %v833 = vunpack.c.h.b16 %v746
        %v834 = vunpack.c.l.b16 %v747
        %v835 = vunpack.c.h.b16 %v747
        %v836 = vunpack.c.l.b16 %v748
        %v837 = vunpack.c.h.b16 %v748
        %v838 = vunpack.c.l.b16 %v749
        %v839 = vunpack.c.h.b16 %v749
        %v840 = vunpack.c.l.b16 %v750
        %v841 = vunpack.c.h.b16 %v750
        %v842 = vunpack.c.l.b16 %v751
        %v843 = vunpack.c.h.b16 %v751
        %v844 = vunpack.c.l.b16 %v752
        %v845 = vunpack.c.h.b16 %v752
        %v846 = vunpack.c.l.b16 %v753
        %v847 = vunpack.c.h.b16 %v753
        %v848 = vunpack.c.l.b16 %v754
        %v849 = vunpack.c.h.b16 %v754
        %v850 = vunpack.c.l.b16 %v755
        %v851 = vunpack.c.h.b16 %v755
        %v852 = vpack.c.b16 %v792, %v788
        %v853 = vpack.c.b16 %v793, %v789
        %v854 = vpack.c.b16 %v794, %v790
        %v855 = vpack.c.b16 %v795, %v791
        %v856 = vpack.c.b16 %v800, %v796
        %v857 = vpack.c.b16 %v801, %v797
        %v858 = vpack.c.b16 %v802, %v798
        %v859 = vpack.c.b16 %v803, %v799
        %v860 = vpack.c.b16 %v808, %v804
        %v861 = vpack.c.b16 %v809, %v805
        %v862 = vpack.c.b16 %v810, %v806
        %v863 = vpack.c.b16 %v811, %v807
        %v864 = vpack.c.b16 %v816, %v812
        %v865 = vpack.c.b16 %v817, %v813
        %v866 = vpack.c.b16 %v818, %v814
        %v867 = vpack.c.b16 %v819, %v815
        %v868 = vpack.c.b16 %v824, %v820
        %v869 = vpack.c.b16 %v825, %v821
        %v870 = vpack.c.b16 %v826, %v822
        %v871 = vpack.c.b16 %v827, %v823
        %v872 = vpack.c.b16 %v832, %v828
        %v873 = vpack.c.b16 %v833, %v829
        %v874 = vpack.c.b16 %v834, %v830
        %v875 = vpack.c.b16 %v835, %v831
        %v876 = vpack.c.b16 %v840, %v836
        %v877 = vpack.c.b16 %v841, %v837
        %v878 = vpack.c.b16 %v842, %v838
        %v879 = vpack.c.b16 %v843, %v839
        %v880 = vpack.c.b16 %v848, %v844
        %v881 = vpack.c.b16 %v849, %v845
        %v882 = vpack.c.b16 %v850, %v846
        %v883 = vpack.c.b16 %v851, %v847
        %916 = vmatpush.bf16.msra.mxu0 %v880
        %917 = vmatpush.bf16.msra.mxu0 %v876
        %918 = vmatpush.bf16.msra.mxu0 %v872
        %919 = vmatpush.bf16.msra.mxu0 %v868
        %920 = vmatpush.bf16.msra.mxu0 %v864
        %921 = vmatpush.bf16.msra.mxu0 %v860
        %922 = vmatpush.bf16.msra.mxu0 %v856
        %923 = vmatpush.bf16.msra.mxu0 %v852
        %924 = vmatmul.bf16.gmra.mxu0 %v715
        %v925 = vpop.f32.mrf.mxu0
        %v926 = vadd.f32 0.0, %v925
        %v927 = vpop.f32.mrf.mxu0
        %928 = vdwg.mxu0
        %929 = vmatpush.bf16.msra.mxu0 %v881
        %930 = vmatpush.bf16.msra.mxu0 %v877
        %931 = vmatpush.bf16.msra.mxu0 %v873
        %932 = vmatpush.bf16.msra.mxu0 %v869
        %933 = vmatpush.bf16.msra.mxu0 %v865
        %934 = vmatpush.bf16.msra.mxu0 %v861
        %935 = vmatpush.bf16.msra.mxu0 %v857
        %936 = vmatpush.bf16.msra.mxu0 %v853
        %937 = vmatmul.bf16.gmra.mxu0 %v715
        %v938 = vpop.f32.mrf.mxu0
        %v939 = vadd.f32 0.0, %v938
        %v940 = vpop.f32.mrf.mxu0
        %941 = vdwg.mxu0
        %942 = vmatpush.bf16.msra.mxu0 %v882
        %943 = vmatpush.bf16.msra.mxu0 %v878
        %944 = vmatpush.bf16.msra.mxu0 %v874
        %945 = vmatpush.bf16.msra.mxu0 %v870
        %946 = vmatpush.bf16.msra.mxu0 %v866
        %947 = vmatpush.bf16.msra.mxu0 %v862
        %948 = vmatpush.bf16.msra.mxu0 %v858
        %949 = vmatpush.bf16.msra.mxu0 %v854
        %950 = vmatmul.bf16.gmra.mxu0 %v715
        %v951 = vpop.f32.mrf.mxu0
        %v952 = vadd.f32 0.0, %v951
        %v953 = vpop.f32.mrf.mxu0
        %954 = vdwg.mxu0
        %955 = vmatpush.bf16.msra.mxu0 %v883
        %956 = vmatpush.bf16.msra.mxu0 %v879
        %957 = vmatpush.bf16.msra.mxu0 %v875
        %958 = vmatpush.bf16.msra.mxu0 %v871
        %959 = vmatpush.bf16.msra.mxu0 %v867
        %960 = vmatpush.bf16.msra.mxu0 %v863
        %961 = vmatpush.bf16.msra.mxu0 %v859
        %962 = vmatpush.bf16.msra.mxu0 %v855
        %963 = vmatmul.bf16.gmra.mxu0 %v715
        %v964 = vpop.f32.mrf.mxu0
        %v965 = vadd.f32 0.0, %v964
        %v966 = vpop.f32.mrf.mxu0
        %967 = vdwg.mxu0
        %v968 = vadd.f32 %v720, %v926
        %v969 = vadd.f32 %v721, %v939
        %v970 = vadd.f32 %v722, %v952
        %v971 = vadd.f32 %v723, %v965
        %v972 = vxor.u32 %v968, 2147483648
        %v973 = vmul.f32 %v972, 1.442695
        %v974 = vpow.pop %v973
        %v975 = vadd.f32 %v974, 1.0
        %v976 = vrcp.pop %v975
        %v977 = vmul.f32 %v975, %v976
        %v978 = vsub.f32 1.0, %v977
        %v979 = vmul.f32 %v976, %v978
        %v980 = vadd.f32 %v976, %v979
        %vm981 = vweird.f32 %v975
        %vm982 = vweird.f32 %v976
        %vm983 = vmor %vm981, %vm982
        %v984 = vsel %vm983, %v976, %v980
        %v985 = vand.u32 2147483647, %v975
        %vm986 = vcmp.eq.f32.partialorder %v985, 8.507059e+37
        %v987 = vand.u32 %v975, 2147483648
        %v988 = vor.u32 1.1754944e-38, %v987
        %v989 = vsel %vm986, %v988, %v984
        %v990 = vmul.f32 1.0, %v989
        %v991 = vxor.u32 %v969, 2147483648
        %v992 = vmul.f32 %v991, 1.442695
        %v993 = vpow.pop %v992
        %v994 = vadd.f32 %v993, 1.0
        %v995 = vrcp.pop %v994
        %v996 = vmul.f32 %v994, %v995
        %v997 = vsub.f32 1.0, %v996
        %v998 = vmul.f32 %v995, %v997
        %v999 = vadd.f32 %v995, %v998
        %vm1000 = vweird.f32 %v994
        %vm1001 = vweird.f32 %v995
        %vm1002 = vmor %vm1000, %vm1001
        %v1003 = vsel %vm1002, %v995, %v999
        %v1004 = vand.u32 2147483647, %v994
        %vm1005 = vcmp.eq.f32.partialorder %v1004, 8.507059e+37
        %v1006 = vand.u32 %v994, 2147483648
        %v1007 = vor.u32 1.1754944e-38, %v1006
        %v1008 = vsel %vm1005, %v1007, %v1003
        %v1009 = vmul.f32 1.0, %v1008
        %v1010 = vtanh.pop %v970
        %v1011 = vxor.u32 %v971, 2147483648
        %v1012 = vmul.f32 %v1011, 1.442695
        %v1013 = vpow.pop %v1012
        %v1014 = vadd.f32 %v1013, 1.0
        %v1015 = vrcp.pop %v1014
        %v1016 = vmul.f32 %v1014, %v1015
        %v1017 = vsub.f32 1.0, %v1016
        %v1018 = vmul.f32 %v1015, %v1017
        %v1019 = vadd.f32 %v1015, %v1018
        %vm1020 = vweird.f32 %v1014
        %vm1021 = vweird.f32 %v1015
        %vm1022 = vmor %vm1020, %vm1021
        %v1023 = vsel %vm1022, %v1015, %v1019
        %v1024 = vand.u32 2147483647, %v1014
        %vm1025 = vcmp.eq.f32.partialorder %v1024, 8.507059e+37
        %v1026 = vand.u32 %v1014, 2147483648
        %v1027 = vor.u32 1.1754944e-38, %v1026
        %v1028 = vsel %vm1025, %v1027, %v1023
        %v1029 = vmul.f32 1.0, %v1028
        %v1030 = vmul.f32 %v1009, %v716
        %v1031 = vmul.f32 %v990, %v1010
        %v1032 = vadd.f32 %v1030, %v1031
        %v1033 = vtanh.pop %v1032
        %v1034 = vmul.f32 %v1029, %v1033
        %v1035 = vpack.c.bf16 %v1034, %v1034
        %1036 = vst [vmem:[%s304] sm:$0xf] %v1035
        %s1037 = smul.u32 1, 4
        %s1038 = smul.addr %s1037, 8
        %s1039 = scalar_lea.vmem [#allocation2], %s1038
        %v1040 = vld [vmem:[%s1039] sm:$0xff]
        %v1041 = vld [vmem:[%s1039 + $0x8] sm:$0xff]
        %v1042 = vld [vmem:[%s1039 + $0x10] sm:$0xff]
        %v1043 = vld [vmem:[%s1039 + $0x18] sm:$0xff]
        %v1044 = vld [vmem:[%s4] sm:$0xff]
        %v1045 = vld [vmem:[%s4 + $0x8] sm:$0xff]
        %v1046 = vld [vmem:[%s4 + $0x10] sm:$0xff]
        %v1047 = vld [vmem:[%s4 + $0x18] sm:$0xff]
        %v1048 = vld [vmem:[%s4 + $0x20] sm:$0xff]
        %v1049 = vld [vmem:[%s4 + $0x28] sm:$0xff]
        %v1050 = vld [vmem:[%s4 + $0x30] sm:$0xff]
        %v1051 = vld [vmem:[%s4 + $0x38] sm:$0xff]
        %v1052 = vld [vmem:[%s4 + $0x40] sm:$0xff]
        %v1053 = vld [vmem:[%s4 + $0x48] sm:$0xff]
        %v1054 = vld [vmem:[%s4 + $0x50] sm:$0xff]
        %v1055 = vld [vmem:[%s4 + $0x58] sm:$0xff]
        %v1056 = vld [vmem:[%s4 + $0x60] sm:$0xff]
        %v1057 = vld [vmem:[%s4 + $0x68] sm:$0xff]
        %v1058 = vld [vmem:[%s4 + $0x70] sm:$0xff]
        %v1059 = vld [vmem:[%s4 + $0x78] sm:$0xff]
        %v1060 = vld [vmem:[%s4 + $0x80] sm:$0xff]
        %v1061 = vld [vmem:[%s4 + $0x88] sm:$0xff]
        %v1062 = vld [vmem:[%s4 + $0x90] sm:$0xff]
        %v1063 = vld [vmem:[%s4 + $0x98] sm:$0xff]
        %v1064 = vld [vmem:[%s4 + $0xa0] sm:$0xff]
        %v1065 = vld [vmem:[%s4 + $0xa8] sm:$0xff]
        %v1066 = vld [vmem:[%s4 + $0xb0] sm:$0xff]
        %v1067 = vld [vmem:[%s4 + $0xb8] sm:$0xff]
        %v1068 = vld [vmem:[%s4 + $0xc0] sm:$0xff]
        %v1069 = vld [vmem:[%s4 + $0xc8] sm:$0xff]
        %v1070 = vld [vmem:[%s4 + $0xd0] sm:$0xff]
        %v1071 = vld [vmem:[%s4 + $0xd8] sm:$0xff]
        %v1072 = vld [vmem:[%s4 + $0xe0] sm:$0xff]
        %v1073 = vld [vmem:[%s4 + $0xe8] sm:$0xff]
        %v1074 = vld [vmem:[%s4 + $0xf0] sm:$0xff]
        %v1075 = vld [vmem:[%s4 + $0xf8] sm:$0xff]
        %v1108 = vunpack.c.l.b16 %v1044
        %v1109 = vunpack.c.h.b16 %v1044
        %v1110 = vunpack.c.l.b16 %v1045
        %v1111 = vunpack.c.h.b16 %v1045
        %v1112 = vunpack.c.l.b16 %v1046
        %v1113 = vunpack.c.h.b16 %v1046
        %v1114 = vunpack.c.l.b16 %v1047
        %v1115 = vunpack.c.h.b16 %v1047
        %v1116 = vunpack.c.l.b16 %v1048
        %v1117 = vunpack.c.h.b16 %v1048
        %v1118 = vunpack.c.l.b16 %v1049
        %v1119 = vunpack.c.h.b16 %v1049
        %v1120 = vunpack.c.l.b16 %v1050
        %v1121 = vunpack.c.h.b16 %v1050
        %v1122 = vunpack.c.l.b16 %v1051
        %v1123 = vunpack.c.h.b16 %v1051
        %v1124 = vunpack.c.l.b16 %v1052
        %v1125 = vunpack.c.h.b16 %v1052
        %v1126 = vunpack.c.l.b16 %v1053
        %v1127 = vunpack.c.h.b16 %v1053
        %v1128 = vunpack.c.l.b16 %v1054
        %v1129 = vunpack.c.h.b16 %v1054
        %v1130 = vunpack.c.l.b16 %v1055
        %v1131 = vunpack.c.h.b16 %v1055
        %v1132 = vunpack.c.l.b16 %v1056
        %v1133 = vunpack.c.h.b16 %v1056
        %v1134 = vunpack.c.l.b16 %v1057
        %v1135 = vunpack.c.h.b16 %v1057
        %v1136 = vunpack.c.l.b16 %v1058
        %v1137 = vunpack.c.h.b16 %v1058
        %v1138 = vunpack.c.l.b16 %v1059
        %v1139 = vunpack.c.h.b16 %v1059
        %v1140 = vunpack.c.l.b16 %v1060
        %v1141 = vunpack.c.h.b16 %v1060
        %v1142 = vunpack.c.l.b16 %v1061
        %v1143 = vunpack.c.h.b16 %v1061
        %v1144 = vunpack.c.l.b16 %v1062
        %v1145 = vunpack.c.h.b16 %v1062
        %v1146 = vunpack.c.l.b16 %v1063
        %v1147 = vunpack.c.h.b16 %v1063
        %v1148 = vunpack.c.l.b16 %v1064
        %v1149 = vunpack.c.h.b16 %v1064
        %v1150 = vunpack.c.l.b16 %v1065
        %v1151 = vunpack.c.h.b16 %v1065
        %v1152 = vunpack.c.l.b16 %v1066
        %v1153 = vunpack.c.h.b16 %v1066
        %v1154 = vunpack.c.l.b16 %v1067
        %v1155 = vunpack.c.h.b16 %v1067
        %v1156 = vunpack.c.l.b16 %v1068
        %v1157 = vunpack.c.h.b16 %v1068
        %v1158 = vunpack.c.l.b16 %v1069
        %v1159 = vunpack.c.h.b16 %v1069
        %v1160 = vunpack.c.l.b16 %v1070
        %v1161 = vunpack.c.h.b16 %v1070
        %v1162 = vunpack.c.l.b16 %v1071
        %v1163 = vunpack.c.h.b16 %v1071
        %v1164 = vunpack.c.l.b16 %v1072
        %v1165 = vunpack.c.h.b16 %v1072
        %v1166 = vunpack.c.l.b16 %v1073
        %v1167 = vunpack.c.h.b16 %v1073
        %v1168 = vunpack.c.l.b16 %v1074
        %v1169 = vunpack.c.h.b16 %v1074
        %v1170 = vunpack.c.l.b16 %v1075
        %v1171 = vunpack.c.h.b16 %v1075
        %v1172 = vpack.c.b16 %v1112, %v1108
        %v1173 = vpack.c.b16 %v1113, %v1109
        %v1174 = vpack.c.b16 %v1114, %v1110
        %v1175 = vpack.c.b16 %v1115, %v1111
        %v1176 = vpack.c.b16 %v1120, %v1116
        %v1177 = vpack.c.b16 %v1121, %v1117
        %v1178 = vpack.c.b16 %v1122, %v1118
        %v1179 = vpack.c.b16 %v1123, %v1119
        %v1180 = vpack.c.b16 %v1128, %v1124
        %v1181 = vpack.c.b16 %v1129, %v1125
        %v1182 = vpack.c.b16 %v1130, %v1126
        %v1183 = vpack.c.b16 %v1131, %v1127
        %v1184 = vpack.c.b16 %v1136, %v1132
        %v1185 = vpack.c.b16 %v1137, %v1133
        %v1186 = vpack.c.b16 %v1138, %v1134
        %v1187 = vpack.c.b16 %v1139, %v1135
        %v1188 = vpack.c.b16 %v1144, %v1140
        %v1189 = vpack.c.b16 %v1145, %v1141
        %v1190 = vpack.c.b16 %v1146, %v1142
        %v1191 = vpack.c.b16 %v1147, %v1143
        %v1192 = vpack.c.b16 %v1152, %v1148
        %v1193 = vpack.c.b16 %v1153, %v1149
        %v1194 = vpack.c.b16 %v1154, %v1150
        %v1195 = vpack.c.b16 %v1155, %v1151
        %v1196 = vpack.c.b16 %v1160, %v1156
        %v1197 = vpack.c.b16 %v1161, %v1157
        %v1198 = vpack.c.b16 %v1162, %v1158
        %v1199 = vpack.c.b16 %v1163, %v1159
        %v1200 = vpack.c.b16 %v1168, %v1164
        %v1201 = vpack.c.b16 %v1169, %v1165
        %v1202 = vpack.c.b16 %v1170, %v1166
        %v1203 = vpack.c.b16 %v1171, %v1167
        %1236 = vmatpush.bf16.msra.mxu0 %v1200
        %1237 = vmatpush.bf16.msra.mxu0 %v1196
        %1238 = vmatpush.bf16.msra.mxu0 %v1192
        %1239 = vmatpush.bf16.msra.mxu0 %v1188
        %1240 = vmatpush.bf16.msra.mxu0 %v1184
        %1241 = vmatpush.bf16.msra.mxu0 %v1180
        %1242 = vmatpush.bf16.msra.mxu0 %v1176
        %1243 = vmatpush.bf16.msra.mxu0 %v1172
        %1244 = vmatmul.bf16.gmra.mxu0 %v1035
        %v1245 = vpop.f32.mrf.mxu0
        %v1246 = vadd.f32 0.0, %v1245
        %v1247 = vpop.f32.mrf.mxu0
        %1248 = vdwg.mxu0
        %1249 = vmatpush.bf16.msra.mxu0 %v1201
        %1250 = vmatpush.bf16.msra.mxu0 %v1197
        %1251 = vmatpush.bf16.msra.mxu0 %v1193
        %1252 = vmatpush.bf16.msra.mxu0 %v1189
        %1253 = vmatpush.bf16.msra.mxu0 %v1185
        %1254 = vmatpush.bf16.msra.mxu0 %v1181
        %1255 = vmatpush.bf16.msra.mxu0 %v1177
        %1256 = vmatpush.bf16.msra.mxu0 %v1173
        %1257 = vmatmul.bf16.gmra.mxu0 %v1035
        %v1258 = vpop.f32.mrf.mxu0
        %v1259 = vadd.f32 0.0, %v1258
        %v1260 = vpop.f32.mrf.mxu0
        %1261 = vdwg.mxu0
        %1262 = vmatpush.bf16.msra.mxu0 %v1202
        %1263 = vmatpush.bf16.msra.mxu0 %v1198
        %1264 = vmatpush.bf16.msra.mxu0 %v1194
        %1265 = vmatpush.bf16.msra.mxu0 %v1190
        %1266 = vmatpush.bf16.msra.mxu0 %v1186
        %1267 = vmatpush.bf16.msra.mxu0 %v1182
        %1268 = vmatpush.bf16.msra.mxu0 %v1178
        %1269 = vmatpush.bf16.msra.mxu0 %v1174
        %1270 = vmatmul.bf16.gmra.mxu0 %v1035
        %v1271 = vpop.f32.mrf.mxu0
        %v1272 = vadd.f32 0.0, %v1271
        %v1273 = vpop.f32.mrf.mxu0
        %1274 = vdwg.mxu0
        %1275 = vmatpush.bf16.msra.mxu0 %v1203
        %1276 = vmatpush.bf16.msra.mxu0 %v1199
        %1277 = vmatpush.bf16.msra.mxu0 %v1195
        %1278 = vmatpush.bf16.msra.mxu0 %v1191
        %1279 = vmatpush.bf16.msra.mxu0 %v1187
        %1280 = vmatpush.bf16.msra.mxu0 %v1183
        %1281 = vmatpush.bf16.msra.mxu0 %v1179
        %1282 = vmatpush.bf16.msra.mxu0 %v1175
        %1283 = vmatmul.bf16.gmra.mxu0 %v1035
        %v1284 = vpop.f32.mrf.mxu0
        %v1285 = vadd.f32 0.0, %v1284
        %v1286 = vpop.f32.mrf.mxu0
        %1287 = vdwg.mxu0
        %v1288 = vadd.f32 %v1040, %v1246
        %v1289 = vadd.f32 %v1041, %v1259
        %v1290 = vadd.f32 %v1042, %v1272
        %v1291 = vadd.f32 %v1043, %v1285
        %v1292 = vxor.u32 %v1288, 2147483648
        %v1293 = vmul.f32 %v1292, 1.442695
        %v1294 = vpow.pop %v1293
        %v1295 = vadd.f32 %v1294, 1.0
        %v1296 = vrcp.pop %v1295
        %v1297 = vmul.f32 %v1295, %v1296
        %v1298 = vsub.f32 1.0, %v1297
        %v1299 = vmul.f32 %v1296, %v1298
        %v1300 = vadd.f32 %v1296, %v1299
        %vm1301 = vweird.f32 %v1295
        %vm1302 = vweird.f32 %v1296
        %vm1303 = vmor %vm1301, %vm1302
        %v1304 = vsel %vm1303, %v1296, %v1300
        %v1305 = vand.u32 2147483647, %v1295
        %vm1306 = vcmp.eq.f32.partialorder %v1305, 8.507059e+37
        %v1307 = vand.u32 %v1295, 2147483648
        %v1308 = vor.u32 1.1754944e-38, %v1307
        %v1309 = vsel %vm1306, %v1308, %v1304
        %v1310 = vmul.f32 1.0, %v1309
        %v1311 = vxor.u32 %v1289, 2147483648
        %v1312 = vmul.f32 %v1311, 1.442695
        %v1313 = vpow.pop %v1312
        %v1314 = vadd.f32 %v1313, 1.0
        %v1315 = vrcp.pop %v1314
        %v1316 = vmul.f32 %v1314, %v1315
        %v1317 = vsub.f32 1.0, %v1316
        %v1318 = vmul.f32 %v1315, %v1317
        %v1319 = vadd.f32 %v1315, %v1318
        %vm1320 = vweird.f32 %v1314
        %vm1321 = vweird.f32 %v1315
        %vm1322 = vmor %vm1320, %vm1321
        %v1323 = vsel %vm1322, %v1315, %v1319
        %v1324 = vand.u32 2147483647, %v1314
        %vm1325 = vcmp.eq.f32.partialorder %v1324, 8.507059e+37
        %v1326 = vand.u32 %v1314, 2147483648
        %v1327 = vor.u32 1.1754944e-38, %v1326
        %v1328 = vsel %vm1325, %v1327, %v1323
        %v1329 = vmul.f32 1.0, %v1328
        %v1330 = vtanh.pop %v1290
        %v1331 = vxor.u32 %v1291, 2147483648
        %v1332 = vmul.f32 %v1331, 1.442695
        %v1333 = vpow.pop %v1332
        %v1334 = vadd.f32 %v1333, 1.0
        %v1335 = vrcp.pop %v1334
        %v1336 = vmul.f32 %v1334, %v1335
        %v1337 = vsub.f32 1.0, %v1336
        %v1338 = vmul.f32 %v1335, %v1337
        %v1339 = vadd.f32 %v1335, %v1338
        %vm1340 = vweird.f32 %v1334
        %vm1341 = vweird.f32 %v1335
        %vm1342 = vmor %vm1340, %vm1341
        %v1343 = vsel %vm1342, %v1335, %v1339
        %v1344 = vand.u32 2147483647, %v1334
        %vm1345 = vcmp.eq.f32.partialorder %v1344, 8.507059e+37
        %v1346 = vand.u32 %v1334, 2147483648
        %v1347 = vor.u32 1.1754944e-38, %v1346
        %v1348 = vsel %vm1345, %v1347, %v1343
        %v1349 = vmul.f32 1.0, %v1348
        %v1350 = vmul.f32 %v1329, %v1032
        %v1351 = vmul.f32 %v1310, %v1330
        %v1352 = vadd.f32 %v1350, %v1351
        %v1353 = vtanh.pop %v1352
        %v1354 = vmul.f32 %v1349, %v1353
        %v1355 = vpack.c.bf16 %v1354, %v1354
        %s1356 = scalar_lea.vmem %s304, 4
        %1357 = vst [vmem:[%s1356] sm:$0xf] %v1355
        %s1358 = smul.u32 2, 4
        %s1359 = smul.addr %s1358, 8
        %s1360 = scalar_lea.vmem [#allocation2], %s1359
        %v1361 = vld [vmem:[%s1360] sm:$0xff]
        %v1362 = vld [vmem:[%s1360 + $0x8] sm:$0xff]
        %v1363 = vld [vmem:[%s1360 + $0x10] sm:$0xff]
        %v1364 = vld [vmem:[%s1360 + $0x18] sm:$0xff]
        %v1365 = vld [vmem:[%s4] sm:$0xff]
        %v1366 = vld [vmem:[%s4 + $0x8] sm:$0xff]
        %v1367 = vld [vmem:[%s4 + $0x10] sm:$0xff]
        %v1368 = vld [vmem:[%s4 + $0x18] sm:$0xff]
        %v1369 = vld [vmem:[%s4 + $0x20] sm:$0xff]
        %v1370 = vld [vmem:[%s4 + $0x28] sm:$0xff]
        %v1371 = vld [vmem:[%s4 + $0x30] sm:$0xff]
        %v1372 = vld [vmem:[%s4 + $0x38] sm:$0xff]
        %v1373 = vld [vmem:[%s4 + $0x40] sm:$0xff]
        %v1374 = vld [vmem:[%s4 + $0x48] sm:$0xff]
        %v1375 = vld [vmem:[%s4 + $0x50] sm:$0xff]
        %v1376 = vld [vmem:[%s4 + $0x58] sm:$0xff]
        %v1377 = vld [vmem:[%s4 + $0x60] sm:$0xff]
        %v1378 = vld [vmem:[%s4 + $0x68] sm:$0xff]
        %v1379 = vld [vmem:[%s4 + $0x70] sm:$0xff]
        %v1380 = vld [vmem:[%s4 + $0x78] sm:$0xff]
        %v1381 = vld [vmem:[%s4 + $0x80] sm:$0xff]
        %v1382 = vld [vmem:[%s4 + $0x88] sm:$0xff]
        %v1383 = vld [vmem:[%s4 + $0x90] sm:$0xff]
        %v1384 = vld [vmem:[%s4 + $0x98] sm:$0xff]
        %v1385 = vld [vmem:[%s4 + $0xa0] sm:$0xff]
        %v1386 = vld [vmem:[%s4 + $0xa8] sm:$0xff]
        %v1387 = vld [vmem:[%s4 + $0xb0] sm:$0xff]
        %v1388 = vld [vmem:[%s4 + $0xb8] sm:$0xff]
        %v1389 = vld [vmem:[%s4 + $0xc0] sm:$0xff]
        %v1390 = vld [vmem:[%s4 + $0xc8] sm:$0xff]
        %v1391 = vld [vmem:[%s4 + $0xd0] sm:$0xff]
        %v1392 = vld [vmem:[%s4 + $0xd8] sm:$0xff]
        %v1393 = vld [vmem:[%s4 + $0xe0] sm:$0xff]
        %v1394 = vld [vmem:[%s4 + $0xe8] sm:$0xff]
        %v1395 = vld [vmem:[%s4 + $0xf0] sm:$0xff]
        %v1396 = vld [vmem:[%s4 + $0xf8] sm:$0xff]
        %v1429 = vunpack.c.l.b16 %v1365
        %v1430 = vunpack.c.h.b16 %v1365
        %v1431 = vunpack.c.l.b16 %v1366
        %v1432 = vunpack.c.h.b16 %v1366
        %v1433 = vunpack.c.l.b16 %v1367
        %v1434 = vunpack.c.h.b16 %v1367
        %v1435 = vunpack.c.l.b16 %v1368
        %v1436 = vunpack.c.h.b16 %v1368
        %v1437 = vunpack.c.l.b16 %v1369
        %v1438 = vunpack.c.h.b16 %v1369
        %v1439 = vunpack.c.l.b16 %v1370
        %v1440 = vunpack.c.h.b16 %v1370
        %v1441 = vunpack.c.l.b16 %v1371
        %v1442 = vunpack.c.h.b16 %v1371
        %v1443 = vunpack.c.l.b16 %v1372
        %v1444 = vunpack.c.h.b16 %v1372
        %v1445 = vunpack.c.l.b16 %v1373
        %v1446 = vunpack.c.h.b16 %v1373
        %v1447 = vunpack.c.l.b16 %v1374
        %v1448 = vunpack.c.h.b16 %v1374
        %v1449 = vunpack.c.l.b16 %v1375
        %v1450 = vunpack.c.h.b16 %v1375
        %v1451 = vunpack.c.l.b16 %v1376
        %v1452 = vunpack.c.h.b16 %v1376
        %v1453 = vunpack.c.l.b16 %v1377
        %v1454 = vunpack.c.h.b16 %v1377
        %v1455 = vunpack.c.l.b16 %v1378
        %v1456 = vunpack.c.h.b16 %v1378
        %v1457 = vunpack.c.l.b16 %v1379
        %v1458 = vunpack.c.h.b16 %v1379
        %v1459 = vunpack.c.l.b16 %v1380
        %v1460 = vunpack.c.h.b16 %v1380
        %v1461 = vunpack.c.l.b16 %v1381
        %v1462 = vunpack.c.h.b16 %v1381
        %v1463 = vunpack.c.l.b16 %v1382
        %v1464 = vunpack.c.h.b16 %v1382
        %v1465 = vunpack.c.l.b16 %v1383
        %v1466 = vunpack.c.h.b16 %v1383
        %v1467 = vunpack.c.l.b16 %v1384
        %v1468 = vunpack.c.h.b16 %v1384
        %v1469 = vunpack.c.l.b16 %v1385
        %v1470 = vunpack.c.h.b16 %v1385
        %v1471 = vunpack.c.l.b16 %v1386
        %v1472 = vunpack.c.h.b16 %v1386
        %v1473 = vunpack.c.l.b16 %v1387
        %v1474 = vunpack.c.h.b16 %v1387
        %v1475 = vunpack.c.l.b16 %v1388
        %v1476 = vunpack.c.h.b16 %v1388
        %v1477 = vunpack.c.l.b16 %v1389
        %v1478 = vunpack.c.h.b16 %v1389
        %v1479 = vunpack.c.l.b16 %v1390
        %v1480 = vunpack.c.h.b16 %v1390
        %v1481 = vunpack.c.l.b16 %v1391
        %v1482 = vunpack.c.h.b16 %v1391
        %v1483 = vunpack.c.l.b16 %v1392
        %v1484 = vunpack.c.h.b16 %v1392
        %v1485 = vunpack.c.l.b16 %v1393
        %v1486 = vunpack.c.h.b16 %v1393
        %v1487 = vunpack.c.l.b16 %v1394
        %v1488 = vunpack.c.h.b16 %v1394
        %v1489 = vunpack.c.l.b16 %v1395
        %v1490 = vunpack.c.h.b16 %v1395
        %v1491 = vunpack.c.l.b16 %v1396
        %v1492 = vunpack.c.h.b16 %v1396
        %v1493 = vpack.c.b16 %v1433, %v1429
        %v1494 = vpack.c.b16 %v1434, %v1430
        %v1495 = vpack.c.b16 %v1435, %v1431
        %v1496 = vpack.c.b16 %v1436, %v1432
        %v1497 = vpack.c.b16 %v1441, %v1437
        %v1498 = vpack.c.b16 %v1442, %v1438
        %v1499 = vpack.c.b16 %v1443, %v1439
        %v1500 = vpack.c.b16 %v1444, %v1440
        %v1501 = vpack.c.b16 %v1449, %v1445
        %v1502 = vpack.c.b16 %v1450, %v1446
        %v1503 = vpack.c.b16 %v1451, %v1447
        %v1504 = vpack.c.b16 %v1452, %v1448
        %v1505 = vpack.c.b16 %v1457, %v1453
        %v1506 = vpack.c.b16 %v1458, %v1454
        %v1507 = vpack.c.b16 %v1459, %v1455
        %v1508 = vpack.c.b16 %v1460, %v1456
        %v1509 = vpack.c.b16 %v1465, %v1461
        %v1510 = vpack.c.b16 %v1466, %v1462
        %v1511 = vpack.c.b16 %v1467, %v1463
        %v1512 = vpack.c.b16 %v1468, %v1464
        %v1513 = vpack.c.b16 %v1473, %v1469
        %v1514 = vpack.c.b16 %v1474, %v1470
        %v1515 = vpack.c.b16 %v1475, %v1471
        %v1516 = vpack.c.b16 %v1476, %v1472
        %v1517 = vpack.c.b16 %v1481, %v1477
        %v1518 = vpack.c.b16 %v1482, %v1478
        %v1519 = vpack.c.b16 %v1483, %v1479
        %v1520 = vpack.c.b16 %v1484, %v1480
        %v1521 = vpack.c.b16 %v1489, %v1485
        %v1522 = vpack.c.b16 %v1490, %v1486
        %v1523 = vpack.c.b16 %v1491, %v1487
        %v1524 = vpack.c.b16 %v1492, %v1488
        %1557 = vmatpush.bf16.msra.mxu0 %v1521
        %1558 = vmatpush.bf16.msra.mxu0 %v1517
        %1559 = vmatpush.bf16.msra.mxu0 %v1513
        %1560 = vmatpush.bf16.msra.mxu0 %v1509
        %1561 = vmatpush.bf16.msra.mxu0 %v1505
        %1562 = vmatpush.bf16.msra.mxu0 %v1501
        %1563 = vmatpush.bf16.msra.mxu0 %v1497
        %1564 = vmatpush.bf16.msra.mxu0 %v1493
        %1565 = vmatmul.bf16.gmra.mxu0 %v1355
        %v1566 = vpop.f32.mrf.mxu0
        %v1567 = vadd.f32 0.0, %v1566
        %v1568 = vpop.f32.mrf.mxu0
        %1569 = vdwg.mxu0
        %1570 = vmatpush.bf16.msra.mxu0 %v1522
        %1571 = vmatpush.bf16.msra.mxu0 %v1518
        %1572 = vmatpush.bf16.msra.mxu0 %v1514
        %1573 = vmatpush.bf16.msra.mxu0 %v1510
        %1574 = vmatpush.bf16.msra.mxu0 %v1506
        %1575 = vmatpush.bf16.msra.mxu0 %v1502
        %1576 = vmatpush.bf16.msra.mxu0 %v1498
        %1577 = vmatpush.bf16.msra.mxu0 %v1494
        %1578 = vmatmul.bf16.gmra.mxu0 %v1355
        %v1579 = vpop.f32.mrf.mxu0
        %v1580 = vadd.f32 0.0, %v1579
        %v1581 = vpop.f32.mrf.mxu0
        %1582 = vdwg.mxu0
        %1583 = vmatpush.bf16.msra.mxu0 %v1523
        %1584 = vmatpush.bf16.msra.mxu0 %v1519
        %1585 = vmatpush.bf16.msra.mxu0 %v1515
        %1586 = vmatpush.bf16.msra.mxu0 %v1511
        %1587 = vmatpush.bf16.msra.mxu0 %v1507
        %1588 = vmatpush.bf16.msra.mxu0 %v1503
        %1589 = vmatpush.bf16.msra.mxu0 %v1499
        %1590 = vmatpush.bf16.msra.mxu0 %v1495
        %1591 = vmatmul.bf16.gmra.mxu0 %v1355
        %v1592 = vpop.f32.mrf.mxu0
        %v1593 = vadd.f32 0.0, %v1592
        %v1594 = vpop.f32.mrf.mxu0
        %1595 = vdwg.mxu0
        %1596 = vmatpush.bf16.msra.mxu0 %v1524
        %1597 = vmatpush.bf16.msra.mxu0 %v1520
        %1598 = vmatpush.bf16.msra.mxu0 %v1516
        %1599 = vmatpush.bf16.msra.mxu0 %v1512
        %1600 = vmatpush.bf16.msra.mxu0 %v1508
        %1601 = vmatpush.bf16.msra.mxu0 %v1504
        %1602 = vmatpush.bf16.msra.mxu0 %v1500
        %1603 = vmatpush.bf16.msra.mxu0 %v1496
        %1604 = vmatmul.bf16.gmra.mxu0 %v1355
        %v1605 = vpop.f32.mrf.mxu0
        %v1606 = vadd.f32 0.0, %v1605
        %v1607 = vpop.f32.mrf.mxu0
        %1608 = vdwg.mxu0
        %v1609 = vadd.f32 %v1361, %v1567
        %v1610 = vadd.f32 %v1362, %v1580
        %v1611 = vadd.f32 %v1363, %v1593
        %v1612 = vadd.f32 %v1364, %v1606
        %v1613 = vxor.u32 %v1609, 2147483648
        %v1614 = vmul.f32 %v1613, 1.442695
        %v1615 = vpow.pop %v1614
        %v1616 = vadd.f32 %v1615, 1.0
        %v1617 = vrcp.pop %v1616
        %v1618 = vmul.f32 %v1616, %v1617
        %v1619 = vsub.f32 1.0, %v1618
        %v1620 = vmul.f32 %v1617, %v1619
        %v1621 = vadd.f32 %v1617, %v1620
        %vm1622 = vweird.f32 %v1616
        %vm1623 = vweird.f32 %v1617
        %vm1624 = vmor %vm1622, %vm1623
        %v1625 = vsel %vm1624, %v1617, %v1621
        %v1626 = vand.u32 2147483647, %v1616
        %vm1627 = vcmp.eq.f32.partialorder %v1626, 8.507059e+37
        %v1628 = vand.u32 %v1616, 2147483648
        %v1629 = vor.u32 1.1754944e-38, %v1628
        %v1630 = vsel %vm1627, %v1629, %v1625
        %v1631 = vmul.f32 1.0, %v1630
        %v1632 = vxor.u32 %v1610, 2147483648
        %v1633 = vmul.f32 %v1632, 1.442695
        %v1634 = vpow.pop %v1633
        %v1635 = vadd.f32 %v1634, 1.0
        %v1636 = vrcp.pop %v1635
        %v1637 = vmul.f32 %v1635, %v1636
        %v1638 = vsub.f32 1.0, %v1637
        %v1639 = vmul.f32 %v1636, %v1638
        %v1640 = vadd.f32 %v1636, %v1639
        %vm1641 = vweird.f32 %v1635
        %vm1642 = vweird.f32 %v1636
        %vm1643 = vmor %vm1641, %vm1642
        %v1644 = vsel %vm1643, %v1636, %v1640
        %v1645 = vand.u32 2147483647, %v1635
        %vm1646 = vcmp.eq.f32.partialorder %v1645, 8.507059e+37
        %v1647 = vand.u32 %v1635, 2147483648
        %v1648 = vor.u32 1.1754944e-38, %v1647
        %v1649 = vsel %vm1646, %v1648, %v1644
        %v1650 = vmul.f32 1.0, %v1649
        %v1651 = vtanh.pop %v1611
        %v1652 = vxor.u32 %v1612, 2147483648
        %v1653 = vmul.f32 %v1652, 1.442695
        %v1654 = vpow.pop %v1653
        %v1655 = vadd.f32 %v1654, 1.0
        %v1656 = vrcp.pop %v1655
        %v1657 = vmul.f32 %v1655, %v1656
        %v1658 = vsub.f32 1.0, %v1657
        %v1659 = vmul.f32 %v1656, %v1658
        %v1660 = vadd.f32 %v1656, %v1659
        %vm1661 = vweird.f32 %v1655
        %vm1662 = vweird.f32 %v1656
        %vm1663 = vmor %vm1661, %vm1662
        %v1664 = vsel %vm1663, %v1656, %v1660
        %v1665 = vand.u32 2147483647, %v1655
        %vm1666 = vcmp.eq.f32.partialorder %v1665, 8.507059e+37
        %v1667 = vand.u32 %v1655, 2147483648
        %v1668 = vor.u32 1.1754944e-38, %v1667
        %v1669 = vsel %vm1666, %v1668, %v1664
        %v1670 = vmul.f32 1.0, %v1669
        %v1671 = vmul.f32 %v1650, %v1352
        %v1672 = vmul.f32 %v1631, %v1651
        %v1673 = vadd.f32 %v1671, %v1672
        %v1674 = vtanh.pop %v1673
        %v1675 = vmul.f32 %v1670, %v1674
        %v1676 = vpack.c.bf16 %v1675, %v1675
        %s1677 = scalar_lea.vmem %s304, 8
        %1678 = vst [vmem:[%s1677] sm:$0xf] %v1676
        %s1679 = smul.u32 3, 4
        %s1680 = smul.addr %s1679, 8
        %s1681 = scalar_lea.vmem [#allocation2], %s1680
        %v1682 = vld [vmem:[%s1681] sm:$0xff]
        %v1683 = vld [vmem:[%s1681 + $0x8] sm:$0xff]
        %v1684 = vld [vmem:[%s1681 + $0x10] sm:$0xff]
        %v1685 = vld [vmem:[%s1681 + $0x18] sm:$0xff]
        %v1686 = vld [vmem:[%s4] sm:$0xff]
        %v1687 = vld [vmem:[%s4 + $0x8] sm:$0xff]
        %v1688 = vld [vmem:[%s4 + $0x10] sm:$0xff]
        %v1689 = vld [vmem:[%s4 + $0x18] sm:$0xff]
        %v1690 = vld [vmem:[%s4 + $0x20] sm:$0xff]
        %v1691 = vld [vmem:[%s4 + $0x28] sm:$0xff]
        %v1692 = vld [vmem:[%s4 + $0x30] sm:$0xff]
        %v1693 = vld [vmem:[%s4 + $0x38] sm:$0xff]
        %v1694 = vld [vmem:[%s4 + $0x40] sm:$0xff]
        %v1695 = vld [vmem:[%s4 + $0x48] sm:$0xff]
        %v1696 = vld [vmem:[%s4 + $0x50] sm:$0xff]
        %v1697 = vld [vmem:[%s4 + $0x58] sm:$0xff]
        %v1698 = vld [vmem:[%s4 + $0x60] sm:$0xff]
        %v1699 = vld [vmem:[%s4 + $0x68] sm:$0xff]
        %v1700 = vld [vmem:[%s4 + $0x70] sm:$0xff]
        %v1701 = vld [vmem:[%s4 + $0x78] sm:$0xff]
        %v1702 = vld [vmem:[%s4 + $0x80] sm:$0xff]
        %v1703 = vld [vmem:[%s4 + $0x88] sm:$0xff]
        %v1704 = vld [vmem:[%s4 + $0x90] sm:$0xff]
        %v1705 = vld [vmem:[%s4 + $0x98] sm:$0xff]
        %v1706 = vld [vmem:[%s4 + $0xa0] sm:$0xff]
        %v1707 = vld [vmem:[%s4 + $0xa8] sm:$0xff]
        %v1708 = vld [vmem:[%s4 + $0xb0] sm:$0xff]
        %v1709 = vld [vmem:[%s4 + $0xb8] sm:$0xff]
        %v1710 = vld [vmem:[%s4 + $0xc0] sm:$0xff]
        %v1711 = vld [vmem:[%s4 + $0xc8] sm:$0xff]
        %v1712 = vld [vmem:[%s4 + $0xd0] sm:$0xff]
        %v1713 = vld [vmem:[%s4 + $0xd8] sm:$0xff]
        %v1714 = vld [vmem:[%s4 + $0xe0] sm:$0xff]
        %v1715 = vld [vmem:[%s4 + $0xe8] sm:$0xff]
        %v1716 = vld [vmem:[%s4 + $0xf0] sm:$0xff]
        %v1717 = vld [vmem:[%s4 + $0xf8] sm:$0xff]
        %v1750 = vunpack.c.l.b16 %v1686
        %v1751 = vunpack.c.h.b16 %v1686
        %v1752 = vunpack.c.l.b16 %v1687
        %v1753 = vunpack.c.h.b16 %v1687
        %v1754 = vunpack.c.l.b16 %v1688
        %v1755 = vunpack.c.h.b16 %v1688
        %v1756 = vunpack.c.l.b16 %v1689
        %v1757 = vunpack.c.h.b16 %v1689
        %v1758 = vunpack.c.l.b16 %v1690
        %v1759 = vunpack.c.h.b16 %v1690
        %v1760 = vunpack.c.l.b16 %v1691
        %v1761 = vunpack.c.h.b16 %v1691
        %v1762 = vunpack.c.l.b16 %v1692
        %v1763 = vunpack.c.h.b16 %v1692
        %v1764 = vunpack.c.l.b16 %v1693
        %v1765 = vunpack.c.h.b16 %v1693
        %v1766 = vunpack.c.l.b16 %v1694
        %v1767 = vunpack.c.h.b16 %v1694
        %v1768 = vunpack.c.l.b16 %v1695
        %v1769 = vunpack.c.h.b16 %v1695
        %v1770 = vunpack.c.l.b16 %v1696
        %v1771 = vunpack.c.h.b16 %v1696
        %v1772 = vunpack.c.l.b16 %v1697
        %v1773 = vunpack.c.h.b16 %v1697
        %v1774 = vunpack.c.l.b16 %v1698
        %v1775 = vunpack.c.h.b16 %v1698
        %v1776 = vunpack.c.l.b16 %v1699
        %v1777 = vunpack.c.h.b16 %v1699
        %v1778 = vunpack.c.l.b16 %v1700
        %v1779 = vunpack.c.h.b16 %v1700
        %v1780 = vunpack.c.l.b16 %v1701
        %v1781 = vunpack.c.h.b16 %v1701
        %v1782 = vunpack.c.l.b16 %v1702
        %v1783 = vunpack.c.h.b16 %v1702
        %v1784 = vunpack.c.l.b16 %v1703
        %v1785 = vunpack.c.h.b16 %v1703
        %v1786 = vunpack.c.l.b16 %v1704
        %v1787 = vunpack.c.h.b16 %v1704
        %v1788 = vunpack.c.l.b16 %v1705
        %v1789 = vunpack.c.h.b16 %v1705
        %v1790 = vunpack.c.l.b16 %v1706
        %v1791 = vunpack.c.h.b16 %v1706
        %v1792 = vunpack.c.l.b16 %v1707
        %v1793 = vunpack.c.h.b16 %v1707
        %v1794 = vunpack.c.l.b16 %v1708
        %v1795 = vunpack.c.h.b16 %v1708
        %v1796 = vunpack.c.l.b16 %v1709
        %v1797 = vunpack.c.h.b16 %v1709
        %v1798 = vunpack.c.l.b16 %v1710
        %v1799 = vunpack.c.h.b16 %v1710
        %v1800 = vunpack.c.l.b16 %v1711
        %v1801 = vunpack.c.h.b16 %v1711
        %v1802 = vunpack.c.l.b16 %v1712
        %v1803 = vunpack.c.h.b16 %v1712
        %v1804 = vunpack.c.l.b16 %v1713
        %v1805 = vunpack.c.h.b16 %v1713
        %v1806 = vunpack.c.l.b16 %v1714
        %v1807 = vunpack.c.h.b16 %v1714
        %v1808 = vunpack.c.l.b16 %v1715
        %v1809 = vunpack.c.h.b16 %v1715
        %v1810 = vunpack.c.l.b16 %v1716
        %v1811 = vunpack.c.h.b16 %v1716
        %v1812 = vunpack.c.l.b16 %v1717
        %v1813 = vunpack.c.h.b16 %v1717
        %v1814 = vpack.c.b16 %v1754, %v1750
        %v1815 = vpack.c.b16 %v1755, %v1751
        %v1816 = vpack.c.b16 %v1756, %v1752
        %v1817 = vpack.c.b16 %v1757, %v1753
        %v1818 = vpack.c.b16 %v1762, %v1758
        %v1819 = vpack.c.b16 %v1763, %v1759
        %v1820 = vpack.c.b16 %v1764, %v1760
        %v1821 = vpack.c.b16 %v1765, %v1761
        %v1822 = vpack.c.b16 %v1770, %v1766
        %v1823 = vpack.c.b16 %v1771, %v1767
        %v1824 = vpack.c.b16 %v1772, %v1768
        %v1825 = vpack.c.b16 %v1773, %v1769
        %v1826 = vpack.c.b16 %v1778, %v1774
        %v1827 = vpack.c.b16 %v1779, %v1775
        %v1828 = vpack.c.b16 %v1780, %v1776
        %v1829 = vpack.c.b16 %v1781, %v1777
        %v1830 = vpack.c.b16 %v1786, %v1782
        %v1831 = vpack.c.b16 %v1787, %v1783
        %v1832 = vpack.c.b16 %v1788, %v1784
        %v1833 = vpack.c.b16 %v1789, %v1785
        %v1834 = vpack.c.b16 %v1794, %v1790
        %v1835 = vpack.c.b16 %v1795, %v1791
        %v1836 = vpack.c.b16 %v1796, %v1792
        %v1837 = vpack.c.b16 %v1797, %v1793
        %v1838 = vpack.c.b16 %v1802, %v1798
        %v1839 = vpack.c.b16 %v1803, %v1799
        %v1840 = vpack.c.b16 %v1804, %v1800
        %v1841 = vpack.c.b16 %v1805, %v1801
        %v1842 = vpack.c.b16 %v1810, %v1806
        %v1843 = vpack.c.b16 %v1811, %v1807
        %v1844 = vpack.c.b16 %v1812, %v1808
        %v1845 = vpack.c.b16 %v1813, %v1809
        %1878 = vmatpush.bf16.msra.mxu0 %v1842
        %1879 = vmatpush.bf16.msra.mxu0 %v1838
        %1880 = vmatpush.bf16.msra.mxu0 %v1834
        %1881 = vmatpush.bf16.msra.mxu0 %v1830
        %1882 = vmatpush.bf16.msra.mxu0 %v1826
        %1883 = vmatpush.bf16.msra.mxu0 %v1822
        %1884 = vmatpush.bf16.msra.mxu0 %v1818
        %1885 = vmatpush.bf16.msra.mxu0 %v1814
        %1886 = vmatmul.bf16.gmra.mxu0 %v1676
        %v1887 = vpop.f32.mrf.mxu0
        %v1888 = vadd.f32 0.0, %v1887
        %v1889 = vpop.f32.mrf.mxu0
        %1890 = vdwg.mxu0
        %1891 = vmatpush.bf16.msra.mxu0 %v1843
        %1892 = vmatpush.bf16.msra.mxu0 %v1839
        %1893 = vmatpush.bf16.msra.mxu0 %v1835
        %1894 = vmatpush.bf16.msra.mxu0 %v1831
        %1895 = vmatpush.bf16.msra.mxu0 %v1827
        %1896 = vmatpush.bf16.msra.mxu0 %v1823
        %1897 = vmatpush.bf16.msra.mxu0 %v1819
        %1898 = vmatpush.bf16.msra.mxu0 %v1815
        %1899 = vmatmul.bf16.gmra.mxu0 %v1676
        %v1900 = vpop.f32.mrf.mxu0
        %v1901 = vadd.f32 0.0, %v1900
        %v1902 = vpop.f32.mrf.mxu0
        %1903 = vdwg.mxu0
        %1904 = vmatpush.bf16.msra.mxu0 %v1844
        %1905 = vmatpush.bf16.msra.mxu0 %v1840
        %1906 = vmatpush.bf16.msra.mxu0 %v1836
        %1907 = vmatpush.bf16.msra.mxu0 %v1832
        %1908 = vmatpush.bf16.msra.mxu0 %v1828
        %1909 = vmatpush.bf16.msra.mxu0 %v1824
        %1910 = vmatpush.bf16.msra.mxu0 %v1820
        %1911 = vmatpush.bf16.msra.mxu0 %v1816
        %1912 = vmatmul.bf16.gmra.mxu0 %v1676
        %v1913 = vpop.f32.mrf.mxu0
        %v1914 = vadd.f32 0.0, %v1913
        %v1915 = vpop.f32.mrf.mxu0
        %1916 = vdwg.mxu0
        %1917 = vmatpush.bf16.msra.mxu0 %v1845
        %1918 = vmatpush.bf16.msra.mxu0 %v1841
        %1919 = vmatpush.bf16.msra.mxu0 %v1837
        %1920 = vmatpush.bf16.msra.mxu0 %v1833
        %1921 = vmatpush.bf16.msra.mxu0 %v1829
        %1922 = vmatpush.bf16.msra.mxu0 %v1825
        %1923 = vmatpush.bf16.msra.mxu0 %v1821
        %1924 = vmatpush.bf16.msra.mxu0 %v1817
        %1925 = vmatmul.bf16.gmra.mxu0 %v1676
        %v1926 = vpop.f32.mrf.mxu0
        %v1927 = vadd.f32 0.0, %v1926
        %v1928 = vpop.f32.mrf.mxu0
        %1929 = vdwg.mxu0
        %v1930 = vadd.f32 %v1682, %v1888
        %v1931 = vadd.f32 %v1683, %v1901
        %v1932 = vadd.f32 %v1684, %v1914
        %v1933 = vadd.f32 %v1685, %v1927
        %v1934 = vxor.u32 %v1930, 2147483648
        %v1935 = vmul.f32 %v1934, 1.442695
        %v1936 = vpow.pop %v1935
        %v1937 = vadd.f32 %v1936, 1.0
        %v1938 = vrcp.pop %v1937
        %v1939 = vmul.f32 %v1937, %v1938
        %v1940 = vsub.f32 1.0, %v1939
        %v1941 = vmul.f32 %v1938, %v1940
        %v1942 = vadd.f32 %v1938, %v1941
        %vm1943 = vweird.f32 %v1937
        %vm1944 = vweird.f32 %v1938
        %vm1945 = vmor %vm1943, %vm1944
        %v1946 = vsel %vm1945, %v1938, %v1942
        %v1947 = vand.u32 2147483647, %v1937
        %vm1948 = vcmp.eq.f32.partialorder %v1947, 8.507059e+37
        %v1949 = vand.u32 %v1937, 2147483648
        %v1950 = vor.u32 1.1754944e-38, %v1949
        %v1951 = vsel %vm1948, %v1950, %v1946
        %v1952 = vmul.f32 1.0, %v1951
        %v1953 = vxor.u32 %v1931, 2147483648
        %v1954 = vmul.f32 %v1953, 1.442695
        %v1955 = vpow.pop %v1954
        %v1956 = vadd.f32 %v1955, 1.0
        %v1957 = vrcp.pop %v1956
        %v1958 = vmul.f32 %v1956, %v1957
        %v1959 = vsub.f32 1.0, %v1958
        %v1960 = vmul.f32 %v1957, %v1959
        %v1961 = vadd.f32 %v1957, %v1960
        %vm1962 = vweird.f32 %v1956
        %vm1963 = vweird.f32 %v1957
        %vm1964 = vmor %vm1962, %vm1963
        %v1965 = vsel %vm1964, %v1957, %v1961
        %v1966 = vand.u32 2147483647, %v1956
        %vm1967 = vcmp.eq.f32.partialorder %v1966, 8.507059e+37
        %v1968 = vand.u32 %v1956, 2147483648
        %v1969 = vor.u32 1.1754944e-38, %v1968
        %v1970 = vsel %vm1967, %v1969, %v1965
        %v1971 = vmul.f32 1.0, %v1970
        %v1972 = vtanh.pop %v1932
        %v1973 = vxor.u32 %v1933, 2147483648
        %v1974 = vmul.f32 %v1973, 1.442695
        %v1975 = vpow.pop %v1974
        %v1976 = vadd.f32 %v1975, 1.0
        %v1977 = vrcp.pop %v1976
        %v1978 = vmul.f32 %v1976, %v1977
        %v1979 = vsub.f32 1.0, %v1978
        %v1980 = vmul.f32 %v1977, %v1979
        %v1981 = vadd.f32 %v1977, %v1980
        %vm1982 = vweird.f32 %v1976
        %vm1983 = vweird.f32 %v1977
        %vm1984 = vmor %vm1982, %vm1983
        %v1985 = vsel %vm1984, %v1977, %v1981
        %v1986 = vand.u32 2147483647, %v1976
        %vm1987 = vcmp.eq.f32.partialorder %v1986, 8.507059e+37
        %v1988 = vand.u32 %v1976, 2147483648
        %v1989 = vor.u32 1.1754944e-38, %v1988
        %v1990 = vsel %vm1987, %v1989, %v1985
        %v1991 = vmul.f32 1.0, %v1990
        %v1992 = vmul.f32 %v1971, %v1673
        %v1993 = vmul.f32 %v1952, %v1972
        %v1994 = vadd.f32 %v1992, %v1993
        %v1995 = vtanh.pop %v1994
        %v1996 = vmul.f32 %v1991, %v1995
        %v1997 = vpack.c.bf16 %v1996, %v1996
        %s1998 = scalar_lea.vmem %s304, 12
        %1999 = vst [vmem:[%s1998] sm:$0xf] %v1997
        %s2000 = smul.u32 4, 4
        %s2001 = smul.addr %s2000, 8
        %s2002 = scalar_lea.vmem [#allocation2], %s2001
        %v2003 = vld [vmem:[%s2002] sm:$0xff]
        %v2004 = vld [vmem:[%s2002 + $0x8] sm:$0xff]
        %v2005 = vld [vmem:[%s2002 + $0x10] sm:$0xff]
        %v2006 = vld [vmem:[%s2002 + $0x18] sm:$0xff]
        %v2007 = vld [vmem:[%s4] sm:$0xff]
        %v2008 = vld [vmem:[%s4 + $0x8] sm:$0xff]
        %v2009 = vld [vmem:[%s4 + $0x10] sm:$0xff]
        %v2010 = vld [vmem:[%s4 + $0x18] sm:$0xff]
        %v2011 = vld [vmem:[%s4 + $0x20] sm:$0xff]
        %v2012 = vld [vmem:[%s4 + $0x28] sm:$0xff]
        %v2013 = vld [vmem:[%s4 + $0x30] sm:$0xff]
        %v2014 = vld [vmem:[%s4 + $0x38] sm:$0xff]
        %v2015 = vld [vmem:[%s4 + $0x40] sm:$0xff]
        %v2016 = vld [vmem:[%s4 + $0x48] sm:$0xff]
        %v2017 = vld [vmem:[%s4 + $0x50] sm:$0xff]
        %v2018 = vld [vmem:[%s4 + $0x58] sm:$0xff]
        %v2019 = vld [vmem:[%s4 + $0x60] sm:$0xff]
        %v2020 = vld [vmem:[%s4 + $0x68] sm:$0xff]
        %v2021 = vld [vmem:[%s4 + $0x70] sm:$0xff]
        %v2022 = vld [vmem:[%s4 + $0x78] sm:$0xff]
        %v2023 = vld [vmem:[%s4 + $0x80] sm:$0xff]
        %v2024 = vld [vmem:[%s4 + $0x88] sm:$0xff]
        %v2025 = vld [vmem:[%s4 + $0x90] sm:$0xff]
        %v2026 = vld [vmem:[%s4 + $0x98] sm:$0xff]
        %v2027 = vld [vmem:[%s4 + $0xa0] sm:$0xff]
        %v2028 = vld [vmem:[%s4 + $0xa8] sm:$0xff]
        %v2029 = vld [vmem:[%s4 + $0xb0] sm:$0xff]
        %v2030 = vld [vmem:[%s4 + $0xb8] sm:$0xff]
        %v2031 = vld [vmem:[%s4 + $0xc0] sm:$0xff]
        %v2032 = vld [vmem:[%s4 + $0xc8] sm:$0xff]
        %v2033 = vld [vmem:[%s4 + $0xd0] sm:$0xff]
        %v2034 = vld [vmem:[%s4 + $0xd8] sm:$0xff]
        %v2035 = vld [vmem:[%s4 + $0xe0] sm:$0xff]
        %v2036 = vld [vmem:[%s4 + $0xe8] sm:$0xff]
        %v2037 = vld [vmem:[%s4 + $0xf0] sm:$0xff]
        %v2038 = vld [vmem:[%s4 + $0xf8] sm:$0xff]
        %v2071 = vunpack.c.l.b16 %v2007
        %v2072 = vunpack.c.h.b16 %v2007
        %v2073 = vunpack.c.l.b16 %v2008
        %v2074 = vunpack.c.h.b16 %v2008
        %v2075 = vunpack.c.l.b16 %v2009
        %v2076 = vunpack.c.h.b16 %v2009
        %v2077 = vunpack.c.l.b16 %v2010
        %v2078 = vunpack.c.h.b16 %v2010
        %v2079 = vunpack.c.l.b16 %v2011
        %v2080 = vunpack.c.h.b16 %v2011
        %v2081 = vunpack.c.l.b16 %v2012
        %v2082 = vunpack.c.h.b16 %v2012
        %v2083 = vunpack.c.l.b16 %v2013
        %v2084 = vunpack.c.h.b16 %v2013
        %v2085 = vunpack.c.l.b16 %v2014
        %v2086 = vunpack.c.h.b16 %v2014
        %v2087 = vunpack.c.l.b16 %v2015
        %v2088 = vunpack.c.h.b16 %v2015
        %v2089 = vunpack.c.l.b16 %v2016
        %v2090 = vunpack.c.h.b16 %v2016
        %v2091 = vunpack.c.l.b16 %v2017
        %v2092 = vunpack.c.h.b16 %v2017
        %v2093 = vunpack.c.l.b16 %v2018
        %v2094 = vunpack.c.h.b16 %v2018
        %v2095 = vunpack.c.l.b16 %v2019
        %v2096 = vunpack.c.h.b16 %v2019
        %v2097 = vunpack.c.l.b16 %v2020
        %v2098 = vunpack.c.h.b16 %v2020
        %v2099 = vunpack.c.l.b16 %v2021
        %v2100 = vunpack.c.h.b16 %v2021
        %v2101 = vunpack.c.l.b16 %v2022
        %v2102 = vunpack.c.h.b16 %v2022
        %v2103 = vunpack.c.l.b16 %v2023
        %v2104 = vunpack.c.h.b16 %v2023
        %v2105 = vunpack.c.l.b16 %v2024
        %v2106 = vunpack.c.h.b16 %v2024
        %v2107 = vunpack.c.l.b16 %v2025
        %v2108 = vunpack.c.h.b16 %v2025
        %v2109 = vunpack.c.l.b16 %v2026
        %v2110 = vunpack.c.h.b16 %v2026
        %v2111 = vunpack.c.l.b16 %v2027
        %v2112 = vunpack.c.h.b16 %v2027
        %v2113 = vunpack.c.l.b16 %v2028
        %v2114 = vunpack.c.h.b16 %v2028
        %v2115 = vunpack.c.l.b16 %v2029
        %v2116 = vunpack.c.h.b16 %v2029
        %v2117 = vunpack.c.l.b16 %v2030
        %v2118 = vunpack.c.h.b16 %v2030
        %v2119 = vunpack.c.l.b16 %v2031
        %v2120 = vunpack.c.h.b16 %v2031
        %v2121 = vunpack.c.l.b16 %v2032
        %v2122 = vunpack.c.h.b16 %v2032
        %v2123 = vunpack.c.l.b16 %v2033
        %v2124 = vunpack.c.h.b16 %v2033
        %v2125 = vunpack.c.l.b16 %v2034
        %v2126 = vunpack.c.h.b16 %v2034
        %v2127 = vunpack.c.l.b16 %v2035
        %v2128 = vunpack.c.h.b16 %v2035
        %v2129 = vunpack.c.l.b16 %v2036
        %v2130 = vunpack.c.h.b16 %v2036
        %v2131 = vunpack.c.l.b16 %v2037
        %v2132 = vunpack.c.h.b16 %v2037
        %v2133 = vunpack.c.l.b16 %v2038
        %v2134 = vunpack.c.h.b16 %v2038
        %v2135 = vpack.c.b16 %v2075, %v2071
        %v2136 = vpack.c.b16 %v2076, %v2072
        %v2137 = vpack.c.b16 %v2077, %v2073
        %v2138 = vpack.c.b16 %v2078, %v2074
        %v2139 = vpack.c.b16 %v2083, %v2079
        %v2140 = vpack.c.b16 %v2084, %v2080
        %v2141 = vpack.c.b16 %v2085, %v2081
        %v2142 = vpack.c.b16 %v2086, %v2082
        %v2143 = vpack.c.b16 %v2091, %v2087
        %v2144 = vpack.c.b16 %v2092, %v2088
        %v2145 = vpack.c.b16 %v2093, %v2089
        %v2146 = vpack.c.b16 %v2094, %v2090
        %v2147 = vpack.c.b16 %v2099, %v2095
        %v2148 = vpack.c.b16 %v2100, %v2096
        %v2149 = vpack.c.b16 %v2101, %v2097
        %v2150 = vpack.c.b16 %v2102, %v2098
        %v2151 = vpack.c.b16 %v2107, %v2103
        %v2152 = vpack.c.b16 %v2108, %v2104
        %v2153 = vpack.c.b16 %v2109, %v2105
        %v2154 = vpack.c.b16 %v2110, %v2106
        %v2155 = vpack.c.b16 %v2115, %v2111
        %v2156 = vpack.c.b16 %v2116, %v2112
        %v2157 = vpack.c.b16 %v2117, %v2113
        %v2158 = vpack.c.b16 %v2118, %v2114
        %v2159 = vpack.c.b16 %v2123, %v2119
        %v2160 = vpack.c.b16 %v2124, %v2120
        %v2161 = vpack.c.b16 %v2125, %v2121
        %v2162 = vpack.c.b16 %v2126, %v2122
        %v2163 = vpack.c.b16 %v2131, %v2127
        %v2164 = vpack.c.b16 %v2132, %v2128
        %v2165 = vpack.c.b16 %v2133, %v2129
        %v2166 = vpack.c.b16 %v2134, %v2130
        %2199 = vmatpush.bf16.msra.mxu0 %v2163
        %2200 = vmatpush.bf16.msra.mxu0 %v2159
        %2201 = vmatpush.bf16.msra.mxu0 %v2155
        %2202 = vmatpush.bf16.msra.mxu0 %v2151
        %2203 = vmatpush.bf16.msra.mxu0 %v2147
        %2204 = vmatpush.bf16.msra.mxu0 %v2143
        %2205 = vmatpush.bf16.msra.mxu0 %v2139
        %2206 = vmatpush.bf16.msra.mxu0 %v2135
        %2207 = vmatmul.bf16.gmra.mxu0 %v1997
        %v2208 = vpop.f32.mrf.mxu0
        %v2209 = vadd.f32 0.0, %v2208
        %v2210 = vpop.f32.mrf.mxu0
        %2211 = vdwg.mxu0
        %2212 = vmatpush.bf16.msra.mxu0 %v2164
        %2213 = vmatpush.bf16.msra.mxu0 %v2160
        %2214 = vmatpush.bf16.msra.mxu0 %v2156
        %2215 = vmatpush.bf16.msra.mxu0 %v2152
        %2216 = vmatpush.bf16.msra.mxu0 %v2148
        %2217 = vmatpush.bf16.msra.mxu0 %v2144
        %2218 = vmatpush.bf16.msra.mxu0 %v2140
        %2219 = vmatpush.bf16.msra.mxu0 %v2136
        %2220 = vmatmul.bf16.gmra.mxu0 %v1997
        %v2221 = vpop.f32.mrf.mxu0
        %v2222 = vadd.f32 0.0, %v2221
        %v2223 = vpop.f32.mrf.mxu0
        %2224 = vdwg.mxu0
        %2225 = vmatpush.bf16.msra.mxu0 %v2165
        %2226 = vmatpush.bf16.msra.mxu0 %v2161
        %2227 = vmatpush.bf16.msra.mxu0 %v2157
        %2228 = vmatpush.bf16.msra.mxu0 %v2153
        %2229 = vmatpush.bf16.msra.mxu0 %v2149
        %2230 = vmatpush.bf16.msra.mxu0 %v2145
        %2231 = vmatpush.bf16.msra.mxu0 %v2141
        %2232 = vmatpush.bf16.msra.mxu0 %v2137
        %2233 = vmatmul.bf16.gmra.mxu0 %v1997
        %v2234 = vpop.f32.mrf.mxu0
        %v2235 = vadd.f32 0.0, %v2234
        %v2236 = vpop.f32.mrf.mxu0
        %2237 = vdwg.mxu0
        %2238 = vmatpush.bf16.msra.mxu0 %v2166
        %2239 = vmatpush.bf16.msra.mxu0 %v2162
        %2240 = vmatpush.bf16.msra.mxu0 %v2158
        %2241 = vmatpush.bf16.msra.mxu0 %v2154
        %2242 = vmatpush.bf16.msra.mxu0 %v2150
        %2243 = vmatpush.bf16.msra.mxu0 %v2146
        %2244 = vmatpush.bf16.msra.mxu0 %v2142
        %2245 = vmatpush.bf16.msra.mxu0 %v2138
        %2246 = vmatmul.bf16.gmra.mxu0 %v1997
        %v2247 = vpop.f32.mrf.mxu0
        %v2248 = vadd.f32 0.0, %v2247
        %v2249 = vpop.f32.mrf.mxu0
        %2250 = vdwg.mxu0
        %v2251 = vadd.f32 %v2003, %v2209
        %v2252 = vadd.f32 %v2004, %v2222
        %v2253 = vadd.f32 %v2005, %v2235
        %v2254 = vadd.f32 %v2006, %v2248
        %v2255 = vxor.u32 %v2251, 2147483648
        %v2256 = vmul.f32 %v2255, 1.442695
        %v2257 = vpow.pop %v2256
        %v2258 = vadd.f32 %v2257, 1.0
        %v2259 = vrcp.pop %v2258
        %v2260 = vmul.f32 %v2258, %v2259
        %v2261 = vsub.f32 1.0, %v2260
        %v2262 = vmul.f32 %v2259, %v2261
        %v2263 = vadd.f32 %v2259, %v2262
        %vm2264 = vweird.f32 %v2258
        %vm2265 = vweird.f32 %v2259
        %vm2266 = vmor %vm2264, %vm2265
        %v2267 = vsel %vm2266, %v2259, %v2263
        %v2268 = vand.u32 2147483647, %v2258
        %vm2269 = vcmp.eq.f32.partialorder %v2268, 8.507059e+37
        %v2270 = vand.u32 %v2258, 2147483648
        %v2271 = vor.u32 1.1754944e-38, %v2270
        %v2272 = vsel %vm2269, %v2271, %v2267
        %v2273 = vmul.f32 1.0, %v2272
        %v2274 = vxor.u32 %v2252, 2147483648
        %v2275 = vmul.f32 %v2274, 1.442695
        %v2276 = vpow.pop %v2275
        %v2277 = vadd.f32 %v2276, 1.0
        %v2278 = vrcp.pop %v2277
        %v2279 = vmul.f32 %v2277, %v2278
        %v2280 = vsub.f32 1.0, %v2279
        %v2281 = vmul.f32 %v2278, %v2280
        %v2282 = vadd.f32 %v2278, %v2281
        %vm2283 = vweird.f32 %v2277
        %vm2284 = vweird.f32 %v2278
        %vm2285 = vmor %vm2283, %vm2284
        %v2286 = vsel %vm2285, %v2278, %v2282
        %v2287 = vand.u32 2147483647, %v2277
        %vm2288 = vcmp.eq.f32.partialorder %v2287, 8.507059e+37
        %v2289 = vand.u32 %v2277, 2147483648
        %v2290 = vor.u32 1.1754944e-38, %v2289
        %v2291 = vsel %vm2288, %v2290, %v2286
        %v2292 = vmul.f32 1.0, %v2291
        %v2293 = vtanh.pop %v2253
        %v2294 = vxor.u32 %v2254, 2147483648
        %v2295 = vmul.f32 %v2294, 1.442695
        %v2296 = vpow.pop %v2295
        %v2297 = vadd.f32 %v2296, 1.0
        %v2298 = vrcp.pop %v2297
        %v2299 = vmul.f32 %v2297, %v2298
        %v2300 = vsub.f32 1.0, %v2299
        %v2301 = vmul.f32 %v2298, %v2300
        %v2302 = vadd.f32 %v2298, %v2301
        %vm2303 = vweird.f32 %v2297
        %vm2304 = vweird.f32 %v2298
        %vm2305 = vmor %vm2303, %vm2304
        %v2306 = vsel %vm2305, %v2298, %v2302
        %v2307 = vand.u32 2147483647, %v2297
        %vm2308 = vcmp.eq.f32.partialorder %v2307, 8.507059e+37
        %v2309 = vand.u32 %v2297, 2147483648
        %v2310 = vor.u32 1.1754944e-38, %v2309
        %v2311 = vsel %vm2308, %v2310, %v2306
        %v2312 = vmul.f32 1.0, %v2311
        %v2313 = vmul.f32 %v2292, %v1994
        %v2314 = vmul.f32 %v2273, %v2293
        %v2315 = vadd.f32 %v2313, %v2314
        %v2316 = vtanh.pop %v2315
        %v2317 = vmul.f32 %v2312, %v2316
        %v2318 = vpack.c.bf16 %v2317, %v2317
        %s2319 = scalar_lea.vmem %s304, 16
        %2320 = vst [vmem:[%s2319] sm:$0xf] %v2318
        %s2321 = smul.u32 5, 4
        %s2322 = smul.addr %s2321, 8
        %s2323 = scalar_lea.vmem [#allocation2], %s2322
        %v2324 = vld [vmem:[%s2323] sm:$0xff]
        %v2325 = vld [vmem:[%s2323 + $0x8] sm:$0xff]
        %v2326 = vld [vmem:[%s2323 + $0x10] sm:$0xff]
        %v2327 = vld [vmem:[%s2323 + $0x18] sm:$0xff]
        %v2328 = vld [vmem:[%s4] sm:$0xff]
        %v2329 = vld [vmem:[%s4 + $0x8] sm:$0xff]
        %v2330 = vld [vmem:[%s4 + $0x10] sm:$0xff]
        %v2331 = vld [vmem:[%s4 + $0x18] sm:$0xff]
        %v2332 = vld [vmem:[%s4 + $0x20] sm:$0xff]
        %v2333 = vld [vmem:[%s4 + $0x28] sm:$0xff]
        %v2334 = vld [vmem:[%s4 + $0x30] sm:$0xff]
        %v2335 = vld [vmem:[%s4 + $0x38] sm:$0xff]
        %v2336 = vld [vmem:[%s4 + $0x40] sm:$0xff]
        %v2337 = vld [vmem:[%s4 + $0x48] sm:$0xff]
        %v2338 = vld [vmem:[%s4 + $0x50] sm:$0xff]
        %v2339 = vld [vmem:[%s4 + $0x58] sm:$0xff]
        %v2340 = vld [vmem:[%s4 + $0x60] sm:$0xff]
        %v2341 = vld [vmem:[%s4 + $0x68] sm:$0xff]
        %v2342 = vld [vmem:[%s4 + $0x70] sm:$0xff]
        %v2343 = vld [vmem:[%s4 + $0x78] sm:$0xff]
        %v2344 = vld [vmem:[%s4 + $0x80] sm:$0xff]
        %v2345 = vld [vmem:[%s4 + $0x88] sm:$0xff]
        %v2346 = vld [vmem:[%s4 + $0x90] sm:$0xff]
        %v2347 = vld [vmem:[%s4 + $0x98] sm:$0xff]
        %v2348 = vld [vmem:[%s4 + $0xa0] sm:$0xff]
        %v2349 = vld [vmem:[%s4 + $0xa8] sm:$0xff]
        %v2350 = vld [vmem:[%s4 + $0xb0] sm:$0xff]
        %v2351 = vld [vmem:[%s4 + $0xb8] sm:$0xff]
        %v2352 = vld [vmem:[%s4 + $0xc0] sm:$0xff]
        %v2353 = vld [vmem:[%s4 + $0xc8] sm:$0xff]
        %v2354 = vld [vmem:[%s4 + $0xd0] sm:$0xff]
        %v2355 = vld [vmem:[%s4 + $0xd8] sm:$0xff]
        %v2356 = vld [vmem:[%s4 + $0xe0] sm:$0xff]
        %v2357 = vld [vmem:[%s4 + $0xe8] sm:$0xff]
        %v2358 = vld [vmem:[%s4 + $0xf0] sm:$0xff]
        %v2359 = vld [vmem:[%s4 + $0xf8] sm:$0xff]
        %v2392 = vunpack.c.l.b16 %v2328
        %v2393 = vunpack.c.h.b16 %v2328
        %v2394 = vunpack.c.l.b16 %v2329
        %v2395 = vunpack.c.h.b16 %v2329
        %v2396 = vunpack.c.l.b16 %v2330
        %v2397 = vunpack.c.h.b16 %v2330
        %v2398 = vunpack.c.l.b16 %v2331
        %v2399 = vunpack.c.h.b16 %v2331
        %v2400 = vunpack.c.l.b16 %v2332
        %v2401 = vunpack.c.h.b16 %v2332
        %v2402 = vunpack.c.l.b16 %v2333
        %v2403 = vunpack.c.h.b16 %v2333
        %v2404 = vunpack.c.l.b16 %v2334
        %v2405 = vunpack.c.h.b16 %v2334
        %v2406 = vunpack.c.l.b16 %v2335
        %v2407 = vunpack.c.h.b16 %v2335
        %v2408 = vunpack.c.l.b16 %v2336
        %v2409 = vunpack.c.h.b16 %v2336
        %v2410 = vunpack.c.l.b16 %v2337
        %v2411 = vunpack.c.h.b16 %v2337
        %v2412 = vunpack.c.l.b16 %v2338
        %v2413 = vunpack.c.h.b16 %v2338
        %v2414 = vunpack.c.l.b16 %v2339
        %v2415 = vunpack.c.h.b16 %v2339
        %v2416 = vunpack.c.l.b16 %v2340
        %v2417 = vunpack.c.h.b16 %v2340
        %v2418 = vunpack.c.l.b16 %v2341
        %v2419 = vunpack.c.h.b16 %v2341
        %v2420 = vunpack.c.l.b16 %v2342
        %v2421 = vunpack.c.h.b16 %v2342
        %v2422 = vunpack.c.l.b16 %v2343
        %v2423 = vunpack.c.h.b16 %v2343
        %v2424 = vunpack.c.l.b16 %v2344
        %v2425 = vunpack.c.h.b16 %v2344
        %v2426 = vunpack.c.l.b16 %v2345
        %v2427 = vunpack.c.h.b16 %v2345
        %v2428 = vunpack.c.l.b16 %v2346
        %v2429 = vunpack.c.h.b16 %v2346
        %v2430 = vunpack.c.l.b16 %v2347
        %v2431 = vunpack.c.h.b16 %v2347
        %v2432 = vunpack.c.l.b16 %v2348
        %v2433 = vunpack.c.h.b16 %v2348
        %v2434 = vunpack.c.l.b16 %v2349
        %v2435 = vunpack.c.h.b16 %v2349
        %v2436 = vunpack.c.l.b16 %v2350
        %v2437 = vunpack.c.h.b16 %v2350
        %v2438 = vunpack.c.l.b16 %v2351
        %v2439 = vunpack.c.h.b16 %v2351
        %v2440 = vunpack.c.l.b16 %v2352
        %v2441 = vunpack.c.h.b16 %v2352
        %v2442 = vunpack.c.l.b16 %v2353
        %v2443 = vunpack.c.h.b16 %v2353
        %v2444 = vunpack.c.l.b16 %v2354
        %v2445 = vunpack.c.h.b16 %v2354
        %v2446 = vunpack.c.l.b16 %v2355
        %v2447 = vunpack.c.h.b16 %v2355
        %v2448 = vunpack.c.l.b16 %v2356
        %v2449 = vunpack.c.h.b16 %v2356
        %v2450 = vunpack.c.l.b16 %v2357
        %v2451 = vunpack.c.h.b16 %v2357
        %v2452 = vunpack.c.l.b16 %v2358
        %v2453 = vunpack.c.h.b16 %v2358
        %v2454 = vunpack.c.l.b16 %v2359
        %v2455 = vunpack.c.h.b16 %v2359
        %v2456 = vpack.c.b16 %v2396, %v2392
        %v2457 = vpack.c.b16 %v2397, %v2393
        %v2458 = vpack.c.b16 %v2398, %v2394
        %v2459 = vpack.c.b16 %v2399, %v2395
        %v2460 = vpack.c.b16 %v2404, %v2400
        %v2461 = vpack.c.b16 %v2405, %v2401
        %v2462 = vpack.c.b16 %v2406, %v2402
        %v2463 = vpack.c.b16 %v2407, %v2403
        %v2464 = vpack.c.b16 %v2412, %v2408
        %v2465 = vpack.c.b16 %v2413, %v2409
        %v2466 = vpack.c.b16 %v2414, %v2410
        %v2467 = vpack.c.b16 %v2415, %v2411
        %v2468 = vpack.c.b16 %v2420, %v2416
        %v2469 = vpack.c.b16 %v2421, %v2417
        %v2470 = vpack.c.b16 %v2422, %v2418
        %v2471 = vpack.c.b16 %v2423, %v2419
        %v2472 = vpack.c.b16 %v2428, %v2424
        %v2473 = vpack.c.b16 %v2429, %v2425
        %v2474 = vpack.c.b16 %v2430, %v2426
        %v2475 = vpack.c.b16 %v2431, %v2427
        %v2476 = vpack.c.b16 %v2436, %v2432
        %v2477 = vpack.c.b16 %v2437, %v2433
        %v2478 = vpack.c.b16 %v2438, %v2434
        %v2479 = vpack.c.b16 %v2439, %v2435
        %v2480 = vpack.c.b16 %v2444, %v2440
        %v2481 = vpack.c.b16 %v2445, %v2441
        %v2482 = vpack.c.b16 %v2446, %v2442
        %v2483 = vpack.c.b16 %v2447, %v2443
        %v2484 = vpack.c.b16 %v2452, %v2448
        %v2485 = vpack.c.b16 %v2453, %v2449
        %v2486 = vpack.c.b16 %v2454, %v2450
        %v2487 = vpack.c.b16 %v2455, %v2451
        %2520 = vmatpush.bf16.msra.mxu0 %v2484
        %2521 = vmatpush.bf16.msra.mxu0 %v2480
        %2522 = vmatpush.bf16.msra.mxu0 %v2476
        %2523 = vmatpush.bf16.msra.mxu0 %v2472
        %2524 = vmatpush.bf16.msra.mxu0 %v2468
        %2525 = vmatpush.bf16.msra.mxu0 %v2464
        %2526 = vmatpush.bf16.msra.mxu0 %v2460
        %2527 = vmatpush.bf16.msra.mxu0 %v2456
        %2528 = vmatmul.bf16.gmra.mxu0 %v2318
        %v2529 = vpop.f32.mrf.mxu0
        %v2530 = vadd.f32 0.0, %v2529
        %v2531 = vpop.f32.mrf.mxu0
        %2532 = vdwg.mxu0
        %2533 = vmatpush.bf16.msra.mxu0 %v2485
        %2534 = vmatpush.bf16.msra.mxu0 %v2481
        %2535 = vmatpush.bf16.msra.mxu0 %v2477
        %2536 = vmatpush.bf16.msra.mxu0 %v2473
        %2537 = vmatpush.bf16.msra.mxu0 %v2469
        %2538 = vmatpush.bf16.msra.mxu0 %v2465
        %2539 = vmatpush.bf16.msra.mxu0 %v2461
        %2540 = vmatpush.bf16.msra.mxu0 %v2457
        %2541 = vmatmul.bf16.gmra.mxu0 %v2318
        %v2542 = vpop.f32.mrf.mxu0
        %v2543 = vadd.f32 0.0, %v2542
        %v2544 = vpop.f32.mrf.mxu0
        %2545 = vdwg.mxu0
        %2546 = vmatpush.bf16.msra.mxu0 %v2486
        %2547 = vmatpush.bf16.msra.mxu0 %v2482
        %2548 = vmatpush.bf16.msra.mxu0 %v2478
        %2549 = vmatpush.bf16.msra.mxu0 %v2474
        %2550 = vmatpush.bf16.msra.mxu0 %v2470
        %2551 = vmatpush.bf16.msra.mxu0 %v2466
        %2552 = vmatpush.bf16.msra.mxu0 %v2462
        %2553 = vmatpush.bf16.msra.mxu0 %v2458
        %2554 = vmatmul.bf16.gmra.mxu0 %v2318
        %v2555 = vpop.f32.mrf.mxu0
        %v2556 = vadd.f32 0.0, %v2555
        %v2557 = vpop.f32.mrf.mxu0
        %2558 = vdwg.mxu0
        %2559 = vmatpush.bf16.msra.mxu0 %v2487
        %2560 = vmatpush.bf16.msra.mxu0 %v2483
        %2561 = vmatpush.bf16.msra.mxu0 %v2479
        %2562 = vmatpush.bf16.msra.mxu0 %v2475
        %2563 = vmatpush.bf16.msra.mxu0 %v2471
        %2564 = vmatpush.bf16.msra.mxu0 %v2467
        %2565 = vmatpush.bf16.msra.mxu0 %v2463
        %2566 = vmatpush.bf16.msra.mxu0 %v2459
        %2567 = vmatmul.bf16.gmra.mxu0 %v2318
        %v2568 = vpop.f32.mrf.mxu0
        %v2569 = vadd.f32 0.0, %v2568
        %v2570 = vpop.f32.mrf.mxu0
        %2571 = vdwg.mxu0
        %v2572 = vadd.f32 %v2324, %v2530
        %v2573 = vadd.f32 %v2325, %v2543
        %v2574 = vadd.f32 %v2326, %v2556
        %v2575 = vadd.f32 %v2327, %v2569
        %v2576 = vxor.u32 %v2572, 2147483648
        %v2577 = vmul.f32 %v2576, 1.442695
        %v2578 = vpow.pop %v2577
        %v2579 = vadd.f32 %v2578, 1.0
        %v2580 = vrcp.pop %v2579
        %v2581 = vmul.f32 %v2579, %v2580
        %v2582 = vsub.f32 1.0, %v2581
        %v2583 = vmul.f32 %v2580, %v2582
        %v2584 = vadd.f32 %v2580, %v2583
        %vm2585 = vweird.f32 %v2579
        %vm2586 = vweird.f32 %v2580
        %vm2587 = vmor %vm2585, %vm2586
        %v2588 = vsel %vm2587, %v2580, %v2584
        %v2589 = vand.u32 2147483647, %v2579
        %vm2590 = vcmp.eq.f32.partialorder %v2589, 8.507059e+37
        %v2591 = vand.u32 %v2579, 2147483648
        %v2592 = vor.u32 1.1754944e-38, %v2591
        %v2593 = vsel %vm2590, %v2592, %v2588
        %v2594 = vmul.f32 1.0, %v2593
        %v2595 = vxor.u32 %v2573, 2147483648
        %v2596 = vmul.f32 %v2595, 1.442695
        %v2597 = vpow.pop %v2596
        %v2598 = vadd.f32 %v2597, 1.0
        %v2599 = vrcp.pop %v2598
        %v2600 = vmul.f32 %v2598, %v2599
        %v2601 = vsub.f32 1.0, %v2600
        %v2602 = vmul.f32 %v2599, %v2601
        %v2603 = vadd.f32 %v2599, %v2602
        %vm2604 = vweird.f32 %v2598
        %vm2605 = vweird.f32 %v2599
        %vm2606 = vmor %vm2604, %vm2605
        %v2607 = vsel %vm2606, %v2599, %v2603
        %v2608 = vand.u32 2147483647, %v2598
        %vm2609 = vcmp.eq.f32.partialorder %v2608, 8.507059e+37
        %v2610 = vand.u32 %v2598, 2147483648
        %v2611 = vor.u32 1.1754944e-38, %v2610
        %v2612 = vsel %vm2609, %v2611, %v2607
        %v2613 = vmul.f32 1.0, %v2612
        %v2614 = vtanh.pop %v2574
        %v2615 = vxor.u32 %v2575, 2147483648
        %v2616 = vmul.f32 %v2615, 1.442695
        %v2617 = vpow.pop %v2616
        %v2618 = vadd.f32 %v2617, 1.0
        %v2619 = vrcp.pop %v2618
        %v2620 = vmul.f32 %v2618, %v2619
        %v2621 = vsub.f32 1.0, %v2620
        %v2622 = vmul.f32 %v2619, %v2621
        %v2623 = vadd.f32 %v2619, %v2622
        %vm2624 = vweird.f32 %v2618
        %vm2625 = vweird.f32 %v2619
        %vm2626 = vmor %vm2624, %vm2625
        %v2627 = vsel %vm2626, %v2619, %v2623
        %v2628 = vand.u32 2147483647, %v2618
        %vm2629 = vcmp.eq.f32.partialorder %v2628, 8.507059e+37
        %v2630 = vand.u32 %v2618, 2147483648
        %v2631 = vor.u32 1.1754944e-38, %v2630
        %v2632 = vsel %vm2629, %v2631, %v2627
        %v2633 = vmul.f32 1.0, %v2632
        %v2634 = vmul.f32 %v2613, %v2315
        %v2635 = vmul.f32 %v2594, %v2614
        %v2636 = vadd.f32 %v2634, %v2635
        %v2637 = vtanh.pop %v2636
        %v2638 = vmul.f32 %v2633, %v2637
        %v2639 = vpack.c.bf16 %v2638, %v2638
        %s2640 = scalar_lea.vmem %s304, 20
        %2641 = vst [vmem:[%s2640] sm:$0xf] %v2639
        %s2642 = smul.u32 6, 4
        %s2643 = smul.addr %s2642, 8
        %s2644 = scalar_lea.vmem [#allocation2], %s2643
        %v2645 = vld [vmem:[%s2644] sm:$0xff]
        %v2646 = vld [vmem:[%s2644 + $0x8] sm:$0xff]
        %v2647 = vld [vmem:[%s2644 + $0x10] sm:$0xff]
        %v2648 = vld [vmem:[%s2644 + $0x18] sm:$0xff]
        %v2649 = vld [vmem:[%s4] sm:$0xff]
        %v2650 = vld [vmem:[%s4 + $0x8] sm:$0xff]
        %v2651 = vld [vmem:[%s4 + $0x10] sm:$0xff]
        %v2652 = vld [vmem:[%s4 + $0x18] sm:$0xff]
        %v2653 = vld [vmem:[%s4 + $0x20] sm:$0xff]
        %v2654 = vld [vmem:[%s4 + $0x28] sm:$0xff]
        %v2655 = vld [vmem:[%s4 + $0x30] sm:$0xff]
        %v2656 = vld [vmem:[%s4 + $0x38] sm:$0xff]
        %v2657 = vld [vmem:[%s4 + $0x40] sm:$0xff]
        %v2658 = vld [vmem:[%s4 + $0x48] sm:$0xff]
        %v2659 = vld [vmem:[%s4 + $0x50] sm:$0xff]
        %v2660 = vld [vmem:[%s4 + $0x58] sm:$0xff]
        %v2661 = vld [vmem:[%s4 + $0x60] sm:$0xff]
        %v2662 = vld [vmem:[%s4 + $0x68] sm:$0xff]
        %v2663 = vld [vmem:[%s4 + $0x70] sm:$0xff]
        %v2664 = vld [vmem:[%s4 + $0x78] sm:$0xff]
        %v2665 = vld [vmem:[%s4 + $0x80] sm:$0xff]
        %v2666 = vld [vmem:[%s4 + $0x88] sm:$0xff]
        %v2667 = vld [vmem:[%s4 + $0x90] sm:$0xff]
        %v2668 = vld [vmem:[%s4 + $0x98] sm:$0xff]
        %v2669 = vld [vmem:[%s4 + $0xa0] sm:$0xff]
        %v2670 = vld [vmem:[%s4 + $0xa8] sm:$0xff]
        %v2671 = vld [vmem:[%s4 + $0xb0] sm:$0xff]
        %v2672 = vld [vmem:[%s4 + $0xb8] sm:$0xff]
        %v2673 = vld [vmem:[%s4 + $0xc0] sm:$0xff]
        %v2674 = vld [vmem:[%s4 + $0xc8] sm:$0xff]
        %v2675 = vld [vmem:[%s4 + $0xd0] sm:$0xff]
        %v2676 = vld [vmem:[%s4 + $0xd8] sm:$0xff]
        %v2677 = vld [vmem:[%s4 + $0xe0] sm:$0xff]
        %v2678 = vld [vmem:[%s4 + $0xe8] sm:$0xff]
        %v2679 = vld [vmem:[%s4 + $0xf0] sm:$0xff]
        %v2680 = vld [vmem:[%s4 + $0xf8] sm:$0xff]
        %v2713 = vunpack.c.l.b16 %v2649
        %v2714 = vunpack.c.h.b16 %v2649
        %v2715 = vunpack.c.l.b16 %v2650
        %v2716 = vunpack.c.h.b16 %v2650
        %v2717 = vunpack.c.l.b16 %v2651
        %v2718 = vunpack.c.h.b16 %v2651
        %v2719 = vunpack.c.l.b16 %v2652
        %v2720 = vunpack.c.h.b16 %v2652
        %v2721 = vunpack.c.l.b16 %v2653
        %v2722 = vunpack.c.h.b16 %v2653
        %v2723 = vunpack.c.l.b16 %v2654
        %v2724 = vunpack.c.h.b16 %v2654
        %v2725 = vunpack.c.l.b16 %v2655
        %v2726 = vunpack.c.h.b16 %v2655
        %v2727 = vunpack.c.l.b16 %v2656
        %v2728 = vunpack.c.h.b16 %v2656
        %v2729 = vunpack.c.l.b16 %v2657
        %v2730 = vunpack.c.h.b16 %v2657
        %v2731 = vunpack.c.l.b16 %v2658
        %v2732 = vunpack.c.h.b16 %v2658
        %v2733 = vunpack.c.l.b16 %v2659
        %v2734 = vunpack.c.h.b16 %v2659
        %v2735 = vunpack.c.l.b16 %v2660
        %v2736 = vunpack.c.h.b16 %v2660
        %v2737 = vunpack.c.l.b16 %v2661
        %v2738 = vunpack.c.h.b16 %v2661
        %v2739 = vunpack.c.l.b16 %v2662
        %v2740 = vunpack.c.h.b16 %v2662
        %v2741 = vunpack.c.l.b16 %v2663
        %v2742 = vunpack.c.h.b16 %v2663
        %v2743 = vunpack.c.l.b16 %v2664
        %v2744 = vunpack.c.h.b16 %v2664
        %v2745 = vunpack.c.l.b16 %v2665
        %v2746 = vunpack.c.h.b16 %v2665
        %v2747 = vunpack.c.l.b16 %v2666
        %v2748 = vunpack.c.h.b16 %v2666
        %v2749 = vunpack.c.l.b16 %v2667
        %v2750 = vunpack.c.h.b16 %v2667
        %v2751 = vunpack.c.l.b16 %v2668
        %v2752 = vunpack.c.h.b16 %v2668
        %v2753 = vunpack.c.l.b16 %v2669
        %v2754 = vunpack.c.h.b16 %v2669
        %v2755 = vunpack.c.l.b16 %v2670
        %v2756 = vunpack.c.h.b16 %v2670
        %v2757 = vunpack.c.l.b16 %v2671
        %v2758 = vunpack.c.h.b16 %v2671
        %v2759 = vunpack.c.l.b16 %v2672
        %v2760 = vunpack.c.h.b16 %v2672
        %v2761 = vunpack.c.l.b16 %v2673
        %v2762 = vunpack.c.h.b16 %v2673
        %v2763 = vunpack.c.l.b16 %v2674
        %v2764 = vunpack.c.h.b16 %v2674
        %v2765 = vunpack.c.l.b16 %v2675
        %v2766 = vunpack.c.h.b16 %v2675
        %v2767 = vunpack.c.l.b16 %v2676
        %v2768 = vunpack.c.h.b16 %v2676
        %v2769 = vunpack.c.l.b16 %v2677
        %v2770 = vunpack.c.h.b16 %v2677
        %v2771 = vunpack.c.l.b16 %v2678
        %v2772 = vunpack.c.h.b16 %v2678
        %v2773 = vunpack.c.l.b16 %v2679
        %v2774 = vunpack.c.h.b16 %v2679
        %v2775 = vunpack.c.l.b16 %v2680
        %v2776 = vunpack.c.h.b16 %v2680
        %v2777 = vpack.c.b16 %v2717, %v2713
        %v2778 = vpack.c.b16 %v2718, %v2714
        %v2779 = vpack.c.b16 %v2719, %v2715
        %v2780 = vpack.c.b16 %v2720, %v2716
        %v2781 = vpack.c.b16 %v2725, %v2721
        %v2782 = vpack.c.b16 %v2726, %v2722
        %v2783 = vpack.c.b16 %v2727, %v2723
        %v2784 = vpack.c.b16 %v2728, %v2724
        %v2785 = vpack.c.b16 %v2733, %v2729
        %v2786 = vpack.c.b16 %v2734, %v2730
        %v2787 = vpack.c.b16 %v2735, %v2731
        %v2788 = vpack.c.b16 %v2736, %v2732
        %v2789 = vpack.c.b16 %v2741, %v2737
        %v2790 = vpack.c.b16 %v2742, %v2738
        %v2791 = vpack.c.b16 %v2743, %v2739
        %v2792 = vpack.c.b16 %v2744, %v2740
        %v2793 = vpack.c.b16 %v2749, %v2745
        %v2794 = vpack.c.b16 %v2750, %v2746
        %v2795 = vpack.c.b16 %v2751, %v2747
        %v2796 = vpack.c.b16 %v2752, %v2748
        %v2797 = vpack.c.b16 %v2757, %v2753
        %v2798 = vpack.c.b16 %v2758, %v2754
        %v2799 = vpack.c.b16 %v2759, %v2755
        %v2800 = vpack.c.b16 %v2760, %v2756
        %v2801 = vpack.c.b16 %v2765, %v2761
        %v2802 = vpack.c.b16 %v2766, %v2762
        %v2803 = vpack.c.b16 %v2767, %v2763
        %v2804 = vpack.c.b16 %v2768, %v2764
        %v2805 = vpack.c.b16 %v2773, %v2769
        %v2806 = vpack.c.b16 %v2774, %v2770
        %v2807 = vpack.c.b16 %v2775, %v2771
        %v2808 = vpack.c.b16 %v2776, %v2772
        %2841 = vmatpush.bf16.msra.mxu0 %v2805
        %2842 = vmatpush.bf16.msra.mxu0 %v2801
        %2843 = vmatpush.bf16.msra.mxu0 %v2797
        %2844 = vmatpush.bf16.msra.mxu0 %v2793
        %2845 = vmatpush.bf16.msra.mxu0 %v2789
        %2846 = vmatpush.bf16.msra.mxu0 %v2785
        %2847 = vmatpush.bf16.msra.mxu0 %v2781
        %2848 = vmatpush.bf16.msra.mxu0 %v2777
        %2849 = vmatmul.bf16.gmra.mxu0 %v2639
        %v2850 = vpop.f32.mrf.mxu0
        %v2851 = vadd.f32 0.0, %v2850
        %v2852 = vpop.f32.mrf.mxu0
        %2853 = vdwg.mxu0
        %2854 = vmatpush.bf16.msra.mxu0 %v2806
        %2855 = vmatpush.bf16.msra.mxu0 %v2802
        %2856 = vmatpush.bf16.msra.mxu0 %v2798
        %2857 = vmatpush.bf16.msra.mxu0 %v2794
        %2858 = vmatpush.bf16.msra.mxu0 %v2790
        %2859 = vmatpush.bf16.msra.mxu0 %v2786
        %2860 = vmatpush.bf16.msra.mxu0 %v2782
        %2861 = vmatpush.bf16.msra.mxu0 %v2778
        %2862 = vmatmul.bf16.gmra.mxu0 %v2639
        %v2863 = vpop.f32.mrf.mxu0
        %v2864 = vadd.f32 0.0, %v2863
        %v2865 = vpop.f32.mrf.mxu0
        %2866 = vdwg.mxu0
        %2867 = vmatpush.bf16.msra.mxu0 %v2807
        %2868 = vmatpush.bf16.msra.mxu0 %v2803
        %2869 = vmatpush.bf16.msra.mxu0 %v2799
        %2870 = vmatpush.bf16.msra.mxu0 %v2795
        %2871 = vmatpush.bf16.msra.mxu0 %v2791
        %2872 = vmatpush.bf16.msra.mxu0 %v2787
        %2873 = vmatpush.bf16.msra.mxu0 %v2783
        %2874 = vmatpush.bf16.msra.mxu0 %v2779
        %2875 = vmatmul.bf16.gmra.mxu0 %v2639
        %v2876 = vpop.f32.mrf.mxu0
        %v2877 = vadd.f32 0.0, %v2876
        %v2878 = vpop.f32.mrf.mxu0
        %2879 = vdwg.mxu0
        %2880 = vmatpush.bf16.msra.mxu0 %v2808
        %2881 = vmatpush.bf16.msra.mxu0 %v2804
        %2882 = vmatpush.bf16.msra.mxu0 %v2800
        %2883 = vmatpush.bf16.msra.mxu0 %v2796
        %2884 = vmatpush.bf16.msra.mxu0 %v2792
        %2885 = vmatpush.bf16.msra.mxu0 %v2788
        %2886 = vmatpush.bf16.msra.mxu0 %v2784
        %2887 = vmatpush.bf16.msra.mxu0 %v2780
        %2888 = vmatmul.bf16.gmra.mxu0 %v2639
        %v2889 = vpop.f32.mrf.mxu0
        %v2890 = vadd.f32 0.0, %v2889
        %v2891 = vpop.f32.mrf.mxu0
        %2892 = vdwg.mxu0
        %v2893 = vadd.f32 %v2645, %v2851
        %v2894 = vadd.f32 %v2646, %v2864
        %v2895 = vadd.f32 %v2647, %v2877
        %v2896 = vadd.f32 %v2648, %v2890
        %v2897 = vxor.u32 %v2893, 2147483648
        %v2898 = vmul.f32 %v2897, 1.442695
        %v2899 = vpow.pop %v2898
        %v2900 = vadd.f32 %v2899, 1.0
        %v2901 = vrcp.pop %v2900
        %v2902 = vmul.f32 %v2900, %v2901
        %v2903 = vsub.f32 1.0, %v2902
        %v2904 = vmul.f32 %v2901, %v2903
        %v2905 = vadd.f32 %v2901, %v2904
        %vm2906 = vweird.f32 %v2900
        %vm2907 = vweird.f32 %v2901
        %vm2908 = vmor %vm2906, %vm2907
        %v2909 = vsel %vm2908, %v2901, %v2905
        %v2910 = vand.u32 2147483647, %v2900
        %vm2911 = vcmp.eq.f32.partialorder %v2910, 8.507059e+37
        %v2912 = vand.u32 %v2900, 2147483648
        %v2913 = vor.u32 1.1754944e-38, %v2912
        %v2914 = vsel %vm2911, %v2913, %v2909
        %v2915 = vmul.f32 1.0, %v2914
        %v2916 = vxor.u32 %v2894, 2147483648
        %v2917 = vmul.f32 %v2916, 1.442695
        %v2918 = vpow.pop %v2917
        %v2919 = vadd.f32 %v2918, 1.0
        %v2920 = vrcp.pop %v2919
        %v2921 = vmul.f32 %v2919, %v2920
        %v2922 = vsub.f32 1.0, %v2921
        %v2923 = vmul.f32 %v2920, %v2922
        %v2924 = vadd.f32 %v2920, %v2923
        %vm2925 = vweird.f32 %v2919
        %vm2926 = vweird.f32 %v2920
        %vm2927 = vmor %vm2925, %vm2926
        %v2928 = vsel %vm2927, %v2920, %v2924
        %v2929 = vand.u32 2147483647, %v2919
        %vm2930 = vcmp.eq.f32.partialorder %v2929, 8.507059e+37
        %v2931 = vand.u32 %v2919, 2147483648
        %v2932 = vor.u32 1.1754944e-38, %v2931
        %v2933 = vsel %vm2930, %v2932, %v2928
        %v2934 = vmul.f32 1.0, %v2933
        %v2935 = vtanh.pop %v2895
        %v2936 = vxor.u32 %v2896, 2147483648
        %v2937 = vmul.f32 %v2936, 1.442695
        %v2938 = vpow.pop %v2937
        %v2939 = vadd.f32 %v2938, 1.0
        %v2940 = vrcp.pop %v2939
        %v2941 = vmul.f32 %v2939, %v2940
        %v2942 = vsub.f32 1.0, %v2941
        %v2943 = vmul.f32 %v2940, %v2942
        %v2944 = vadd.f32 %v2940, %v2943
        %vm2945 = vweird.f32 %v2939
        %vm2946 = vweird.f32 %v2940
        %vm2947 = vmor %vm2945, %vm2946
        %v2948 = vsel %vm2947, %v2940, %v2944
        %v2949 = vand.u32 2147483647, %v2939
        %vm2950 = vcmp.eq.f32.partialorder %v2949, 8.507059e+37
        %v2951 = vand.u32 %v2939, 2147483648
        %v2952 = vor.u32 1.1754944e-38, %v2951
        %v2953 = vsel %vm2950, %v2952, %v2948
        %v2954 = vmul.f32 1.0, %v2953
        %v2955 = vmul.f32 %v2934, %v2636
        %v2956 = vmul.f32 %v2915, %v2935
        %v2957 = vadd.f32 %v2955, %v2956
        %v2958 = vtanh.pop %v2957
        %v2959 = vmul.f32 %v2954, %v2958
        %v2960 = vpack.c.bf16 %v2959, %v2959
        %s2961 = scalar_lea.vmem %s304, 24
        %2962 = vst [vmem:[%s2961] sm:$0xf] %v2960
        %s2963 = smul.u32 7, 4
        %s2964 = smul.addr %s2963, 8
        %s2965 = scalar_lea.vmem [#allocation2], %s2964
        %v2966 = vld [vmem:[%s2965] sm:$0xff]
        %v2967 = vld [vmem:[%s2965 + $0x8] sm:$0xff]
        %v2968 = vld [vmem:[%s2965 + $0x10] sm:$0xff]
        %v2969 = vld [vmem:[%s2965 + $0x18] sm:$0xff]
        %v2970 = vld [vmem:[%s4] sm:$0xff]
        %v2971 = vld [vmem:[%s4 + $0x8] sm:$0xff]
        %v2972 = vld [vmem:[%s4 + $0x10] sm:$0xff]
        %v2973 = vld [vmem:[%s4 + $0x18] sm:$0xff]
        %v2974 = vld [vmem:[%s4 + $0x20] sm:$0xff]
        %v2975 = vld [vmem:[%s4 + $0x28] sm:$0xff]
        %v2976 = vld [vmem:[%s4 + $0x30] sm:$0xff]
        %v2977 = vld [vmem:[%s4 + $0x38] sm:$0xff]
        %v2978 = vld [vmem:[%s4 + $0x40] sm:$0xff]
        %v2979 = vld [vmem:[%s4 + $0x48] sm:$0xff]
        %v2980 = vld [vmem:[%s4 + $0x50] sm:$0xff]
        %v2981 = vld [vmem:[%s4 + $0x58] sm:$0xff]
        %v2982 = vld [vmem:[%s4 + $0x60] sm:$0xff]
        %v2983 = vld [vmem:[%s4 + $0x68] sm:$0xff]
        %v2984 = vld [vmem:[%s4 + $0x70] sm:$0xff]
        %v2985 = vld [vmem:[%s4 + $0x78] sm:$0xff]
        %v2986 = vld [vmem:[%s4 + $0x80] sm:$0xff]
        %v2987 = vld [vmem:[%s4 + $0x88] sm:$0xff]
        %v2988 = vld [vmem:[%s4 + $0x90] sm:$0xff]
        %v2989 = vld [vmem:[%s4 + $0x98] sm:$0xff]
        %v2990 = vld [vmem:[%s4 + $0xa0] sm:$0xff]
        %v2991 = vld [vmem:[%s4 + $0xa8] sm:$0xff]
        %v2992 = vld [vmem:[%s4 + $0xb0] sm:$0xff]
        %v2993 = vld [vmem:[%s4 + $0xb8] sm:$0xff]
        %v2994 = vld [vmem:[%s4 + $0xc0] sm:$0xff]
        %v2995 = vld [vmem:[%s4 + $0xc8] sm:$0xff]
        %v2996 = vld [vmem:[%s4 + $0xd0] sm:$0xff]
        %v2997 = vld [vmem:[%s4 + $0xd8] sm:$0xff]
        %v2998 = vld [vmem:[%s4 + $0xe0] sm:$0xff]
        %v2999 = vld [vmem:[%s4 + $0xe8] sm:$0xff]
        %v3000 = vld [vmem:[%s4 + $0xf0] sm:$0xff]
        %v3001 = vld [vmem:[%s4 + $0xf8] sm:$0xff]
        %v3034 = vunpack.c.l.b16 %v2970
        %v3035 = vunpack.c.h.b16 %v2970
        %v3036 = vunpack.c.l.b16 %v2971
        %v3037 = vunpack.c.h.b16 %v2971
        %v3038 = vunpack.c.l.b16 %v2972
        %v3039 = vunpack.c.h.b16 %v2972
        %v3040 = vunpack.c.l.b16 %v2973
        %v3041 = vunpack.c.h.b16 %v2973
        %v3042 = vunpack.c.l.b16 %v2974
        %v3043 = vunpack.c.h.b16 %v2974
        %v3044 = vunpack.c.l.b16 %v2975
        %v3045 = vunpack.c.h.b16 %v2975
        %v3046 = vunpack.c.l.b16 %v2976
        %v3047 = vunpack.c.h.b16 %v2976
        %v3048 = vunpack.c.l.b16 %v2977
        %v3049 = vunpack.c.h.b16 %v2977
        %v3050 = vunpack.c.l.b16 %v2978
        %v3051 = vunpack.c.h.b16 %v2978
        %v3052 = vunpack.c.l.b16 %v2979
        %v3053 = vunpack.c.h.b16 %v2979
        %v3054 = vunpack.c.l.b16 %v2980
        %v3055 = vunpack.c.h.b16 %v2980
        %v3056 = vunpack.c.l.b16 %v2981
        %v3057 = vunpack.c.h.b16 %v2981
        %v3058 = vunpack.c.l.b16 %v2982
        %v3059 = vunpack.c.h.b16 %v2982
        %v3060 = vunpack.c.l.b16 %v2983
        %v3061 = vunpack.c.h.b16 %v2983
        %v3062 = vunpack.c.l.b16 %v2984
        %v3063 = vunpack.c.h.b16 %v2984
        %v3064 = vunpack.c.l.b16 %v2985
        %v3065 = vunpack.c.h.b16 %v2985
        %v3066 = vunpack.c.l.b16 %v2986
        %v3067 = vunpack.c.h.b16 %v2986
        %v3068 = vunpack.c.l.b16 %v2987
        %v3069 = vunpack.c.h.b16 %v2987
        %v3070 = vunpack.c.l.b16 %v2988
        %v3071 = vunpack.c.h.b16 %v2988
        %v3072 = vunpack.c.l.b16 %v2989
        %v3073 = vunpack.c.h.b16 %v2989
        %v3074 = vunpack.c.l.b16 %v2990
        %v3075 = vunpack.c.h.b16 %v2990
        %v3076 = vunpack.c.l.b16 %v2991
        %v3077 = vunpack.c.h.b16 %v2991
        %v3078 = vunpack.c.l.b16 %v2992
        %v3079 = vunpack.c.h.b16 %v2992
        %v3080 = vunpack.c.l.b16 %v2993
        %v3081 = vunpack.c.h.b16 %v2993
        %v3082 = vunpack.c.l.b16 %v2994
        %v3083 = vunpack.c.h.b16 %v2994
        %v3084 = vunpack.c.l.b16 %v2995
        %v3085 = vunpack.c.h.b16 %v2995
        %v3086 = vunpack.c.l.b16 %v2996
        %v3087 = vunpack.c.h.b16 %v2996
        %v3088 = vunpack.c.l.b16 %v2997
        %v3089 = vunpack.c.h.b16 %v2997
        %v3090 = vunpack.c.l.b16 %v2998
        %v3091 = vunpack.c.h.b16 %v2998
        %v3092 = vunpack.c.l.b16 %v2999
        %v3093 = vunpack.c.h.b16 %v2999
        %v3094 = vunpack.c.l.b16 %v3000
        %v3095 = vunpack.c.h.b16 %v3000
        %v3096 = vunpack.c.l.b16 %v3001
        %v3097 = vunpack.c.h.b16 %v3001
        %v3098 = vpack.c.b16 %v3038, %v3034
        %v3099 = vpack.c.b16 %v3039, %v3035
        %v3100 = vpack.c.b16 %v3040, %v3036
        %v3101 = vpack.c.b16 %v3041, %v3037
        %v3102 = vpack.c.b16 %v3046, %v3042
        %v3103 = vpack.c.b16 %v3047, %v3043
        %v3104 = vpack.c.b16 %v3048, %v3044
        %v3105 = vpack.c.b16 %v3049, %v3045
        %v3106 = vpack.c.b16 %v3054, %v3050
        %v3107 = vpack.c.b16 %v3055, %v3051
        %v3108 = vpack.c.b16 %v3056, %v3052
        %v3109 = vpack.c.b16 %v3057, %v3053
        %v3110 = vpack.c.b16 %v3062, %v3058
        %v3111 = vpack.c.b16 %v3063, %v3059
        %v3112 = vpack.c.b16 %v3064, %v3060
        %v3113 = vpack.c.b16 %v3065, %v3061
        %v3114 = vpack.c.b16 %v3070, %v3066
        %v3115 = vpack.c.b16 %v3071, %v3067
        %v3116 = vpack.c.b16 %v3072, %v3068
        %v3117 = vpack.c.b16 %v3073, %v3069
        %v3118 = vpack.c.b16 %v3078, %v3074
        %v3119 = vpack.c.b16 %v3079, %v3075
        %v3120 = vpack.c.b16 %v3080, %v3076
        %v3121 = vpack.c.b16 %v3081, %v3077
        %v3122 = vpack.c.b16 %v3086, %v3082
        %v3123 = vpack.c.b16 %v3087, %v3083
        %v3124 = vpack.c.b16 %v3088, %v3084
        %v3125 = vpack.c.b16 %v3089, %v3085
        %v3126 = vpack.c.b16 %v3094, %v3090
        %v3127 = vpack.c.b16 %v3095, %v3091
        %v3128 = vpack.c.b16 %v3096, %v3092
        %v3129 = vpack.c.b16 %v3097, %v3093
        %3162 = vmatpush.bf16.msra.mxu0 %v3126
        %3163 = vmatpush.bf16.msra.mxu0 %v3122
        %3164 = vmatpush.bf16.msra.mxu0 %v3118
        %3165 = vmatpush.bf16.msra.mxu0 %v3114
        %3166 = vmatpush.bf16.msra.mxu0 %v3110
        %3167 = vmatpush.bf16.msra.mxu0 %v3106
        %3168 = vmatpush.bf16.msra.mxu0 %v3102
        %3169 = vmatpush.bf16.msra.mxu0 %v3098
        %3170 = vmatmul.bf16.gmra.mxu0 %v2960
        %v3171 = vpop.f32.mrf.mxu0
        %v3172 = vadd.f32 0.0, %v3171
        %v3173 = vpop.f32.mrf.mxu0
        %3174 = vdwg.mxu0
        %3175 = vmatpush.bf16.msra.mxu0 %v3127
        %3176 = vmatpush.bf16.msra.mxu0 %v3123
        %3177 = vmatpush.bf16.msra.mxu0 %v3119
        %3178 = vmatpush.bf16.msra.mxu0 %v3115
        %3179 = vmatpush.bf16.msra.mxu0 %v3111
        %3180 = vmatpush.bf16.msra.mxu0 %v3107
        %3181 = vmatpush.bf16.msra.mxu0 %v3103
        %3182 = vmatpush.bf16.msra.mxu0 %v3099
        %3183 = vmatmul.bf16.gmra.mxu0 %v2960
        %v3184 = vpop.f32.mrf.mxu0
        %v3185 = vadd.f32 0.0, %v3184
        %v3186 = vpop.f32.mrf.mxu0
        %3187 = vdwg.mxu0
        %3188 = vmatpush.bf16.msra.mxu0 %v3128
        %3189 = vmatpush.bf16.msra.mxu0 %v3124
        %3190 = vmatpush.bf16.msra.mxu0 %v3120
        %3191 = vmatpush.bf16.msra.mxu0 %v3116
        %3192 = vmatpush.bf16.msra.mxu0 %v3112
        %3193 = vmatpush.bf16.msra.mxu0 %v3108
        %3194 = vmatpush.bf16.msra.mxu0 %v3104
        %3195 = vmatpush.bf16.msra.mxu0 %v3100
        %3196 = vmatmul.bf16.gmra.mxu0 %v2960
        %v3197 = vpop.f32.mrf.mxu0
        %v3198 = vadd.f32 0.0, %v3197
        %v3199 = vpop.f32.mrf.mxu0
        %3200 = vdwg.mxu0
        %3201 = vmatpush.bf16.msra.mxu0 %v3129
        %3202 = vmatpush.bf16.msra.mxu0 %v3125
        %3203 = vmatpush.bf16.msra.mxu0 %v3121
        %3204 = vmatpush.bf16.msra.mxu0 %v3117
        %3205 = vmatpush.bf16.msra.mxu0 %v3113
        %3206 = vmatpush.bf16.msra.mxu0 %v3109
        %3207 = vmatpush.bf16.msra.mxu0 %v3105
        %3208 = vmatpush.bf16.msra.mxu0 %v3101
        %3209 = vmatmul.bf16.gmra.mxu0 %v2960
        %v3210 = vpop.f32.mrf.mxu0
        %v3211 = vadd.f32 0.0, %v3210
        %v3212 = vpop.f32.mrf.mxu0
        %3213 = vdwg.mxu0
        %v3214 = vadd.f32 %v2966, %v3172
        %v3215 = vadd.f32 %v2967, %v3185
        %v3216 = vadd.f32 %v2968, %v3198
        %v3217 = vadd.f32 %v2969, %v3211
        %v3218 = vxor.u32 %v3214, 2147483648
        %v3219 = vmul.f32 %v3218, 1.442695
        %v3220 = vpow.pop %v3219
        %v3221 = vadd.f32 %v3220, 1.0
        %v3222 = vrcp.pop %v3221
        %v3223 = vmul.f32 %v3221, %v3222
        %v3224 = vsub.f32 1.0, %v3223
        %v3225 = vmul.f32 %v3222, %v3224
        %v3226 = vadd.f32 %v3222, %v3225
        %vm3227 = vweird.f32 %v3221
        %vm3228 = vweird.f32 %v3222
        %vm3229 = vmor %vm3227, %vm3228
        %v3230 = vsel %vm3229, %v3222, %v3226
        %v3231 = vand.u32 2147483647, %v3221
        %vm3232 = vcmp.eq.f32.partialorder %v3231, 8.507059e+37
        %v3233 = vand.u32 %v3221, 2147483648
        %v3234 = vor.u32 1.1754944e-38, %v3233
        %v3235 = vsel %vm3232, %v3234, %v3230
        %v3236 = vmul.f32 1.0, %v3235
        %v3237 = vxor.u32 %v3215, 2147483648
        %v3238 = vmul.f32 %v3237, 1.442695
        %v3239 = vpow.pop %v3238
        %v3240 = vadd.f32 %v3239, 1.0
        %v3241 = vrcp.pop %v3240
        %v3242 = vmul.f32 %v3240, %v3241
        %v3243 = vsub.f32 1.0, %v3242
        %v3244 = vmul.f32 %v3241, %v3243
        %v3245 = vadd.f32 %v3241, %v3244
        %vm3246 = vweird.f32 %v3240
        %vm3247 = vweird.f32 %v3241
        %vm3248 = vmor %vm3246, %vm3247
        %v3249 = vsel %vm3248, %v3241, %v3245
        %v3250 = vand.u32 2147483647, %v3240
        %vm3251 = vcmp.eq.f32.partialorder %v3250, 8.507059e+37
        %v3252 = vand.u32 %v3240, 2147483648
        %v3253 = vor.u32 1.1754944e-38, %v3252
        %v3254 = vsel %vm3251, %v3253, %v3249
        %v3255 = vmul.f32 1.0, %v3254
        %v3256 = vtanh.pop %v3216
        %v3257 = vxor.u32 %v3217, 2147483648
        %v3258 = vmul.f32 %v3257, 1.442695
        %v3259 = vpow.pop %v3258
        %v3260 = vadd.f32 %v3259, 1.0
        %v3261 = vrcp.pop %v3260
        %v3262 = vmul.f32 %v3260, %v3261
        %v3263 = vsub.f32 1.0, %v3262
        %v3264 = vmul.f32 %v3261, %v3263
        %v3265 = vadd.f32 %v3261, %v3264
        %vm3266 = vweird.f32 %v3260
        %vm3267 = vweird.f32 %v3261
        %vm3268 = vmor %vm3266, %vm3267
        %v3269 = vsel %vm3268, %v3261, %v3265
        %v3270 = vand.u32 2147483647, %v3260
        %vm3271 = vcmp.eq.f32.partialorder %v3270, 8.507059e+37
        %v3272 = vand.u32 %v3260, 2147483648
        %v3273 = vor.u32 1.1754944e-38, %v3272
        %v3274 = vsel %vm3271, %v3273, %v3269
        %v3275 = vmul.f32 1.0, %v3274
        %v3276 = vmul.f32 %v3255, %v2957
        %v3277 = vmul.f32 %v3236, %v3256
        %v3278 = vadd.f32 %v3276, %v3277
        %v3279 = vtanh.pop %v3278
        %v3280 = vmul.f32 %v3275, %v3279
        %v3281 = vpack.c.bf16 %v3280, %v3280
        %s3282 = scalar_lea.vmem %s304, 28
        %3283 = vst [vmem:[%s3282] sm:$0xf] %v3281
        %s3284 = smul.u32 8, 4
        %s3285 = smul.addr %s3284, 8
        %s3286 = scalar_lea.vmem [#allocation2], %s3285
        %v3287 = vld [vmem:[%s3286] sm:$0xff]
        %v3288 = vld [vmem:[%s3286 + $0x8] sm:$0xff]
        %v3289 = vld [vmem:[%s3286 + $0x10] sm:$0xff]
        %v3290 = vld [vmem:[%s3286 + $0x18] sm:$0xff]
        %v3291 = vld [vmem:[%s4] sm:$0xff]
        %v3292 = vld [vmem:[%s4 + $0x8] sm:$0xff]
        %v3293 = vld [vmem:[%s4 + $0x10] sm:$0xff]
        %v3294 = vld [vmem:[%s4 + $0x18] sm:$0xff]
        %v3295 = vld [vmem:[%s4 + $0x20] sm:$0xff]
        %v3296 = vld [vmem:[%s4 + $0x28] sm:$0xff]
        %v3297 = vld [vmem:[%s4 + $0x30] sm:$0xff]
        %v3298 = vld [vmem:[%s4 + $0x38] sm:$0xff]
        %v3299 = vld [vmem:[%s4 + $0x40] sm:$0xff]
        %v3300 = vld [vmem:[%s4 + $0x48] sm:$0xff]
        %v3301 = vld [vmem:[%s4 + $0x50] sm:$0xff]
        %v3302 = vld [vmem:[%s4 + $0x58] sm:$0xff]
        %v3303 = vld [vmem:[%s4 + $0x60] sm:$0xff]
        %v3304 = vld [vmem:[%s4 + $0x68] sm:$0xff]
        %v3305 = vld [vmem:[%s4 + $0x70] sm:$0xff]
        %v3306 = vld [vmem:[%s4 + $0x78] sm:$0xff]
        %v3307 = vld [vmem:[%s4 + $0x80] sm:$0xff]
        %v3308 = vld [vmem:[%s4 + $0x88] sm:$0xff]
        %v3309 = vld [vmem:[%s4 + $0x90] sm:$0xff]
        %v3310 = vld [vmem:[%s4 + $0x98] sm:$0xff]
        %v3311 = vld [vmem:[%s4 + $0xa0] sm:$0xff]
        %v3312 = vld [vmem:[%s4 + $0xa8] sm:$0xff]
        %v3313 = vld [vmem:[%s4 + $0xb0] sm:$0xff]
        %v3314 = vld [vmem:[%s4 + $0xb8] sm:$0xff]
        %v3315 = vld [vmem:[%s4 + $0xc0] sm:$0xff]
        %v3316 = vld [vmem:[%s4 + $0xc8] sm:$0xff]
        %v3317 = vld [vmem:[%s4 + $0xd0] sm:$0xff]
        %v3318 = vld [vmem:[%s4 + $0xd8] sm:$0xff]
        %v3319 = vld [vmem:[%s4 + $0xe0] sm:$0xff]
        %v3320 = vld [vmem:[%s4 + $0xe8] sm:$0xff]
        %v3321 = vld [vmem:[%s4 + $0xf0] sm:$0xff]
        %v3322 = vld [vmem:[%s4 + $0xf8] sm:$0xff]
        %v3355 = vunpack.c.l.b16 %v3291
        %v3356 = vunpack.c.h.b16 %v3291
        %v3357 = vunpack.c.l.b16 %v3292
        %v3358 = vunpack.c.h.b16 %v3292
        %v3359 = vunpack.c.l.b16 %v3293
        %v3360 = vunpack.c.h.b16 %v3293
        %v3361 = vunpack.c.l.b16 %v3294
        %v3362 = vunpack.c.h.b16 %v3294
        %v3363 = vunpack.c.l.b16 %v3295
        %v3364 = vunpack.c.h.b16 %v3295
        %v3365 = vunpack.c.l.b16 %v3296
        %v3366 = vunpack.c.h.b16 %v3296
        %v3367 = vunpack.c.l.b16 %v3297
        %v3368 = vunpack.c.h.b16 %v3297
        %v3369 = vunpack.c.l.b16 %v3298
        %v3370 = vunpack.c.h.b16 %v3298
        %v3371 = vunpack.c.l.b16 %v3299
        %v3372 = vunpack.c.h.b16 %v3299
        %v3373 = vunpack.c.l.b16 %v3300
        %v3374 = vunpack.c.h.b16 %v3300
        %v3375 = vunpack.c.l.b16 %v3301
        %v3376 = vunpack.c.h.b16 %v3301
        %v3377 = vunpack.c.l.b16 %v3302
        %v3378 = vunpack.c.h.b16 %v3302
        %v3379 = vunpack.c.l.b16 %v3303
        %v3380 = vunpack.c.h.b16 %v3303
        %v3381 = vunpack.c.l.b16 %v3304
        %v3382 = vunpack.c.h.b16 %v3304
        %v3383 = vunpack.c.l.b16 %v3305
        %v3384 = vunpack.c.h.b16 %v3305
        %v3385 = vunpack.c.l.b16 %v3306
        %v3386 = vunpack.c.h.b16 %v3306
        %v3387 = vunpack.c.l.b16 %v3307
        %v3388 = vunpack.c.h.b16 %v3307
        %v3389 = vunpack.c.l.b16 %v3308
        %v3390 = vunpack.c.h.b16 %v3308
        %v3391 = vunpack.c.l.b16 %v3309
        %v3392 = vunpack.c.h.b16 %v3309
        %v3393 = vunpack.c.l.b16 %v3310
        %v3394 = vunpack.c.h.b16 %v3310
        %v3395 = vunpack.c.l.b16 %v3311
        %v3396 = vunpack.c.h.b16 %v3311
        %v3397 = vunpack.c.l.b16 %v3312
        %v3398 = vunpack.c.h.b16 %v3312
        %v3399 = vunpack.c.l.b16 %v3313
        %v3400 = vunpack.c.h.b16 %v3313
        %v3401 = vunpack.c.l.b16 %v3314
        %v3402 = vunpack.c.h.b16 %v3314
        %v3403 = vunpack.c.l.b16 %v3315
        %v3404 = vunpack.c.h.b16 %v3315
        %v3405 = vunpack.c.l.b16 %v3316
        %v3406 = vunpack.c.h.b16 %v3316
        %v3407 = vunpack.c.l.b16 %v3317
        %v3408 = vunpack.c.h.b16 %v3317
        %v3409 = vunpack.c.l.b16 %v3318
        %v3410 = vunpack.c.h.b16 %v3318
        %v3411 = vunpack.c.l.b16 %v3319
        %v3412 = vunpack.c.h.b16 %v3319
        %v3413 = vunpack.c.l.b16 %v3320
        %v3414 = vunpack.c.h.b16 %v3320
        %v3415 = vunpack.c.l.b16 %v3321
        %v3416 = vunpack.c.h.b16 %v3321
        %v3417 = vunpack.c.l.b16 %v3322
        %v3418 = vunpack.c.h.b16 %v3322
        %v3419 = vpack.c.b16 %v3359, %v3355
        %v3420 = vpack.c.b16 %v3360, %v3356
        %v3421 = vpack.c.b16 %v3361, %v3357
        %v3422 = vpack.c.b16 %v3362, %v3358
        %v3423 = vpack.c.b16 %v3367, %v3363
        %v3424 = vpack.c.b16 %v3368, %v3364
        %v3425 = vpack.c.b16 %v3369, %v3365
        %v3426 = vpack.c.b16 %v3370, %v3366
        %v3427 = vpack.c.b16 %v3375, %v3371
        %v3428 = vpack.c.b16 %v3376, %v3372
        %v3429 = vpack.c.b16 %v3377, %v3373
        %v3430 = vpack.c.b16 %v3378, %v3374
        %v3431 = vpack.c.b16 %v3383, %v3379
        %v3432 = vpack.c.b16 %v3384, %v3380
        %v3433 = vpack.c.b16 %v3385, %v3381
        %v3434 = vpack.c.b16 %v3386, %v3382
        %v3435 = vpack.c.b16 %v3391, %v3387
        %v3436 = vpack.c.b16 %v3392, %v3388
        %v3437 = vpack.c.b16 %v3393, %v3389
        %v3438 = vpack.c.b16 %v3394, %v3390
        %v3439 = vpack.c.b16 %v3399, %v3395
        %v3440 = vpack.c.b16 %v3400, %v3396
        %v3441 = vpack.c.b16 %v3401, %v3397
        %v3442 = vpack.c.b16 %v3402, %v3398
        %v3443 = vpack.c.b16 %v3407, %v3403
        %v3444 = vpack.c.b16 %v3408, %v3404
        %v3445 = vpack.c.b16 %v3409, %v3405
        %v3446 = vpack.c.b16 %v3410, %v3406
        %v3447 = vpack.c.b16 %v3415, %v3411
        %v3448 = vpack.c.b16 %v3416, %v3412
        %v3449 = vpack.c.b16 %v3417, %v3413
        %v3450 = vpack.c.b16 %v3418, %v3414
        %3483 = vmatpush.bf16.msra.mxu0 %v3447
        %3484 = vmatpush.bf16.msra.mxu0 %v3443
        %3485 = vmatpush.bf16.msra.mxu0 %v3439
        %3486 = vmatpush.bf16.msra.mxu0 %v3435
        %3487 = vmatpush.bf16.msra.mxu0 %v3431
        %3488 = vmatpush.bf16.msra.mxu0 %v3427
        %3489 = vmatpush.bf16.msra.mxu0 %v3423
        %3490 = vmatpush.bf16.msra.mxu0 %v3419
        %3491 = vmatmul.bf16.gmra.mxu0 %v3281
        %v3492 = vpop.f32.mrf.mxu0
        %v3493 = vadd.f32 0.0, %v3492
        %v3494 = vpop.f32.mrf.mxu0
        %3495 = vdwg.mxu0
        %3496 = vmatpush.bf16.msra.mxu0 %v3448
        %3497 = vmatpush.bf16.msra.mxu0 %v3444
        %3498 = vmatpush.bf16.msra.mxu0 %v3440
        %3499 = vmatpush.bf16.msra.mxu0 %v3436
        %3500 = vmatpush.bf16.msra.mxu0 %v3432
        %3501 = vmatpush.bf16.msra.mxu0 %v3428
        %3502 = vmatpush.bf16.msra.mxu0 %v3424
        %3503 = vmatpush.bf16.msra.mxu0 %v3420
        %3504 = vmatmul.bf16.gmra.mxu0 %v3281
        %v3505 = vpop.f32.mrf.mxu0
        %v3506 = vadd.f32 0.0, %v3505
        %v3507 = vpop.f32.mrf.mxu0
        %3508 = vdwg.mxu0
        %3509 = vmatpush.bf16.msra.mxu0 %v3449
        %3510 = vmatpush.bf16.msra.mxu0 %v3445
        %3511 = vmatpush.bf16.msra.mxu0 %v3441
        %3512 = vmatpush.bf16.msra.mxu0 %v3437
        %3513 = vmatpush.bf16.msra.mxu0 %v3433
        %3514 = vmatpush.bf16.msra.mxu0 %v3429
        %3515 = vmatpush.bf16.msra.mxu0 %v3425
        %3516 = vmatpush.bf16.msra.mxu0 %v3421
        %3517 = vmatmul.bf16.gmra.mxu0 %v3281
        %v3518 = vpop.f32.mrf.mxu0
        %v3519 = vadd.f32 0.0, %v3518
        %v3520 = vpop.f32.mrf.mxu0
        %3521 = vdwg.mxu0
        %3522 = vmatpush.bf16.msra.mxu0 %v3450
        %3523 = vmatpush.bf16.msra.mxu0 %v3446
        %3524 = vmatpush.bf16.msra.mxu0 %v3442
        %3525 = vmatpush.bf16.msra.mxu0 %v3438
        %3526 = vmatpush.bf16.msra.mxu0 %v3434
        %3527 = vmatpush.bf16.msra.mxu0 %v3430
        %3528 = vmatpush.bf16.msra.mxu0 %v3426
        %3529 = vmatpush.bf16.msra.mxu0 %v3422
        %3530 = vmatmul.bf16.gmra.mxu0 %v3281
        %v3531 = vpop.f32.mrf.mxu0
        %v3532 = vadd.f32 0.0, %v3531
        %v3533 = vpop.f32.mrf.mxu0
        %3534 = vdwg.mxu0
        %v3535 = vadd.f32 %v3287, %v3493
        %v3536 = vadd.f32 %v3288, %v3506
        %v3537 = vadd.f32 %v3289, %v3519
        %v3538 = vadd.f32 %v3290, %v3532
        %v3539 = vxor.u32 %v3535, 2147483648
        %v3540 = vmul.f32 %v3539, 1.442695
        %v3541 = vpow.pop %v3540
        %v3542 = vadd.f32 %v3541, 1.0
        %v3543 = vrcp.pop %v3542
        %v3544 = vmul.f32 %v3542, %v3543
        %v3545 = vsub.f32 1.0, %v3544
        %v3546 = vmul.f32 %v3543, %v3545
        %v3547 = vadd.f32 %v3543, %v3546
        %vm3548 = vweird.f32 %v3542
        %vm3549 = vweird.f32 %v3543
        %vm3550 = vmor %vm3548, %vm3549
        %v3551 = vsel %vm3550, %v3543, %v3547
        %v3552 = vand.u32 2147483647, %v3542
        %vm3553 = vcmp.eq.f32.partialorder %v3552, 8.507059e+37
        %v3554 = vand.u32 %v3542, 2147483648
        %v3555 = vor.u32 1.1754944e-38, %v3554
        %v3556 = vsel %vm3553, %v3555, %v3551
        %v3557 = vmul.f32 1.0, %v3556
        %v3558 = vxor.u32 %v3536, 2147483648
        %v3559 = vmul.f32 %v3558, 1.442695
        %v3560 = vpow.pop %v3559
        %v3561 = vadd.f32 %v3560, 1.0
        %v3562 = vrcp.pop %v3561
        %v3563 = vmul.f32 %v3561, %v3562
        %v3564 = vsub.f32 1.0, %v3563
        %v3565 = vmul.f32 %v3562, %v3564
        %v3566 = vadd.f32 %v3562, %v3565
        %vm3567 = vweird.f32 %v3561
        %vm3568 = vweird.f32 %v3562
        %vm3569 = vmor %vm3567, %vm3568
        %v3570 = vsel %vm3569, %v3562, %v3566
        %v3571 = vand.u32 2147483647, %v3561
        %vm3572 = vcmp.eq.f32.partialorder %v3571, 8.507059e+37
        %v3573 = vand.u32 %v3561, 2147483648
        %v3574 = vor.u32 1.1754944e-38, %v3573
        %v3575 = vsel %vm3572, %v3574, %v3570
        %v3576 = vmul.f32 1.0, %v3575
        %v3577 = vtanh.pop %v3537
        %v3578 = vxor.u32 %v3538, 2147483648
        %v3579 = vmul.f32 %v3578, 1.442695
        %v3580 = vpow.pop %v3579
        %v3581 = vadd.f32 %v3580, 1.0
        %v3582 = vrcp.pop %v3581
        %v3583 = vmul.f32 %v3581, %v3582
        %v3584 = vsub.f32 1.0, %v3583
        %v3585 = vmul.f32 %v3582, %v3584
        %v3586 = vadd.f32 %v3582, %v3585
        %vm3587 = vweird.f32 %v3581
        %vm3588 = vweird.f32 %v3582
        %vm3589 = vmor %vm3587, %vm3588
        %v3590 = vsel %vm3589, %v3582, %v3586
        %v3591 = vand.u32 2147483647, %v3581
        %vm3592 = vcmp.eq.f32.partialorder %v3591, 8.507059e+37
        %v3593 = vand.u32 %v3581, 2147483648
        %v3594 = vor.u32 1.1754944e-38, %v3593
        %v3595 = vsel %vm3592, %v3594, %v3590
        %v3596 = vmul.f32 1.0, %v3595
        %v3597 = vmul.f32 %v3576, %v3278
        %v3598 = vmul.f32 %v3557, %v3577
        %v3599 = vadd.f32 %v3597, %v3598
        %v3600 = vtanh.pop %v3599
        %v3601 = vmul.f32 %v3596, %v3600
        %v3602 = vpack.c.bf16 %v3601, %v3601
        %s3603 = scalar_lea.vmem %s304, 32
        %3604 = vst [vmem:[%s3603] sm:$0xf] %v3602
        %s3605 = smul.u32 9, 4
        %s3606 = smul.addr %s3605, 8
        %s3607 = scalar_lea.vmem [#allocation2], %s3606
        %v3608 = vld [vmem:[%s3607] sm:$0xff]
        %v3609 = vld [vmem:[%s3607 + $0x8] sm:$0xff]
        %v3610 = vld [vmem:[%s3607 + $0x10] sm:$0xff]
        %v3611 = vld [vmem:[%s3607 + $0x18] sm:$0xff]
        %v3612 = vld [vmem:[%s4] sm:$0xff]
        %v3613 = vld [vmem:[%s4 + $0x8] sm:$0xff]
        %v3614 = vld [vmem:[%s4 + $0x10] sm:$0xff]
        %v3615 = vld [vmem:[%s4 + $0x18] sm:$0xff]
        %v3616 = vld [vmem:[%s4 + $0x20] sm:$0xff]
        %v3617 = vld [vmem:[%s4 + $0x28] sm:$0xff]
        %v3618 = vld [vmem:[%s4 + $0x30] sm:$0xff]
        %v3619 = vld [vmem:[%s4 + $0x38] sm:$0xff]
        %v3620 = vld [vmem:[%s4 + $0x40] sm:$0xff]
        %v3621 = vld [vmem:[%s4 + $0x48] sm:$0xff]
        %v3622 = vld [vmem:[%s4 + $0x50] sm:$0xff]
        %v3623 = vld [vmem:[%s4 + $0x58] sm:$0xff]
        %v3624 = vld [vmem:[%s4 + $0x60] sm:$0xff]
        %v3625 = vld [vmem:[%s4 + $0x68] sm:$0xff]
        %v3626 = vld [vmem:[%s4 + $0x70] sm:$0xff]
        %v3627 = vld [vmem:[%s4 + $0x78] sm:$0xff]
        %v3628 = vld [vmem:[%s4 + $0x80] sm:$0xff]
        %v3629 = vld [vmem:[%s4 + $0x88] sm:$0xff]
        %v3630 = vld [vmem:[%s4 + $0x90] sm:$0xff]
        %v3631 = vld [vmem:[%s4 + $0x98] sm:$0xff]
        %v3632 = vld [vmem:[%s4 + $0xa0] sm:$0xff]
        %v3633 = vld [vmem:[%s4 + $0xa8] sm:$0xff]
        %v3634 = vld [vmem:[%s4 + $0xb0] sm:$0xff]
        %v3635 = vld [vmem:[%s4 + $0xb8] sm:$0xff]
        %v3636 = vld [vmem:[%s4 + $0xc0] sm:$0xff]
        %v3637 = vld [vmem:[%s4 + $0xc8] sm:$0xff]
        %v3638 = vld [vmem:[%s4 + $0xd0] sm:$0xff]
        %v3639 = vld [vmem:[%s4 + $0xd8] sm:$0xff]
        %v3640 = vld [vmem:[%s4 + $0xe0] sm:$0xff]
        %v3641 = vld [vmem:[%s4 + $0xe8] sm:$0xff]
        %v3642 = vld [vmem:[%s4 + $0xf0] sm:$0xff]
        %v3643 = vld [vmem:[%s4 + $0xf8] sm:$0xff]
        %v3676 = vunpack.c.l.b16 %v3612
        %v3677 = vunpack.c.h.b16 %v3612
        %v3678 = vunpack.c.l.b16 %v3613
        %v3679 = vunpack.c.h.b16 %v3613
        %v3680 = vunpack.c.l.b16 %v3614
        %v3681 = vunpack.c.h.b16 %v3614
        %v3682 = vunpack.c.l.b16 %v3615
        %v3683 = vunpack.c.h.b16 %v3615
        %v3684 = vunpack.c.l.b16 %v3616
        %v3685 = vunpack.c.h.b16 %v3616
        %v3686 = vunpack.c.l.b16 %v3617
        %v3687 = vunpack.c.h.b16 %v3617
        %v3688 = vunpack.c.l.b16 %v3618
        %v3689 = vunpack.c.h.b16 %v3618
        %v3690 = vunpack.c.l.b16 %v3619
        %v3691 = vunpack.c.h.b16 %v3619
        %v3692 = vunpack.c.l.b16 %v3620
        %v3693 = vunpack.c.h.b16 %v3620
        %v3694 = vunpack.c.l.b16 %v3621
        %v3695 = vunpack.c.h.b16 %v3621
        %v3696 = vunpack.c.l.b16 %v3622
        %v3697 = vunpack.c.h.b16 %v3622
        %v3698 = vunpack.c.l.b16 %v3623
        %v3699 = vunpack.c.h.b16 %v3623
        %v3700 = vunpack.c.l.b16 %v3624
        %v3701 = vunpack.c.h.b16 %v3624
        %v3702 = vunpack.c.l.b16 %v3625
        %v3703 = vunpack.c.h.b16 %v3625
        %v3704 = vunpack.c.l.b16 %v3626
        %v3705 = vunpack.c.h.b16 %v3626
        %v3706 = vunpack.c.l.b16 %v3627
        %v3707 = vunpack.c.h.b16 %v3627
        %v3708 = vunpack.c.l.b16 %v3628
        %v3709 = vunpack.c.h.b16 %v3628
        %v3710 = vunpack.c.l.b16 %v3629
        %v3711 = vunpack.c.h.b16 %v3629
        %v3712 = vunpack.c.l.b16 %v3630
        %v3713 = vunpack.c.h.b16 %v3630
        %v3714 = vunpack.c.l.b16 %v3631
        %v3715 = vunpack.c.h.b16 %v3631
        %v3716 = vunpack.c.l.b16 %v3632
        %v3717 = vunpack.c.h.b16 %v3632
        %v3718 = vunpack.c.l.b16 %v3633
        %v3719 = vunpack.c.h.b16 %v3633
        %v3720 = vunpack.c.l.b16 %v3634
        %v3721 = vunpack.c.h.b16 %v3634
        %v3722 = vunpack.c.l.b16 %v3635
        %v3723 = vunpack.c.h.b16 %v3635
        %v3724 = vunpack.c.l.b16 %v3636
        %v3725 = vunpack.c.h.b16 %v3636
        %v3726 = vunpack.c.l.b16 %v3637
        %v3727 = vunpack.c.h.b16 %v3637
        %v3728 = vunpack.c.l.b16 %v3638
        %v3729 = vunpack.c.h.b16 %v3638
        %v3730 = vunpack.c.l.b16 %v3639
        %v3731 = vunpack.c.h.b16 %v3639
        %v3732 = vunpack.c.l.b16 %v3640
        %v3733 = vunpack.c.h.b16 %v3640
        %v3734 = vunpack.c.l.b16 %v3641
        %v3735 = vunpack.c.h.b16 %v3641
        %v3736 = vunpack.c.l.b16 %v3642
        %v3737 = vunpack.c.h.b16 %v3642
        %v3738 = vunpack.c.l.b16 %v3643
        %v3739 = vunpack.c.h.b16 %v3643
        %v3740 = vpack.c.b16 %v3680, %v3676
        %v3741 = vpack.c.b16 %v3681, %v3677
        %v3742 = vpack.c.b16 %v3682, %v3678
        %v3743 = vpack.c.b16 %v3683, %v3679
        %v3744 = vpack.c.b16 %v3688, %v3684
        %v3745 = vpack.c.b16 %v3689, %v3685
        %v3746 = vpack.c.b16 %v3690, %v3686
        %v3747 = vpack.c.b16 %v3691, %v3687
        %v3748 = vpack.c.b16 %v3696, %v3692
        %v3749 = vpack.c.b16 %v3697, %v3693
        %v3750 = vpack.c.b16 %v3698, %v3694
        %v3751 = vpack.c.b16 %v3699, %v3695
        %v3752 = vpack.c.b16 %v3704, %v3700
        %v3753 = vpack.c.b16 %v3705, %v3701
        %v3754 = vpack.c.b16 %v3706, %v3702
        %v3755 = vpack.c.b16 %v3707, %v3703
        %v3756 = vpack.c.b16 %v3712, %v3708
        %v3757 = vpack.c.b16 %v3713, %v3709
        %v3758 = vpack.c.b16 %v3714, %v3710
        %v3759 = vpack.c.b16 %v3715, %v3711
        %v3760 = vpack.c.b16 %v3720, %v3716
        %v3761 = vpack.c.b16 %v3721, %v3717
        %v3762 = vpack.c.b16 %v3722, %v3718
        %v3763 = vpack.c.b16 %v3723, %v3719
        %v3764 = vpack.c.b16 %v3728, %v3724
        %v3765 = vpack.c.b16 %v3729, %v3725
        %v3766 = vpack.c.b16 %v3730, %v3726
        %v3767 = vpack.c.b16 %v3731, %v3727
        %v3768 = vpack.c.b16 %v3736, %v3732
        %v3769 = vpack.c.b16 %v3737, %v3733
        %v3770 = vpack.c.b16 %v3738, %v3734
        %v3771 = vpack.c.b16 %v3739, %v3735
        %3804 = vmatpush.bf16.msra.mxu0 %v3768
        %3805 = vmatpush.bf16.msra.mxu0 %v3764
        %3806 = vmatpush.bf16.msra.mxu0 %v3760
        %3807 = vmatpush.bf16.msra.mxu0 %v3756
        %3808 = vmatpush.bf16.msra.mxu0 %v3752
        %3809 = vmatpush.bf16.msra.mxu0 %v3748
        %3810 = vmatpush.bf16.msra.mxu0 %v3744
        %3811 = vmatpush.bf16.msra.mxu0 %v3740
        %3812 = vmatmul.bf16.gmra.mxu0 %v3602
        %v3813 = vpop.f32.mrf.mxu0
        %v3814 = vadd.f32 0.0, %v3813
        %v3815 = vpop.f32.mrf.mxu0
        %3816 = vdwg.mxu0
        %3817 = vmatpush.bf16.msra.mxu0 %v3769
        %3818 = vmatpush.bf16.msra.mxu0 %v3765
        %3819 = vmatpush.bf16.msra.mxu0 %v3761
        %3820 = vmatpush.bf16.msra.mxu0 %v3757
        %3821 = vmatpush.bf16.msra.mxu0 %v3753
        %3822 = vmatpush.bf16.msra.mxu0 %v3749
        %3823 = vmatpush.bf16.msra.mxu0 %v3745
        %3824 = vmatpush.bf16.msra.mxu0 %v3741
        %3825 = vmatmul.bf16.gmra.mxu0 %v3602
        %v3826 = vpop.f32.mrf.mxu0
        %v3827 = vadd.f32 0.0, %v3826
        %v3828 = vpop.f32.mrf.mxu0
        %3829 = vdwg.mxu0
        %3830 = vmatpush.bf16.msra.mxu0 %v3770
        %3831 = vmatpush.bf16.msra.mxu0 %v3766
        %3832 = vmatpush.bf16.msra.mxu0 %v3762
        %3833 = vmatpush.bf16.msra.mxu0 %v3758
        %3834 = vmatpush.bf16.msra.mxu0 %v3754
        %3835 = vmatpush.bf16.msra.mxu0 %v3750
        %3836 = vmatpush.bf16.msra.mxu0 %v3746
        %3837 = vmatpush.bf16.msra.mxu0 %v3742
        %3838 = vmatmul.bf16.gmra.mxu0 %v3602
        %v3839 = vpop.f32.mrf.mxu0
        %v3840 = vadd.f32 0.0, %v3839
        %v3841 = vpop.f32.mrf.mxu0
        %3842 = vdwg.mxu0
        %3843 = vmatpush.bf16.msra.mxu0 %v3771
        %3844 = vmatpush.bf16.msra.mxu0 %v3767
        %3845 = vmatpush.bf16.msra.mxu0 %v3763
        %3846 = vmatpush.bf16.msra.mxu0 %v3759
        %3847 = vmatpush.bf16.msra.mxu0 %v3755
        %3848 = vmatpush.bf16.msra.mxu0 %v3751
        %3849 = vmatpush.bf16.msra.mxu0 %v3747
        %3850 = vmatpush.bf16.msra.mxu0 %v3743
        %3851 = vmatmul.bf16.gmra.mxu0 %v3602
        %v3852 = vpop.f32.mrf.mxu0
        %v3853 = vadd.f32 0.0, %v3852
        %v3854 = vpop.f32.mrf.mxu0
        %3855 = vdwg.mxu0
        %v3856 = vadd.f32 %v3608, %v3814
        %v3857 = vadd.f32 %v3609, %v3827
        %v3858 = vadd.f32 %v3610, %v3840
        %v3859 = vadd.f32 %v3611, %v3853
        %v3860 = vxor.u32 %v3856, 2147483648
        %v3861 = vmul.f32 %v3860, 1.442695
        %v3862 = vpow.pop %v3861
        %v3863 = vadd.f32 %v3862, 1.0
        %v3864 = vrcp.pop %v3863
        %v3865 = vmul.f32 %v3863, %v3864
        %v3866 = vsub.f32 1.0, %v3865
        %v3867 = vmul.f32 %v3864, %v3866
        %v3868 = vadd.f32 %v3864, %v3867
        %vm3869 = vweird.f32 %v3863
        %vm3870 = vweird.f32 %v3864
        %vm3871 = vmor %vm3869, %vm3870
        %v3872 = vsel %vm3871, %v3864, %v3868
        %v3873 = vand.u32 2147483647, %v3863
        %vm3874 = vcmp.eq.f32.partialorder %v3873, 8.507059e+37
        %v3875 = vand.u32 %v3863, 2147483648
        %v3876 = vor.u32 1.1754944e-38, %v3875
        %v3877 = vsel %vm3874, %v3876, %v3872
        %v3878 = vmul.f32 1.0, %v3877
        %v3879 = vxor.u32 %v3857, 2147483648
        %v3880 = vmul.f32 %v3879, 1.442695
        %v3881 = vpow.pop %v3880
        %v3882 = vadd.f32 %v3881, 1.0
        %v3883 = vrcp.pop %v3882
        %v3884 = vmul.f32 %v3882, %v3883
        %v3885 = vsub.f32 1.0, %v3884
        %v3886 = vmul.f32 %v3883, %v3885
        %v3887 = vadd.f32 %v3883, %v3886
        %vm3888 = vweird.f32 %v3882
        %vm3889 = vweird.f32 %v3883
        %vm3890 = vmor %vm3888, %vm3889
        %v3891 = vsel %vm3890, %v3883, %v3887
        %v3892 = vand.u32 2147483647, %v3882
        %vm3893 = vcmp.eq.f32.partialorder %v3892, 8.507059e+37
        %v3894 = vand.u32 %v3882, 2147483648
        %v3895 = vor.u32 1.1754944e-38, %v3894
        %v3896 = vsel %vm3893, %v3895, %v3891
        %v3897 = vmul.f32 1.0, %v3896
        %v3898 = vtanh.pop %v3858
        %v3899 = vxor.u32 %v3859, 2147483648
        %v3900 = vmul.f32 %v3899, 1.442695
        %v3901 = vpow.pop %v3900
        %v3902 = vadd.f32 %v3901, 1.0
        %v3903 = vrcp.pop %v3902
        %v3904 = vmul.f32 %v3902, %v3903
        %v3905 = vsub.f32 1.0, %v3904
        %v3906 = vmul.f32 %v3903, %v3905
        %v3907 = vadd.f32 %v3903, %v3906
        %vm3908 = vweird.f32 %v3902
        %vm3909 = vweird.f32 %v3903
        %vm3910 = vmor %vm3908, %vm3909
        %v3911 = vsel %vm3910, %v3903, %v3907
        %v3912 = vand.u32 2147483647, %v3902
        %vm3913 = vcmp.eq.f32.partialorder %v3912, 8.507059e+37
        %v3914 = vand.u32 %v3902, 2147483648
        %v3915 = vor.u32 1.1754944e-38, %v3914
        %v3916 = vsel %vm3913, %v3915, %v3911
        %v3917 = vmul.f32 1.0, %v3916
        %v3918 = vmul.f32 %v3897, %v3599
        %v3919 = vmul.f32 %v3878, %v3898
        %v3920 = vadd.f32 %v3918, %v3919
        %v3921 = vtanh.pop %v3920
        %v3922 = vmul.f32 %v3917, %v3921
        %v3923 = vpack.c.bf16 %v3922, %v3922
        %s3924 = scalar_lea.vmem %s304, 36
        %3925 = vst [vmem:[%s3924] sm:$0xf] %v3923
        %s3926 = smul.u32 10, 4
        %s3927 = smul.addr %s3926, 8
        %s3928 = scalar_lea.vmem [#allocation2], %s3927
        %v3929 = vld [vmem:[%s3928] sm:$0xff]
        %v3930 = vld [vmem:[%s3928 + $0x8] sm:$0xff]
        %v3931 = vld [vmem:[%s3928 + $0x10] sm:$0xff]
        %v3932 = vld [vmem:[%s3928 + $0x18] sm:$0xff]
        %v3933 = vld [vmem:[%s4] sm:$0xff]
        %v3934 = vld [vmem:[%s4 + $0x8] sm:$0xff]
        %v3935 = vld [vmem:[%s4 + $0x10] sm:$0xff]
        %v3936 = vld [vmem:[%s4 + $0x18] sm:$0xff]
        %v3937 = vld [vmem:[%s4 + $0x20] sm:$0xff]
        %v3938 = vld [vmem:[%s4 + $0x28] sm:$0xff]
        %v3939 = vld [vmem:[%s4 + $0x30] sm:$0xff]
        %v3940 = vld [vmem:[%s4 + $0x38] sm:$0xff]
        %v3941 = vld [vmem:[%s4 + $0x40] sm:$0xff]
        %v3942 = vld [vmem:[%s4 + $0x48] sm:$0xff]
        %v3943 = vld [vmem:[%s4 + $0x50] sm:$0xff]
        %v3944 = vld [vmem:[%s4 + $0x58] sm:$0xff]
        %v3945 = vld [vmem:[%s4 + $0x60] sm:$0xff]
        %v3946 = vld [vmem:[%s4 + $0x68] sm:$0xff]
        %v3947 = vld [vmem:[%s4 + $0x70] sm:$0xff]
        %v3948 = vld [vmem:[%s4 + $0x78] sm:$0xff]
        %v3949 = vld [vmem:[%s4 + $0x80] sm:$0xff]
        %v3950 = vld [vmem:[%s4 + $0x88] sm:$0xff]
        %v3951 = vld [vmem:[%s4 + $0x90] sm:$0xff]
        %v3952 = vld [vmem:[%s4 + $0x98] sm:$0xff]
        %v3953 = vld [vmem:[%s4 + $0xa0] sm:$0xff]
        %v3954 = vld [vmem:[%s4 + $0xa8] sm:$0xff]
        %v3955 = vld [vmem:[%s4 + $0xb0] sm:$0xff]
        %v3956 = vld [vmem:[%s4 + $0xb8] sm:$0xff]
        %v3957 = vld [vmem:[%s4 + $0xc0] sm:$0xff]
        %v3958 = vld [vmem:[%s4 + $0xc8] sm:$0xff]
        %v3959 = vld [vmem:[%s4 + $0xd0] sm:$0xff]
        %v3960 = vld [vmem:[%s4 + $0xd8] sm:$0xff]
        %v3961 = vld [vmem:[%s4 + $0xe0] sm:$0xff]
        %v3962 = vld [vmem:[%s4 + $0xe8] sm:$0xff]
        %v3963 = vld [vmem:[%s4 + $0xf0] sm:$0xff]
        %v3964 = vld [vmem:[%s4 + $0xf8] sm:$0xff]
        %v3997 = vunpack.c.l.b16 %v3933
        %v3998 = vunpack.c.h.b16 %v3933
        %v3999 = vunpack.c.l.b16 %v3934
        %v4000 = vunpack.c.h.b16 %v3934
        %v4001 = vunpack.c.l.b16 %v3935
        %v4002 = vunpack.c.h.b16 %v3935
        %v4003 = vunpack.c.l.b16 %v3936
        %v4004 = vunpack.c.h.b16 %v3936
        %v4005 = vunpack.c.l.b16 %v3937
        %v4006 = vunpack.c.h.b16 %v3937
        %v4007 = vunpack.c.l.b16 %v3938
        %v4008 = vunpack.c.h.b16 %v3938
        %v4009 = vunpack.c.l.b16 %v3939
        %v4010 = vunpack.c.h.b16 %v3939
        %v4011 = vunpack.c.l.b16 %v3940
        %v4012 = vunpack.c.h.b16 %v3940
        %v4013 = vunpack.c.l.b16 %v3941
        %v4014 = vunpack.c.h.b16 %v3941
        %v4015 = vunpack.c.l.b16 %v3942
        %v4016 = vunpack.c.h.b16 %v3942
        %v4017 = vunpack.c.l.b16 %v3943
        %v4018 = vunpack.c.h.b16 %v3943
        %v4019 = vunpack.c.l.b16 %v3944
        %v4020 = vunpack.c.h.b16 %v3944
        %v4021 = vunpack.c.l.b16 %v3945
        %v4022 = vunpack.c.h.b16 %v3945
        %v4023 = vunpack.c.l.b16 %v3946
        %v4024 = vunpack.c.h.b16 %v3946
        %v4025 = vunpack.c.l.b16 %v3947
        %v4026 = vunpack.c.h.b16 %v3947
        %v4027 = vunpack.c.l.b16 %v3948
        %v4028 = vunpack.c.h.b16 %v3948
        %v4029 = vunpack.c.l.b16 %v3949
        %v4030 = vunpack.c.h.b16 %v3949
        %v4031 = vunpack.c.l.b16 %v3950
        %v4032 = vunpack.c.h.b16 %v3950
        %v4033 = vunpack.c.l.b16 %v3951
        %v4034 = vunpack.c.h.b16 %v3951
        %v4035 = vunpack.c.l.b16 %v3952
        %v4036 = vunpack.c.h.b16 %v3952
        %v4037 = vunpack.c.l.b16 %v3953
        %v4038 = vunpack.c.h.b16 %v3953
        %v4039 = vunpack.c.l.b16 %v3954
        %v4040 = vunpack.c.h.b16 %v3954
        %v4041 = vunpack.c.l.b16 %v3955
        %v4042 = vunpack.c.h.b16 %v3955
        %v4043 = vunpack.c.l.b16 %v3956
        %v4044 = vunpack.c.h.b16 %v3956
        %v4045 = vunpack.c.l.b16 %v3957
        %v4046 = vunpack.c.h.b16 %v3957
        %v4047 = vunpack.c.l.b16 %v3958
        %v4048 = vunpack.c.h.b16 %v3958
        %v4049 = vunpack.c.l.b16 %v3959
        %v4050 = vunpack.c.h.b16 %v3959
        %v4051 = vunpack.c.l.b16 %v3960
        %v4052 = vunpack.c.h.b16 %v3960
        %v4053 = vunpack.c.l.b16 %v3961
        %v4054 = vunpack.c.h.b16 %v3961
        %v4055 = vunpack.c.l.b16 %v3962
        %v4056 = vunpack.c.h.b16 %v3962
        %v4057 = vunpack.c.l.b16 %v3963
        %v4058 = vunpack.c.h.b16 %v3963
        %v4059 = vunpack.c.l.b16 %v3964
        %v4060 = vunpack.c.h.b16 %v3964
        %v4061 = vpack.c.b16 %v4001, %v3997
        %v4062 = vpack.c.b16 %v4002, %v3998
        %v4063 = vpack.c.b16 %v4003, %v3999
        %v4064 = vpack.c.b16 %v4004, %v4000
        %v4065 = vpack.c.b16 %v4009, %v4005
        %v4066 = vpack.c.b16 %v4010, %v4006
        %v4067 = vpack.c.b16 %v4011, %v4007
        %v4068 = vpack.c.b16 %v4012, %v4008
        %v4069 = vpack.c.b16 %v4017, %v4013
        %v4070 = vpack.c.b16 %v4018, %v4014
        %v4071 = vpack.c.b16 %v4019, %v4015
        %v4072 = vpack.c.b16 %v4020, %v4016
        %v4073 = vpack.c.b16 %v4025, %v4021
        %v4074 = vpack.c.b16 %v4026, %v4022
        %v4075 = vpack.c.b16 %v4027, %v4023
        %v4076 = vpack.c.b16 %v4028, %v4024
        %v4077 = vpack.c.b16 %v4033, %v4029
        %v4078 = vpack.c.b16 %v4034, %v4030
        %v4079 = vpack.c.b16 %v4035, %v4031
        %v4080 = vpack.c.b16 %v4036, %v4032
        %v4081 = vpack.c.b16 %v4041, %v4037
        %v4082 = vpack.c.b16 %v4042, %v4038
        %v4083 = vpack.c.b16 %v4043, %v4039
        %v4084 = vpack.c.b16 %v4044, %v4040
        %v4085 = vpack.c.b16 %v4049, %v4045
        %v4086 = vpack.c.b16 %v4050, %v4046
        %v4087 = vpack.c.b16 %v4051, %v4047
        %v4088 = vpack.c.b16 %v4052, %v4048
        %v4089 = vpack.c.b16 %v4057, %v4053
        %v4090 = vpack.c.b16 %v4058, %v4054
        %v4091 = vpack.c.b16 %v4059, %v4055
        %v4092 = vpack.c.b16 %v4060, %v4056
        %4125 = vmatpush.bf16.msra.mxu0 %v4089
        %4126 = vmatpush.bf16.msra.mxu0 %v4085
        %4127 = vmatpush.bf16.msra.mxu0 %v4081
        %4128 = vmatpush.bf16.msra.mxu0 %v4077
        %4129 = vmatpush.bf16.msra.mxu0 %v4073
        %4130 = vmatpush.bf16.msra.mxu0 %v4069
        %4131 = vmatpush.bf16.msra.mxu0 %v4065
        %4132 = vmatpush.bf16.msra.mxu0 %v4061
        %4133 = vmatmul.bf16.gmra.mxu0 %v3923
        %v4134 = vpop.f32.mrf.mxu0
        %v4135 = vadd.f32 0.0, %v4134
        %v4136 = vpop.f32.mrf.mxu0
        %4137 = vdwg.mxu0
        %4138 = vmatpush.bf16.msra.mxu0 %v4090
        %4139 = vmatpush.bf16.msra.mxu0 %v4086
        %4140 = vmatpush.bf16.msra.mxu0 %v4082
        %4141 = vmatpush.bf16.msra.mxu0 %v4078
        %4142 = vmatpush.bf16.msra.mxu0 %v4074
        %4143 = vmatpush.bf16.msra.mxu0 %v4070
        %4144 = vmatpush.bf16.msra.mxu0 %v4066
        %4145 = vmatpush.bf16.msra.mxu0 %v4062
        %4146 = vmatmul.bf16.gmra.mxu0 %v3923
        %v4147 = vpop.f32.mrf.mxu0
        %v4148 = vadd.f32 0.0, %v4147
        %v4149 = vpop.f32.mrf.mxu0
        %4150 = vdwg.mxu0
        %4151 = vmatpush.bf16.msra.mxu0 %v4091
        %4152 = vmatpush.bf16.msra.mxu0 %v4087
        %4153 = vmatpush.bf16.msra.mxu0 %v4083
        %4154 = vmatpush.bf16.msra.mxu0 %v4079
        %4155 = vmatpush.bf16.msra.mxu0 %v4075
        %4156 = vmatpush.bf16.msra.mxu0 %v4071
        %4157 = vmatpush.bf16.msra.mxu0 %v4067
        %4158 = vmatpush.bf16.msra.mxu0 %v4063
        %4159 = vmatmul.bf16.gmra.mxu0 %v3923
        %v4160 = vpop.f32.mrf.mxu0
        %v4161 = vadd.f32 0.0, %v4160
        %v4162 = vpop.f32.mrf.mxu0
        %4163 = vdwg.mxu0
        %4164 = vmatpush.bf16.msra.mxu0 %v4092
        %4165 = vmatpush.bf16.msra.mxu0 %v4088
        %4166 = vmatpush.bf16.msra.mxu0 %v4084
        %4167 = vmatpush.bf16.msra.mxu0 %v4080
        %4168 = vmatpush.bf16.msra.mxu0 %v4076
        %4169 = vmatpush.bf16.msra.mxu0 %v4072
        %4170 = vmatpush.bf16.msra.mxu0 %v4068
        %4171 = vmatpush.bf16.msra.mxu0 %v4064
        %4172 = vmatmul.bf16.gmra.mxu0 %v3923
        %v4173 = vpop.f32.mrf.mxu0
        %v4174 = vadd.f32 0.0, %v4173
        %v4175 = vpop.f32.mrf.mxu0
        %4176 = vdwg.mxu0
        %v4177 = vadd.f32 %v3929, %v4135
        %v4178 = vadd.f32 %v3930, %v4148
        %v4179 = vadd.f32 %v3931, %v4161
        %v4180 = vadd.f32 %v3932, %v4174
        %v4181 = vxor.u32 %v4177, 2147483648
        %v4182 = vmul.f32 %v4181, 1.442695
        %v4183 = vpow.pop %v4182
        %v4184 = vadd.f32 %v4183, 1.0
        %v4185 = vrcp.pop %v4184
        %v4186 = vmul.f32 %v4184, %v4185
        %v4187 = vsub.f32 1.0, %v4186
        %v4188 = vmul.f32 %v4185, %v4187
        %v4189 = vadd.f32 %v4185, %v4188
        %vm4190 = vweird.f32 %v4184
        %vm4191 = vweird.f32 %v4185
        %vm4192 = vmor %vm4190, %vm4191
        %v4193 = vsel %vm4192, %v4185, %v4189
        %v4194 = vand.u32 2147483647, %v4184
        %vm4195 = vcmp.eq.f32.partialorder %v4194, 8.507059e+37
        %v4196 = vand.u32 %v4184, 2147483648
        %v4197 = vor.u32 1.1754944e-38, %v4196
        %v4198 = vsel %vm4195, %v4197, %v4193
        %v4199 = vmul.f32 1.0, %v4198
        %v4200 = vxor.u32 %v4178, 2147483648
        %v4201 = vmul.f32 %v4200, 1.442695
        %v4202 = vpow.pop %v4201
        %v4203 = vadd.f32 %v4202, 1.0
        %v4204 = vrcp.pop %v4203
        %v4205 = vmul.f32 %v4203, %v4204
        %v4206 = vsub.f32 1.0, %v4205
        %v4207 = vmul.f32 %v4204, %v4206
        %v4208 = vadd.f32 %v4204, %v4207
        %vm4209 = vweird.f32 %v4203
        %vm4210 = vweird.f32 %v4204
        %vm4211 = vmor %vm4209, %vm4210
        %v4212 = vsel %vm4211, %v4204, %v4208
        %v4213 = vand.u32 2147483647, %v4203
        %vm4214 = vcmp.eq.f32.partialorder %v4213, 8.507059e+37
        %v4215 = vand.u32 %v4203, 2147483648
        %v4216 = vor.u32 1.1754944e-38, %v4215
        %v4217 = vsel %vm4214, %v4216, %v4212
        %v4218 = vmul.f32 1.0, %v4217
        %v4219 = vtanh.pop %v4179
        %v4220 = vxor.u32 %v4180, 2147483648
        %v4221 = vmul.f32 %v4220, 1.442695
        %v4222 = vpow.pop %v4221
        %v4223 = vadd.f32 %v4222, 1.0
        %v4224 = vrcp.pop %v4223
        %v4225 = vmul.f32 %v4223, %v4224
        %v4226 = vsub.f32 1.0, %v4225
        %v4227 = vmul.f32 %v4224, %v4226
        %v4228 = vadd.f32 %v4224, %v4227
        %vm4229 = vweird.f32 %v4223
        %vm4230 = vweird.f32 %v4224
        %vm4231 = vmor %vm4229, %vm4230
        %v4232 = vsel %vm4231, %v4224, %v4228
        %v4233 = vand.u32 2147483647, %v4223
        %vm4234 = vcmp.eq.f32.partialorder %v4233, 8.507059e+37
        %v4235 = vand.u32 %v4223, 2147483648
        %v4236 = vor.u32 1.1754944e-38, %v4235
        %v4237 = vsel %vm4234, %v4236, %v4232
        %v4238 = vmul.f32 1.0, %v4237
        %v4239 = vmul.f32 %v4218, %v3920
        %v4240 = vmul.f32 %v4199, %v4219
        %v4241 = vadd.f32 %v4239, %v4240
        %v4242 = vtanh.pop %v4241
        %v4243 = vmul.f32 %v4238, %v4242
        %v4244 = vpack.c.bf16 %v4243, %v4243
        %s4245 = scalar_lea.vmem %s304, 40
        %4246 = vst [vmem:[%s4245] sm:$0xf] %v4244
        %s4247 = smul.u32 11, 4
        %s4248 = smul.addr %s4247, 8
        %s4249 = scalar_lea.vmem [#allocation2], %s4248
        %v4250 = vld [vmem:[%s4249] sm:$0xff]
        %v4251 = vld [vmem:[%s4249 + $0x8] sm:$0xff]
        %v4252 = vld [vmem:[%s4249 + $0x10] sm:$0xff]
        %v4253 = vld [vmem:[%s4249 + $0x18] sm:$0xff]
        %v4254 = vld [vmem:[%s4] sm:$0xff]
        %v4255 = vld [vmem:[%s4 + $0x8] sm:$0xff]
        %v4256 = vld [vmem:[%s4 + $0x10] sm:$0xff]
        %v4257 = vld [vmem:[%s4 + $0x18] sm:$0xff]
        %v4258 = vld [vmem:[%s4 + $0x20] sm:$0xff]
        %v4259 = vld [vmem:[%s4 + $0x28] sm:$0xff]
        %v4260 = vld [vmem:[%s4 + $0x30] sm:$0xff]
        %v4261 = vld [vmem:[%s4 + $0x38] sm:$0xff]
        %v4262 = vld [vmem:[%s4 + $0x40] sm:$0xff]
        %v4263 = vld [vmem:[%s4 + $0x48] sm:$0xff]
        %v4264 = vld [vmem:[%s4 + $0x50] sm:$0xff]
        %v4265 = vld [vmem:[%s4 + $0x58] sm:$0xff]
        %v4266 = vld [vmem:[%s4 + $0x60] sm:$0xff]
        %v4267 = vld [vmem:[%s4 + $0x68] sm:$0xff]
        %v4268 = vld [vmem:[%s4 + $0x70] sm:$0xff]
        %v4269 = vld [vmem:[%s4 + $0x78] sm:$0xff]
        %v4270 = vld [vmem:[%s4 + $0x80] sm:$0xff]
        %v4271 = vld [vmem:[%s4 + $0x88] sm:$0xff]
        %v4272 = vld [vmem:[%s4 + $0x90] sm:$0xff]
        %v4273 = vld [vmem:[%s4 + $0x98] sm:$0xff]
        %v4274 = vld [vmem:[%s4 + $0xa0] sm:$0xff]
        %v4275 = vld [vmem:[%s4 + $0xa8] sm:$0xff]
        %v4276 = vld [vmem:[%s4 + $0xb0] sm:$0xff]
        %v4277 = vld [vmem:[%s4 + $0xb8] sm:$0xff]
        %v4278 = vld [vmem:[%s4 + $0xc0] sm:$0xff]
        %v4279 = vld [vmem:[%s4 + $0xc8] sm:$0xff]
        %v4280 = vld [vmem:[%s4 + $0xd0] sm:$0xff]
        %v4281 = vld [vmem:[%s4 + $0xd8] sm:$0xff]
        %v4282 = vld [vmem:[%s4 + $0xe0] sm:$0xff]
        %v4283 = vld [vmem:[%s4 + $0xe8] sm:$0xff]
        %v4284 = vld [vmem:[%s4 + $0xf0] sm:$0xff]
        %v4285 = vld [vmem:[%s4 + $0xf8] sm:$0xff]
        %v4318 = vunpack.c.l.b16 %v4254
        %v4319 = vunpack.c.h.b16 %v4254
        %v4320 = vunpack.c.l.b16 %v4255
        %v4321 = vunpack.c.h.b16 %v4255
        %v4322 = vunpack.c.l.b16 %v4256
        %v4323 = vunpack.c.h.b16 %v4256
        %v4324 = vunpack.c.l.b16 %v4257
        %v4325 = vunpack.c.h.b16 %v4257
        %v4326 = vunpack.c.l.b16 %v4258
        %v4327 = vunpack.c.h.b16 %v4258
        %v4328 = vunpack.c.l.b16 %v4259
        %v4329 = vunpack.c.h.b16 %v4259
        %v4330 = vunpack.c.l.b16 %v4260
        %v4331 = vunpack.c.h.b16 %v4260
        %v4332 = vunpack.c.l.b16 %v4261
        %v4333 = vunpack.c.h.b16 %v4261
        %v4334 = vunpack.c.l.b16 %v4262
        %v4335 = vunpack.c.h.b16 %v4262
        %v4336 = vunpack.c.l.b16 %v4263
        %v4337 = vunpack.c.h.b16 %v4263
        %v4338 = vunpack.c.l.b16 %v4264
        %v4339 = vunpack.c.h.b16 %v4264
        %v4340 = vunpack.c.l.b16 %v4265
        %v4341 = vunpack.c.h.b16 %v4265
        %v4342 = vunpack.c.l.b16 %v4266
        %v4343 = vunpack.c.h.b16 %v4266
        %v4344 = vunpack.c.l.b16 %v4267
        %v4345 = vunpack.c.h.b16 %v4267
        %v4346 = vunpack.c.l.b16 %v4268
        %v4347 = vunpack.c.h.b16 %v4268
        %v4348 = vunpack.c.l.b16 %v4269
        %v4349 = vunpack.c.h.b16 %v4269
        %v4350 = vunpack.c.l.b16 %v4270
        %v4351 = vunpack.c.h.b16 %v4270
        %v4352 = vunpack.c.l.b16 %v4271
        %v4353 = vunpack.c.h.b16 %v4271
        %v4354 = vunpack.c.l.b16 %v4272
        %v4355 = vunpack.c.h.b16 %v4272
        %v4356 = vunpack.c.l.b16 %v4273
        %v4357 = vunpack.c.h.b16 %v4273
        %v4358 = vunpack.c.l.b16 %v4274
        %v4359 = vunpack.c.h.b16 %v4274
        %v4360 = vunpack.c.l.b16 %v4275
        %v4361 = vunpack.c.h.b16 %v4275
        %v4362 = vunpack.c.l.b16 %v4276
        %v4363 = vunpack.c.h.b16 %v4276
        %v4364 = vunpack.c.l.b16 %v4277
        %v4365 = vunpack.c.h.b16 %v4277
        %v4366 = vunpack.c.l.b16 %v4278
        %v4367 = vunpack.c.h.b16 %v4278
        %v4368 = vunpack.c.l.b16 %v4279
        %v4369 = vunpack.c.h.b16 %v4279
        %v4370 = vunpack.c.l.b16 %v4280
        %v4371 = vunpack.c.h.b16 %v4280
        %v4372 = vunpack.c.l.b16 %v4281
        %v4373 = vunpack.c.h.b16 %v4281
        %v4374 = vunpack.c.l.b16 %v4282
        %v4375 = vunpack.c.h.b16 %v4282
        %v4376 = vunpack.c.l.b16 %v4283
        %v4377 = vunpack.c.h.b16 %v4283
        %v4378 = vunpack.c.l.b16 %v4284
        %v4379 = vunpack.c.h.b16 %v4284
        %v4380 = vunpack.c.l.b16 %v4285
        %v4381 = vunpack.c.h.b16 %v4285
        %v4382 = vpack.c.b16 %v4322, %v4318
        %v4383 = vpack.c.b16 %v4323, %v4319
        %v4384 = vpack.c.b16 %v4324, %v4320
        %v4385 = vpack.c.b16 %v4325, %v4321
        %v4386 = vpack.c.b16 %v4330, %v4326
        %v4387 = vpack.c.b16 %v4331, %v4327
        %v4388 = vpack.c.b16 %v4332, %v4328
        %v4389 = vpack.c.b16 %v4333, %v4329
        %v4390 = vpack.c.b16 %v4338, %v4334
        %v4391 = vpack.c.b16 %v4339, %v4335
        %v4392 = vpack.c.b16 %v4340, %v4336
        %v4393 = vpack.c.b16 %v4341, %v4337
        %v4394 = vpack.c.b16 %v4346, %v4342
        %v4395 = vpack.c.b16 %v4347, %v4343
        %v4396 = vpack.c.b16 %v4348, %v4344
        %v4397 = vpack.c.b16 %v4349, %v4345
        %v4398 = vpack.c.b16 %v4354, %v4350
        %v4399 = vpack.c.b16 %v4355, %v4351
        %v4400 = vpack.c.b16 %v4356, %v4352
        %v4401 = vpack.c.b16 %v4357, %v4353
        %v4402 = vpack.c.b16 %v4362, %v4358
        %v4403 = vpack.c.b16 %v4363, %v4359
        %v4404 = vpack.c.b16 %v4364, %v4360
        %v4405 = vpack.c.b16 %v4365, %v4361
        %v4406 = vpack.c.b16 %v4370, %v4366
        %v4407 = vpack.c.b16 %v4371, %v4367
        %v4408 = vpack.c.b16 %v4372, %v4368
        %v4409 = vpack.c.b16 %v4373, %v4369
        %v4410 = vpack.c.b16 %v4378, %v4374
        %v4411 = vpack.c.b16 %v4379, %v4375
        %v4412 = vpack.c.b16 %v4380, %v4376
        %v4413 = vpack.c.b16 %v4381, %v4377
        %4446 = vmatpush.bf16.msra.mxu0 %v4410
        %4447 = vmatpush.bf16.msra.mxu0 %v4406
        %4448 = vmatpush.bf16.msra.mxu0 %v4402
        %4449 = vmatpush.bf16.msra.mxu0 %v4398
        %4450 = vmatpush.bf16.msra.mxu0 %v4394
        %4451 = vmatpush.bf16.msra.mxu0 %v4390
        %4452 = vmatpush.bf16.msra.mxu0 %v4386
        %4453 = vmatpush.bf16.msra.mxu0 %v4382
        %4454 = vmatmul.bf16.gmra.mxu0 %v4244
        %v4455 = vpop.f32.mrf.mxu0
        %v4456 = vadd.f32 0.0, %v4455
        %v4457 = vpop.f32.mrf.mxu0
        %4458 = vdwg.mxu0
        %4459 = vmatpush.bf16.msra.mxu0 %v4411
        %4460 = vmatpush.bf16.msra.mxu0 %v4407
        %4461 = vmatpush.bf16.msra.mxu0 %v4403
        %4462 = vmatpush.bf16.msra.mxu0 %v4399
        %4463 = vmatpush.bf16.msra.mxu0 %v4395
        %4464 = vmatpush.bf16.msra.mxu0 %v4391
        %4465 = vmatpush.bf16.msra.mxu0 %v4387
        %4466 = vmatpush.bf16.msra.mxu0 %v4383
        %4467 = vmatmul.bf16.gmra.mxu0 %v4244
        %v4468 = vpop.f32.mrf.mxu0
        %v4469 = vadd.f32 0.0, %v4468
        %v4470 = vpop.f32.mrf.mxu0
        %4471 = vdwg.mxu0
        %4472 = vmatpush.bf16.msra.mxu0 %v4412
        %4473 = vmatpush.bf16.msra.mxu0 %v4408
        %4474 = vmatpush.bf16.msra.mxu0 %v4404
        %4475 = vmatpush.bf16.msra.mxu0 %v4400
        %4476 = vmatpush.bf16.msra.mxu0 %v4396
        %4477 = vmatpush.bf16.msra.mxu0 %v4392
        %4478 = vmatpush.bf16.msra.mxu0 %v4388
        %4479 = vmatpush.bf16.msra.mxu0 %v4384
        %4480 = vmatmul.bf16.gmra.mxu0 %v4244
        %v4481 = vpop.f32.mrf.mxu0
        %v4482 = vadd.f32 0.0, %v4481
        %v4483 = vpop.f32.mrf.mxu0
        %4484 = vdwg.mxu0
        %4485 = vmatpush.bf16.msra.mxu0 %v4413
        %4486 = vmatpush.bf16.msra.mxu0 %v4409
        %4487 = vmatpush.bf16.msra.mxu0 %v4405
        %4488 = vmatpush.bf16.msra.mxu0 %v4401
        %4489 = vmatpush.bf16.msra.mxu0 %v4397
        %4490 = vmatpush.bf16.msra.mxu0 %v4393
        %4491 = vmatpush.bf16.msra.mxu0 %v4389
        %4492 = vmatpush.bf16.msra.mxu0 %v4385
        %4493 = vmatmul.bf16.gmra.mxu0 %v4244
        %v4494 = vpop.f32.mrf.mxu0
        %v4495 = vadd.f32 0.0, %v4494
        %v4496 = vpop.f32.mrf.mxu0
        %4497 = vdwg.mxu0
        %v4498 = vadd.f32 %v4250, %v4456
        %v4499 = vadd.f32 %v4251, %v4469
        %v4500 = vadd.f32 %v4252, %v4482
        %v4501 = vadd.f32 %v4253, %v4495
        %v4502 = vxor.u32 %v4498, 2147483648
        %v4503 = vmul.f32 %v4502, 1.442695
        %v4504 = vpow.pop %v4503
        %v4505 = vadd.f32 %v4504, 1.0
        %v4506 = vrcp.pop %v4505
        %v4507 = vmul.f32 %v4505, %v4506
        %v4508 = vsub.f32 1.0, %v4507
        %v4509 = vmul.f32 %v4506, %v4508
        %v4510 = vadd.f32 %v4506, %v4509
        %vm4511 = vweird.f32 %v4505
        %vm4512 = vweird.f32 %v4506
        %vm4513 = vmor %vm4511, %vm4512
        %v4514 = vsel %vm4513, %v4506, %v4510
        %v4515 = vand.u32 2147483647, %v4505
        %vm4516 = vcmp.eq.f32.partialorder %v4515, 8.507059e+37
        %v4517 = vand.u32 %v4505, 2147483648
        %v4518 = vor.u32 1.1754944e-38, %v4517
        %v4519 = vsel %vm4516, %v4518, %v4514
        %v4520 = vmul.f32 1.0, %v4519
        %v4521 = vxor.u32 %v4499, 2147483648
        %v4522 = vmul.f32 %v4521, 1.442695
        %v4523 = vpow.pop %v4522
        %v4524 = vadd.f32 %v4523, 1.0
        %v4525 = vrcp.pop %v4524
        %v4526 = vmul.f32 %v4524, %v4525
        %v4527 = vsub.f32 1.0, %v4526
        %v4528 = vmul.f32 %v4525, %v4527
        %v4529 = vadd.f32 %v4525, %v4528
        %vm4530 = vweird.f32 %v4524
        %vm4531 = vweird.f32 %v4525
        %vm4532 = vmor %vm4530, %vm4531
        %v4533 = vsel %vm4532, %v4525, %v4529
        %v4534 = vand.u32 2147483647, %v4524
        %vm4535 = vcmp.eq.f32.partialorder %v4534, 8.507059e+37
        %v4536 = vand.u32 %v4524, 2147483648
        %v4537 = vor.u32 1.1754944e-38, %v4536
        %v4538 = vsel %vm4535, %v4537, %v4533
        %v4539 = vmul.f32 1.0, %v4538
        %v4540 = vtanh.pop %v4500
        %v4541 = vxor.u32 %v4501, 2147483648
        %v4542 = vmul.f32 %v4541, 1.442695
        %v4543 = vpow.pop %v4542
        %v4544 = vadd.f32 %v4543, 1.0
        %v4545 = vrcp.pop %v4544
        %v4546 = vmul.f32 %v4544, %v4545
        %v4547 = vsub.f32 1.0, %v4546
        %v4548 = vmul.f32 %v4545, %v4547
        %v4549 = vadd.f32 %v4545, %v4548
        %vm4550 = vweird.f32 %v4544
        %vm4551 = vweird.f32 %v4545
        %vm4552 = vmor %vm4550, %vm4551
        %v4553 = vsel %vm4552, %v4545, %v4549
        %v4554 = vand.u32 2147483647, %v4544
        %vm4555 = vcmp.eq.f32.partialorder %v4554, 8.507059e+37
        %v4556 = vand.u32 %v4544, 2147483648
        %v4557 = vor.u32 1.1754944e-38, %v4556
        %v4558 = vsel %vm4555, %v4557, %v4553
        %v4559 = vmul.f32 1.0, %v4558
        %v4560 = vmul.f32 %v4539, %v4241
        %v4561 = vmul.f32 %v4520, %v4540
        %v4562 = vadd.f32 %v4560, %v4561
        %v4563 = vtanh.pop %v4562
        %v4564 = vmul.f32 %v4559, %v4563
        %v4565 = vpack.c.bf16 %v4564, %v4564
        %s4566 = scalar_lea.vmem %s304, 44
        %4567 = vst [vmem:[%s4566] sm:$0xf] %v4565
        %s4568 = smul.u32 12, 4
        %s4569 = smul.addr %s4568, 8
        %s4570 = scalar_lea.vmem [#allocation2], %s4569
        %v4571 = vld [vmem:[%s4570] sm:$0xff]
        %v4572 = vld [vmem:[%s4570 + $0x8] sm:$0xff]
        %v4573 = vld [vmem:[%s4570 + $0x10] sm:$0xff]
        %v4574 = vld [vmem:[%s4570 + $0x18] sm:$0xff]
        %v4575 = vld [vmem:[%s4] sm:$0xff]
        %v4576 = vld [vmem:[%s4 + $0x8] sm:$0xff]
        %v4577 = vld [vmem:[%s4 + $0x10] sm:$0xff]
        %v4578 = vld [vmem:[%s4 + $0x18] sm:$0xff]
        %v4579 = vld [vmem:[%s4 + $0x20] sm:$0xff]
        %v4580 = vld [vmem:[%s4 + $0x28] sm:$0xff]
        %v4581 = vld [vmem:[%s4 + $0x30] sm:$0xff]
        %v4582 = vld [vmem:[%s4 + $0x38] sm:$0xff]
        %v4583 = vld [vmem:[%s4 + $0x40] sm:$0xff]
        %v4584 = vld [vmem:[%s4 + $0x48] sm:$0xff]
        %v4585 = vld [vmem:[%s4 + $0x50] sm:$0xff]
        %v4586 = vld [vmem:[%s4 + $0x58] sm:$0xff]
        %v4587 = vld [vmem:[%s4 + $0x60] sm:$0xff]
        %v4588 = vld [vmem:[%s4 + $0x68] sm:$0xff]
        %v4589 = vld [vmem:[%s4 + $0x70] sm:$0xff]
        %v4590 = vld [vmem:[%s4 + $0x78] sm:$0xff]
        %v4591 = vld [vmem:[%s4 + $0x80] sm:$0xff]
        %v4592 = vld [vmem:[%s4 + $0x88] sm:$0xff]
        %v4593 = vld [vmem:[%s4 + $0x90] sm:$0xff]
        %v4594 = vld [vmem:[%s4 + $0x98] sm:$0xff]
        %v4595 = vld [vmem:[%s4 + $0xa0] sm:$0xff]
        %v4596 = vld [vmem:[%s4 + $0xa8] sm:$0xff]
        %v4597 = vld [vmem:[%s4 + $0xb0] sm:$0xff]
        %v4598 = vld [vmem:[%s4 + $0xb8] sm:$0xff]
        %v4599 = vld [vmem:[%s4 + $0xc0] sm:$0xff]
        %v4600 = vld [vmem:[%s4 + $0xc8] sm:$0xff]
        %v4601 = vld [vmem:[%s4 + $0xd0] sm:$0xff]
        %v4602 = vld [vmem:[%s4 + $0xd8] sm:$0xff]
        %v4603 = vld [vmem:[%s4 + $0xe0] sm:$0xff]
        %v4604 = vld [vmem:[%s4 + $0xe8] sm:$0xff]
        %v4605 = vld [vmem:[%s4 + $0xf0] sm:$0xff]
        %v4606 = vld [vmem:[%s4 + $0xf8] sm:$0xff]
        %v4639 = vunpack.c.l.b16 %v4575
        %v4640 = vunpack.c.h.b16 %v4575
        %v4641 = vunpack.c.l.b16 %v4576
        %v4642 = vunpack.c.h.b16 %v4576
        %v4643 = vunpack.c.l.b16 %v4577
        %v4644 = vunpack.c.h.b16 %v4577
        %v4645 = vunpack.c.l.b16 %v4578
        %v4646 = vunpack.c.h.b16 %v4578
        %v4647 = vunpack.c.l.b16 %v4579
        %v4648 = vunpack.c.h.b16 %v4579
        %v4649 = vunpack.c.l.b16 %v4580
        %v4650 = vunpack.c.h.b16 %v4580
        %v4651 = vunpack.c.l.b16 %v4581
        %v4652 = vunpack.c.h.b16 %v4581
        %v4653 = vunpack.c.l.b16 %v4582
        %v4654 = vunpack.c.h.b16 %v4582
        %v4655 = vunpack.c.l.b16 %v4583
        %v4656 = vunpack.c.h.b16 %v4583
        %v4657 = vunpack.c.l.b16 %v4584
        %v4658 = vunpack.c.h.b16 %v4584
        %v4659 = vunpack.c.l.b16 %v4585
        %v4660 = vunpack.c.h.b16 %v4585
        %v4661 = vunpack.c.l.b16 %v4586
        %v4662 = vunpack.c.h.b16 %v4586
        %v4663 = vunpack.c.l.b16 %v4587
        %v4664 = vunpack.c.h.b16 %v4587
        %v4665 = vunpack.c.l.b16 %v4588
        %v4666 = vunpack.c.h.b16 %v4588
        %v4667 = vunpack.c.l.b16 %v4589
        %v4668 = vunpack.c.h.b16 %v4589
        %v4669 = vunpack.c.l.b16 %v4590
        %v4670 = vunpack.c.h.b16 %v4590
        %v4671 = vunpack.c.l.b16 %v4591
        %v4672 = vunpack.c.h.b16 %v4591
        %v4673 = vunpack.c.l.b16 %v4592
        %v4674 = vunpack.c.h.b16 %v4592
        %v4675 = vunpack.c.l.b16 %v4593
        %v4676 = vunpack.c.h.b16 %v4593
        %v4677 = vunpack.c.l.b16 %v4594
        %v4678 = vunpack.c.h.b16 %v4594
        %v4679 = vunpack.c.l.b16 %v4595
        %v4680 = vunpack.c.h.b16 %v4595
        %v4681 = vunpack.c.l.b16 %v4596
        %v4682 = vunpack.c.h.b16 %v4596
        %v4683 = vunpack.c.l.b16 %v4597
        %v4684 = vunpack.c.h.b16 %v4597
        %v4685 = vunpack.c.l.b16 %v4598
        %v4686 = vunpack.c.h.b16 %v4598
        %v4687 = vunpack.c.l.b16 %v4599
        %v4688 = vunpack.c.h.b16 %v4599
        %v4689 = vunpack.c.l.b16 %v4600
        %v4690 = vunpack.c.h.b16 %v4600
        %v4691 = vunpack.c.l.b16 %v4601
        %v4692 = vunpack.c.h.b16 %v4601
        %v4693 = vunpack.c.l.b16 %v4602
        %v4694 = vunpack.c.h.b16 %v4602
        %v4695 = vunpack.c.l.b16 %v4603
        %v4696 = vunpack.c.h.b16 %v4603
        %v4697 = vunpack.c.l.b16 %v4604
        %v4698 = vunpack.c.h.b16 %v4604
        %v4699 = vunpack.c.l.b16 %v4605
        %v4700 = vunpack.c.h.b16 %v4605
        %v4701 = vunpack.c.l.b16 %v4606
        %v4702 = vunpack.c.h.b16 %v4606
        %v4703 = vpack.c.b16 %v4643, %v4639
        %v4704 = vpack.c.b16 %v4644, %v4640
        %v4705 = vpack.c.b16 %v4645, %v4641
        %v4706 = vpack.c.b16 %v4646, %v4642
        %v4707 = vpack.c.b16 %v4651, %v4647
        %v4708 = vpack.c.b16 %v4652, %v4648
        %v4709 = vpack.c.b16 %v4653, %v4649
        %v4710 = vpack.c.b16 %v4654, %v4650
        %v4711 = vpack.c.b16 %v4659, %v4655
        %v4712 = vpack.c.b16 %v4660, %v4656
        %v4713 = vpack.c.b16 %v4661, %v4657
        %v4714 = vpack.c.b16 %v4662, %v4658
        %v4715 = vpack.c.b16 %v4667, %v4663
        %v4716 = vpack.c.b16 %v4668, %v4664
        %v4717 = vpack.c.b16 %v4669, %v4665
        %v4718 = vpack.c.b16 %v4670, %v4666
        %v4719 = vpack.c.b16 %v4675, %v4671
        %v4720 = vpack.c.b16 %v4676, %v4672
        %v4721 = vpack.c.b16 %v4677, %v4673
        %v4722 = vpack.c.b16 %v4678, %v4674
        %v4723 = vpack.c.b16 %v4683, %v4679
        %v4724 = vpack.c.b16 %v4684, %v4680
        %v4725 = vpack.c.b16 %v4685, %v4681
        %v4726 = vpack.c.b16 %v4686, %v4682
        %v4727 = vpack.c.b16 %v4691, %v4687
        %v4728 = vpack.c.b16 %v4692, %v4688
        %v4729 = vpack.c.b16 %v4693, %v4689
        %v4730 = vpack.c.b16 %v4694, %v4690
        %v4731 = vpack.c.b16 %v4699, %v4695
        %v4732 = vpack.c.b16 %v4700, %v4696
        %v4733 = vpack.c.b16 %v4701, %v4697
        %v4734 = vpack.c.b16 %v4702, %v4698
        %4767 = vmatpush.bf16.msra.mxu0 %v4731
        %4768 = vmatpush.bf16.msra.mxu0 %v4727
        %4769 = vmatpush.bf16.msra.mxu0 %v4723
        %4770 = vmatpush.bf16.msra.mxu0 %v4719
        %4771 = vmatpush.bf16.msra.mxu0 %v4715
        %4772 = vmatpush.bf16.msra.mxu0 %v4711
        %4773 = vmatpush.bf16.msra.mxu0 %v4707
        %4774 = vmatpush.bf16.msra.mxu0 %v4703
        %4775 = vmatmul.bf16.gmra.mxu0 %v4565
        %v4776 = vpop.f32.mrf.mxu0
        %v4777 = vadd.f32 0.0, %v4776
        %v4778 = vpop.f32.mrf.mxu0
        %4779 = vdwg.mxu0
        %4780 = vmatpush.bf16.msra.mxu0 %v4732
        %4781 = vmatpush.bf16.msra.mxu0 %v4728
        %4782 = vmatpush.bf16.msra.mxu0 %v4724
        %4783 = vmatpush.bf16.msra.mxu0 %v4720
        %4784 = vmatpush.bf16.msra.mxu0 %v4716
        %4785 = vmatpush.bf16.msra.mxu0 %v4712
        %4786 = vmatpush.bf16.msra.mxu0 %v4708
        %4787 = vmatpush.bf16.msra.mxu0 %v4704
        %4788 = vmatmul.bf16.gmra.mxu0 %v4565
        %v4789 = vpop.f32.mrf.mxu0
        %v4790 = vadd.f32 0.0, %v4789
        %v4791 = vpop.f32.mrf.mxu0
        %4792 = vdwg.mxu0
        %4793 = vmatpush.bf16.msra.mxu0 %v4733
        %4794 = vmatpush.bf16.msra.mxu0 %v4729
        %4795 = vmatpush.bf16.msra.mxu0 %v4725
        %4796 = vmatpush.bf16.msra.mxu0 %v4721
        %4797 = vmatpush.bf16.msra.mxu0 %v4717
        %4798 = vmatpush.bf16.msra.mxu0 %v4713
        %4799 = vmatpush.bf16.msra.mxu0 %v4709
        %4800 = vmatpush.bf16.msra.mxu0 %v4705
        %4801 = vmatmul.bf16.gmra.mxu0 %v4565
        %v4802 = vpop.f32.mrf.mxu0
        %v4803 = vadd.f32 0.0, %v4802
        %v4804 = vpop.f32.mrf.mxu0
        %4805 = vdwg.mxu0
        %4806 = vmatpush.bf16.msra.mxu0 %v4734
        %4807 = vmatpush.bf16.msra.mxu0 %v4730
        %4808 = vmatpush.bf16.msra.mxu0 %v4726
        %4809 = vmatpush.bf16.msra.mxu0 %v4722
        %4810 = vmatpush.bf16.msra.mxu0 %v4718
        %4811 = vmatpush.bf16.msra.mxu0 %v4714
        %4812 = vmatpush.bf16.msra.mxu0 %v4710
        %4813 = vmatpush.bf16.msra.mxu0 %v4706
        %4814 = vmatmul.bf16.gmra.mxu0 %v4565
        %v4815 = vpop.f32.mrf.mxu0
        %v4816 = vadd.f32 0.0, %v4815
        %v4817 = vpop.f32.mrf.mxu0
        %4818 = vdwg.mxu0
        %v4819 = vadd.f32 %v4571, %v4777
        %v4820 = vadd.f32 %v4572, %v4790
        %v4821 = vadd.f32 %v4573, %v4803
        %v4822 = vadd.f32 %v4574, %v4816
        %v4823 = vxor.u32 %v4819, 2147483648
        %v4824 = vmul.f32 %v4823, 1.442695
        %v4825 = vpow.pop %v4824
        %v4826 = vadd.f32 %v4825, 1.0
        %v4827 = vrcp.pop %v4826
        %v4828 = vmul.f32 %v4826, %v4827
        %v4829 = vsub.f32 1.0, %v4828
        %v4830 = vmul.f32 %v4827, %v4829
        %v4831 = vadd.f32 %v4827, %v4830
        %vm4832 = vweird.f32 %v4826
        %vm4833 = vweird.f32 %v4827
        %vm4834 = vmor %vm4832, %vm4833
        %v4835 = vsel %vm4834, %v4827, %v4831
        %v4836 = vand.u32 2147483647, %v4826
        %vm4837 = vcmp.eq.f32.partialorder %v4836, 8.507059e+37
        %v4838 = vand.u32 %v4826, 2147483648
        %v4839 = vor.u32 1.1754944e-38, %v4838
        %v4840 = vsel %vm4837, %v4839, %v4835
        %v4841 = vmul.f32 1.0, %v4840
        %v4842 = vxor.u32 %v4820, 2147483648
        %v4843 = vmul.f32 %v4842, 1.442695
        %v4844 = vpow.pop %v4843
        %v4845 = vadd.f32 %v4844, 1.0
        %v4846 = vrcp.pop %v4845
        %v4847 = vmul.f32 %v4845, %v4846
        %v4848 = vsub.f32 1.0, %v4847
        %v4849 = vmul.f32 %v4846, %v4848
        %v4850 = vadd.f32 %v4846, %v4849
        %vm4851 = vweird.f32 %v4845
        %vm4852 = vweird.f32 %v4846
        %vm4853 = vmor %vm4851, %vm4852
        %v4854 = vsel %vm4853, %v4846, %v4850
        %v4855 = vand.u32 2147483647, %v4845
        %vm4856 = vcmp.eq.f32.partialorder %v4855, 8.507059e+37
        %v4857 = vand.u32 %v4845, 2147483648
        %v4858 = vor.u32 1.1754944e-38, %v4857
        %v4859 = vsel %vm4856, %v4858, %v4854
        %v4860 = vmul.f32 1.0, %v4859
        %v4861 = vtanh.pop %v4821
        %v4862 = vxor.u32 %v4822, 2147483648
        %v4863 = vmul.f32 %v4862, 1.442695
        %v4864 = vpow.pop %v4863
        %v4865 = vadd.f32 %v4864, 1.0
        %v4866 = vrcp.pop %v4865
        %v4867 = vmul.f32 %v4865, %v4866
        %v4868 = vsub.f32 1.0, %v4867
        %v4869 = vmul.f32 %v4866, %v4868
        %v4870 = vadd.f32 %v4866, %v4869
        %vm4871 = vweird.f32 %v4865
        %vm4872 = vweird.f32 %v4866
        %vm4873 = vmor %vm4871, %vm4872
        %v4874 = vsel %vm4873, %v4866, %v4870
        %v4875 = vand.u32 2147483647, %v4865
        %vm4876 = vcmp.eq.f32.partialorder %v4875, 8.507059e+37
        %v4877 = vand.u32 %v4865, 2147483648
        %v4878 = vor.u32 1.1754944e-38, %v4877
        %v4879 = vsel %vm4876, %v4878, %v4874
        %v4880 = vmul.f32 1.0, %v4879
        %v4881 = vmul.f32 %v4860, %v4562
        %v4882 = vmul.f32 %v4841, %v4861
        %v4883 = vadd.f32 %v4881, %v4882
        %v4884 = vtanh.pop %v4883
        %v4885 = vmul.f32 %v4880, %v4884
        %v4886 = vpack.c.bf16 %v4885, %v4885
        %s4887 = scalar_lea.vmem %s304, 48
        %4888 = vst [vmem:[%s4887] sm:$0xf] %v4886
        %s4889 = smul.u32 13, 4
        %s4890 = smul.addr %s4889, 8
        %s4891 = scalar_lea.vmem [#allocation2], %s4890
        %v4892 = vld [vmem:[%s4891] sm:$0xff]
        %v4893 = vld [vmem:[%s4891 + $0x8] sm:$0xff]
        %v4894 = vld [vmem:[%s4891 + $0x10] sm:$0xff]
        %v4895 = vld [vmem:[%s4891 + $0x18] sm:$0xff]
        %v4896 = vld [vmem:[%s4] sm:$0xff]
        %v4897 = vld [vmem:[%s4 + $0x8] sm:$0xff]
        %v4898 = vld [vmem:[%s4 + $0x10] sm:$0xff]
        %v4899 = vld [vmem:[%s4 + $0x18] sm:$0xff]
        %v4900 = vld [vmem:[%s4 + $0x20] sm:$0xff]
        %v4901 = vld [vmem:[%s4 + $0x28] sm:$0xff]
        %v4902 = vld [vmem:[%s4 + $0x30] sm:$0xff]
        %v4903 = vld [vmem:[%s4 + $0x38] sm:$0xff]
        %v4904 = vld [vmem:[%s4 + $0x40] sm:$0xff]
        %v4905 = vld [vmem:[%s4 + $0x48] sm:$0xff]
        %v4906 = vld [vmem:[%s4 + $0x50] sm:$0xff]
        %v4907 = vld [vmem:[%s4 + $0x58] sm:$0xff]
        %v4908 = vld [vmem:[%s4 + $0x60] sm:$0xff]
        %v4909 = vld [vmem:[%s4 + $0x68] sm:$0xff]
        %v4910 = vld [vmem:[%s4 + $0x70] sm:$0xff]
        %v4911 = vld [vmem:[%s4 + $0x78] sm:$0xff]
        %v4912 = vld [vmem:[%s4 + $0x80] sm:$0xff]
        %v4913 = vld [vmem:[%s4 + $0x88] sm:$0xff]
        %v4914 = vld [vmem:[%s4 + $0x90] sm:$0xff]
        %v4915 = vld [vmem:[%s4 + $0x98] sm:$0xff]
        %v4916 = vld [vmem:[%s4 + $0xa0] sm:$0xff]
        %v4917 = vld [vmem:[%s4 + $0xa8] sm:$0xff]
        %v4918 = vld [vmem:[%s4 + $0xb0] sm:$0xff]
        %v4919 = vld [vmem:[%s4 + $0xb8] sm:$0xff]
        %v4920 = vld [vmem:[%s4 + $0xc0] sm:$0xff]
        %v4921 = vld [vmem:[%s4 + $0xc8] sm:$0xff]
        %v4922 = vld [vmem:[%s4 + $0xd0] sm:$0xff]
        %v4923 = vld [vmem:[%s4 + $0xd8] sm:$0xff]
        %v4924 = vld [vmem:[%s4 + $0xe0] sm:$0xff]
        %v4925 = vld [vmem:[%s4 + $0xe8] sm:$0xff]
        %v4926 = vld [vmem:[%s4 + $0xf0] sm:$0xff]
        %v4927 = vld [vmem:[%s4 + $0xf8] sm:$0xff]
        %v4960 = vunpack.c.l.b16 %v4896
        %v4961 = vunpack.c.h.b16 %v4896
        %v4962 = vunpack.c.l.b16 %v4897
        %v4963 = vunpack.c.h.b16 %v4897
        %v4964 = vunpack.c.l.b16 %v4898
        %v4965 = vunpack.c.h.b16 %v4898
        %v4966 = vunpack.c.l.b16 %v4899
        %v4967 = vunpack.c.h.b16 %v4899
        %v4968 = vunpack.c.l.b16 %v4900
        %v4969 = vunpack.c.h.b16 %v4900
        %v4970 = vunpack.c.l.b16 %v4901
        %v4971 = vunpack.c.h.b16 %v4901
        %v4972 = vunpack.c.l.b16 %v4902
        %v4973 = vunpack.c.h.b16 %v4902
        %v4974 = vunpack.c.l.b16 %v4903
        %v4975 = vunpack.c.h.b16 %v4903
        %v4976 = vunpack.c.l.b16 %v4904
        %v4977 = vunpack.c.h.b16 %v4904
        %v4978 = vunpack.c.l.b16 %v4905
        %v4979 = vunpack.c.h.b16 %v4905
        %v4980 = vunpack.c.l.b16 %v4906
        %v4981 = vunpack.c.h.b16 %v4906
        %v4982 = vunpack.c.l.b16 %v4907
        %v4983 = vunpack.c.h.b16 %v4907
        %v4984 = vunpack.c.l.b16 %v4908
        %v4985 = vunpack.c.h.b16 %v4908
        %v4986 = vunpack.c.l.b16 %v4909
        %v4987 = vunpack.c.h.b16 %v4909
        %v4988 = vunpack.c.l.b16 %v4910
        %v4989 = vunpack.c.h.b16 %v4910
        %v4990 = vunpack.c.l.b16 %v4911
        %v4991 = vunpack.c.h.b16 %v4911
        %v4992 = vunpack.c.l.b16 %v4912
        %v4993 = vunpack.c.h.b16 %v4912
        %v4994 = vunpack.c.l.b16 %v4913
        %v4995 = vunpack.c.h.b16 %v4913
        %v4996 = vunpack.c.l.b16 %v4914
        %v4997 = vunpack.c.h.b16 %v4914
        %v4998 = vunpack.c.l.b16 %v4915
        %v4999 = vunpack.c.h.b16 %v4915
        %v5000 = vunpack.c.l.b16 %v4916
        %v5001 = vunpack.c.h.b16 %v4916
        %v5002 = vunpack.c.l.b16 %v4917
        %v5003 = vunpack.c.h.b16 %v4917
        %v5004 = vunpack.c.l.b16 %v4918
        %v5005 = vunpack.c.h.b16 %v4918
        %v5006 = vunpack.c.l.b16 %v4919
        %v5007 = vunpack.c.h.b16 %v4919
        %v5008 = vunpack.c.l.b16 %v4920
        %v5009 = vunpack.c.h.b16 %v4920
        %v5010 = vunpack.c.l.b16 %v4921
        %v5011 = vunpack.c.h.b16 %v4921
        %v5012 = vunpack.c.l.b16 %v4922
        %v5013 = vunpack.c.h.b16 %v4922
        %v5014 = vunpack.c.l.b16 %v4923
        %v5015 = vunpack.c.h.b16 %v4923
        %v5016 = vunpack.c.l.b16 %v4924
        %v5017 = vunpack.c.h.b16 %v4924
        %v5018 = vunpack.c.l.b16 %v4925
        %v5019 = vunpack.c.h.b16 %v4925
        %v5020 = vunpack.c.l.b16 %v4926
        %v5021 = vunpack.c.h.b16 %v4926
        %v5022 = vunpack.c.l.b16 %v4927
        %v5023 = vunpack.c.h.b16 %v4927
        %v5024 = vpack.c.b16 %v4964, %v4960
        %v5025 = vpack.c.b16 %v4965, %v4961
        %v5026 = vpack.c.b16 %v4966, %v4962
        %v5027 = vpack.c.b16 %v4967, %v4963
        %v5028 = vpack.c.b16 %v4972, %v4968
        %v5029 = vpack.c.b16 %v4973, %v4969
        %v5030 = vpack.c.b16 %v4974, %v4970
        %v5031 = vpack.c.b16 %v4975, %v4971
        %v5032 = vpack.c.b16 %v4980, %v4976
        %v5033 = vpack.c.b16 %v4981, %v4977
        %v5034 = vpack.c.b16 %v4982, %v4978
        %v5035 = vpack.c.b16 %v4983, %v4979
        %v5036 = vpack.c.b16 %v4988, %v4984
        %v5037 = vpack.c.b16 %v4989, %v4985
        %v5038 = vpack.c.b16 %v4990, %v4986
        %v5039 = vpack.c.b16 %v4991, %v4987
        %v5040 = vpack.c.b16 %v4996, %v4992
        %v5041 = vpack.c.b16 %v4997, %v4993
        %v5042 = vpack.c.b16 %v4998, %v4994
        %v5043 = vpack.c.b16 %v4999, %v4995
        %v5044 = vpack.c.b16 %v5004, %v5000
        %v5045 = vpack.c.b16 %v5005, %v5001
        %v5046 = vpack.c.b16 %v5006, %v5002
        %v5047 = vpack.c.b16 %v5007, %v5003
        %v5048 = vpack.c.b16 %v5012, %v5008
        %v5049 = vpack.c.b16 %v5013, %v5009
        %v5050 = vpack.c.b16 %v5014, %v5010
        %v5051 = vpack.c.b16 %v5015, %v5011
        %v5052 = vpack.c.b16 %v5020, %v5016
        %v5053 = vpack.c.b16 %v5021, %v5017
        %v5054 = vpack.c.b16 %v5022, %v5018
        %v5055 = vpack.c.b16 %v5023, %v5019
        %5088 = vmatpush.bf16.msra.mxu0 %v5052
        %5089 = vmatpush.bf16.msra.mxu0 %v5048
        %5090 = vmatpush.bf16.msra.mxu0 %v5044
        %5091 = vmatpush.bf16.msra.mxu0 %v5040
        %5092 = vmatpush.bf16.msra.mxu0 %v5036
        %5093 = vmatpush.bf16.msra.mxu0 %v5032
        %5094 = vmatpush.bf16.msra.mxu0 %v5028
        %5095 = vmatpush.bf16.msra.mxu0 %v5024
        %5096 = vmatmul.bf16.gmra.mxu0 %v4886
        %v5097 = vpop.f32.mrf.mxu0
        %v5098 = vadd.f32 0.0, %v5097
        %v5099 = vpop.f32.mrf.mxu0
        %5100 = vdwg.mxu0
        %5101 = vmatpush.bf16.msra.mxu0 %v5053
        %5102 = vmatpush.bf16.msra.mxu0 %v5049
        %5103 = vmatpush.bf16.msra.mxu0 %v5045
        %5104 = vmatpush.bf16.msra.mxu0 %v5041
        %5105 = vmatpush.bf16.msra.mxu0 %v5037
        %5106 = vmatpush.bf16.msra.mxu0 %v5033
        %5107 = vmatpush.bf16.msra.mxu0 %v5029
        %5108 = vmatpush.bf16.msra.mxu0 %v5025
        %5109 = vmatmul.bf16.gmra.mxu0 %v4886
        %v5110 = vpop.f32.mrf.mxu0
        %v5111 = vadd.f32 0.0, %v5110
        %v5112 = vpop.f32.mrf.mxu0
        %5113 = vdwg.mxu0
        %5114 = vmatpush.bf16.msra.mxu0 %v5054
        %5115 = vmatpush.bf16.msra.mxu0 %v5050
        %5116 = vmatpush.bf16.msra.mxu0 %v5046
        %5117 = vmatpush.bf16.msra.mxu0 %v5042
        %5118 = vmatpush.bf16.msra.mxu0 %v5038
        %5119 = vmatpush.bf16.msra.mxu0 %v5034
        %5120 = vmatpush.bf16.msra.mxu0 %v5030
        %5121 = vmatpush.bf16.msra.mxu0 %v5026
        %5122 = vmatmul.bf16.gmra.mxu0 %v4886
        %v5123 = vpop.f32.mrf.mxu0
        %v5124 = vadd.f32 0.0, %v5123
        %v5125 = vpop.f32.mrf.mxu0
        %5126 = vdwg.mxu0
        %5127 = vmatpush.bf16.msra.mxu0 %v5055
        %5128 = vmatpush.bf16.msra.mxu0 %v5051
        %5129 = vmatpush.bf16.msra.mxu0 %v5047
        %5130 = vmatpush.bf16.msra.mxu0 %v5043
        %5131 = vmatpush.bf16.msra.mxu0 %v5039
        %5132 = vmatpush.bf16.msra.mxu0 %v5035
        %5133 = vmatpush.bf16.msra.mxu0 %v5031
        %5134 = vmatpush.bf16.msra.mxu0 %v5027
        %5135 = vmatmul.bf16.gmra.mxu0 %v4886
        %v5136 = vpop.f32.mrf.mxu0
        %v5137 = vadd.f32 0.0, %v5136
        %v5138 = vpop.f32.mrf.mxu0
        %5139 = vdwg.mxu0
        %v5140 = vadd.f32 %v4892, %v5098
        %v5141 = vadd.f32 %v4893, %v5111
        %v5142 = vadd.f32 %v4894, %v5124
        %v5143 = vadd.f32 %v4895, %v5137
        %v5144 = vxor.u32 %v5140, 2147483648
        %v5145 = vmul.f32 %v5144, 1.442695
        %v5146 = vpow.pop %v5145
        %v5147 = vadd.f32 %v5146, 1.0
        %v5148 = vrcp.pop %v5147
        %v5149 = vmul.f32 %v5147, %v5148
        %v5150 = vsub.f32 1.0, %v5149
        %v5151 = vmul.f32 %v5148, %v5150
        %v5152 = vadd.f32 %v5148, %v5151
        %vm5153 = vweird.f32 %v5147
        %vm5154 = vweird.f32 %v5148
        %vm5155 = vmor %vm5153, %vm5154
        %v5156 = vsel %vm5155, %v5148, %v5152
        %v5157 = vand.u32 2147483647, %v5147
        %vm5158 = vcmp.eq.f32.partialorder %v5157, 8.507059e+37
        %v5159 = vand.u32 %v5147, 2147483648
        %v5160 = vor.u32 1.1754944e-38, %v5159
        %v5161 = vsel %vm5158, %v5160, %v5156
        %v5162 = vmul.f32 1.0, %v5161
        %v5163 = vxor.u32 %v5141, 2147483648
        %v5164 = vmul.f32 %v5163, 1.442695
        %v5165 = vpow.pop %v5164
        %v5166 = vadd.f32 %v5165, 1.0
        %v5167 = vrcp.pop %v5166
        %v5168 = vmul.f32 %v5166, %v5167
        %v5169 = vsub.f32 1.0, %v5168
        %v5170 = vmul.f32 %v5167, %v5169
        %v5171 = vadd.f32 %v5167, %v5170
        %vm5172 = vweird.f32 %v5166
        %vm5173 = vweird.f32 %v5167
        %vm5174 = vmor %vm5172, %vm5173
        %v5175 = vsel %vm5174, %v5167, %v5171
        %v5176 = vand.u32 2147483647, %v5166
        %vm5177 = vcmp.eq.f32.partialorder %v5176, 8.507059e+37
        %v5178 = vand.u32 %v5166, 2147483648
        %v5179 = vor.u32 1.1754944e-38, %v5178
        %v5180 = vsel %vm5177, %v5179, %v5175
        %v5181 = vmul.f32 1.0, %v5180
        %v5182 = vtanh.pop %v5142
        %v5183 = vxor.u32 %v5143, 2147483648
        %v5184 = vmul.f32 %v5183, 1.442695
        %v5185 = vpow.pop %v5184
        %v5186 = vadd.f32 %v5185, 1.0
        %v5187 = vrcp.pop %v5186
        %v5188 = vmul.f32 %v5186, %v5187
        %v5189 = vsub.f32 1.0, %v5188
        %v5190 = vmul.f32 %v5187, %v5189
        %v5191 = vadd.f32 %v5187, %v5190
        %vm5192 = vweird.f32 %v5186
        %vm5193 = vweird.f32 %v5187
        %vm5194 = vmor %vm5192, %vm5193
        %v5195 = vsel %vm5194, %v5187, %v5191
        %v5196 = vand.u32 2147483647, %v5186
        %vm5197 = vcmp.eq.f32.partialorder %v5196, 8.507059e+37
        %v5198 = vand.u32 %v5186, 2147483648
        %v5199 = vor.u32 1.1754944e-38, %v5198
        %v5200 = vsel %vm5197, %v5199, %v5195
        %v5201 = vmul.f32 1.0, %v5200
        %v5202 = vmul.f32 %v5181, %v4883
        %v5203 = vmul.f32 %v5162, %v5182
        %v5204 = vadd.f32 %v5202, %v5203
        %v5205 = vtanh.pop %v5204
        %v5206 = vmul.f32 %v5201, %v5205
        %v5207 = vpack.c.bf16 %v5206, %v5206
        %s5208 = scalar_lea.vmem %s304, 52
        %5209 = vst [vmem:[%s5208] sm:$0xf] %v5207
        %s5210 = smul.u32 14, 4
        %s5211 = smul.addr %s5210, 8
        %s5212 = scalar_lea.vmem [#allocation2], %s5211
        %v5213 = vld [vmem:[%s5212] sm:$0xff]
        %v5214 = vld [vmem:[%s5212 + $0x8] sm:$0xff]
        %v5215 = vld [vmem:[%s5212 + $0x10] sm:$0xff]
        %v5216 = vld [vmem:[%s5212 + $0x18] sm:$0xff]
        %v5217 = vld [vmem:[%s4] sm:$0xff]
        %v5218 = vld [vmem:[%s4 + $0x8] sm:$0xff]
        %v5219 = vld [vmem:[%s4 + $0x10] sm:$0xff]
        %v5220 = vld [vmem:[%s4 + $0x18] sm:$0xff]
        %v5221 = vld [vmem:[%s4 + $0x20] sm:$0xff]
        %v5222 = vld [vmem:[%s4 + $0x28] sm:$0xff]
        %v5223 = vld [vmem:[%s4 + $0x30] sm:$0xff]
        %v5224 = vld [vmem:[%s4 + $0x38] sm:$0xff]
        %v5225 = vld [vmem:[%s4 + $0x40] sm:$0xff]
        %v5226 = vld [vmem:[%s4 + $0x48] sm:$0xff]
        %v5227 = vld [vmem:[%s4 + $0x50] sm:$0xff]
        %v5228 = vld [vmem:[%s4 + $0x58] sm:$0xff]
        %v5229 = vld [vmem:[%s4 + $0x60] sm:$0xff]
        %v5230 = vld [vmem:[%s4 + $0x68] sm:$0xff]
        %v5231 = vld [vmem:[%s4 + $0x70] sm:$0xff]
        %v5232 = vld [vmem:[%s4 + $0x78] sm:$0xff]
        %v5233 = vld [vmem:[%s4 + $0x80] sm:$0xff]
        %v5234 = vld [vmem:[%s4 + $0x88] sm:$0xff]
        %v5235 = vld [vmem:[%s4 + $0x90] sm:$0xff]
        %v5236 = vld [vmem:[%s4 + $0x98] sm:$0xff]
        %v5237 = vld [vmem:[%s4 + $0xa0] sm:$0xff]
        %v5238 = vld [vmem:[%s4 + $0xa8] sm:$0xff]
        %v5239 = vld [vmem:[%s4 + $0xb0] sm:$0xff]
        %v5240 = vld [vmem:[%s4 + $0xb8] sm:$0xff]
        %v5241 = vld [vmem:[%s4 + $0xc0] sm:$0xff]
        %v5242 = vld [vmem:[%s4 + $0xc8] sm:$0xff]
        %v5243 = vld [vmem:[%s4 + $0xd0] sm:$0xff]
        %v5244 = vld [vmem:[%s4 + $0xd8] sm:$0xff]
        %v5245 = vld [vmem:[%s4 + $0xe0] sm:$0xff]
        %v5246 = vld [vmem:[%s4 + $0xe8] sm:$0xff]
        %v5247 = vld [vmem:[%s4 + $0xf0] sm:$0xff]
        %v5248 = vld [vmem:[%s4 + $0xf8] sm:$0xff]
        %v5281 = vunpack.c.l.b16 %v5217
        %v5282 = vunpack.c.h.b16 %v5217
        %v5283 = vunpack.c.l.b16 %v5218
        %v5284 = vunpack.c.h.b16 %v5218
        %v5285 = vunpack.c.l.b16 %v5219
        %v5286 = vunpack.c.h.b16 %v5219
        %v5287 = vunpack.c.l.b16 %v5220
        %v5288 = vunpack.c.h.b16 %v5220
        %v5289 = vunpack.c.l.b16 %v5221
        %v5290 = vunpack.c.h.b16 %v5221
        %v5291 = vunpack.c.l.b16 %v5222
        %v5292 = vunpack.c.h.b16 %v5222
        %v5293 = vunpack.c.l.b16 %v5223
        %v5294 = vunpack.c.h.b16 %v5223
        %v5295 = vunpack.c.l.b16 %v5224
        %v5296 = vunpack.c.h.b16 %v5224
        %v5297 = vunpack.c.l.b16 %v5225
        %v5298 = vunpack.c.h.b16 %v5225
        %v5299 = vunpack.c.l.b16 %v5226
        %v5300 = vunpack.c.h.b16 %v5226
        %v5301 = vunpack.c.l.b16 %v5227
        %v5302 = vunpack.c.h.b16 %v5227
        %v5303 = vunpack.c.l.b16 %v5228
        %v5304 = vunpack.c.h.b16 %v5228
        %v5305 = vunpack.c.l.b16 %v5229
        %v5306 = vunpack.c.h.b16 %v5229
        %v5307 = vunpack.c.l.b16 %v5230
        %v5308 = vunpack.c.h.b16 %v5230
        %v5309 = vunpack.c.l.b16 %v5231
        %v5310 = vunpack.c.h.b16 %v5231
        %v5311 = vunpack.c.l.b16 %v5232
        %v5312 = vunpack.c.h.b16 %v5232
        %v5313 = vunpack.c.l.b16 %v5233
        %v5314 = vunpack.c.h.b16 %v5233
        %v5315 = vunpack.c.l.b16 %v5234
        %v5316 = vunpack.c.h.b16 %v5234
        %v5317 = vunpack.c.l.b16 %v5235
        %v5318 = vunpack.c.h.b16 %v5235
        %v5319 = vunpack.c.l.b16 %v5236
        %v5320 = vunpack.c.h.b16 %v5236
        %v5321 = vunpack.c.l.b16 %v5237
        %v5322 = vunpack.c.h.b16 %v5237
        %v5323 = vunpack.c.l.b16 %v5238
        %v5324 = vunpack.c.h.b16 %v5238
        %v5325 = vunpack.c.l.b16 %v5239
        %v5326 = vunpack.c.h.b16 %v5239
        %v5327 = vunpack.c.l.b16 %v5240
        %v5328 = vunpack.c.h.b16 %v5240
        %v5329 = vunpack.c.l.b16 %v5241
        %v5330 = vunpack.c.h.b16 %v5241
        %v5331 = vunpack.c.l.b16 %v5242
        %v5332 = vunpack.c.h.b16 %v5242
        %v5333 = vunpack.c.l.b16 %v5243
        %v5334 = vunpack.c.h.b16 %v5243
        %v5335 = vunpack.c.l.b16 %v5244
        %v5336 = vunpack.c.h.b16 %v5244
        %v5337 = vunpack.c.l.b16 %v5245
        %v5338 = vunpack.c.h.b16 %v5245
        %v5339 = vunpack.c.l.b16 %v5246
        %v5340 = vunpack.c.h.b16 %v5246
        %v5341 = vunpack.c.l.b16 %v5247
        %v5342 = vunpack.c.h.b16 %v5247
        %v5343 = vunpack.c.l.b16 %v5248
        %v5344 = vunpack.c.h.b16 %v5248
        %v5345 = vpack.c.b16 %v5285, %v5281
        %v5346 = vpack.c.b16 %v5286, %v5282
        %v5347 = vpack.c.b16 %v5287, %v5283
        %v5348 = vpack.c.b16 %v5288, %v5284
        %v5349 = vpack.c.b16 %v5293, %v5289
        %v5350 = vpack.c.b16 %v5294, %v5290
        %v5351 = vpack.c.b16 %v5295, %v5291
        %v5352 = vpack.c.b16 %v5296, %v5292
        %v5353 = vpack.c.b16 %v5301, %v5297
        %v5354 = vpack.c.b16 %v5302, %v5298
        %v5355 = vpack.c.b16 %v5303, %v5299
        %v5356 = vpack.c.b16 %v5304, %v5300
        %v5357 = vpack.c.b16 %v5309, %v5305
        %v5358 = vpack.c.b16 %v5310, %v5306
        %v5359 = vpack.c.b16 %v5311, %v5307
        %v5360 = vpack.c.b16 %v5312, %v5308
        %v5361 = vpack.c.b16 %v5317, %v5313
        %v5362 = vpack.c.b16 %v5318, %v5314
        %v5363 = vpack.c.b16 %v5319, %v5315
        %v5364 = vpack.c.b16 %v5320, %v5316
        %v5365 = vpack.c.b16 %v5325, %v5321
        %v5366 = vpack.c.b16 %v5326, %v5322
        %v5367 = vpack.c.b16 %v5327, %v5323
        %v5368 = vpack.c.b16 %v5328, %v5324
        %v5369 = vpack.c.b16 %v5333, %v5329
        %v5370 = vpack.c.b16 %v5334, %v5330
        %v5371 = vpack.c.b16 %v5335, %v5331
        %v5372 = vpack.c.b16 %v5336, %v5332
        %v5373 = vpack.c.b16 %v5341, %v5337
        %v5374 = vpack.c.b16 %v5342, %v5338
        %v5375 = vpack.c.b16 %v5343, %v5339
        %v5376 = vpack.c.b16 %v5344, %v5340
        %5409 = vmatpush.bf16.msra.mxu0 %v5373
        %5410 = vmatpush.bf16.msra.mxu0 %v5369
        %5411 = vmatpush.bf16.msra.mxu0 %v5365
        %5412 = vmatpush.bf16.msra.mxu0 %v5361
        %5413 = vmatpush.bf16.msra.mxu0 %v5357
        %5414 = vmatpush.bf16.msra.mxu0 %v5353
        %5415 = vmatpush.bf16.msra.mxu0 %v5349
        %5416 = vmatpush.bf16.msra.mxu0 %v5345
        %5417 = vmatmul.bf16.gmra.mxu0 %v5207
        %v5418 = vpop.f32.mrf.mxu0
        %v5419 = vadd.f32 0.0, %v5418
        %v5420 = vpop.f32.mrf.mxu0
        %5421 = vdwg.mxu0
        %5422 = vmatpush.bf16.msra.mxu0 %v5374
        %5423 = vmatpush.bf16.msra.mxu0 %v5370
        %5424 = vmatpush.bf16.msra.mxu0 %v5366
        %5425 = vmatpush.bf16.msra.mxu0 %v5362
        %5426 = vmatpush.bf16.msra.mxu0 %v5358
        %5427 = vmatpush.bf16.msra.mxu0 %v5354
        %5428 = vmatpush.bf16.msra.mxu0 %v5350
        %5429 = vmatpush.bf16.msra.mxu0 %v5346
        %5430 = vmatmul.bf16.gmra.mxu0 %v5207
        %v5431 = vpop.f32.mrf.mxu0
        %v5432 = vadd.f32 0.0, %v5431
        %v5433 = vpop.f32.mrf.mxu0
        %5434 = vdwg.mxu0
        %5435 = vmatpush.bf16.msra.mxu0 %v5375
        %5436 = vmatpush.bf16.msra.mxu0 %v5371
        %5437 = vmatpush.bf16.msra.mxu0 %v5367
        %5438 = vmatpush.bf16.msra.mxu0 %v5363
        %5439 = vmatpush.bf16.msra.mxu0 %v5359
        %5440 = vmatpush.bf16.msra.mxu0 %v5355
        %5441 = vmatpush.bf16.msra.mxu0 %v5351
        %5442 = vmatpush.bf16.msra.mxu0 %v5347
        %5443 = vmatmul.bf16.gmra.mxu0 %v5207
        %v5444 = vpop.f32.mrf.mxu0
        %v5445 = vadd.f32 0.0, %v5444
        %v5446 = vpop.f32.mrf.mxu0
        %5447 = vdwg.mxu0
        %5448 = vmatpush.bf16.msra.mxu0 %v5376
        %5449 = vmatpush.bf16.msra.mxu0 %v5372
        %5450 = vmatpush.bf16.msra.mxu0 %v5368
        %5451 = vmatpush.bf16.msra.mxu0 %v5364
        %5452 = vmatpush.bf16.msra.mxu0 %v5360
        %5453 = vmatpush.bf16.msra.mxu0 %v5356
        %5454 = vmatpush.bf16.msra.mxu0 %v5352
        %5455 = vmatpush.bf16.msra.mxu0 %v5348
        %5456 = vmatmul.bf16.gmra.mxu0 %v5207
        %v5457 = vpop.f32.mrf.mxu0
        %v5458 = vadd.f32 0.0, %v5457
        %v5459 = vpop.f32.mrf.mxu0
        %5460 = vdwg.mxu0
        %v5461 = vadd.f32 %v5213, %v5419
        %v5462 = vadd.f32 %v5214, %v5432
        %v5463 = vadd.f32 %v5215, %v5445
        %v5464 = vadd.f32 %v5216, %v5458
        %v5465 = vxor.u32 %v5461, 2147483648
        %v5466 = vmul.f32 %v5465, 1.442695
        %v5467 = vpow.pop %v5466
        %v5468 = vadd.f32 %v5467, 1.0
        %v5469 = vrcp.pop %v5468
        %v5470 = vmul.f32 %v5468, %v5469
        %v5471 = vsub.f32 1.0, %v5470
        %v5472 = vmul.f32 %v5469, %v5471
        %v5473 = vadd.f32 %v5469, %v5472
        %vm5474 = vweird.f32 %v5468
        %vm5475 = vweird.f32 %v5469
        %vm5476 = vmor %vm5474, %vm5475
        %v5477 = vsel %vm5476, %v5469, %v5473
        %v5478 = vand.u32 2147483647, %v5468
        %vm5479 = vcmp.eq.f32.partialorder %v5478, 8.507059e+37
        %v5480 = vand.u32 %v5468, 2147483648
        %v5481 = vor.u32 1.1754944e-38, %v5480
        %v5482 = vsel %vm5479, %v5481, %v5477
        %v5483 = vmul.f32 1.0, %v5482
        %v5484 = vxor.u32 %v5462, 2147483648
        %v5485 = vmul.f32 %v5484, 1.442695
        %v5486 = vpow.pop %v5485
        %v5487 = vadd.f32 %v5486, 1.0
        %v5488 = vrcp.pop %v5487
        %v5489 = vmul.f32 %v5487, %v5488
        %v5490 = vsub.f32 1.0, %v5489
        %v5491 = vmul.f32 %v5488, %v5490
        %v5492 = vadd.f32 %v5488, %v5491
        %vm5493 = vweird.f32 %v5487
        %vm5494 = vweird.f32 %v5488
        %vm5495 = vmor %vm5493, %vm5494
        %v5496 = vsel %vm5495, %v5488, %v5492
        %v5497 = vand.u32 2147483647, %v5487
        %vm5498 = vcmp.eq.f32.partialorder %v5497, 8.507059e+37
        %v5499 = vand.u32 %v5487, 2147483648
        %v5500 = vor.u32 1.1754944e-38, %v5499
        %v5501 = vsel %vm5498, %v5500, %v5496
        %v5502 = vmul.f32 1.0, %v5501
        %v5503 = vtanh.pop %v5463
        %v5504 = vxor.u32 %v5464, 2147483648
        %v5505 = vmul.f32 %v5504, 1.442695
        %v5506 = vpow.pop %v5505
        %v5507 = vadd.f32 %v5506, 1.0
        %v5508 = vrcp.pop %v5507
        %v5509 = vmul.f32 %v5507, %v5508
        %v5510 = vsub.f32 1.0, %v5509
        %v5511 = vmul.f32 %v5508, %v5510
        %v5512 = vadd.f32 %v5508, %v5511
        %vm5513 = vweird.f32 %v5507
        %vm5514 = vweird.f32 %v5508
        %vm5515 = vmor %vm5513, %vm5514
        %v5516 = vsel %vm5515, %v5508, %v5512
        %v5517 = vand.u32 2147483647, %v5507
        %vm5518 = vcmp.eq.f32.partialorder %v5517, 8.507059e+37
        %v5519 = vand.u32 %v5507, 2147483648
        %v5520 = vor.u32 1.1754944e-38, %v5519
        %v5521 = vsel %vm5518, %v5520, %v5516
        %v5522 = vmul.f32 1.0, %v5521
        %v5523 = vmul.f32 %v5502, %v5204
        %v5524 = vmul.f32 %v5483, %v5503
        %v5525 = vadd.f32 %v5523, %v5524
        %v5526 = vtanh.pop %v5525
        %v5527 = vmul.f32 %v5522, %v5526
        %v5528 = vpack.c.bf16 %v5527, %v5527
        %s5529 = scalar_lea.vmem %s304, 56
        %5530 = vst [vmem:[%s5529] sm:$0xf] %v5528
        %s5531 = smul.u32 15, 4
        %s5532 = smul.addr %s5531, 8
        %s5533 = scalar_lea.vmem [#allocation2], %s5532
        %v5534 = vld [vmem:[%s5533] sm:$0xff]
        %v5535 = vld [vmem:[%s5533 + $0x8] sm:$0xff]
        %v5536 = vld [vmem:[%s5533 + $0x10] sm:$0xff]
        %v5537 = vld [vmem:[%s5533 + $0x18] sm:$0xff]
        %v5538 = vld [vmem:[%s4] sm:$0xff]
        %v5539 = vld [vmem:[%s4 + $0x8] sm:$0xff]
        %v5540 = vld [vmem:[%s4 + $0x10] sm:$0xff]
        %v5541 = vld [vmem:[%s4 + $0x18] sm:$0xff]
        %v5542 = vld [vmem:[%s4 + $0x20] sm:$0xff]
        %v5543 = vld [vmem:[%s4 + $0x28] sm:$0xff]
        %v5544 = vld [vmem:[%s4 + $0x30] sm:$0xff]
        %v5545 = vld [vmem:[%s4 + $0x38] sm:$0xff]
        %v5546 = vld [vmem:[%s4 + $0x40] sm:$0xff]
        %v5547 = vld [vmem:[%s4 + $0x48] sm:$0xff]
        %v5548 = vld [vmem:[%s4 + $0x50] sm:$0xff]
        %v5549 = vld [vmem:[%s4 + $0x58] sm:$0xff]
        %v5550 = vld [vmem:[%s4 + $0x60] sm:$0xff]
        %v5551 = vld [vmem:[%s4 + $0x68] sm:$0xff]
        %v5552 = vld [vmem:[%s4 + $0x70] sm:$0xff]
        %v5553 = vld [vmem:[%s4 + $0x78] sm:$0xff]
        %v5554 = vld [vmem:[%s4 + $0x80] sm:$0xff]
        %v5555 = vld [vmem:[%s4 + $0x88] sm:$0xff]
        %v5556 = vld [vmem:[%s4 + $0x90] sm:$0xff]
        %v5557 = vld [vmem:[%s4 + $0x98] sm:$0xff]
        %v5558 = vld [vmem:[%s4 + $0xa0] sm:$0xff]
        %v5559 = vld [vmem:[%s4 + $0xa8] sm:$0xff]
        %v5560 = vld [vmem:[%s4 + $0xb0] sm:$0xff]
        %v5561 = vld [vmem:[%s4 + $0xb8] sm:$0xff]
        %v5562 = vld [vmem:[%s4 + $0xc0] sm:$0xff]
        %v5563 = vld [vmem:[%s4 + $0xc8] sm:$0xff]
        %v5564 = vld [vmem:[%s4 + $0xd0] sm:$0xff]
        %v5565 = vld [vmem:[%s4 + $0xd8] sm:$0xff]
        %v5566 = vld [vmem:[%s4 + $0xe0] sm:$0xff]
        %v5567 = vld [vmem:[%s4 + $0xe8] sm:$0xff]
        %v5568 = vld [vmem:[%s4 + $0xf0] sm:$0xff]
        %v5569 = vld [vmem:[%s4 + $0xf8] sm:$0xff]
        %v5602 = vunpack.c.l.b16 %v5538
        %v5603 = vunpack.c.h.b16 %v5538
        %v5604 = vunpack.c.l.b16 %v5539
        %v5605 = vunpack.c.h.b16 %v5539
        %v5606 = vunpack.c.l.b16 %v5540
        %v5607 = vunpack.c.h.b16 %v5540
        %v5608 = vunpack.c.l.b16 %v5541
        %v5609 = vunpack.c.h.b16 %v5541
        %v5610 = vunpack.c.l.b16 %v5542
        %v5611 = vunpack.c.h.b16 %v5542
        %v5612 = vunpack.c.l.b16 %v5543
        %v5613 = vunpack.c.h.b16 %v5543
        %v5614 = vunpack.c.l.b16 %v5544
        %v5615 = vunpack.c.h.b16 %v5544
        %v5616 = vunpack.c.l.b16 %v5545
        %v5617 = vunpack.c.h.b16 %v5545
        %v5618 = vunpack.c.l.b16 %v5546
        %v5619 = vunpack.c.h.b16 %v5546
        %v5620 = vunpack.c.l.b16 %v5547
        %v5621 = vunpack.c.h.b16 %v5547
        %v5622 = vunpack.c.l.b16 %v5548
        %v5623 = vunpack.c.h.b16 %v5548
        %v5624 = vunpack.c.l.b16 %v5549
        %v5625 = vunpack.c.h.b16 %v5549
        %v5626 = vunpack.c.l.b16 %v5550
        %v5627 = vunpack.c.h.b16 %v5550
        %v5628 = vunpack.c.l.b16 %v5551
        %v5629 = vunpack.c.h.b16 %v5551
        %v5630 = vunpack.c.l.b16 %v5552
        %v5631 = vunpack.c.h.b16 %v5552
        %v5632 = vunpack.c.l.b16 %v5553
        %v5633 = vunpack.c.h.b16 %v5553
        %v5634 = vunpack.c.l.b16 %v5554
        %v5635 = vunpack.c.h.b16 %v5554
        %v5636 = vunpack.c.l.b16 %v5555
        %v5637 = vunpack.c.h.b16 %v5555
        %v5638 = vunpack.c.l.b16 %v5556
        %v5639 = vunpack.c.h.b16 %v5556
        %v5640 = vunpack.c.l.b16 %v5557
        %v5641 = vunpack.c.h.b16 %v5557
        %v5642 = vunpack.c.l.b16 %v5558
        %v5643 = vunpack.c.h.b16 %v5558
        %v5644 = vunpack.c.l.b16 %v5559
        %v5645 = vunpack.c.h.b16 %v5559
        %v5646 = vunpack.c.l.b16 %v5560
        %v5647 = vunpack.c.h.b16 %v5560
        %v5648 = vunpack.c.l.b16 %v5561
        %v5649 = vunpack.c.h.b16 %v5561
        %v5650 = vunpack.c.l.b16 %v5562
        %v5651 = vunpack.c.h.b16 %v5562
        %v5652 = vunpack.c.l.b16 %v5563
        %v5653 = vunpack.c.h.b16 %v5563
        %v5654 = vunpack.c.l.b16 %v5564
        %v5655 = vunpack.c.h.b16 %v5564
        %v5656 = vunpack.c.l.b16 %v5565
        %v5657 = vunpack.c.h.b16 %v5565
        %v5658 = vunpack.c.l.b16 %v5566
        %v5659 = vunpack.c.h.b16 %v5566
        %v5660 = vunpack.c.l.b16 %v5567
        %v5661 = vunpack.c.h.b16 %v5567
        %v5662 = vunpack.c.l.b16 %v5568
        %v5663 = vunpack.c.h.b16 %v5568
        %v5664 = vunpack.c.l.b16 %v5569
        %v5665 = vunpack.c.h.b16 %v5569
        %v5666 = vpack.c.b16 %v5606, %v5602
        %v5667 = vpack.c.b16 %v5607, %v5603
        %v5668 = vpack.c.b16 %v5608, %v5604
        %v5669 = vpack.c.b16 %v5609, %v5605
        %v5670 = vpack.c.b16 %v5614, %v5610
        %v5671 = vpack.c.b16 %v5615, %v5611
        %v5672 = vpack.c.b16 %v5616, %v5612
        %v5673 = vpack.c.b16 %v5617, %v5613
        %v5674 = vpack.c.b16 %v5622, %v5618
        %v5675 = vpack.c.b16 %v5623, %v5619
        %v5676 = vpack.c.b16 %v5624, %v5620
        %v5677 = vpack.c.b16 %v5625, %v5621
        %v5678 = vpack.c.b16 %v5630, %v5626
        %v5679 = vpack.c.b16 %v5631, %v5627
        %v5680 = vpack.c.b16 %v5632, %v5628
        %v5681 = vpack.c.b16 %v5633, %v5629
        %v5682 = vpack.c.b16 %v5638, %v5634
        %v5683 = vpack.c.b16 %v5639, %v5635
        %v5684 = vpack.c.b16 %v5640, %v5636
        %v5685 = vpack.c.b16 %v5641, %v5637
        %v5686 = vpack.c.b16 %v5646, %v5642
        %v5687 = vpack.c.b16 %v5647, %v5643
        %v5688 = vpack.c.b16 %v5648, %v5644
        %v5689 = vpack.c.b16 %v5649, %v5645
        %v5690 = vpack.c.b16 %v5654, %v5650
        %v5691 = vpack.c.b16 %v5655, %v5651
        %v5692 = vpack.c.b16 %v5656, %v5652
        %v5693 = vpack.c.b16 %v5657, %v5653
        %v5694 = vpack.c.b16 %v5662, %v5658
        %v5695 = vpack.c.b16 %v5663, %v5659
        %v5696 = vpack.c.b16 %v5664, %v5660
        %v5697 = vpack.c.b16 %v5665, %v5661
        %5730 = vmatpush.bf16.msra.mxu0 %v5694
        %5731 = vmatpush.bf16.msra.mxu0 %v5690
        %5732 = vmatpush.bf16.msra.mxu0 %v5686
        %5733 = vmatpush.bf16.msra.mxu0 %v5682
        %5734 = vmatpush.bf16.msra.mxu0 %v5678
        %5735 = vmatpush.bf16.msra.mxu0 %v5674
        %5736 = vmatpush.bf16.msra.mxu0 %v5670
        %5737 = vmatpush.bf16.msra.mxu0 %v5666
        %5738 = vmatmul.bf16.gmra.mxu0 %v5528
        %v5739 = vpop.f32.mrf.mxu0
        %v5740 = vadd.f32 0.0, %v5739
        %v5741 = vpop.f32.mrf.mxu0
        %5742 = vdwg.mxu0
        %5743 = vmatpush.bf16.msra.mxu0 %v5695
        %5744 = vmatpush.bf16.msra.mxu0 %v5691
        %5745 = vmatpush.bf16.msra.mxu0 %v5687
        %5746 = vmatpush.bf16.msra.mxu0 %v5683
        %5747 = vmatpush.bf16.msra.mxu0 %v5679
        %5748 = vmatpush.bf16.msra.mxu0 %v5675
        %5749 = vmatpush.bf16.msra.mxu0 %v5671
        %5750 = vmatpush.bf16.msra.mxu0 %v5667
        %5751 = vmatmul.bf16.gmra.mxu0 %v5528
        %v5752 = vpop.f32.mrf.mxu0
        %v5753 = vadd.f32 0.0, %v5752
        %v5754 = vpop.f32.mrf.mxu0
        %5755 = vdwg.mxu0
        %5756 = vmatpush.bf16.msra.mxu0 %v5696
        %5757 = vmatpush.bf16.msra.mxu0 %v5692
        %5758 = vmatpush.bf16.msra.mxu0 %v5688
        %5759 = vmatpush.bf16.msra.mxu0 %v5684
        %5760 = vmatpush.bf16.msra.mxu0 %v5680
        %5761 = vmatpush.bf16.msra.mxu0 %v5676
        %5762 = vmatpush.bf16.msra.mxu0 %v5672
        %5763 = vmatpush.bf16.msra.mxu0 %v5668
        %5764 = vmatmul.bf16.gmra.mxu0 %v5528
        %v5765 = vpop.f32.mrf.mxu0
        %v5766 = vadd.f32 0.0, %v5765
        %v5767 = vpop.f32.mrf.mxu0
        %5768 = vdwg.mxu0
        %5769 = vmatpush.bf16.msra.mxu0 %v5697
        %5770 = vmatpush.bf16.msra.mxu0 %v5693
        %5771 = vmatpush.bf16.msra.mxu0 %v5689
        %5772 = vmatpush.bf16.msra.mxu0 %v5685
        %5773 = vmatpush.bf16.msra.mxu0 %v5681
        %5774 = vmatpush.bf16.msra.mxu0 %v5677
        %5775 = vmatpush.bf16.msra.mxu0 %v5673
        %5776 = vmatpush.bf16.msra.mxu0 %v5669
        %5777 = vmatmul.bf16.gmra.mxu0 %v5528
        %v5778 = vpop.f32.mrf.mxu0
        %v5779 = vadd.f32 0.0, %v5778
        %v5780 = vpop.f32.mrf.mxu0
        %5781 = vdwg.mxu0
        %v5782 = vadd.f32 %v5534, %v5740
        %v5783 = vadd.f32 %v5535, %v5753
        %v5784 = vadd.f32 %v5536, %v5766
        %v5785 = vadd.f32 %v5537, %v5779
        %v5786 = vxor.u32 %v5782, 2147483648
        %v5787 = vmul.f32 %v5786, 1.442695
        %v5788 = vpow.pop %v5787
        %v5789 = vadd.f32 %v5788, 1.0
        %v5790 = vrcp.pop %v5789
        %v5791 = vmul.f32 %v5789, %v5790
        %v5792 = vsub.f32 1.0, %v5791
        %v5793 = vmul.f32 %v5790, %v5792
        %v5794 = vadd.f32 %v5790, %v5793
        %vm5795 = vweird.f32 %v5789
        %vm5796 = vweird.f32 %v5790
        %vm5797 = vmor %vm5795, %vm5796
        %v5798 = vsel %vm5797, %v5790, %v5794
        %v5799 = vand.u32 2147483647, %v5789
        %vm5800 = vcmp.eq.f32.partialorder %v5799, 8.507059e+37
        %v5801 = vand.u32 %v5789, 2147483648
        %v5802 = vor.u32 1.1754944e-38, %v5801
        %v5803 = vsel %vm5800, %v5802, %v5798
        %v5804 = vmul.f32 1.0, %v5803
        %v5805 = vxor.u32 %v5783, 2147483648
        %v5806 = vmul.f32 %v5805, 1.442695
        %v5807 = vpow.pop %v5806
        %v5808 = vadd.f32 %v5807, 1.0
        %v5809 = vrcp.pop %v5808
        %v5810 = vmul.f32 %v5808, %v5809
        %v5811 = vsub.f32 1.0, %v5810
        %v5812 = vmul.f32 %v5809, %v5811
        %v5813 = vadd.f32 %v5809, %v5812
        %vm5814 = vweird.f32 %v5808
        %vm5815 = vweird.f32 %v5809
        %vm5816 = vmor %vm5814, %vm5815
        %v5817 = vsel %vm5816, %v5809, %v5813
        %v5818 = vand.u32 2147483647, %v5808
        %vm5819 = vcmp.eq.f32.partialorder %v5818, 8.507059e+37
        %v5820 = vand.u32 %v5808, 2147483648
        %v5821 = vor.u32 1.1754944e-38, %v5820
        %v5822 = vsel %vm5819, %v5821, %v5817
        %v5823 = vmul.f32 1.0, %v5822
        %v5824 = vtanh.pop %v5784
        %v5825 = vxor.u32 %v5785, 2147483648
        %v5826 = vmul.f32 %v5825, 1.442695
        %v5827 = vpow.pop %v5826
        %v5828 = vadd.f32 %v5827, 1.0
        %v5829 = vrcp.pop %v5828
        %v5830 = vmul.f32 %v5828, %v5829
        %v5831 = vsub.f32 1.0, %v5830
        %v5832 = vmul.f32 %v5829, %v5831
        %v5833 = vadd.f32 %v5829, %v5832
        %vm5834 = vweird.f32 %v5828
        %vm5835 = vweird.f32 %v5829
        %vm5836 = vmor %vm5834, %vm5835
        %v5837 = vsel %vm5836, %v5829, %v5833
        %v5838 = vand.u32 2147483647, %v5828
        %vm5839 = vcmp.eq.f32.partialorder %v5838, 8.507059e+37
        %v5840 = vand.u32 %v5828, 2147483648
        %v5841 = vor.u32 1.1754944e-38, %v5840
        %v5842 = vsel %vm5839, %v5841, %v5837
        %v5843 = vmul.f32 1.0, %v5842
        %v5844 = vmul.f32 %v5823, %v5525
        %v5845 = vmul.f32 %v5804, %v5824
        %v5846 = vadd.f32 %v5844, %v5845
        %v5847 = vtanh.pop %v5846
        %v5848 = vmul.f32 %v5843, %v5847
        %v5849 = vpack.c.bf16 %v5848, %v5848
        %s5850 = scalar_lea.vmem %s304, 60
        %5851 = vst [vmem:[%s5850] sm:$0xf] %v5849
        %5852 = vst [vmem:[#allocation3] sm:$0xf] %v5849
        %5853 = vst [vmem:[#allocation4] sm:$0xff] %v5846
        %p5854 = scmp.eq.s32.totalorder %s22, 3
        // Predicated region
        $region49: #{rnn_lm_forward.2} parent=43 // pred_check
          %p5855 = pneg %p5854
        $region50: #{rnn_lm_forward.2} parent=43 // pred_check_branch
          %5857 = sbr.rel (%p5855) target = $region52
        $region51: #{rnn_lm_forward.2} parent=43 // pred_region
          %v5858 = vunpack.c.l.bf16 %v5849
          %5859 = vst [vmem:[#allocation5] sm:$0xff] %v5858
          %5860 = vst [vmem:[#allocation7] sm:$0xff] %v5846
        $region52: #{rnn_lm_forward.2} parent=43 // pred_fallthru
          _
        %s5861 = smul.u32 16, %s22
        %p5862 = scmp.lt.s32.totalorder %s5861, 63
        %s5863 = scalar_select %p5862, %s5861, 63
        %s5864 = smul.addr %s5863, 4
        %s5865 = scalar_lea.vmem %s6, %s5864
        // Predicated region
        $region53: #{rnn_lm_forward.2} parent=43 // pred_check
          %p5866 = pneg %p171
        $region54: #{rnn_lm_forward.2} parent=43 // pred_check_branch
          %5868 = sbr.rel (%p5866) target = $region56
        $region55: #{rnn_lm_forward.2} parent=43 // pred_region
          %s5869 = smul.u32 16, %s22
        $region56: #{rnn_lm_forward.2} parent=43 // pred_fallthru
          _
        // Predicated region
        $region57: #{rnn_lm_forward.2} parent=43 // pred_check
          %p5870 = pneg %p192
        $region58: #{rnn_lm_forward.2} parent=43 // pred_check_branch
          %5872 = sbr.rel (%p5870) target = $region60
        $region59: #{rnn_lm_forward.2} parent=43 // pred_region
          %5874 = vsyncadd [#allocation6], 0
          %s5876 = sshll.u32 [#allocation5], 4
          %s5877 = int_to_ptr.vmem [resolvable:$true] %s5876
          %s5878 = sshll.u32 %s7, 4
          %s5879 = int_to_ptr.hbm [resolvable:$true] %s5878
          %5881 = dma.vmem_to_hbm [thread:$0]  %s5877, 128, %s5879, [#allocation6]
        $region60: #{rnn_lm_forward.2} parent=43 // pred_fallthru
          _
        // Predicated region
        $region61: #{rnn_lm_forward.2} parent=43 // pred_check
          %p5882 = pneg %p213
        $region62: #{rnn_lm_forward.2} parent=43 // pred_check_branch
          %5884 = sbr.rel (%p5882) target = $region64
        $region63: #{rnn_lm_forward.2} parent=43 // pred_region
          %5886 = vsyncadd [#allocation8], 0
          %s5888 = sshll.u32 [#allocation7], 4
          %s5889 = int_to_ptr.vmem [resolvable:$true] %s5888
          %s5890 = sshll.u32 %s8, 4
          %s5891 = int_to_ptr.hbm [resolvable:$true] %s5890
          %5893 = dma.vmem_to_hbm [thread:$0]  %s5889, 128, %s5891, [#allocation8]
        $region64: #{rnn_lm_forward.2} parent=43 // pred_fallthru
          _
        // Predicated region
        $region65: #{rnn_lm_forward.2} parent=43 // pred_check
          %p5894 = pneg %p192
        $region66: #{rnn_lm_forward.2} parent=43 // pred_check_branch
          %5896 = sbr.rel (%p5894) target = $region68
        $region67: #{rnn_lm_forward.2} parent=43 // pred_region
          %5898 = dma.done [#allocation6], 128
        $region68: #{rnn_lm_forward.2} parent=43 // pred_fallthru
          _
        // Predicated region
        $region69: #{rnn_lm_forward.2} parent=43 // pred_check
          %p5899 = pneg %p213
        $region70: #{rnn_lm_forward.2} parent=43 // pred_check_branch
          %5901 = sbr.rel (%p5899) target = $region72
        $region71: #{rnn_lm_forward.2} parent=43 // pred_region
          %5903 = dma.done [#allocation8], 128
        $region72: #{rnn_lm_forward.2} parent=43 // pred_fallthru
          _
      $region44: #{rnn_lm_forward.2} parent=5 // pred_fallthru
        _
      %p5904 = scmp.le.s32.totalorder 2, %s17
      // Predicated region
      $region73: #{rnn_lm_forward.2} parent=5 // pred_check
        %p5905 = pneg %p5904
      $region74: #{rnn_lm_forward.2} parent=5 // pred_check_branch
        %5907 = sbr.rel (%p5905) target = $region76
      $region75: #{rnn_lm_forward.2} parent=5 // pred_region
        %s5908 = ssub.s32 %s17, 2
        // Predicated region
        $region77: #{rnn_lm_forward.2} parent=75 // pred_check
          %p5909 = pneg %p177
        $region78: #{rnn_lm_forward.2} parent=75 // pred_check_branch
          %5911 = sbr.rel (%p5909) target = $region80
        $region79: #{rnn_lm_forward.2} parent=75 // pred_region
          %s5912 = smul.u32 16, %s23
          %p5913 = scmp.lt.s32.totalorder %s5912, 63
          %s5914 = scalar_select %p5913, %s5912, 63
          %s5915 = smul.addr %s5914, 4
          %s5916 = scalar_lea.vmem %s6, %s5915
        $region80: #{rnn_lm_forward.2} parent=75 // pred_fallthru
          _
      $region76: #{rnn_lm_forward.2} parent=5 // pred_fallthru
        _
    $region6: #{rnn_lm_forward.2} parent=1 // loop_footer
      %s21 = sadd.s32 1, %s17
    $region7: #{rnn_lm_forward.2} parent=1 // loop_footer_branch
      %16 = sbr.rel target = $region3
    $region8: #{rnn_lm_forward.2} parent=1 // loop_exit
      _
    %5917 = vsyncpa [#allocation6], 1
    %s5918 = scalar_lea.sflag [#allocation6], 1
    %5919 = vsyncpa %s5918, 1
    %5920 = vsyncpa [#allocation8], 1

</llo_original>
